<compile_context>
chip_gen: v6e
topology: v6e:2x2x1
jax: 0.10.0
libtpu: 0.0.40
codegen_flags: <defaults>
</compile_context>

<pallas_src>
import functools

import jax
import jax.numpy as jnp
from jax.experimental import pallas as pl
from jax.experimental.pallas import tpu as pltpu

F32 = jnp.float32
BF16 = jnp.bfloat16


# -------------- fused bilinear 2x upsample (align_corners=True), per sample ----------- #

def _upsample_kernel(ry_ref, m_ref, x_ref, o_ref):
    # out[n] = Ry @ x[n] @ M,  M = kron(Rx^T, I_C)  -> separable bilinear, no transposes.
    t = jnp.dot(ry_ref[...], x_ref[0], preferred_element_type=jnp.float32)   # (H2, W*C)
    o_ref[0] = jnp.dot(t, m_ref[...],
                       preferred_element_type=jnp.float32).astype(o_ref.dtype)


def _bilinear_matrix(n_in, n_out):
    # align_corners=True interpolation matrix R (n_out, n_in): out = R @ in
    if n_in == 1:
        return jnp.ones((n_out, 1), F32)
    if n_out == 1:
        return jnp.zeros((1, n_in), F32).at[0, 0].set(1.0)
    src = jnp.arange(n_out, dtype=F32) * (float(n_in - 1) / float(n_out - 1))
    i0 = jnp.clip(jnp.floor(src), 0.0, float(n_in - 1)).astype(jnp.int32)
    i1 = jnp.minimum(i0 + 1, n_in - 1)
    w1 = src - i0.astype(F32)
    w0 = 1.0 - w1
    rows = jnp.arange(n_out)
    R = jnp.zeros((n_out, n_in), F32)
    R = R.at[rows, i0].add(w0)
    R = R.at[rows, i1].add(w1)
    return R


def bilinear_upsample_2x(x):
    # x: (N, H, W, C) f32 -> (N, 2H, 2W, C), bilinear, align_corners=True.
    N, H, W, C = x.shape
    H2, W2 = 2 * H, 2 * W
    Ry = _bilinear_matrix(H, H2)                                        # (H2, H)
    Rx = _bilinear_matrix(W, W2)                                        # (W2, W)
    M = jnp.kron(jnp.transpose(Rx), jnp.eye(C, dtype=F32))              # (W*C, W2*C)
    xf = x.astype(F32).reshape(N, H, W * C)

    out = pl.pallas_call(
        _upsample_kernel,
        grid=(N,),
        in_specs=[
            pl.BlockSpec((H2, H), lambda n: (0, 0)),
            pl.BlockSpec((W * C, W2 * C), lambda n: (0, 0)),
            pl.BlockSpec((1, H, W * C), lambda n: (n, 0, 0)),
        ],
        out_specs=pl.BlockSpec((1, H2, W2 * C), lambda n: (n, 0, 0)),
        out_shape=jax.ShapeDtypeStruct((N, H2, W2 * C), F32),
        compiler_params=pltpu.CompilerParams(dimension_semantics=("parallel",)),
    )(Ry, M, xf)
    return out.reshape(N, H2, W2, C)


# ------------- fused DoubleConv: (conv3x3+bias -> GN -> ReLU) x 2, per sample ---------- #

def _double_conv_kernel(xp_ref, w1_ref, b1_ref, g1_ref, bb1_ref, agg1_ref, agg1t_ref,
                        w2_ref, b2_ref, g2_ref, bb2_ref, agg2_ref, agg2t_ref,
                        o_ref, hpad_ref, *, H, W, G, eps):
    HW = H * W
    xp = xp_ref[0]                                   # (H+2, W+2, Cin) bf16, VMEM resident
    Cin = xp.shape[-1]
    Cmid = w1_ref.shape[-1]
    Cout = w2_ref.shape[-1]

    def conv3x3(get_window, w_ref, b_ref, cin, cout):
        # 3x3 / stride-1 / pad-1 conv as 9 shifted-window MXU matmuls, f32 accumulation.
        acc = jnp.zeros((HW, cout), jnp.float32)
        t = 0
        for i in range(3):
            for j in range(3):
                win = get_window(i, j).reshape(HW, cin)            # (HW, cin) bf16
                acc = acc + jnp.dot(win, w_ref[t],
                                    preferred_element_type=jnp.float32)
                t += 1
        return acc + b_ref[...]                                     # fused bias

    def gn_relu(y, gamma_ref, beta_ref, agg_ref, aggt_ref, c):
        # GroupNorm stats via tiny one-hot aggregation matmuls (no in-kernel reshapes),
        # ReLU fused.
        cnt = float(HW * (c // G))
        s1 = jnp.sum(y, axis=0, keepdims=True)                      # (1, c)
        s2 = jnp.sum(y * y, axis=0, keepdims=True)                  # (1, c)
        gs1 = jnp.dot(s1, agg_ref[...], preferred_element_type=jnp.float32)   # (1, G)
        gs2 = jnp.dot(s2, agg_ref[...], preferred_element_type=jnp.float32)   # (1, G)
        mean = gs1 / cnt
        var = jnp.maximum(gs2 / cnt - mean * mean, 0.0)
        inv = jax.lax.rsqrt(var + eps)
        mean_c = jnp.dot(mean, aggt_ref[...], preferred_element_type=jnp.float32)  # (1, c)
        inv_c = jnp.dot(inv, aggt_ref[...], preferred_element_type=jnp.float32)    # (1, c)
        return jnp.maximum((y - mean_c) * (inv_c * gamma_ref[...]) + beta_ref[...], 0.0)

    # ---- conv1 + GroupNorm + ReLU ----
    y1 = conv3x3(lambda i, j: xp[i:i + H, j:j + W, :], w1_ref, b1_ref, Cin, Cmid)
    h = gn_relu(y1, g1_ref, bb1_ref, agg1_ref, agg1t_ref, Cmid)

    # ---- re-pad the intermediate inside VMEM (no HBM round trip) ----
    hpad_ref[...] = jnp.zeros_like(hpad_ref)
    hpad_ref[1:H + 1, 1:W + 1, :] = h.reshape(H, W, Cmid).astype(hpad_ref.dtype)

    # ---- conv2 + GroupNorm + ReLU ----
    y2 = conv3x3(lambda i, j: hpad_ref[i:i + H, j:j + W, :], w2_ref, b2_ref, Cmid, Cout)
    out = gn_relu(y2, g2_ref, bb2_ref, agg2_ref, agg2t_ref, Cout)

    # lane-dense NCHW-style store: (Cout, H*W) with H*W a multiple of 128.
    o_ref[0] = jnp.transpose(out, (1, 0)).astype(o_ref.dtype)


def double_conv(x, p, *, out_dtype=F32):
    # x: (N, H, W, Cin) NHWC -> (N, Cout, H, W) NCHW.
    N, H, W, Cin = x.shape
    G = p["groups"]
    w1 = p["w1"].reshape(9, Cin, -1).astype(BF16)                 # (9, Cin, Cmid), HWIO taps
    Cmid = w1.shape[-1]
    w2 = p["w2"].reshape(9, Cmid, -1).astype(BF16)                # (9, Cmid, Cout)
    Cout = w2.shape[-1]

    def agg_pair(c):
        grp = jnp.arange(c) // (c // G)
        a = (grp[:, None] == jnp.arange(G)[None, :]).astype(F32)  # (c, G)
        return a, jnp.transpose(a)

    agg1, agg1t = agg_pair(Cmid)
    agg2, agg2t = agg_pair(Cout)

    xp = jnp.pad(x, ((0, 0), (1, 1), (1, 1), (0, 0))).astype(BF16)
    row = lambda v: v.reshape(1, -1).astype(F32)

    out = pl.pallas_call(
        functools.partial(_double_conv_kernel, H=H, W=W, G=G, eps=1e-5),
        grid=(N,),
        in_specs=[
            pl.BlockSpec((1, H + 2, W + 2, Cin), lambda n: (n, 0, 0, 0)),
            pl.BlockSpec((9, Cin, Cmid), lambda n: (0, 0, 0)),
            pl.BlockSpec((1, Cmid), lambda n: (0, 0)),
            pl.BlockSpec((1, Cmid), lambda n: (0, 0)),
            pl.BlockSpec((1, Cmid), lambda n: (0, 0)),
            pl.BlockSpec((Cmid, G), lambda n: (0, 0)),
            pl.BlockSpec((G, Cmid), lambda n: (0, 0)),
            pl.BlockSpec((9, Cmid, Cout), lambda n: (0, 0, 0)),
            pl.BlockSpec((1, Cout), lambda n: (0, 0)),
            pl.BlockSpec((1, Cout), lambda n: (0, 0)),
            pl.BlockSpec((1, Cout), lambda n: (0, 0)),
            pl.BlockSpec((Cout, G), lambda n: (0, 0)),
            pl.BlockSpec((G, Cout), lambda n: (0, 0)),
        ],
        out_specs=pl.BlockSpec((1, Cout, H * W), lambda n: (n, 0, 0)),
        out_shape=jax.ShapeDtypeStruct((N, Cout, H * W), out_dtype),
        scratch_shapes=[pltpu.VMEM((H + 2, W + 2, Cmid), BF16)],
        compiler_params=pltpu.CompilerParams(dimension_semantics=("parallel",)),
    )(xp, w1, row(p["b1"]), row(p["g1"]), row(p["bb1"]), agg1, agg1t,
      w2, row(p["b2"]), row(p["g2"]), row(p["bb2"]), agg2, agg2t)

    return out.reshape(N, Cout, H, W)                              # already NCHW


# -------------------------------- Up forward ------------------------------------------ #

def make_params(key, in_channels, out_channels, num_groups):
    mid = in_channels // 2          # bilinear=True branch: DoubleConv mid = in//2
    ks = jax.random.split(key, 8)

    def conv_w(k, cin, cout):
        std = (2.0 / (9 * cin)) ** 0.5
        return jax.random.normal(k, (3, 3, cin, cout), F32) * std

    return {
        "groups": num_groups,
        "w1": conv_w(ks[0], in_channels, mid),
        "b1": 0.05 * jax.random.normal(ks[1], (mid,), F32),
        "g1": 1.0 + 0.05 * jax.random.normal(ks[2], (mid,), F32),
        "bb1": 0.05 * jax.random.normal(ks[3], (mid,), F32),
        "w2": conv_w(ks[4], mid, out_channels),
        "b2": 0.05 * jax.random.normal(ks[5], (out_channels,), F32),
        "g2": 1.0 + 0.05 * jax.random.normal(ks[6], (out_channels,), F32),
        "bb2": 0.05 * jax.random.normal(ks[7], (out_channels,), F32),
    }


def up_forward(params, x1_nchw, x2_nchw):
    x1 = jnp.transpose(x1_nchw, (0, 2, 3, 1)).astype(F32)          # NCHW -> NHWC
    x2 = jnp.transpose(x2_nchw, (0, 2, 3, 1)).astype(F32)

    x1 = bilinear_upsample_2x(x1)
    dy = x2.shape[1] - x1.shape[1]
    dx = x2.shape[2] - x1.shape[2]
    x1 = jnp.pad(x1, ((0, 0),
                      (dy // 2, dy - dy // 2),
                      (dx // 2, dx - dx // 2),
                      (0, 0)))
    x = jnp.concatenate([x2, x1], axis=-1)                          # == torch.cat([x2, x1], 1)
    return double_conv(x, params, out_dtype=F32)                    # (N, Cout, H, W) NCHW


if __name__ == "__main__":
    key = jax.random.PRNGKey(0)
    k1, k2, kp = jax.random.split(key, 3)

    # Up(in_channels=64, out_channels=32, bilinear=True, norm_num_groups=8):
    # x1 is the low-res feature map (in//2 channels), x2 the skip connection.
    in_channels, out_channels, num_groups, N = 64, 32, 8, 2
    x1 = jax.random.normal(k1, (N, in_channels // 2, 8, 8), F32)     # NCHW
    x2 = jax.random.normal(k2, (N, in_channels // 2, 16, 16), F32)   # NCHW
    params = make_params(kp, in_channels, out_channels, num_groups)

    fwd = jax.jit(functools.partial(up_forward, params))
    y = jax.block_until_ready(fwd(x1, x2))

    assert y.shape == (N, out_channels, 16, 16), y.shape
    assert bool(jnp.all(jnp.isfinite(y)))
    print("KERNEL_OK")
</pallas_src>

<mosaic_0001>
module attributes {stable_mosaic.version = 11 : i64} {
  func.func private @main(%arg0: i32) attributes {dimension_semantics = [#tpu.dimension_semantics<core_parallel>], iteration_bounds = array<i64: 2>, tpu.core_type = #tpu.core_type<sc_scalar_subcore>, window_params = []} {
    return
  }
}

module attributes {stable_mosaic.version = 11 : i64} {
  func.func private @main(%arg0: i32) attributes {dimension_semantics = [#tpu.dimension_semantics<core_parallel>], iteration_bounds = array<i64: 2>, tpu.core_type = #tpu.core_type<sc_scalar_subcore>, window_params = []} {
    return
  }
}

module attributes {stable_mosaic.version = 11 : i64} {
  func.func @_upsample_kernel(%arg0: i32, %arg1: memref<16x8xf32, #tpu.memory_space<vmem>>, %arg2: memref<256x512xf32, #tpu.memory_space<vmem>>, %arg3: memref<1x8x256xf32, #tpu.memory_space<vmem>>, %arg4: memref<1x16x512xf32, #tpu.memory_space<vmem>>) attributes {dimension_semantics = [#tpu.dimension_semantics<parallel>], iteration_bounds = array<i64: 2>, scalar_prefetch = 0 : i64, scratch_operands = 0 : i64, tpu.core_type = #tpu.core_type<tc>, window_params = [{pipeline_mode = #tpu.pipeline_mode<synchronous>, transform_indices = @transform_0, window_bounds = array<i64: 16, 8>}, {pipeline_mode = #tpu.pipeline_mode<synchronous>, transform_indices = @transform_1, window_bounds = array<i64: 256, 512>}, {transform_indices = @transform_2, window_bounds = array<i64: 1, 8, 256>}, {transform_indices = @transform_3, window_bounds = array<i64: 1, 16, 512>}]} {
    %c0 = arith.constant 0 : index
    %c0_0 = arith.constant 0 : index
    %0 = vector.load %arg1[%c0, %c0_0] : memref<16x8xf32, #tpu.memory_space<vmem>>, vector<16x8xf32>
    %c0_1 = arith.constant 0 : index
    %c0_2 = arith.constant 0 : index
    %c0_3 = arith.constant 0 : index
    %1 = vector.load %arg3[%c0_1, %c0_2, %c0_3] : memref<1x8x256xf32, #tpu.memory_space<vmem>>, vector<1x8x256xf32>
    %2 = vector.shape_cast %1 : vector<1x8x256xf32> to vector<8x256xf32>
    %cst = arith.constant dense<0.000000e+00> : vector<16x256xf32>
    %3 = tpu.matmul %0, %2, %cst {dimension_numbers = #tpu.dot_dimension_numbers<[1], [0], [0], [1], [0, 0, 1, 1], [], []>} : vector<16x8xf32>, vector<8x256xf32>, vector<16x256xf32> -> vector<16x256xf32>
    %c0_4 = arith.constant 0 : index
    %c0_5 = arith.constant 0 : index
    %4 = vector.load %arg2[%c0_4, %c0_5] : memref<256x512xf32, #tpu.memory_space<vmem>>, vector<256x512xf32>
    %cst_6 = arith.constant dense<0.000000e+00> : vector<16x512xf32>
    %5 = tpu.matmul %3, %4, %cst_6 {dimension_numbers = #tpu.dot_dimension_numbers<[1], [0], [0], [1], [0, 0, 1, 1], [], []>} : vector<16x256xf32>, vector<256x512xf32>, vector<16x512xf32> -> vector<16x512xf32>
    %c0_7 = arith.constant 0 : index
    %c0_8 = arith.constant 0 : index
    %c0_9 = arith.constant 0 : index
    %6 = vector.load %arg4[%c0_7, %c0_8, %c0_9] : memref<1x16x512xf32, #tpu.memory_space<vmem>>, vector<1x16x512xf32>
    %7 = vector.shape_cast %6 : vector<1x16x512xf32> to vector<16x512xf32>
    %8 = vector.shape_cast %5 : vector<16x512xf32> to vector<1x16x512xf32>
    tpu.vector_store %arg4[%c0_7, %c0_8, %c0_9], %8 {strides = array<i32>} : memref<1x16x512xf32, #tpu.memory_space<vmem>>, vector<1x16x512xf32>,
    return
  }
  func.func @transform_0(%arg0: i32) -> (i32, i32) {
    %c0_i32 = arith.constant 0 : i32
    %c0_i32_0 = arith.constant 0 : i32
    %c0_i32_1 = arith.constant 0 : i32
    return %c0_i32, %c0_i32_0 : i32, i32
  }
  func.func @transform_1(%arg0: i32) -> (i32, i32) {
    %c0_i32 = arith.constant 0 : i32
    %c0_i32_0 = arith.constant 0 : i32
    %c0_i32_1 = arith.constant 0 : i32
    return %c0_i32, %c0_i32_0 : i32, i32
  }
  func.func @transform_2(%arg0: i32) -> (i32, i32, i32) {
    %c0_i32 = arith.constant 0 : i32
    %c0_i32_0 = arith.constant 0 : i32
    %c0_i32_1 = arith.constant 0 : i32
    return %arg0, %c0_i32, %c0_i32_0 : i32, i32, i32
  }
  func.func @transform_3(%arg0: i32) -> (i32, i32, i32) {
    %c0_i32 = arith.constant 0 : i32
    %c0_i32_0 = arith.constant 0 : i32
    %c0_i32_1 = arith.constant 0 : i32
    return %arg0, %c0_i32, %c0_i32_0 : i32, i32, i32
  }
}

module attributes {stable_mosaic.version = 11 : i64} {
  func.func @_double_conv_kernel(%arg0: i32, %arg1: memref<1x18x18x64xbf16, #tpu.memory_space<vmem>>, %arg2: memref<9x64x32xbf16, #tpu.memory_space<vmem>>, %arg3: memref<1x32xf32, #tpu.memory_space<vmem>>, %arg4: memref<1x32xf32, #tpu.memory_space<vmem>>, %arg5: memref<1x32xf32, #tpu.memory_space<vmem>>, %arg6: memref<32x8xf32, #tpu.memory_space<vmem>>, %arg7: memref<8x32xf32, #tpu.memory_space<vmem>>, %arg8: memref<9x32x32xbf16, #tpu.memory_space<vmem>>, %arg9: memref<1x32xf32, #tpu.memory_space<vmem>>, %arg10: memref<1x32xf32, #tpu.memory_space<vmem>>, %arg11: memref<1x32xf32, #tpu.memory_space<vmem>>, %arg12: memref<32x8xf32, #tpu.memory_space<vmem>>, %arg13: memref<8x32xf32, #tpu.memory_space<vmem>>, %arg14: memref<1x32x256xf32, #tpu.memory_space<vmem>>, %arg15: memref<18x18x32xbf16, #tpu.memory_space<vmem>>) attributes {dimension_semantics = [#tpu.dimension_semantics<parallel>], iteration_bounds = array<i64: 2>, scalar_prefetch = 0 : i64, scratch_operands = 1 : i64, tpu.core_type = #tpu.core_type<tc>, window_params = [{transform_indices = @transform_0, window_bounds = array<i64: 1, 18, 18, 64>}, {pipeline_mode = #tpu.pipeline_mode<synchronous>, transform_indices = @transform_1, window_bounds = array<i64: 9, 64, 32>}, {pipeline_mode = #tpu.pipeline_mode<synchronous>, transform_indices = @transform_2, window_bounds = array<i64: 1, 32>}, {pipeline_mode = #tpu.pipeline_mode<synchronous>, transform_indices = @transform_3, window_bounds = array<i64: 1, 32>}, {pipeline_mode = #tpu.pipeline_mode<synchronous>, transform_indices = @transform_4, window_bounds = array<i64: 1, 32>}, {pipeline_mode = #tpu.pipeline_mode<synchronous>, transform_indices = @transform_5, window_bounds = array<i64: 32, 8>}, {pipeline_mode = #tpu.pipeline_mode<synchronous>, transform_indices = @transform_6, window_bounds = array<i64: 8, 32>}, {pipeline_mode = #tpu.pipeline_mode<synchronous>, transform_indices = @transform_7, window_bounds = array<i64: 9, 32, 32>}, {pipeline_mode = #tpu.pipeline_mode<synchronous>, transform_indices = @transform_8, window_bounds = array<i64: 1, 32>}, {pipeline_mode = #tpu.pipeline_mode<synchronous>, transform_indices = @transform_9, window_bounds = array<i64: 1, 32>}, {pipeline_mode = #tpu.pipeline_mode<synchronous>, transform_indices = @transform_10, window_bounds = array<i64: 1, 32>}, {pipeline_mode = #tpu.pipeline_mode<synchronous>, transform_indices = @transform_11, window_bounds = array<i64: 32, 8>}, {pipeline_mode = #tpu.pipeline_mode<synchronous>, transform_indices = @transform_12, window_bounds = array<i64: 8, 32>}, {transform_indices = @transform_13, window_bounds = array<i64: 1, 32, 256>}]} {
    %c0 = arith.constant 0 : index
    %c0_0 = arith.constant 0 : index
    %c0_1 = arith.constant 0 : index
    %c0_2 = arith.constant 0 : index
    %0 = vector.load %arg1[%c0, %c0_0, %c0_1, %c0_2] : memref<1x18x18x64xbf16, #tpu.memory_space<vmem>>, vector<1x18x18x64xbf16>
    %1 = vector.shape_cast %0 : vector<1x18x18x64xbf16> to vector<18x18x64xbf16>
    %cst = arith.constant 0.000000e+00 : f32
    %2 = vector.broadcast %cst : f32 to vector<256x32xf32>
    %3 = vector.extract_strided_slice %1 {offsets = [0, 0, 0], sizes = [16, 16, 64], strides = [1, 1, 1]} : vector<18x18x64xbf16> to vector<16x16x64xbf16>
    %4 = vector.shape_cast %3 : vector<16x16x64xbf16> to vector<256x64xbf16>
    %c0_3 = arith.constant 0 : index
    %c0_4 = arith.constant 0 : index
    %c0_5 = arith.constant 0 : index
    %5 = vector.load %arg2[%c0_3, %c0_4, %c0_5] : memref<9x64x32xbf16, #tpu.memory_space<vmem>>, vector<1x64x32xbf16>
    %6 = vector.shape_cast %5 : vector<1x64x32xbf16> to vector<64x32xbf16>
    %cst_6 = arith.constant dense<0.000000e+00> : vector<256x32xf32>
    %7 = tpu.matmul %4, %6, %cst_6 {dimension_numbers = #tpu.dot_dimension_numbers<[1], [0], [0], [1], [0, 0, 1, 1], [], []>} : vector<256x64xbf16>, vector<64x32xbf16>, vector<256x32xf32> -> vector<256x32xf32>
    %8 = arith.addf %2, %7 : vector<256x32xf32>
    %9 = vector.extract_strided_slice %1 {offsets = [0, 1, 0], sizes = [16, 16, 64], strides = [1, 1, 1]} : vector<18x18x64xbf16> to vector<16x16x64xbf16>
    %10 = vector.shape_cast %9 : vector<16x16x64xbf16> to vector<256x64xbf16>
    %c1 = arith.constant 1 : index
    %c0_7 = arith.constant 0 : index
    %c0_8 = arith.constant 0 : index
    %11 = vector.load %arg2[%c1, %c0_7, %c0_8] : memref<9x64x32xbf16, #tpu.memory_space<vmem>>, vector<1x64x32xbf16>
    %12 = vector.shape_cast %11 : vector<1x64x32xbf16> to vector<64x32xbf16>
    %cst_9 = arith.constant dense<0.000000e+00> : vector<256x32xf32>
    %13 = tpu.matmul %10, %12, %cst_9 {dimension_numbers = #tpu.dot_dimension_numbers<[1], [0], [0], [1], [0, 0, 1, 1], [], []>} : vector<256x64xbf16>, vector<64x32xbf16>, vector<256x32xf32> -> vector<256x32xf32>
    %14 = arith.addf %8, %13 : vector<256x32xf32>
    %15 = vector.extract_strided_slice %1 {offsets = [0, 2, 0], sizes = [16, 16, 64], strides = [1, 1, 1]} : vector<18x18x64xbf16> to vector<16x16x64xbf16>
    %16 = vector.shape_cast %15 : vector<16x16x64xbf16> to vector<256x64xbf16>
    %c2 = arith.constant 2 : index
    %c0_10 = arith.constant 0 : index
    %c0_11 = arith.constant 0 : index
    %17 = vector.load %arg2[%c2, %c0_10, %c0_11] : memref<9x64x32xbf16, #tpu.memory_space<vmem>>, vector<1x64x32xbf16>
    %18 = vector.shape_cast %17 : vector<1x64x32xbf16> to vector<64x32xbf16>
    %cst_12 = arith.constant dense<0.000000e+00> : vector<256x32xf32>
    %19 = tpu.matmul %16, %18, %cst_12 {dimension_numbers = #tpu.dot_dimension_numbers<[1], [0], [0], [1], [0, 0, 1, 1], [], []>} : vector<256x64xbf16>, vector<64x32xbf16>, vector<256x32xf32> -> vector<256x32xf32>
    %20 = arith.addf %14, %19 : vector<256x32xf32>
    %21 = vector.extract_strided_slice %1 {offsets = [1, 0, 0], sizes = [16, 16, 64], strides = [1, 1, 1]} : vector<18x18x64xbf16> to vector<16x16x64xbf16>
    %22 = vector.shape_cast %21 : vector<16x16x64xbf16> to vector<256x64xbf16>
    %c3 = arith.constant 3 : index
    %c0_13 = arith.constant 0 : index
    %c0_14 = arith.constant 0 : index
    %23 = vector.load %arg2[%c3, %c0_13, %c0_14] : memref<9x64x32xbf16, #tpu.memory_space<vmem>>, vector<1x64x32xbf16>
    %24 = vector.shape_cast %23 : vector<1x64x32xbf16> to vector<64x32xbf16>
    %cst_15 = arith.constant dense<0.000000e+00> : vector<256x32xf32>
    %25 = tpu.matmul %22, %24, %cst_15 {dimension_numbers = #tpu.dot_dimension_numbers<[1], [0], [0], [1], [0, 0, 1, 1], [], []>} : vector<256x64xbf16>, vector<64x32xbf16>, vector<256x32xf32> -> vector<256x32xf32>
    %26 = arith.addf %20, %25 : vector<256x32xf32>
    %27 = vector.extract_strided_slice %1 {offsets = [1, 1, 0], sizes = [16, 16, 64], strides = [1, 1, 1]} : vector<18x18x64xbf16> to vector<16x16x64xbf16>
    %28 = vector.shape_cast %27 : vector<16x16x64xbf16> to vector<256x64xbf16>
    %c4 = arith.constant 4 : index
    %c0_16 = arith.constant 0 : index
    %c0_17 = arith.constant 0 : index
    %29 = vector.load %arg2[%c4, %c0_16, %c0_17] : memref<9x64x32xbf16, #tpu.memory_space<vmem>>, vector<1x64x32xbf16>
    %30 = vector.shape_cast %29 : vector<1x64x32xbf16> to vector<64x32xbf16>
    %cst_18 = arith.constant dense<0.000000e+00> : vector<256x32xf32>
    %31 = tpu.matmul %28, %30, %cst_18 {dimension_numbers = #tpu.dot_dimension_numbers<[1], [0], [0], [1], [0, 0, 1, 1], [], []>} : vector<256x64xbf16>, vector<64x32xbf16>, vector<256x32xf32> -> vector<256x32xf32>
    %32 = arith.addf %26, %31 : vector<256x32xf32>
    %33 = vector.extract_strided_slice %1 {offsets = [1, 2, 0], sizes = [16, 16, 64], strides = [1, 1, 1]} : vector<18x18x64xbf16> to vector<16x16x64xbf16>
    %34 = vector.shape_cast %33 : vector<16x16x64xbf16> to vector<256x64xbf16>
    %c5 = arith.constant 5 : index
    %c0_19 = arith.constant 0 : index
    %c0_20 = arith.constant 0 : index
    %35 = vector.load %arg2[%c5, %c0_19, %c0_20] : memref<9x64x32xbf16, #tpu.memory_space<vmem>>, vector<1x64x32xbf16>
    %36 = vector.shape_cast %35 : vector<1x64x32xbf16> to vector<64x32xbf16>
    %cst_21 = arith.constant dense<0.000000e+00> : vector<256x32xf32>
    %37 = tpu.matmul %34, %36, %cst_21 {dimension_numbers = #tpu.dot_dimension_numbers<[1], [0], [0], [1], [0, 0, 1, 1], [], []>} : vector<256x64xbf16>, vector<64x32xbf16>, vector<256x32xf32> -> vector<256x32xf32>
    %38 = arith.addf %32, %37 : vector<256x32xf32>
    %39 = vector.extract_strided_slice %1 {offsets = [2, 0, 0], sizes = [16, 16, 64], strides = [1, 1, 1]} : vector<18x18x64xbf16> to vector<16x16x64xbf16>
    %40 = vector.shape_cast %39 : vector<16x16x64xbf16> to vector<256x64xbf16>
    %c6 = arith.constant 6 : index
    %c0_22 = arith.constant 0 : index
    %c0_23 = arith.constant 0 : index
    %41 = vector.load %arg2[%c6, %c0_22, %c0_23] : memref<9x64x32xbf16, #tpu.memory_space<vmem>>, vector<1x64x32xbf16>
    %42 = vector.shape_cast %41 : vector<1x64x32xbf16> to vector<64x32xbf16>
    %cst_24 = arith.constant dense<0.000000e+00> : vector<256x32xf32>
    %43 = tpu.matmul %40, %42, %cst_24 {dimension_numbers = #tpu.dot_dimension_numbers<[1], [0], [0], [1], [0, 0, 1, 1], [], []>} : vector<256x64xbf16>, vector<64x32xbf16>, vector<256x32xf32> -> vector<256x32xf32>
    %44 = arith.addf %38, %43 : vector<256x32xf32>
    %45 = vector.extract_strided_slice %1 {offsets = [2, 1, 0], sizes = [16, 16, 64], strides = [1, 1, 1]} : vector<18x18x64xbf16> to vector<16x16x64xbf16>
    %46 = vector.shape_cast %45 : vector<16x16x64xbf16> to vector<256x64xbf16>
    %c7 = arith.constant 7 : index
    %c0_25 = arith.constant 0 : index
    %c0_26 = arith.constant 0 : index
    %47 = vector.load %arg2[%c7, %c0_25, %c0_26] : memref<9x64x32xbf16, #tpu.memory_space<vmem>>, vector<1x64x32xbf16>
    %48 = vector.shape_cast %47 : vector<1x64x32xbf16> to vector<64x32xbf16>
    %cst_27 = arith.constant dense<0.000000e+00> : vector<256x32xf32>
    %49 = tpu.matmul %46, %48, %cst_27 {dimension_numbers = #tpu.dot_dimension_numbers<[1], [0], [0], [1], [0, 0, 1, 1], [], []>} : vector<256x64xbf16>, vector<64x32xbf16>, vector<256x32xf32> -> vector<256x32xf32>
    %50 = arith.addf %44, %49 : vector<256x32xf32>
    %51 = vector.extract_strided_slice %1 {offsets = [2, 2, 0], sizes = [16, 16, 64], strides = [1, 1, 1]} : vector<18x18x64xbf16> to vector<16x16x64xbf16>
    %52 = vector.shape_cast %51 : vector<16x16x64xbf16> to vector<256x64xbf16>
    %c8 = arith.constant 8 : index
    %c0_28 = arith.constant 0 : index
    %c0_29 = arith.constant 0 : index
    %53 = vector.load %arg2[%c8, %c0_28, %c0_29] : memref<9x64x32xbf16, #tpu.memory_space<vmem>>, vector<1x64x32xbf16>
    %54 = vector.shape_cast %53 : vector<1x64x32xbf16> to vector<64x32xbf16>
    %cst_30 = arith.constant dense<0.000000e+00> : vector<256x32xf32>
    %55 = tpu.matmul %52, %54, %cst_30 {dimension_numbers = #tpu.dot_dimension_numbers<[1], [0], [0], [1], [0, 0, 1, 1], [], []>} : vector<256x64xbf16>, vector<64x32xbf16>, vector<256x32xf32> -> vector<256x32xf32>
    %56 = arith.addf %50, %55 : vector<256x32xf32>
    %c0_31 = arith.constant 0 : index
    %c0_32 = arith.constant 0 : index
    %57 = vector.load %arg3[%c0_31, %c0_32] : memref<1x32xf32, #tpu.memory_space<vmem>>, vector<1x32xf32>
    %58 = vector.broadcast %57 : vector<1x32xf32> to vector<256x32xf32>
    %59 = arith.addf %56, %58 : vector<256x32xf32>
    %cst_33 = arith.constant dense<0.000000e+00> : vector<32xf32>
    %60 = vector.multi_reduction <add>, %59, %cst_33 [0] : vector<256x32xf32> to vector<32xf32>
    %61 = vector.shape_cast %60 : vector<32xf32> to vector<1x32xf32>
    %62 = arith.mulf %59, %59 : vector<256x32xf32>
    %cst_34 = arith.constant dense<0.000000e+00> : vector<32xf32>
    %63 = vector.multi_reduction <add>, %62, %cst_34 [0] : vector<256x32xf32> to vector<32xf32>
    %64 = vector.shape_cast %63 : vector<32xf32> to vector<1x32xf32>
    %c0_35 = arith.constant 0 : index
    %c0_36 = arith.constant 0 : index
    %65 = vector.load %arg6[%c0_35, %c0_36] : memref<32x8xf32, #tpu.memory_space<vmem>>, vector<32x8xf32>
    %cst_37 = arith.constant dense<0.000000e+00> : vector<1x8xf32>
    %66 = tpu.matmul %61, %65, %cst_37 {dimension_numbers = #tpu.dot_dimension_numbers<[1], [0], [0], [1], [0, 0, 1, 1], [], []>} : vector<1x32xf32>, vector<32x8xf32>, vector<1x8xf32> -> vector<1x8xf32>
    %c0_38 = arith.constant 0 : index
    %c0_39 = arith.constant 0 : index
    %67 = vector.load %arg6[%c0_38, %c0_39] : memref<32x8xf32, #tpu.memory_space<vmem>>, vector<32x8xf32>
    %cst_40 = arith.constant dense<0.000000e+00> : vector<1x8xf32>
    %68 = tpu.matmul %64, %67, %cst_40 {dimension_numbers = #tpu.dot_dimension_numbers<[1], [0], [0], [1], [0, 0, 1, 1], [], []>} : vector<1x32xf32>, vector<32x8xf32>, vector<1x8xf32> -> vector<1x8xf32>
    %cst_41 = arith.constant 1.024000e+03 : f32
    %69 = vector.broadcast %cst_41 : f32 to vector<1x8xf32>
    %70 = arith.divf %66, %69 : vector<1x8xf32>
    %cst_42 = arith.constant 1.024000e+03 : f32
    %71 = vector.broadcast %cst_42 : f32 to vector<1x8xf32>
    %72 = arith.divf %68, %71 : vector<1x8xf32>
    %73 = arith.mulf %70, %70 : vector<1x8xf32>
    %74 = arith.subf %72, %73 : vector<1x8xf32>
    %cst_43 = arith.constant 0.000000e+00 : f32
    %75 = vector.broadcast %cst_43 : f32 to vector<1x8xf32>
    %76 = arith.maximumf %74, %75 : vector<1x8xf32>
    %cst_44 = arith.constant 9.99999974E-6 : f32
    %77 = vector.broadcast %cst_44 : f32 to vector<1x8xf32>
    %78 = arith.addf %76, %77 : vector<1x8xf32>
    %79 = math.rsqrt %78 : vector<1x8xf32>
    %c0_45 = arith.constant 0 : index
    %c0_46 = arith.constant 0 : index
    %80 = vector.load %arg7[%c0_45, %c0_46] : memref<8x32xf32, #tpu.memory_space<vmem>>, vector<8x32xf32>
    %cst_47 = arith.constant dense<0.000000e+00> : vector<1x32xf32>
    %81 = tpu.matmul %70, %80, %cst_47 {dimension_numbers = #tpu.dot_dimension_numbers<[1], [0], [0], [1], [0, 0, 1, 1], [], []>} : vector<1x8xf32>, vector<8x32xf32>, vector<1x32xf32> -> vector<1x32xf32>
    %c0_48 = arith.constant 0 : index
    %c0_49 = arith.constant 0 : index
    %82 = vector.load %arg7[%c0_48, %c0_49] : memref<8x32xf32, #tpu.memory_space<vmem>>, vector<8x32xf32>
    %cst_50 = arith.constant dense<0.000000e+00> : vector<1x32xf32>
    %83 = tpu.matmul %79, %82, %cst_50 {dimension_numbers = #tpu.dot_dimension_numbers<[1], [0], [0], [1], [0, 0, 1, 1], [], []>} : vector<1x8xf32>, vector<8x32xf32>, vector<1x32xf32> -> vector<1x32xf32>
    %84 = vector.broadcast %81 : vector<1x32xf32> to vector<256x32xf32>
    %85 = arith.subf %59, %84 : vector<256x32xf32>
    %c0_51 = arith.constant 0 : index
    %c0_52 = arith.constant 0 : index
    %86 = vector.load %arg4[%c0_51, %c0_52] : memref<1x32xf32, #tpu.memory_space<vmem>>, vector<1x32xf32>
    %87 = arith.mulf %83, %86 : vector<1x32xf32>
    %88 = vector.broadcast %87 : vector<1x32xf32> to vector<256x32xf32>
    %89 = arith.mulf %85, %88 : vector<256x32xf32>
    %c0_53 = arith.constant 0 : index
    %c0_54 = arith.constant 0 : index
    %90 = vector.load %arg5[%c0_53, %c0_54] : memref<1x32xf32, #tpu.memory_space<vmem>>, vector<1x32xf32>
    %91 = vector.broadcast %90 : vector<1x32xf32> to vector<256x32xf32>
    %92 = arith.addf %89, %91 : vector<256x32xf32>
    %cst_55 = arith.constant 0.000000e+00 : f32
    %93 = vector.broadcast %cst_55 : f32 to vector<256x32xf32>
    %94 = arith.maximumf %92, %93 : vector<256x32xf32>
    %cst_56 = arith.constant 0.000000e+00 : bf16
    %95 = vector.broadcast %cst_56 : bf16 to vector<18x18x32xbf16>
    %c0_57 = arith.constant 0 : index
    %c0_58 = arith.constant 0 : index
    %c0_59 = arith.constant 0 : index
    %96 = vector.load %arg15[%c0_57, %c0_58, %c0_59] : memref<18x18x32xbf16, #tpu.memory_space<vmem>>, vector<18x18x32xbf16>
    tpu.vector_store %arg15[%c0_57, %c0_58, %c0_59], %95 {strides = array<i32>} : memref<18x18x32xbf16, #tpu.memory_space<vmem>>, vector<18x18x32xbf16>,
    %97 = vector.shape_cast %94 : vector<256x32xf32> to vector<16x16x32xf32>
    %98 = arith.truncf %97 : vector<16x16x32xf32> to vector<16x16x32xbf16>
    %c1_60 = arith.constant 1 : index
    %c1_61 = arith.constant 1 : index
    %c0_62 = arith.constant 0 : index
    %99 = vector.load %arg15[%c1_60, %c1_61, %c0_62] : memref<18x18x32xbf16, #tpu.memory_space<vmem>>, vector<16x16x32xbf16>
    tpu.vector_store %arg15[%c1_60, %c1_61, %c0_62], %98 {strides = array<i32>} : memref<18x18x32xbf16, #tpu.memory_space<vmem>>, vector<16x16x32xbf16>,
    %cst_63 = arith.constant 0.000000e+00 : f32
    %100 = vector.broadcast %cst_63 : f32 to vector<256x32xf32>
    %c0_64 = arith.constant 0 : index
    %c0_65 = arith.constant 0 : index
    %c0_66 = arith.constant 0 : index
    %101 = vector.load %arg15[%c0_64, %c0_65, %c0_66] : memref<18x18x32xbf16, #tpu.memory_space<vmem>>, vector<16x16x32xbf16>
    %102 = vector.shape_cast %101 : vector<16x16x32xbf16> to vector<256x32xbf16>
    %c0_67 = arith.constant 0 : index
    %c0_68 = arith.constant 0 : index
    %c0_69 = arith.constant 0 : index
    %103 = vector.load %arg8[%c0_67, %c0_68, %c0_69] : memref<9x32x32xbf16, #tpu.memory_space<vmem>>, vector<1x32x32xbf16>
    %104 = vector.shape_cast %103 : vector<1x32x32xbf16> to vector<32x32xbf16>
    %cst_70 = arith.constant dense<0.000000e+00> : vector<256x32xf32>
    %105 = tpu.matmul %102, %104, %cst_70 {dimension_numbers = #tpu.dot_dimension_numbers<[1], [0], [0], [1], [0, 0, 1, 1], [], []>} : vector<256x32xbf16>, vector<32x32xbf16>, vector<256x32xf32> -> vector<256x32xf32>
    %106 = arith.addf %100, %105 : vector<256x32xf32>
    %c0_71 = arith.constant 0 : index
    %c1_72 = arith.constant 1 : index
    %c0_73 = arith.constant 0 : index
    %107 = vector.load %arg15[%c0_71, %c1_72, %c0_73] : memref<18x18x32xbf16, #tpu.memory_space<vmem>>, vector<16x16x32xbf16>
    %108 = vector.shape_cast %107 : vector<16x16x32xbf16> to vector<256x32xbf16>
    %c1_74 = arith.constant 1 : index
    %c0_75 = arith.constant 0 : index
    %c0_76 = arith.constant 0 : index
    %109 = vector.load %arg8[%c1_74, %c0_75, %c0_76] : memref<9x32x32xbf16, #tpu.memory_space<vmem>>, vector<1x32x32xbf16>
    %110 = vector.shape_cast %109 : vector<1x32x32xbf16> to vector<32x32xbf16>
    %cst_77 = arith.constant dense<0.000000e+00> : vector<256x32xf32>
    %111 = tpu.matmul %108, %110, %cst_77 {dimension_numbers = #tpu.dot_dimension_numbers<[1], [0], [0], [1], [0, 0, 1, 1], [], []>} : vector<256x32xbf16>, vector<32x32xbf16>, vector<256x32xf32> -> vector<256x32xf32>
    %112 = arith.addf %106, %111 : vector<256x32xf32>
    %c0_78 = arith.constant 0 : index
    %c2_79 = arith.constant 2 : index
    %c0_80 = arith.constant 0 : index
    %113 = vector.load %arg15[%c0_78, %c2_79, %c0_80] : memref<18x18x32xbf16, #tpu.memory_space<vmem>>, vector<16x16x32xbf16>
    %114 = vector.shape_cast %113 : vector<16x16x32xbf16> to vector<256x32xbf16>
    %c2_81 = arith.constant 2 : index
    %c0_82 = arith.constant 0 : index
    %c0_83 = arith.constant 0 : index
    %115 = vector.load %arg8[%c2_81, %c0_82, %c0_83] : memref<9x32x32xbf16, #tpu.memory_space<vmem>>, vector<1x32x32xbf16>
    %116 = vector.shape_cast %115 : vector<1x32x32xbf16> to vector<32x32xbf16>
    %cst_84 = arith.constant dense<0.000000e+00> : vector<256x32xf32>
    %117 = tpu.matmul %114, %116, %cst_84 {dimension_numbers = #tpu.dot_dimension_numbers<[1], [0], [0], [1], [0, 0, 1, 1], [], []>} : vector<256x32xbf16>, vector<32x32xbf16>, vector<256x32xf32> -> vector<256x32xf32>
    %118 = arith.addf %112, %117 : vector<256x32xf32>
    %c1_85 = arith.constant 1 : index
    %c0_86 = arith.constant 0 : index
    %c0_87 = arith.constant 0 : index
    %119 = vector.load %arg15[%c1_85, %c0_86, %c0_87] : memref<18x18x32xbf16, #tpu.memory_space<vmem>>, vector<16x16x32xbf16>
    %120 = vector.shape_cast %119 : vector<16x16x32xbf16> to vector<256x32xbf16>
    %c3_88 = arith.constant 3 : index
    %c0_89 = arith.constant 0 : index
    %c0_90 = arith.constant 0 : index
    %121 = vector.load %arg8[%c3_88, %c0_89, %c0_90] : memref<9x32x32xbf16, #tpu.memory_space<vmem>>, vector<1x32x32xbf16>
    %122 = vector.shape_cast %121 : vector<1x32x32xbf16> to vector<32x32xbf16>
    %cst_91 = arith.constant dense<0.000000e+00> : vector<256x32xf32>
    %123 = tpu.matmul %120, %122, %cst_91 {dimension_numbers = #tpu.dot_dimension_numbers<[1], [0], [0], [1], [0, 0, 1, 1], [], []>} : vector<256x32xbf16>, vector<32x32xbf16>, vector<256x32xf32> -> vector<256x32xf32>
    %124 = arith.addf %118, %123 : vector<256x32xf32>
    %c1_92 = arith.constant 1 : index
    %c1_93 = arith.constant 1 : index
    %c0_94 = arith.constant 0 : index
    %125 = vector.load %arg15[%c1_92, %c1_93, %c0_94] : memref<18x18x32xbf16, #tpu.memory_space<vmem>>, vector<16x16x32xbf16>
    %126 = vector.shape_cast %125 : vector<16x16x32xbf16> to vector<256x32xbf16>
    %c4_95 = arith.constant 4 : index
    %c0_96 = arith.constant 0 : index
    %c0_97 = arith.constant 0 : index
    %127 = vector.load %arg8[%c4_95, %c0_96, %c0_97] : memref<9x32x32xbf16, #tpu.memory_space<vmem>>, vector<1x32x32xbf16>
    %128 = vector.shape_cast %127 : vector<1x32x32xbf16> to vector<32x32xbf16>
    %cst_98 = arith.constant dense<0.000000e+00> : vector<256x32xf32>
    %129 = tpu.matmul %126, %128, %cst_98 {dimension_numbers = #tpu.dot_dimension_numbers<[1], [0], [0], [1], [0, 0, 1, 1], [], []>} : vector<256x32xbf16>, vector<32x32xbf16>, vector<256x32xf32> -> vector<256x32xf32>
    %130 = arith.addf %124, %129 : vector<256x32xf32>
    %c1_99 = arith.constant 1 : index
    %c2_100 = arith.constant 2 : index
    %c0_101 = arith.constant 0 : index
    %131 = vector.load %arg15[%c1_99, %c2_100, %c0_101] : memref<18x18x32xbf16, #tpu.memory_space<vmem>>, vector<16x16x32xbf16>
    %132 = vector.shape_cast %131 : vector<16x16x32xbf16> to vector<256x32xbf16>
    %c5_102 = arith.constant 5 : index
    %c0_103 = arith.constant 0 : index
    %c0_104 = arith.constant 0 : index
    %133 = vector.load %arg8[%c5_102, %c0_103, %c0_104] : memref<9x32x32xbf16, #tpu.memory_space<vmem>>, vector<1x32x32xbf16>
    %134 = vector.shape_cast %133 : vector<1x32x32xbf16> to vector<32x32xbf16>
    %cst_105 = arith.constant dense<0.000000e+00> : vector<256x32xf32>
    %135 = tpu.matmul %132, %134, %cst_105 {dimension_numbers = #tpu.dot_dimension_numbers<[1], [0], [0], [1], [0, 0, 1, 1], [], []>} : vector<256x32xbf16>, vector<32x32xbf16>, vector<256x32xf32> -> vector<256x32xf32>
    %136 = arith.addf %130, %135 : vector<256x32xf32>
    %c2_106 = arith.constant 2 : index
    %c0_107 = arith.constant 0 : index
    %c0_108 = arith.constant 0 : index
    %137 = vector.load %arg15[%c2_106, %c0_107, %c0_108] : memref<18x18x32xbf16, #tpu.memory_space<vmem>>, vector<16x16x32xbf16>
    %138 = vector.shape_cast %137 : vector<16x16x32xbf16> to vector<256x32xbf16>
    %c6_109 = arith.constant 6 : index
    %c0_110 = arith.constant 0 : index
    %c0_111 = arith.constant 0 : index
    %139 = vector.load %arg8[%c6_109, %c0_110, %c0_111] : memref<9x32x32xbf16, #tpu.memory_space<vmem>>, vector<1x32x32xbf16>
    %140 = vector.shape_cast %139 : vector<1x32x32xbf16> to vector<32x32xbf16>
    %cst_112 = arith.constant dense<0.000000e+00> : vector<256x32xf32>
    %141 = tpu.matmul %138, %140, %cst_112 {dimension_numbers = #tpu.dot_dimension_numbers<[1], [0], [0], [1], [0, 0, 1, 1], [], []>} : vector<256x32xbf16>, vector<32x32xbf16>, vector<256x32xf32> -> vector<256x32xf32>
    %142 = arith.addf %136, %141 : vector<256x32xf32>
    %c2_113 = arith.constant 2 : index
    %c1_114 = arith.constant 1 : index
    %c0_115 = arith.constant 0 : index
    %143 = vector.load %arg15[%c2_113, %c1_114, %c0_115] : memref<18x18x32xbf16, #tpu.memory_space<vmem>>, vector<16x16x32xbf16>
    %144 = vector.shape_cast %143 : vector<16x16x32xbf16> to vector<256x32xbf16>
    %c7_116 = arith.constant 7 : index
    %c0_117 = arith.constant 0 : index
    %c0_118 = arith.constant 0 : index
    %145 = vector.load %arg8[%c7_116, %c0_117, %c0_118] : memref<9x32x32xbf16, #tpu.memory_space<vmem>>, vector<1x32x32xbf16>
    %146 = vector.shape_cast %145 : vector<1x32x32xbf16> to vector<32x32xbf16>
    %cst_119 = arith.constant dense<0.000000e+00> : vector<256x32xf32>
    %147 = tpu.matmul %144, %146, %cst_119 {dimension_numbers = #tpu.dot_dimension_numbers<[1], [0], [0], [1], [0, 0, 1, 1], [], []>} : vector<256x32xbf16>, vector<32x32xbf16>, vector<256x32xf32> -> vector<256x32xf32>
    %148 = arith.addf %142, %147 : vector<256x32xf32>
    %c2_120 = arith.constant 2 : index
    %c2_121 = arith.constant 2 : index
    %c0_122 = arith.constant 0 : index
    %149 = vector.load %arg15[%c2_120, %c2_121, %c0_122] : memref<18x18x32xbf16, #tpu.memory_space<vmem>>, vector<16x16x32xbf16>
    %150 = vector.shape_cast %149 : vector<16x16x32xbf16> to vector<256x32xbf16>
    %c8_123 = arith.constant 8 : index
    %c0_124 = arith.constant 0 : index
    %c0_125 = arith.constant 0 : index
    %151 = vector.load %arg8[%c8_123, %c0_124, %c0_125] : memref<9x32x32xbf16, #tpu.memory_space<vmem>>, vector<1x32x32xbf16>
    %152 = vector.shape_cast %151 : vector<1x32x32xbf16> to vector<32x32xbf16>
    %cst_126 = arith.constant dense<0.000000e+00> : vector<256x32xf32>
    %153 = tpu.matmul %150, %152, %cst_126 {dimension_numbers = #tpu.dot_dimension_numbers<[1], [0], [0], [1], [0, 0, 1, 1], [], []>} : vector<256x32xbf16>, vector<32x32xbf16>, vector<256x32xf32> -> vector<256x32xf32>
    %154 = arith.addf %148, %153 : vector<256x32xf32>
    %c0_127 = arith.constant 0 : index
    %c0_128 = arith.constant 0 : index
    %155 = vector.load %arg9[%c0_127, %c0_128] : memref<1x32xf32, #tpu.memory_space<vmem>>, vector<1x32xf32>
    %156 = vector.broadcast %155 : vector<1x32xf32> to vector<256x32xf32>
    %157 = arith.addf %154, %156 : vector<256x32xf32>
    %cst_129 = arith.constant dense<0.000000e+00> : vector<32xf32>
    %158 = vector.multi_reduction <add>, %157, %cst_129 [0] : vector<256x32xf32> to vector<32xf32>
    %159 = vector.shape_cast %158 : vector<32xf32> to vector<1x32xf32>
    %160 = arith.mulf %157, %157 : vector<256x32xf32>
    %cst_130 = arith.constant dense<0.000000e+00> : vector<32xf32>
    %161 = vector.multi_reduction <add>, %160, %cst_130 [0] : vector<256x32xf32> to vector<32xf32>
    %162 = vector.shape_cast %161 : vector<32xf32> to vector<1x32xf32>
    %c0_131 = arith.constant 0 : index
    %c0_132 = arith.constant 0 : index
    %163 = vector.load %arg12[%c0_131, %c0_132] : memref<32x8xf32, #tpu.memory_space<vmem>>, vector<32x8xf32>
    %cst_133 = arith.constant dense<0.000000e+00> : vector<1x8xf32>
    %164 = tpu.matmul %159, %163, %cst_133 {dimension_numbers = #tpu.dot_dimension_numbers<[1], [0], [0], [1], [0, 0, 1, 1], [], []>} : vector<1x32xf32>, vector<32x8xf32>, vector<1x8xf32> -> vector<1x8xf32>
    %c0_134 = arith.constant 0 : index
    %c0_135 = arith.constant 0 : index
    %165 = vector.load %arg12[%c0_134, %c0_135] : memref<32x8xf32, #tpu.memory_space<vmem>>, vector<32x8xf32>
    %cst_136 = arith.constant dense<0.000000e+00> : vector<1x8xf32>
    %166 = tpu.matmul %162, %165, %cst_136 {dimension_numbers = #tpu.dot_dimension_numbers<[1], [0], [0], [1], [0, 0, 1, 1], [], []>} : vector<1x32xf32>, vector<32x8xf32>, vector<1x8xf32> -> vector<1x8xf32>
    %cst_137 = arith.constant 1.024000e+03 : f32
    %167 = vector.broadcast %cst_137 : f32 to vector<1x8xf32>
    %168 = arith.divf %164, %167 : vector<1x8xf32>
    %cst_138 = arith.constant 1.024000e+03 : f32
    %169 = vector.broadcast %cst_138 : f32 to vector<1x8xf32>
    %170 = arith.divf %166, %169 : vector<1x8xf32>
    %171 = arith.mulf %168, %168 : vector<1x8xf32>
    %172 = arith.subf %170, %171 : vector<1x8xf32>
    %cst_139 = arith.constant 0.000000e+00 : f32
    %173 = vector.broadcast %cst_139 : f32 to vector<1x8xf32>
    %174 = arith.maximumf %172, %173 : vector<1x8xf32>
    %cst_140 = arith.constant 9.99999974E-6 : f32
    %175 = vector.broadcast %cst_140 : f32 to vector<1x8xf32>
    %176 = arith.addf %174, %175 : vector<1x8xf32>
    %177 = math.rsqrt %176 : vector<1x8xf32>
    %c0_141 = arith.constant 0 : index
    %c0_142 = arith.constant 0 : index
    %178 = vector.load %arg13[%c0_141, %c0_142] : memref<8x32xf32, #tpu.memory_space<vmem>>, vector<8x32xf32>
    %cst_143 = arith.constant dense<0.000000e+00> : vector<1x32xf32>
    %179 = tpu.matmul %168, %178, %cst_143 {dimension_numbers = #tpu.dot_dimension_numbers<[1], [0], [0], [1], [0, 0, 1, 1], [], []>} : vector<1x8xf32>, vector<8x32xf32>, vector<1x32xf32> -> vector<1x32xf32>
    %c0_144 = arith.constant 0 : index
    %c0_145 = arith.constant 0 : index
    %180 = vector.load %arg13[%c0_144, %c0_145] : memref<8x32xf32, #tpu.memory_space<vmem>>, vector<8x32xf32>
    %cst_146 = arith.constant dense<0.000000e+00> : vector<1x32xf32>
    %181 = tpu.matmul %177, %180, %cst_146 {dimension_numbers = #tpu.dot_dimension_numbers<[1], [0], [0], [1], [0, 0, 1, 1], [], []>} : vector<1x8xf32>, vector<8x32xf32>, vector<1x32xf32> -> vector<1x32xf32>
    %182 = vector.broadcast %179 : vector<1x32xf32> to vector<256x32xf32>
    %183 = arith.subf %157, %182 : vector<256x32xf32>
    %c0_147 = arith.constant 0 : index
    %c0_148 = arith.constant 0 : index
    %184 = vector.load %arg10[%c0_147, %c0_148] : memref<1x32xf32, #tpu.memory_space<vmem>>, vector<1x32xf32>
    %185 = arith.mulf %181, %184 : vector<1x32xf32>
    %186 = vector.broadcast %185 : vector<1x32xf32> to vector<256x32xf32>
    %187 = arith.mulf %183, %186 : vector<256x32xf32>
    %c0_149 = arith.constant 0 : index
    %c0_150 = arith.constant 0 : index
    %188 = vector.load %arg11[%c0_149, %c0_150] : memref<1x32xf32, #tpu.memory_space<vmem>>, vector<1x32xf32>
    %189 = vector.broadcast %188 : vector<1x32xf32> to vector<256x32xf32>
    %190 = arith.addf %187, %189 : vector<256x32xf32>
    %cst_151 = arith.constant 0.000000e+00 : f32
    %191 = vector.broadcast %cst_151 : f32 to vector<256x32xf32>
    %192 = arith.maximumf %190, %191 : vector<256x32xf32>
    %193 = tpu.transpose %192, [1, 0] : vector<256x32xf32> -> vector<32x256xf32>
    %c0_152 = arith.constant 0 : index
    %c0_153 = arith.constant 0 : index
    %c0_154 = arith.constant 0 : index
    %194 = vector.load %arg14[%c0_152, %c0_153, %c0_154] : memref<1x32x256xf32, #tpu.memory_space<vmem>>, vector<1x32x256xf32>
    %195 = vector.shape_cast %194 : vector<1x32x256xf32> to vector<32x256xf32>
    %196 = vector.shape_cast %193 : vector<32x256xf32> to vector<1x32x256xf32>
    tpu.vector_store %arg14[%c0_152, %c0_153, %c0_154], %196 {strides = array<i32>} : memref<1x32x256xf32, #tpu.memory_space<vmem>>, vector<1x32x256xf32>,
    return
  }
  func.func @transform_0(%arg0: i32) -> (i32, i32, i32, i32) {
    %c0_i32 = arith.constant 0 : i32
    %c0_i32_0 = arith.constant 0 : i32
    %c0_i32_1 = arith.constant 0 : i32
    %c0_i32_2 = arith.constant 0 : i32
    return %arg0, %c0_i32, %c0_i32_0, %c0_i32_1 : i32, i32, i32, i32
  }
  func.func @transform_1(%arg0: i32) -> (i32, i32, i32) {
    %c0_i32 = arith.constant 0 : i32
    %c0_i32_0 = arith.constant 0 : i32
    %c0_i32_1 = arith.constant 0 : i32
    %c0_i32_2 = arith.constant 0 : i32
    return %c0_i32, %c0_i32_0, %c0_i32_1 : i32, i32, i32
  }
  func.func @transform_2(%arg0: i32) -> (i32, i32) {
    %c0_i32 = arith.constant 0 : i32
    %c0_i32_0 = arith.constant 0 : i32
    %c0_i32_1 = arith.constant 0 : i32
    return %c0_i32, %c0_i32_0 : i32, i32
  }
  func.func @transform_3(%arg0: i32) -> (i32, i32) {
    %c0_i32 = arith.constant 0 : i32
    %c0_i32_0 = arith.constant 0 : i32
    %c0_i32_1 = arith.constant 0 : i32
    return %c0_i32, %c0_i32_0 : i32, i32
  }
  func.func @transform_4(%arg0: i32) -> (i32, i32) {
    %c0_i32 = arith.constant 0 : i32
    %c0_i32_0 = arith.constant 0 : i32
    %c0_i32_1 = arith.constant 0 : i32
    return %c0_i32, %c0_i32_0 : i32, i32
  }
  func.func @transform_5(%arg0: i32) -> (i32, i32) {
    %c0_i32 = arith.constant 0 : i32
    %c0_i32_0 = arith.constant 0 : i32
    %c0_i32_1 = arith.constant 0 : i32
    return %c0_i32, %c0_i32_0 : i32, i32
  }
  func.func @transform_6(%arg0: i32) -> (i32, i32) {
    %c0_i32 = arith.constant 0 : i32
    %c0_i32_0 = arith.constant 0 : i32
    %c0_i32_1 = arith.constant 0 : i32
    return %c0_i32, %c0_i32_0 : i32, i32
  }
  func.func @transform_7(%arg0: i32) -> (i32, i32, i32) {
    %c0_i32 = arith.constant 0 : i32
    %c0_i32_0 = arith.constant 0 : i32
    %c0_i32_1 = arith.constant 0 : i32
    %c0_i32_2 = arith.constant 0 : i32
    return %c0_i32, %c0_i32_0, %c0_i32_1 : i32, i32, i32
  }
  func.func @transform_8(%arg0: i32) -> (i32, i32) {
    %c0_i32 = arith.constant 0 : i32
    %c0_i32_0 = arith.constant 0 : i32
    %c0_i32_1 = arith.constant 0 : i32
    return %c0_i32, %c0_i32_0 : i32, i32
  }
  func.func @transform_9(%arg0: i32) -> (i32, i32) {
    %c0_i32 = arith.constant 0 : i32
    %c0_i32_0 = arith.constant 0 : i32
    %c0_i32_1 = arith.constant 0 : i32
    return %c0_i32, %c0_i32_0 : i32, i32
  }
  func.func @transform_10(%arg0: i32) -> (i32, i32) {
    %c0_i32 = arith.constant 0 : i32
    %c0_i32_0 = arith.constant 0 : i32
    %c0_i32_1 = arith.constant 0 : i32
    return %c0_i32, %c0_i32_0 : i32, i32
  }
  func.func @transform_11(%arg0: i32) -> (i32, i32) {
    %c0_i32 = arith.constant 0 : i32
    %c0_i32_0 = arith.constant 0 : i32
    %c0_i32_1 = arith.constant 0 : i32
    return %c0_i32, %c0_i32_0 : i32, i32
  }
  func.func @transform_12(%arg0: i32) -> (i32, i32) {
    %c0_i32 = arith.constant 0 : i32
    %c0_i32_0 = arith.constant 0 : i32
    %c0_i32_1 = arith.constant 0 : i32
    return %c0_i32, %c0_i32_0 : i32, i32
  }
  func.func @transform_13(%arg0: i32) -> (i32, i32, i32) {
    %c0_i32 = arith.constant 0 : i32
    %c0_i32_0 = arith.constant 0 : i32
    %c0_i32_1 = arith.constant 0 : i32
    return %arg0, %c0_i32, %c0_i32_0 : i32, i32, i32
  }
}

</mosaic_0001>

<llo_original>
// kernel: up_forward.2
$region0: #{up_forward.2}
  #allocation0 [shape = 'u32[]', space=smem, size = 0x4, offset = 0x4, fixed_abs, tag = 'smem constant byte address 0x4 - core index']
  #allocation1 [shape = 'u32[144,128]{1,0:T(1,128)}', space=vmem, size = 0x12000, scoped, tag = 'internal scratch']
  %s0 = inlined_call_operand.vmem [shape: f32[16,8], index: 0, kind: input, shape index: {}]
  %s1 = inlined_call_operand.vmem [shape: f32[256,512], index: 1, kind: input, shape index: {}]
  %s2 = inlined_call_operand.vmem [shape: f32[2,8,256], index: 2, kind: input, shape index: {}]
  %s3 = inlined_call_operand.vmem [shape: f32[2,16,512], index: 3, kind: output, shape index: {}]
  %s4 = sld [smem:[#allocation0]]
  $region45: #{up_forward.2} parent=0
    _
  %s6 = ssub.s32 1, %s4
  %s7 = scalar_select 0, %s6, %s4
  loop: start=0, step=1, limit=4
  $region2: #{up_forward.2} parent=0 // loop_pre_header
    _
  $region3: #{up_forward.2} parent=0 // loop_header
    %s9 = sphi 0, %s13
    %p10 = scmp.ge.s32.totalorder %s9, 4
    %s17 = sphi 0, %s17
    %s19 = sphi 0, %s17
    %s20 = sphi 0, %s19
    %s34 = sphi 0, %s20
    %s38 = sphi 0, %s38
    %s40 = sphi 0, %s38
    %s41 = sphi 0, %s40
    %s55 = sphi 0, %s41
    %s61 = sphi 0, %s63
    %s64 = sphi 0, %s61
    %s65 = sphi 0, %s64
    %s81 = sphi 0, %s65
    %s87 = sphi 0, %s89
    %s90 = sphi 0, %s87
    %s91 = sphi 0, %s90
    %s107 = sphi 0, %s91
  $region4: #{up_forward.2} parent=0 // loop_header_branch
    %12 = sbr.rel (%p10) target = $region8
  $region5: #{up_forward.2} parent=0 // loop_body
    %s14 = ssub.s32 %s9, 1
    %s15 = ssub.s32 %s9, 2
    %s16 = sadd.s32 %s9, 1
    %s18 = sadd.s32 %s17, 1
    %p21 = scmp.eq.s32.totalorder %s9, 1
    %p22 = scmp.ne.s32.totalorder %s17, %s19
    %p23 = scmp.eq.s32.totalorder %s9, 0
    %p24 = por %p22, %p23
    %p25 = scmp.ne.s32.totalorder %s17, %s19
    %p26 = scmp.eq.s32.totalorder %s14, 1
    %p27 = por %p25, %p26
    %p28 = scmp.ne.s32.totalorder %s19, %s20
    %p29 = scmp.eq.s32.totalorder %s14, 0
    %p30 = por %p28, %p29
    %p31 = scmp.ne.s32.totalorder %s19, %s20
    %p32 = scmp.eq.s32.totalorder %s15, 1
    %p33 = por %p31, %p32
    %p35 = scmp.ne.s32.totalorder %s20, %s34
    %p36 = scmp.eq.s32.totalorder %s15, 0
    %p37 = por %p35, %p36
    %s39 = sadd.s32 %s38, 1
    %p42 = scmp.eq.s32.totalorder %s9, 1
    %p43 = scmp.ne.s32.totalorder %s38, %s40
    %p44 = scmp.eq.s32.totalorder %s9, 0
    %p45 = por %p43, %p44
    %p46 = scmp.ne.s32.totalorder %s38, %s40
    %p47 = scmp.eq.s32.totalorder %s14, 1
    %p48 = por %p46, %p47
    %p49 = scmp.ne.s32.totalorder %s40, %s41
    %p50 = scmp.eq.s32.totalorder %s14, 0
    %p51 = por %p49, %p50
    %p52 = scmp.ne.s32.totalorder %s40, %s41
    %p53 = scmp.eq.s32.totalorder %s15, 1
    %p54 = por %p52, %p53
    %p56 = scmp.ne.s32.totalorder %s41, %s55
    %p57 = scmp.eq.s32.totalorder %s15, 0
    %p58 = por %p56, %p57
    %s59 = ssub.s32 %s9, %s16
    %p60 = scmp.eq.s32.totalorder %s59, 0
    %s62 = sadd.s32 %s61, 1
    %s63 = scalar_select %p60, %s61, %s62
    %p66 = pneg %p60
    %p67 = scmp.eq.s32.totalorder %s9, 1
    %p68 = por %p66, %p67
    %p69 = scmp.ne.s32.totalorder %s61, %s64
    %p70 = scmp.eq.s32.totalorder %s9, 0
    %p71 = por %p69, %p70
    %p72 = scmp.ne.s32.totalorder %s61, %s64
    %p73 = scmp.eq.s32.totalorder %s14, 1
    %p74 = por %p72, %p73
    %p75 = scmp.ne.s32.totalorder %s64, %s65
    %p76 = scmp.eq.s32.totalorder %s14, 0
    %p77 = por %p75, %p76
    %p78 = scmp.ne.s32.totalorder %s64, %s65
    %p79 = scmp.eq.s32.totalorder %s15, 1
    %p80 = por %p78, %p79
    %p82 = scmp.ne.s32.totalorder %s65, %s81
    %p83 = scmp.eq.s32.totalorder %s15, 0
    %p84 = por %p82, %p83
    %s85 = ssub.s32 %s9, %s16
    %p86 = scmp.eq.s32.totalorder %s85, 0
    %s88 = sadd.s32 %s87, 1
    %s89 = scalar_select %p86, %s87, %s88
    %p92 = pneg %p86
    %p93 = scmp.eq.s32.totalorder %s9, 1
    %p94 = por %p92, %p93
    %p95 = scmp.ne.s32.totalorder %s87, %s90
    %p96 = scmp.eq.s32.totalorder %s9, 0
    %p97 = por %p95, %p96
    %p98 = scmp.ne.s32.totalorder %s87, %s90
    %p99 = scmp.eq.s32.totalorder %s14, 1
    %p100 = por %p98, %p99
    %p101 = scmp.ne.s32.totalorder %s90, %s91
    %p102 = scmp.eq.s32.totalorder %s14, 0
    %p103 = por %p101, %p102
    %p104 = scmp.ne.s32.totalorder %s90, %s91
    %p105 = scmp.eq.s32.totalorder %s15, 1
    %p106 = por %p104, %p105
    %p108 = scmp.ne.s32.totalorder %s91, %s107
    %p109 = scmp.eq.s32.totalorder %s15, 0
    %p110 = por %p108, %p109
    %p111 = scmp.le.s32.totalorder 1, %s9
    %p112 = scmp.lt.s32.totalorder %s9, 3
    %p113 = pnand %p111, %p112
    %p114 = pneg %p113
    // Predicated region
    $region9: #{up_forward.2} parent=5 // pred_check
      _
    $region10: #{up_forward.2} parent=5 // pred_check_branch
      %116 = sbr.rel (%p113) target = $region12
    $region11: #{up_forward.2} parent=5 // pred_region
      %s117 = ssub.s32 %s9, 1
      // Predicated region
      $region13: #{up_forward.2} parent=11 // pred_check
        %p118 = pneg %p30
      $region14: #{up_forward.2} parent=11 // pred_check_branch
        %120 = sbr.rel (%p118) target = $region16
      $region15: #{up_forward.2} parent=11 // pred_region
        _
      $region16: #{up_forward.2} parent=11 // pred_fallthru
        _
      // Predicated region
      $region17: #{up_forward.2} parent=11 // pred_check
        %p121 = pneg %p51
      $region18: #{up_forward.2} parent=11 // pred_check_branch
        %123 = sbr.rel (%p121) target = $region20
      $region19: #{up_forward.2} parent=11 // pred_region
        _
      $region20: #{up_forward.2} parent=11 // pred_fallthru
        _
    $region12: #{up_forward.2} parent=5 // pred_fallthru
      _
    %p124 = scmp.lt.s32.totalorder %s9, 2
    // Predicated region
    $region21: #{up_forward.2} parent=5 // pred_check
      %p125 = pneg %p124
    $region22: #{up_forward.2} parent=5 // pred_check_branch
      %127 = sbr.rel (%p125) target = $region24
    $region23: #{up_forward.2} parent=5 // pred_region
      // Predicated region
      $region25: #{up_forward.2} parent=23 // pred_check
        %p128 = pneg %p71
      $region26: #{up_forward.2} parent=23 // pred_check_branch
        %130 = sbr.rel (%p128) target = $region28
      $region27: #{up_forward.2} parent=23 // pred_region
        %p131 = scmp.lt.s32.totalorder %s9, 1
        %s132 = scalar_select %p131, %s9, 1
        %s133 = smul.addr %s132, 2
        %s134 = smul.addr %s133, 8
        %s135 = scalar_lea.vmem %s2, %s134
      $region28: #{up_forward.2} parent=23 // pred_fallthru
        _
    $region24: #{up_forward.2} parent=5 // pred_fallthru
      _
    %p136 = scmp.le.s32.totalorder 1, %s9
    %p137 = scmp.lt.s32.totalorder %s9, 3
    %p138 = pnand %p136, %p137
    %p139 = pneg %p138
    // Predicated region
    $region29: #{up_forward.2} parent=5 // pred_check
      _
    $region30: #{up_forward.2} parent=5 // pred_check_branch
      %141 = sbr.rel (%p138) target = $region32
    $region31: #{up_forward.2} parent=5 // pred_region
      %s142 = ssub.s32 %s9, 1
      %p143 = pneg %p30
      %p144 = pneg %p27
      %p145 = pneg %p51
      %p146 = pneg %p48
      %p147 = scmp.lt.s32.totalorder %s14, 1
      %s148 = scalar_select %p147, %s14, 1
      %s149 = smul.addr %s148, 2
      %s150 = smul.addr %s149, 8
      %s151 = scalar_lea.vmem %s2, %s150
      %p152 = pneg %p77
      %p153 = pneg %p74
      %p154 = pneg %p103
      %p155 = pneg %p100
      %p156 = scmp.lt.s32.totalorder %s14, 1
      %s157 = scalar_select %p156, %s14, 1
      %s158 = smul.addr %s157, 8
      %s159 = smul.addr %s158, 8
      %s160 = scalar_lea.vmem %s3, %s159
      %p161 = scmp.lt.s32.totalorder %s14, 1
      %s162 = scalar_select %p161, %s14, 1
      %s163 = smul.addr %s162, 2
      %s164 = smul.addr %s163, 8
      %s165 = scalar_lea.vmem %s2, %s164
      %p166 = scmp.lt.s32.totalorder %s14, 1
      %s167 = scalar_select %p166, %s14, 1
      %s168 = smul.addr %s167, 8
      %s169 = smul.addr %s168, 8
      %s170 = scalar_lea.vmem %s3, %s169
      %v171 = vld [vmem:[%s0] sm:$0xff]
      %v172 = vld [vmem:[%s0 + $0x8] sm:$0xff]
      %v173 = vld [vmem:[%s165] sm:$0xff]
      %v174 = vld [vmem:[%s165 + $0x8] sm:$0xff]
      %vm175 = vcmask 64512
      %v177 = vsel %vm175, %v171, 0
      %v180 = vsel %vm175, %v172, 0
      %182 = vmatprep.subr.mxu0 0.0
      %183 = vmatpush1.msra.mxu0 0.0
      %184 = vmatprep.subr.mxu0 0.0
      %185 = vmatpush1.msra.mxu0 0.0
      %186 = vmatprep.subr.mxu0 0.0
      %187 = vmatpush1.msra.mxu0 0.0
      %188 = vmatprep.subr.mxu0 0.0
      %189 = vmatpush1.msra.mxu0 0.0
      %190 = vmatprep.subr.mxu0 0.0
      %191 = vmatpush1.msra.mxu0 0.0
      %192 = vmatprep.subr.mxu0 0.0
      %193 = vmatpush1.msra.mxu0 0.0
      %194 = vmatprep.subr.mxu0 0.0
      %195 = vmatpush1.msra.mxu0 0.0
      %196 = vmatprep.subr.mxu0 0.0
      %197 = vmatpush1.msra.mxu0 0.0
      %198 = vmatprep.subr.mxu0 0.0
      %199 = vmatpush1.msra.mxu0 0.0
      %200 = vmatprep.subr.mxu0 0.0
      %201 = vmatpush1.msra.mxu0 0.0
      %202 = vmatprep.subr.mxu0 0.0
      %203 = vmatpush1.msra.mxu0 0.0
      %204 = vmatprep.subr.mxu0 0.0
      %205 = vmatpush1.msra.mxu0 0.0
      %206 = vmatprep.subr.mxu0 0.0
      %207 = vmatpush1.msra.mxu0 0.0
      %208 = vmatprep.subr.mxu0 0.0
      %209 = vmatpush1.msra.mxu0 0.0
      %210 = vmatprep.subr.mxu0 0.0
      %211 = vmatpush1.msra.mxu0 0.0
      %212 = vmatprep.subr.mxu0 %v174
      %213 = vmatpush1.msra.mxu0 %v173
      %214 = vmatprep.subr.mxu0 0.0
      %215 = vmatpush2.msra.mxu0 0.0
      %216 = vmatprep.subr.mxu0 0.0
      %217 = vmatpush2.msra.mxu0 0.0
      %218 = vmatprep.subr.mxu0 0.0
      %219 = vmatpush2.msra.mxu0 0.0
      %220 = vmatprep.subr.mxu0 0.0
      %221 = vmatpush2.msra.mxu0 0.0
      %222 = vmatprep.subr.mxu0 0.0
      %223 = vmatpush2.msra.mxu0 0.0
      %224 = vmatprep.subr.mxu0 0.0
      %225 = vmatpush2.msra.mxu0 0.0
      %226 = vmatprep.subr.mxu0 0.0
      %227 = vmatpush2.msra.mxu0 0.0
      %228 = vmatprep.subr.mxu0 0.0
      %229 = vmatpush2.msra.mxu0 0.0
      %230 = vmatprep.subr.mxu0 0.0
      %231 = vmatpush2.msra.mxu0 0.0
      %232 = vmatprep.subr.mxu0 0.0
      %233 = vmatpush2.msra.mxu0 0.0
      %234 = vmatprep.subr.mxu0 0.0
      %235 = vmatpush2.msra.mxu0 0.0
      %236 = vmatprep.subr.mxu0 0.0
      %237 = vmatpush2.msra.mxu0 0.0
      %238 = vmatprep.subr.mxu0 0.0
      %239 = vmatpush2.msra.mxu0 0.0
      %240 = vmatprep.subr.mxu0 0.0
      %241 = vmatpush2.msra.mxu0 0.0
      %242 = vmatprep.subr.mxu0 0.0
      %243 = vmatpush2.msra.mxu0 0.0
      %244 = vmatprep.subr.mxu0 0.0
      %245 = vmatpush2.msra.mxu0 0.0
      %246 = vmatprep.mubr.f32.mxu0 0.0
      %247 = vmatmul.mubr.f32.gmra.mxu0 %v177
      %v248 = vpop.f32.mrf.mxu0
      %v249 = vadd.f32 0.0, %v248
      %v250 = vpop.f32.mrf.mxu0
      %v251 = vadd.f32 0.0, %v250
      %252 = vmatprep.mubr.f32.mxu0 0.0
      %253 = vmatmul.mubr.f32.gmra.mxu0 %v180
      %v254 = vpop.f32.mrf.mxu0
      %v255 = vadd.f32 0.0, %v254
      %v256 = vpop.f32.mrf.mxu0
      %v257 = vadd.f32 0.0, %v256
      %258 = vdwg.mxu0
      %v259 = vld [vmem:[%s1] sm:$0xff]
      %v260 = vld [vmem:[%s1 + $0x8] sm:$0xff]
      %v261 = vld [vmem:[%s1 + $0x10] sm:$0xff]
      %v262 = vld [vmem:[%s1 + $0x18] sm:$0xff]
      %v263 = vld [vmem:[%s1 + $0x20] sm:$0xff]
      %v264 = vld [vmem:[%s1 + $0x28] sm:$0xff]
      %v265 = vld [vmem:[%s1 + $0x30] sm:$0xff]
      %v266 = vld [vmem:[%s1 + $0x38] sm:$0xff]
      %v267 = vld [vmem:[%s1 + $0x40] sm:$0xff]
      %v268 = vld [vmem:[%s1 + $0x48] sm:$0xff]
      %v269 = vld [vmem:[%s1 + $0x50] sm:$0xff]
      %v270 = vld [vmem:[%s1 + $0x58] sm:$0xff]
      %v271 = vld [vmem:[%s1 + $0x60] sm:$0xff]
      %v272 = vld [vmem:[%s1 + $0x68] sm:$0xff]
      %v273 = vld [vmem:[%s1 + $0x70] sm:$0xff]
      %v274 = vld [vmem:[%s1 + $0x78] sm:$0xff]
      %v275 = vld [vmem:[%s1 + $0x80] sm:$0xff]
      %v276 = vld [vmem:[%s1 + $0x88] sm:$0xff]
      %v277 = vld [vmem:[%s1 + $0x90] sm:$0xff]
      %v278 = vld [vmem:[%s1 + $0x98] sm:$0xff]
      %v279 = vld [vmem:[%s1 + $0xa0] sm:$0xff]
      %v280 = vld [vmem:[%s1 + $0xa8] sm:$0xff]
      %v281 = vld [vmem:[%s1 + $0xb0] sm:$0xff]
      %v282 = vld [vmem:[%s1 + $0xb8] sm:$0xff]
      %v283 = vld [vmem:[%s1 + $0xc0] sm:$0xff]
      %v284 = vld [vmem:[%s1 + $0xc8] sm:$0xff]
      %v285 = vld [vmem:[%s1 + $0xd0] sm:$0xff]
      %v286 = vld [vmem:[%s1 + $0xd8] sm:$0xff]
      %v287 = vld [vmem:[%s1 + $0xe0] sm:$0xff]
      %v288 = vld [vmem:[%s1 + $0xe8] sm:$0xff]
      %v289 = vld [vmem:[%s1 + $0xf0] sm:$0xff]
      %v290 = vld [vmem:[%s1 + $0xf8] sm:$0xff]
      %v291 = vld [vmem:[%s1 + $0x100] sm:$0xff]
      %v292 = vld [vmem:[%s1 + $0x108] sm:$0xff]
      %v293 = vld [vmem:[%s1 + $0x110] sm:$0xff]
      %v294 = vld [vmem:[%s1 + $0x118] sm:$0xff]
      %v295 = vld [vmem:[%s1 + $0x120] sm:$0xff]
      %v296 = vld [vmem:[%s1 + $0x128] sm:$0xff]
      %v297 = vld [vmem:[%s1 + $0x130] sm:$0xff]
      %v298 = vld [vmem:[%s1 + $0x138] sm:$0xff]
      %v299 = vld [vmem:[%s1 + $0x140] sm:$0xff]
      %v300 = vld [vmem:[%s1 + $0x148] sm:$0xff]
      %v301 = vld [vmem:[%s1 + $0x150] sm:$0xff]
      %v302 = vld [vmem:[%s1 + $0x158] sm:$0xff]
      %v303 = vld [vmem:[%s1 + $0x160] sm:$0xff]
      %v304 = vld [vmem:[%s1 + $0x168] sm:$0xff]
      %v305 = vld [vmem:[%s1 + $0x170] sm:$0xff]
      %v306 = vld [vmem:[%s1 + $0x178] sm:$0xff]
      %v307 = vld [vmem:[%s1 + $0x180] sm:$0xff]
      %v308 = vld [vmem:[%s1 + $0x188] sm:$0xff]
      %v309 = vld [vmem:[%s1 + $0x190] sm:$0xff]
      %v310 = vld [vmem:[%s1 + $0x198] sm:$0xff]
      %v311 = vld [vmem:[%s1 + $0x1a0] sm:$0xff]
      %v312 = vld [vmem:[%s1 + $0x1a8] sm:$0xff]
      %v313 = vld [vmem:[%s1 + $0x1b0] sm:$0xff]
      %v314 = vld [vmem:[%s1 + $0x1b8] sm:$0xff]
      %v315 = vld [vmem:[%s1 + $0x1c0] sm:$0xff]
      %v316 = vld [vmem:[%s1 + $0x1c8] sm:$0xff]
      %v317 = vld [vmem:[%s1 + $0x1d0] sm:$0xff]
      %v318 = vld [vmem:[%s1 + $0x1d8] sm:$0xff]
      %v319 = vld [vmem:[%s1 + $0x1e0] sm:$0xff]
      %v320 = vld [vmem:[%s1 + $0x1e8] sm:$0xff]
      %v321 = vld [vmem:[%s1 + $0x1f0] sm:$0xff]
      %v322 = vld [vmem:[%s1 + $0x1f8] sm:$0xff]
      %v323 = vld [vmem:[%s1 + $0x200] sm:$0xff]
      %v324 = vld [vmem:[%s1 + $0x208] sm:$0xff]
      %v325 = vld [vmem:[%s1 + $0x210] sm:$0xff]
      %v326 = vld [vmem:[%s1 + $0x218] sm:$0xff]
      %v327 = vld [vmem:[%s1 + $0x220] sm:$0xff]
      %v328 = vld [vmem:[%s1 + $0x228] sm:$0xff]
      %v329 = vld [vmem:[%s1 + $0x230] sm:$0xff]
      %v330 = vld [vmem:[%s1 + $0x238] sm:$0xff]
      %v331 = vld [vmem:[%s1 + $0x240] sm:$0xff]
      %v332 = vld [vmem:[%s1 + $0x248] sm:$0xff]
      %v333 = vld [vmem:[%s1 + $0x250] sm:$0xff]
      %v334 = vld [vmem:[%s1 + $0x258] sm:$0xff]
      %v335 = vld [vmem:[%s1 + $0x260] sm:$0xff]
      %v336 = vld [vmem:[%s1 + $0x268] sm:$0xff]
      %v337 = vld [vmem:[%s1 + $0x270] sm:$0xff]
      %v338 = vld [vmem:[%s1 + $0x278] sm:$0xff]
      %v339 = vld [vmem:[%s1 + $0x280] sm:$0xff]
      %v340 = vld [vmem:[%s1 + $0x288] sm:$0xff]
      %v341 = vld [vmem:[%s1 + $0x290] sm:$0xff]
      %v342 = vld [vmem:[%s1 + $0x298] sm:$0xff]
      %v343 = vld [vmem:[%s1 + $0x2a0] sm:$0xff]
      %v344 = vld [vmem:[%s1 + $0x2a8] sm:$0xff]
      %v345 = vld [vmem:[%s1 + $0x2b0] sm:$0xff]
      %v346 = vld [vmem:[%s1 + $0x2b8] sm:$0xff]
      %v347 = vld [vmem:[%s1 + $0x2c0] sm:$0xff]
      %v348 = vld [vmem:[%s1 + $0x2c8] sm:$0xff]
      %v349 = vld [vmem:[%s1 + $0x2d0] sm:$0xff]
      %v350 = vld [vmem:[%s1 + $0x2d8] sm:$0xff]
      %v351 = vld [vmem:[%s1 + $0x2e0] sm:$0xff]
      %v352 = vld [vmem:[%s1 + $0x2e8] sm:$0xff]
      %v353 = vld [vmem:[%s1 + $0x2f0] sm:$0xff]
      %v354 = vld [vmem:[%s1 + $0x2f8] sm:$0xff]
      %v355 = vld [vmem:[%s1 + $0x300] sm:$0xff]
      %v356 = vld [vmem:[%s1 + $0x308] sm:$0xff]
      %v357 = vld [vmem:[%s1 + $0x310] sm:$0xff]
      %v358 = vld [vmem:[%s1 + $0x318] sm:$0xff]
      %v359 = vld [vmem:[%s1 + $0x320] sm:$0xff]
      %v360 = vld [vmem:[%s1 + $0x328] sm:$0xff]
      %v361 = vld [vmem:[%s1 + $0x330] sm:$0xff]
      %v362 = vld [vmem:[%s1 + $0x338] sm:$0xff]
      %v363 = vld [vmem:[%s1 + $0x340] sm:$0xff]
      %v364 = vld [vmem:[%s1 + $0x348] sm:$0xff]
      %v365 = vld [vmem:[%s1 + $0x350] sm:$0xff]
      %v366 = vld [vmem:[%s1 + $0x358] sm:$0xff]
      %v367 = vld [vmem:[%s1 + $0x360] sm:$0xff]
      %v368 = vld [vmem:[%s1 + $0x368] sm:$0xff]
      %v369 = vld [vmem:[%s1 + $0x370] sm:$0xff]
      %v370 = vld [vmem:[%s1 + $0x378] sm:$0xff]
      %v371 = vld [vmem:[%s1 + $0x380] sm:$0xff]
      %v372 = vld [vmem:[%s1 + $0x388] sm:$0xff]
      %v373 = vld [vmem:[%s1 + $0x390] sm:$0xff]
      %v374 = vld [vmem:[%s1 + $0x398] sm:$0xff]
      %v375 = vld [vmem:[%s1 + $0x3a0] sm:$0xff]
      %v376 = vld [vmem:[%s1 + $0x3a8] sm:$0xff]
      %v377 = vld [vmem:[%s1 + $0x3b0] sm:$0xff]
      %v378 = vld [vmem:[%s1 + $0x3b8] sm:$0xff]
      %v379 = vld [vmem:[%s1 + $0x3c0] sm:$0xff]
      %v380 = vld [vmem:[%s1 + $0x3c8] sm:$0xff]
      %v381 = vld [vmem:[%s1 + $0x3d0] sm:$0xff]
      %v382 = vld [vmem:[%s1 + $0x3d8] sm:$0xff]
      %v383 = vld [vmem:[%s1 + $0x3e0] sm:$0xff]
      %v384 = vld [vmem:[%s1 + $0x3e8] sm:$0xff]
      %v385 = vld [vmem:[%s1 + $0x3f0] sm:$0xff]
      %v386 = vld [vmem:[%s1 + $0x3f8] sm:$0xff]
      %387 = vmatprep.subr.mxu0 %v320
      %388 = vmatpush1.msra.mxu0 %v319
      %389 = vmatprep.subr.mxu0 %v316
      %390 = vmatpush1.msra.mxu0 %v315
      %391 = vmatprep.subr.mxu0 %v312
      %392 = vmatpush1.msra.mxu0 %v311
      %393 = vmatprep.subr.mxu0 %v308
      %394 = vmatpush1.msra.mxu0 %v307
      %395 = vmatprep.subr.mxu0 %v304
      %396 = vmatpush1.msra.mxu0 %v303
      %397 = vmatprep.subr.mxu0 %v300
      %398 = vmatpush1.msra.mxu0 %v299
      %399 = vmatprep.subr.mxu0 %v296
      %400 = vmatpush1.msra.mxu0 %v295
      %401 = vmatprep.subr.mxu0 %v292
      %402 = vmatpush1.msra.mxu0 %v291
      %403 = vmatprep.subr.mxu0 %v288
      %404 = vmatpush1.msra.mxu0 %v287
      %405 = vmatprep.subr.mxu0 %v284
      %406 = vmatpush1.msra.mxu0 %v283
      %407 = vmatprep.subr.mxu0 %v280
      %408 = vmatpush1.msra.mxu0 %v279
      %409 = vmatprep.subr.mxu0 %v276
      %410 = vmatpush1.msra.mxu0 %v275
      %411 = vmatprep.subr.mxu0 %v272
      %412 = vmatpush1.msra.mxu0 %v271
      %413 = vmatprep.subr.mxu0 %v268
      %414 = vmatpush1.msra.mxu0 %v267
      %415 = vmatprep.subr.mxu0 %v264
      %416 = vmatpush1.msra.mxu0 %v263
      %417 = vmatprep.subr.mxu0 %v260
      %418 = vmatpush1.msra.mxu0 %v259
      %419 = vmatprep.subr.mxu0 %v384
      %420 = vmatpush2.msra.mxu0 %v383
      %421 = vmatprep.subr.mxu0 %v380
      %422 = vmatpush2.msra.mxu0 %v379
      %423 = vmatprep.subr.mxu0 %v376
      %424 = vmatpush2.msra.mxu0 %v375
      %425 = vmatprep.subr.mxu0 %v372
      %426 = vmatpush2.msra.mxu0 %v371
      %427 = vmatprep.subr.mxu0 %v368
      %428 = vmatpush2.msra.mxu0 %v367
      %429 = vmatprep.subr.mxu0 %v364
      %430 = vmatpush2.msra.mxu0 %v363
      %431 = vmatprep.subr.mxu0 %v360
      %432 = vmatpush2.msra.mxu0 %v359
      %433 = vmatprep.subr.mxu0 %v356
      %434 = vmatpush2.msra.mxu0 %v355
      %435 = vmatprep.subr.mxu0 %v352
      %436 = vmatpush2.msra.mxu0 %v351
      %437 = vmatprep.subr.mxu0 %v348
      %438 = vmatpush2.msra.mxu0 %v347
      %439 = vmatprep.subr.mxu0 %v344
      %440 = vmatpush2.msra.mxu0 %v343
      %441 = vmatprep.subr.mxu0 %v340
      %442 = vmatpush2.msra.mxu0 %v339
      %443 = vmatprep.subr.mxu0 %v336
      %444 = vmatpush2.msra.mxu0 %v335
      %445 = vmatprep.subr.mxu0 %v332
      %446 = vmatpush2.msra.mxu0 %v331
      %447 = vmatprep.subr.mxu0 %v328
      %448 = vmatpush2.msra.mxu0 %v327
      %449 = vmatprep.subr.mxu0 %v324
      %450 = vmatpush2.msra.mxu0 %v323
      %451 = vmatprep.mubr.f32.mxu0 %v251
      %452 = vmatmul.mubr.f32.gmra.mxu0 %v249
      %v453 = vpop.f32.mrf.mxu0
      %v454 = vadd.f32 0.0, %v453
      %v455 = vpop.f32.mrf.mxu0
      %v456 = vadd.f32 0.0, %v455
      %457 = vmatprep.mubr.f32.mxu0 %v257
      %458 = vmatmul.mubr.f32.gmra.mxu0 %v255
      %v459 = vpop.f32.mrf.mxu0
      %v460 = vadd.f32 0.0, %v459
      %v461 = vpop.f32.mrf.mxu0
      %v462 = vadd.f32 0.0, %v461
      %463 = vdwg.mxu0
      %464 = vmatprep.subr.mxu0 %v322
      %465 = vmatpush1.msra.mxu0 %v321
      %466 = vmatprep.subr.mxu0 %v318
      %467 = vmatpush1.msra.mxu0 %v317
      %468 = vmatprep.subr.mxu0 %v314
      %469 = vmatpush1.msra.mxu0 %v313
      %470 = vmatprep.subr.mxu0 %v310
      %471 = vmatpush1.msra.mxu0 %v309
      %472 = vmatprep.subr.mxu0 %v306
      %473 = vmatpush1.msra.mxu0 %v305
      %474 = vmatprep.subr.mxu0 %v302
      %475 = vmatpush1.msra.mxu0 %v301
      %476 = vmatprep.subr.mxu0 %v298
      %477 = vmatpush1.msra.mxu0 %v297
      %478 = vmatprep.subr.mxu0 %v294
      %479 = vmatpush1.msra.mxu0 %v293
      %480 = vmatprep.subr.mxu0 %v290
      %481 = vmatpush1.msra.mxu0 %v289
      %482 = vmatprep.subr.mxu0 %v286
      %483 = vmatpush1.msra.mxu0 %v285
      %484 = vmatprep.subr.mxu0 %v282
      %485 = vmatpush1.msra.mxu0 %v281
      %486 = vmatprep.subr.mxu0 %v278
      %487 = vmatpush1.msra.mxu0 %v277
      %488 = vmatprep.subr.mxu0 %v274
      %489 = vmatpush1.msra.mxu0 %v273
      %490 = vmatprep.subr.mxu0 %v270
      %491 = vmatpush1.msra.mxu0 %v269
      %492 = vmatprep.subr.mxu0 %v266
      %493 = vmatpush1.msra.mxu0 %v265
      %494 = vmatprep.subr.mxu0 %v262
      %495 = vmatpush1.msra.mxu0 %v261
      %496 = vmatprep.subr.mxu0 %v386
      %497 = vmatpush2.msra.mxu0 %v385
      %498 = vmatprep.subr.mxu0 %v382
      %499 = vmatpush2.msra.mxu0 %v381
      %500 = vmatprep.subr.mxu0 %v378
      %501 = vmatpush2.msra.mxu0 %v377
      %502 = vmatprep.subr.mxu0 %v374
      %503 = vmatpush2.msra.mxu0 %v373
      %504 = vmatprep.subr.mxu0 %v370
      %505 = vmatpush2.msra.mxu0 %v369
      %506 = vmatprep.subr.mxu0 %v366
      %507 = vmatpush2.msra.mxu0 %v365
      %508 = vmatprep.subr.mxu0 %v362
      %509 = vmatpush2.msra.mxu0 %v361
      %510 = vmatprep.subr.mxu0 %v358
      %511 = vmatpush2.msra.mxu0 %v357
      %512 = vmatprep.subr.mxu0 %v354
      %513 = vmatpush2.msra.mxu0 %v353
      %514 = vmatprep.subr.mxu0 %v350
      %515 = vmatpush2.msra.mxu0 %v349
      %516 = vmatprep.subr.mxu0 %v346
      %517 = vmatpush2.msra.mxu0 %v345
      %518 = vmatprep.subr.mxu0 %v342
      %519 = vmatpush2.msra.mxu0 %v341
      %520 = vmatprep.subr.mxu0 %v338
      %521 = vmatpush2.msra.mxu0 %v337
      %522 = vmatprep.subr.mxu0 %v334
      %523 = vmatpush2.msra.mxu0 %v333
      %524 = vmatprep.subr.mxu0 %v330
      %525 = vmatpush2.msra.mxu0 %v329
      %526 = vmatprep.subr.mxu0 %v326
      %527 = vmatpush2.msra.mxu0 %v325
      %528 = vmatprep.mubr.f32.mxu0 %v251
      %529 = vmatmul.mubr.f32.gmra.mxu0 %v249
      %v530 = vpop.f32.mrf.mxu0
      %v531 = vadd.f32 0.0, %v530
      %v532 = vpop.f32.mrf.mxu0
      %v533 = vadd.f32 0.0, %v532
      %534 = vmatprep.mubr.f32.mxu0 %v257
      %535 = vmatmul.mubr.f32.gmra.mxu0 %v255
      %v536 = vpop.f32.mrf.mxu0
      %v537 = vadd.f32 0.0, %v536
      %v538 = vpop.f32.mrf.mxu0
      %v539 = vadd.f32 0.0, %v538
      %540 = vdwg.mxu0
      %541 = vst [vmem:[%s170] sm:$0xff] %v454
      %542 = vst [vmem:[%s170 + $0x8] sm:$0xff] %v456
      %543 = vst [vmem:[%s170 + $0x10] sm:$0xff] %v531
      %544 = vst [vmem:[%s170 + $0x18] sm:$0xff] %v533
      %545 = vst [vmem:[%s170 + $0x20] sm:$0xff] %v460
      %546 = vst [vmem:[%s170 + $0x28] sm:$0xff] %v462
      %547 = vst [vmem:[%s170 + $0x30] sm:$0xff] %v537
      %548 = vst [vmem:[%s170 + $0x38] sm:$0xff] %v539
      %p549 = scmp.lt.s32.totalorder %s14, 1
      %s550 = scalar_select %p549, %s14, 1
      %s551 = smul.addr %s550, 8
      %s552 = smul.addr %s551, 8
      %s553 = scalar_lea.vmem %s3, %s552
      // Predicated region
      $region33: #{up_forward.2} parent=31 // pred_check
        %p554 = pneg %p100
      $region34: #{up_forward.2} parent=31 // pred_check_branch
        %556 = sbr.rel (%p554) target = $region36
      $region35: #{up_forward.2} parent=31 // pred_region
        _
      $region36: #{up_forward.2} parent=31 // pred_fallthru
        _
    $region32: #{up_forward.2} parent=5 // pred_fallthru
      _
    %p557 = scmp.le.s32.totalorder 2, %s9
    // Predicated region
    $region37: #{up_forward.2} parent=5 // pred_check
      %p558 = pneg %p557
    $region38: #{up_forward.2} parent=5 // pred_check_branch
      %560 = sbr.rel (%p558) target = $region40
    $region39: #{up_forward.2} parent=5 // pred_region
      %s561 = ssub.s32 %s9, 2
      // Predicated region
      $region41: #{up_forward.2} parent=39 // pred_check
        %p562 = pneg %p106
      $region42: #{up_forward.2} parent=39 // pred_check_branch
        %564 = sbr.rel (%p562) target = $region44
      $region43: #{up_forward.2} parent=39 // pred_region
        %p565 = scmp.lt.s32.totalorder %s15, 1
        %s566 = scalar_select %p565, %s15, 1
        %s567 = smul.addr %s566, 8
        %s568 = smul.addr %s567, 8
        %s569 = scalar_lea.vmem %s3, %s568
      $region44: #{up_forward.2} parent=39 // pred_fallthru
        _
    $region40: #{up_forward.2} parent=5 // pred_fallthru
      _
  $region6: #{up_forward.2} parent=0 // loop_footer
    %s13 = sadd.s32 1, %s9
  $region7: #{up_forward.2} parent=0 // loop_footer_branch
    %8 = sbr.rel target = $region3
  $region8: #{up_forward.2} parent=0 // loop_exit
    _

// kernel: up_forward.3
$region0: #{up_forward.3}
  #allocation0 [shape = 'u32[]', space=smem, size = 0x4, offset = 0x4, fixed_abs, tag = 'smem constant byte address 0x4 - core index']
  #allocation1 [shape = 'u32[144,128]{1,0:T(1,128)}', space=vmem, size = 0x12000, scoped, tag = 'internal scratch']
  #allocation2 [shape = 'bf16[18,18,32]{2,1,0:T(8,128)(2,1)}', space=vmem, size = 0x1b000, scoped, tag = 'scratch operand']
  %s0 = inlined_call_operand.vmem [shape: bf16[2,18,18,64], index: 0, kind: input, shape index: {}]
  %s1 = inlined_call_operand.vmem [shape: bf16[9,64,32], index: 1, kind: input, shape index: {}]
  %s2 = inlined_call_operand.vmem [shape: f32[1,32], index: 2, kind: input, shape index: {}]
  %s3 = inlined_call_operand.vmem [shape: f32[1,32], index: 3, kind: input, shape index: {}]
  %s4 = inlined_call_operand.vmem [shape: f32[1,32], index: 4, kind: input, shape index: {}]
  %s5 = inlined_call_operand.vmem [shape: f32[32,8], index: 5, kind: input, shape index: {}, may-alias: {5,11}]
  %s6 = inlined_call_operand.vmem [shape: f32[8,32], index: 6, kind: input, shape index: {}, may-alias: {6,12}]
  %s7 = inlined_call_operand.vmem [shape: bf16[9,32,32], index: 7, kind: input, shape index: {}]
  %s8 = inlined_call_operand.vmem [shape: f32[1,32], index: 8, kind: input, shape index: {}]
  %s9 = inlined_call_operand.vmem [shape: f32[1,32], index: 9, kind: input, shape index: {}]
  %s10 = inlined_call_operand.vmem [shape: f32[1,32], index: 10, kind: input, shape index: {}]
  %s11 = inlined_call_operand.vmem [shape: f32[32,8], index: 11, kind: input, shape index: {}, may-alias: {5,11}]
  %s12 = inlined_call_operand.vmem [shape: f32[8,32], index: 12, kind: input, shape index: {}, may-alias: {6,12}]
  %s13 = inlined_call_operand.vmem [shape: f32[2,32,256], index: 13, kind: output, shape index: {}]
  %s14 = sld [smem:[#allocation0]]
  $region85: #{up_forward.3} parent=0
    _
  %s16 = ssub.s32 1, %s14
  %s17 = scalar_select 0, %s16, %s14
  loop: start=0, step=1, limit=4
  $region2: #{up_forward.3} parent=0 // loop_pre_header
    _
  $region3: #{up_forward.3} parent=0 // loop_header
    %s19 = sphi 0, %s23
    %p20 = scmp.ge.s32.totalorder %s19, 4
    %s29 = sphi 0, %s31
    %s32 = sphi 0, %s29
    %s33 = sphi 0, %s32
    %s49 = sphi 0, %s33
    %s53 = sphi 0, %s53
    %s55 = sphi 0, %s53
    %s56 = sphi 0, %s55
    %s70 = sphi 0, %s56
    %s74 = sphi 0, %s74
    %s76 = sphi 0, %s74
    %s77 = sphi 0, %s76
    %s91 = sphi 0, %s77
    %s95 = sphi 0, %s95
    %s97 = sphi 0, %s95
    %s98 = sphi 0, %s97
    %s112 = sphi 0, %s98
    %s116 = sphi 0, %s116
    %s118 = sphi 0, %s116
    %s119 = sphi 0, %s118
    %s133 = sphi 0, %s119
    %s137 = sphi 0, %s137
    %s139 = sphi 0, %s137
    %s140 = sphi 0, %s139
    %s154 = sphi 0, %s140
    %s158 = sphi 0, %s158
    %s160 = sphi 0, %s158
    %s161 = sphi 0, %s160
    %s175 = sphi 0, %s161
    %s179 = sphi 0, %s179
    %s181 = sphi 0, %s179
    %s182 = sphi 0, %s181
    %s196 = sphi 0, %s182
    %s200 = sphi 0, %s200
    %s202 = sphi 0, %s200
    %s203 = sphi 0, %s202
    %s217 = sphi 0, %s203
    %s221 = sphi 0, %s221
    %s223 = sphi 0, %s221
    %s224 = sphi 0, %s223
    %s238 = sphi 0, %s224
    %s242 = sphi 0, %s242
    %s244 = sphi 0, %s242
    %s245 = sphi 0, %s244
    %s259 = sphi 0, %s245
    %s263 = sphi 0, %s263
    %s265 = sphi 0, %s263
    %s266 = sphi 0, %s265
    %s280 = sphi 0, %s266
    %s284 = sphi 0, %s284
    %s286 = sphi 0, %s284
    %s287 = sphi 0, %s286
    %s301 = sphi 0, %s287
    %s307 = sphi 0, %s309
    %s310 = sphi 0, %s307
    %s311 = sphi 0, %s310
    %s327 = sphi 0, %s311
  $region4: #{up_forward.3} parent=0 // loop_header_branch
    %22 = sbr.rel (%p20) target = $region8
  $region5: #{up_forward.3} parent=0 // loop_body
    %s24 = ssub.s32 %s19, 1
    %s25 = ssub.s32 %s19, 2
    %s26 = sadd.s32 %s19, 1
    %s27 = ssub.s32 %s19, %s26
    %p28 = scmp.eq.s32.totalorder %s27, 0
    %s30 = sadd.s32 %s29, 1
    %s31 = scalar_select %p28, %s29, %s30
    %p34 = pneg %p28
    %p35 = scmp.eq.s32.totalorder %s19, 1
    %p36 = por %p34, %p35
    %p37 = scmp.ne.s32.totalorder %s29, %s32
    %p38 = scmp.eq.s32.totalorder %s19, 0
    %p39 = por %p37, %p38
    %p40 = scmp.ne.s32.totalorder %s29, %s32
    %p41 = scmp.eq.s32.totalorder %s24, 1
    %p42 = por %p40, %p41
    %p43 = scmp.ne.s32.totalorder %s32, %s33
    %p44 = scmp.eq.s32.totalorder %s24, 0
    %p45 = por %p43, %p44
    %p46 = scmp.ne.s32.totalorder %s32, %s33
    %p47 = scmp.eq.s32.totalorder %s25, 1
    %p48 = por %p46, %p47
    %p50 = scmp.ne.s32.totalorder %s33, %s49
    %p51 = scmp.eq.s32.totalorder %s25, 0
    %p52 = por %p50, %p51
    %s54 = sadd.s32 %s53, 1
    %p57 = scmp.eq.s32.totalorder %s19, 1
    %p58 = scmp.ne.s32.totalorder %s53, %s55
    %p59 = scmp.eq.s32.totalorder %s19, 0
    %p60 = por %p58, %p59
    %p61 = scmp.ne.s32.totalorder %s53, %s55
    %p62 = scmp.eq.s32.totalorder %s24, 1
    %p63 = por %p61, %p62
    %p64 = scmp.ne.s32.totalorder %s55, %s56
    %p65 = scmp.eq.s32.totalorder %s24, 0
    %p66 = por %p64, %p65
    %p67 = scmp.ne.s32.totalorder %s55, %s56
    %p68 = scmp.eq.s32.totalorder %s25, 1
    %p69 = por %p67, %p68
    %p71 = scmp.ne.s32.totalorder %s56, %s70
    %p72 = scmp.eq.s32.totalorder %s25, 0
    %p73 = por %p71, %p72
    %s75 = sadd.s32 %s74, 1
    %p78 = scmp.eq.s32.totalorder %s19, 1
    %p79 = scmp.ne.s32.totalorder %s74, %s76
    %p80 = scmp.eq.s32.totalorder %s19, 0
    %p81 = por %p79, %p80
    %p82 = scmp.ne.s32.totalorder %s74, %s76
    %p83 = scmp.eq.s32.totalorder %s24, 1
    %p84 = por %p82, %p83
    %p85 = scmp.ne.s32.totalorder %s76, %s77
    %p86 = scmp.eq.s32.totalorder %s24, 0
    %p87 = por %p85, %p86
    %p88 = scmp.ne.s32.totalorder %s76, %s77
    %p89 = scmp.eq.s32.totalorder %s25, 1
    %p90 = por %p88, %p89
    %p92 = scmp.ne.s32.totalorder %s77, %s91
    %p93 = scmp.eq.s32.totalorder %s25, 0
    %p94 = por %p92, %p93
    %s96 = sadd.s32 %s95, 1
    %p99 = scmp.eq.s32.totalorder %s19, 1
    %p100 = scmp.ne.s32.totalorder %s95, %s97
    %p101 = scmp.eq.s32.totalorder %s19, 0
    %p102 = por %p100, %p101
    %p103 = scmp.ne.s32.totalorder %s95, %s97
    %p104 = scmp.eq.s32.totalorder %s24, 1
    %p105 = por %p103, %p104
    %p106 = scmp.ne.s32.totalorder %s97, %s98
    %p107 = scmp.eq.s32.totalorder %s24, 0
    %p108 = por %p106, %p107
    %p109 = scmp.ne.s32.totalorder %s97, %s98
    %p110 = scmp.eq.s32.totalorder %s25, 1
    %p111 = por %p109, %p110
    %p113 = scmp.ne.s32.totalorder %s98, %s112
    %p114 = scmp.eq.s32.totalorder %s25, 0
    %p115 = por %p113, %p114
    %s117 = sadd.s32 %s116, 1
    %p120 = scmp.eq.s32.totalorder %s19, 1
    %p121 = scmp.ne.s32.totalorder %s116, %s118
    %p122 = scmp.eq.s32.totalorder %s19, 0
    %p123 = por %p121, %p122
    %p124 = scmp.ne.s32.totalorder %s116, %s118
    %p125 = scmp.eq.s32.totalorder %s24, 1
    %p126 = por %p124, %p125
    %p127 = scmp.ne.s32.totalorder %s118, %s119
    %p128 = scmp.eq.s32.totalorder %s24, 0
    %p129 = por %p127, %p128
    %p130 = scmp.ne.s32.totalorder %s118, %s119
    %p131 = scmp.eq.s32.totalorder %s25, 1
    %p132 = por %p130, %p131
    %p134 = scmp.ne.s32.totalorder %s119, %s133
    %p135 = scmp.eq.s32.totalorder %s25, 0
    %p136 = por %p134, %p135
    %s138 = sadd.s32 %s137, 1
    %p141 = scmp.eq.s32.totalorder %s19, 1
    %p142 = scmp.ne.s32.totalorder %s137, %s139
    %p143 = scmp.eq.s32.totalorder %s19, 0
    %p144 = por %p142, %p143
    %p145 = scmp.ne.s32.totalorder %s137, %s139
    %p146 = scmp.eq.s32.totalorder %s24, 1
    %p147 = por %p145, %p146
    %p148 = scmp.ne.s32.totalorder %s139, %s140
    %p149 = scmp.eq.s32.totalorder %s24, 0
    %p150 = por %p148, %p149
    %p151 = scmp.ne.s32.totalorder %s139, %s140
    %p152 = scmp.eq.s32.totalorder %s25, 1
    %p153 = por %p151, %p152
    %p155 = scmp.ne.s32.totalorder %s140, %s154
    %p156 = scmp.eq.s32.totalorder %s25, 0
    %p157 = por %p155, %p156
    %s159 = sadd.s32 %s158, 1
    %p162 = scmp.eq.s32.totalorder %s19, 1
    %p163 = scmp.ne.s32.totalorder %s158, %s160
    %p164 = scmp.eq.s32.totalorder %s19, 0
    %p165 = por %p163, %p164
    %p166 = scmp.ne.s32.totalorder %s158, %s160
    %p167 = scmp.eq.s32.totalorder %s24, 1
    %p168 = por %p166, %p167
    %p169 = scmp.ne.s32.totalorder %s160, %s161
    %p170 = scmp.eq.s32.totalorder %s24, 0
    %p171 = por %p169, %p170
    %p172 = scmp.ne.s32.totalorder %s160, %s161
    %p173 = scmp.eq.s32.totalorder %s25, 1
    %p174 = por %p172, %p173
    %p176 = scmp.ne.s32.totalorder %s161, %s175
    %p177 = scmp.eq.s32.totalorder %s25, 0
    %p178 = por %p176, %p177
    %s180 = sadd.s32 %s179, 1
    %p183 = scmp.eq.s32.totalorder %s19, 1
    %p184 = scmp.ne.s32.totalorder %s179, %s181
    %p185 = scmp.eq.s32.totalorder %s19, 0
    %p186 = por %p184, %p185
    %p187 = scmp.ne.s32.totalorder %s179, %s181
    %p188 = scmp.eq.s32.totalorder %s24, 1
    %p189 = por %p187, %p188
    %p190 = scmp.ne.s32.totalorder %s181, %s182
    %p191 = scmp.eq.s32.totalorder %s24, 0
    %p192 = por %p190, %p191
    %p193 = scmp.ne.s32.totalorder %s181, %s182
    %p194 = scmp.eq.s32.totalorder %s25, 1
    %p195 = por %p193, %p194
    %p197 = scmp.ne.s32.totalorder %s182, %s196
    %p198 = scmp.eq.s32.totalorder %s25, 0
    %p199 = por %p197, %p198
    %s201 = sadd.s32 %s200, 1
    %p204 = scmp.eq.s32.totalorder %s19, 1
    %p205 = scmp.ne.s32.totalorder %s200, %s202
    %p206 = scmp.eq.s32.totalorder %s19, 0
    %p207 = por %p205, %p206
    %p208 = scmp.ne.s32.totalorder %s200, %s202
    %p209 = scmp.eq.s32.totalorder %s24, 1
    %p210 = por %p208, %p209
    %p211 = scmp.ne.s32.totalorder %s202, %s203
    %p212 = scmp.eq.s32.totalorder %s24, 0
    %p213 = por %p211, %p212
    %p214 = scmp.ne.s32.totalorder %s202, %s203
    %p215 = scmp.eq.s32.totalorder %s25, 1
    %p216 = por %p214, %p215
    %p218 = scmp.ne.s32.totalorder %s203, %s217
    %p219 = scmp.eq.s32.totalorder %s25, 0
    %p220 = por %p218, %p219
    %s222 = sadd.s32 %s221, 1
    %p225 = scmp.eq.s32.totalorder %s19, 1
    %p226 = scmp.ne.s32.totalorder %s221, %s223
    %p227 = scmp.eq.s32.totalorder %s19, 0
    %p228 = por %p226, %p227
    %p229 = scmp.ne.s32.totalorder %s221, %s223
    %p230 = scmp.eq.s32.totalorder %s24, 1
    %p231 = por %p229, %p230
    %p232 = scmp.ne.s32.totalorder %s223, %s224
    %p233 = scmp.eq.s32.totalorder %s24, 0
    %p234 = por %p232, %p233
    %p235 = scmp.ne.s32.totalorder %s223, %s224
    %p236 = scmp.eq.s32.totalorder %s25, 1
    %p237 = por %p235, %p236
    %p239 = scmp.ne.s32.totalorder %s224, %s238
    %p240 = scmp.eq.s32.totalorder %s25, 0
    %p241 = por %p239, %p240
    %s243 = sadd.s32 %s242, 1
    %p246 = scmp.eq.s32.totalorder %s19, 1
    %p247 = scmp.ne.s32.totalorder %s242, %s244
    %p248 = scmp.eq.s32.totalorder %s19, 0
    %p249 = por %p247, %p248
    %p250 = scmp.ne.s32.totalorder %s242, %s244
    %p251 = scmp.eq.s32.totalorder %s24, 1
    %p252 = por %p250, %p251
    %p253 = scmp.ne.s32.totalorder %s244, %s245
    %p254 = scmp.eq.s32.totalorder %s24, 0
    %p255 = por %p253, %p254
    %p256 = scmp.ne.s32.totalorder %s244, %s245
    %p257 = scmp.eq.s32.totalorder %s25, 1
    %p258 = por %p256, %p257
    %p260 = scmp.ne.s32.totalorder %s245, %s259
    %p261 = scmp.eq.s32.totalorder %s25, 0
    %p262 = por %p260, %p261
    %s264 = sadd.s32 %s263, 1
    %p267 = scmp.eq.s32.totalorder %s19, 1
    %p268 = scmp.ne.s32.totalorder %s263, %s265
    %p269 = scmp.eq.s32.totalorder %s19, 0
    %p270 = por %p268, %p269
    %p271 = scmp.ne.s32.totalorder %s263, %s265
    %p272 = scmp.eq.s32.totalorder %s24, 1
    %p273 = por %p271, %p272
    %p274 = scmp.ne.s32.totalorder %s265, %s266
    %p275 = scmp.eq.s32.totalorder %s24, 0
    %p276 = por %p274, %p275
    %p277 = scmp.ne.s32.totalorder %s265, %s266
    %p278 = scmp.eq.s32.totalorder %s25, 1
    %p279 = por %p277, %p278
    %p281 = scmp.ne.s32.totalorder %s266, %s280
    %p282 = scmp.eq.s32.totalorder %s25, 0
    %p283 = por %p281, %p282
    %s285 = sadd.s32 %s284, 1
    %p288 = scmp.eq.s32.totalorder %s19, 1
    %p289 = scmp.ne.s32.totalorder %s284, %s286
    %p290 = scmp.eq.s32.totalorder %s19, 0
    %p291 = por %p289, %p290
    %p292 = scmp.ne.s32.totalorder %s284, %s286
    %p293 = scmp.eq.s32.totalorder %s24, 1
    %p294 = por %p292, %p293
    %p295 = scmp.ne.s32.totalorder %s286, %s287
    %p296 = scmp.eq.s32.totalorder %s24, 0
    %p297 = por %p295, %p296
    %p298 = scmp.ne.s32.totalorder %s286, %s287
    %p299 = scmp.eq.s32.totalorder %s25, 1
    %p300 = por %p298, %p299
    %p302 = scmp.ne.s32.totalorder %s287, %s301
    %p303 = scmp.eq.s32.totalorder %s25, 0
    %p304 = por %p302, %p303
    %s305 = ssub.s32 %s19, %s26
    %p306 = scmp.eq.s32.totalorder %s305, 0
    %s308 = sadd.s32 %s307, 1
    %s309 = scalar_select %p306, %s307, %s308
    %p312 = pneg %p306
    %p313 = scmp.eq.s32.totalorder %s19, 1
    %p314 = por %p312, %p313
    %p315 = scmp.ne.s32.totalorder %s307, %s310
    %p316 = scmp.eq.s32.totalorder %s19, 0
    %p317 = por %p315, %p316
    %p318 = scmp.ne.s32.totalorder %s307, %s310
    %p319 = scmp.eq.s32.totalorder %s24, 1
    %p320 = por %p318, %p319
    %p321 = scmp.ne.s32.totalorder %s310, %s311
    %p322 = scmp.eq.s32.totalorder %s24, 0
    %p323 = por %p321, %p322
    %p324 = scmp.ne.s32.totalorder %s310, %s311
    %p325 = scmp.eq.s32.totalorder %s25, 1
    %p326 = por %p324, %p325
    %p328 = scmp.ne.s32.totalorder %s311, %s327
    %p329 = scmp.eq.s32.totalorder %s25, 0
    %p330 = por %p328, %p329
    %p331 = scmp.le.s32.totalorder 1, %s19
    %p332 = scmp.lt.s32.totalorder %s19, 3
    %p333 = pnand %p331, %p332
    %p334 = pneg %p333
    // Predicated region
    $region9: #{up_forward.3} parent=5 // pred_check
      _
    $region10: #{up_forward.3} parent=5 // pred_check_branch
      %336 = sbr.rel (%p333) target = $region12
    $region11: #{up_forward.3} parent=5 // pred_region
      %s337 = ssub.s32 %s19, 1
      // Predicated region
      $region13: #{up_forward.3} parent=11 // pred_check
        %p338 = pneg %p66
      $region14: #{up_forward.3} parent=11 // pred_check_branch
        %340 = sbr.rel (%p338) target = $region16
      $region15: #{up_forward.3} parent=11 // pred_region
        _
      $region16: #{up_forward.3} parent=11 // pred_fallthru
        _
      // Predicated region
      $region17: #{up_forward.3} parent=11 // pred_check
        %p341 = pneg %p87
      $region18: #{up_forward.3} parent=11 // pred_check_branch
        %343 = sbr.rel (%p341) target = $region20
      $region19: #{up_forward.3} parent=11 // pred_region
        _
      $region20: #{up_forward.3} parent=11 // pred_fallthru
        _
      // Predicated region
      $region21: #{up_forward.3} parent=11 // pred_check
        %p344 = pneg %p108
      $region22: #{up_forward.3} parent=11 // pred_check_branch
        %346 = sbr.rel (%p344) target = $region24
      $region23: #{up_forward.3} parent=11 // pred_region
        _
      $region24: #{up_forward.3} parent=11 // pred_fallthru
        _
      // Predicated region
      $region25: #{up_forward.3} parent=11 // pred_check
        %p347 = pneg %p129
      $region26: #{up_forward.3} parent=11 // pred_check_branch
        %349 = sbr.rel (%p347) target = $region28
      $region27: #{up_forward.3} parent=11 // pred_region
        _
      $region28: #{up_forward.3} parent=11 // pred_fallthru
        _
      // Predicated region
      $region29: #{up_forward.3} parent=11 // pred_check
        %p350 = pneg %p150
      $region30: #{up_forward.3} parent=11 // pred_check_branch
        %352 = sbr.rel (%p350) target = $region32
      $region31: #{up_forward.3} parent=11 // pred_region
        _
      $region32: #{up_forward.3} parent=11 // pred_fallthru
        _
      // Predicated region
      $region33: #{up_forward.3} parent=11 // pred_check
        %p353 = pneg %p171
      $region34: #{up_forward.3} parent=11 // pred_check_branch
        %355 = sbr.rel (%p353) target = $region36
      $region35: #{up_forward.3} parent=11 // pred_region
        _
      $region36: #{up_forward.3} parent=11 // pred_fallthru
        _
      // Predicated region
      $region37: #{up_forward.3} parent=11 // pred_check
        %p356 = pneg %p192
      $region38: #{up_forward.3} parent=11 // pred_check_branch
        %358 = sbr.rel (%p356) target = $region40
      $region39: #{up_forward.3} parent=11 // pred_region
        _
      $region40: #{up_forward.3} parent=11 // pred_fallthru
        _
      // Predicated region
      $region41: #{up_forward.3} parent=11 // pred_check
        %p359 = pneg %p213
      $region42: #{up_forward.3} parent=11 // pred_check_branch
        %361 = sbr.rel (%p359) target = $region44
      $region43: #{up_forward.3} parent=11 // pred_region
        _
      $region44: #{up_forward.3} parent=11 // pred_fallthru
        _
      // Predicated region
      $region45: #{up_forward.3} parent=11 // pred_check
        %p362 = pneg %p234
      $region46: #{up_forward.3} parent=11 // pred_check_branch
        %364 = sbr.rel (%p362) target = $region48
      $region47: #{up_forward.3} parent=11 // pred_region
        _
      $region48: #{up_forward.3} parent=11 // pred_fallthru
        _
      // Predicated region
      $region49: #{up_forward.3} parent=11 // pred_check
        %p365 = pneg %p255
      $region50: #{up_forward.3} parent=11 // pred_check_branch
        %367 = sbr.rel (%p365) target = $region52
      $region51: #{up_forward.3} parent=11 // pred_region
        _
      $region52: #{up_forward.3} parent=11 // pred_fallthru
        _
      // Predicated region
      $region53: #{up_forward.3} parent=11 // pred_check
        %p368 = pneg %p276
      $region54: #{up_forward.3} parent=11 // pred_check_branch
        %370 = sbr.rel (%p368) target = $region56
      $region55: #{up_forward.3} parent=11 // pred_region
        _
      $region56: #{up_forward.3} parent=11 // pred_fallthru
        _
      // Predicated region
      $region57: #{up_forward.3} parent=11 // pred_check
        %p371 = pneg %p297
      $region58: #{up_forward.3} parent=11 // pred_check_branch
        %373 = sbr.rel (%p371) target = $region60
      $region59: #{up_forward.3} parent=11 // pred_region
        _
      $region60: #{up_forward.3} parent=11 // pred_fallthru
        _
    $region12: #{up_forward.3} parent=5 // pred_fallthru
      _
    %p374 = scmp.lt.s32.totalorder %s19, 2
    // Predicated region
    $region61: #{up_forward.3} parent=5 // pred_check
      %p375 = pneg %p374
    $region62: #{up_forward.3} parent=5 // pred_check_branch
      %377 = sbr.rel (%p375) target = $region64
    $region63: #{up_forward.3} parent=5 // pred_region
      // Predicated region
      $region65: #{up_forward.3} parent=63 // pred_check
        %p378 = pneg %p39
      $region66: #{up_forward.3} parent=63 // pred_check_branch
        %380 = sbr.rel (%p378) target = $region68
      $region67: #{up_forward.3} parent=63 // pred_region
        %p381 = scmp.lt.s32.totalorder %s19, 1
        %s382 = scalar_select %p381, %s19, 1
        %s383 = smul.addr %s382, 54
        %s384 = smul.addr %s383, 4
        %s385 = scalar_lea.vmem %s0, %s384
      $region68: #{up_forward.3} parent=63 // pred_fallthru
        _
    $region64: #{up_forward.3} parent=5 // pred_fallthru
      _
    %p386 = scmp.le.s32.totalorder 1, %s19
    %p387 = scmp.lt.s32.totalorder %s19, 3
    %p388 = pnand %p386, %p387
    %p389 = pneg %p388
    // Predicated region
    $region69: #{up_forward.3} parent=5 // pred_check
      _
    $region70: #{up_forward.3} parent=5 // pred_check_branch
      %391 = sbr.rel (%p388) target = $region72
    $region71: #{up_forward.3} parent=5 // pred_region
      %s392 = ssub.s32 %s19, 1
      %p393 = scmp.lt.s32.totalorder %s24, 1
      %s394 = scalar_select %p393, %s24, 1
      %s395 = smul.addr %s394, 54
      %s396 = smul.addr %s395, 4
      %s397 = scalar_lea.vmem %s0, %s396
      %p398 = pneg %p45
      %p399 = pneg %p42
      %p400 = pneg %p66
      %p401 = pneg %p63
      %p402 = pneg %p87
      %p403 = pneg %p84
      %p404 = pneg %p108
      %p405 = pneg %p105
      %p406 = pneg %p129
      %p407 = pneg %p126
      %p408 = pneg %p150
      %p409 = pneg %p147
      %p410 = pneg %p171
      %p411 = pneg %p168
      %p412 = pneg %p192
      %p413 = pneg %p189
      %p414 = pneg %p213
      %p415 = pneg %p210
      %p416 = pneg %p234
      %p417 = pneg %p231
      %p418 = pneg %p255
      %p419 = pneg %p252
      %p420 = pneg %p276
      %p421 = pneg %p273
      %p422 = pneg %p297
      %p423 = pneg %p294
      %p424 = pneg %p323
      %p425 = pneg %p320
      %p426 = scmp.lt.s32.totalorder %s24, 1
      %s427 = scalar_select %p426, %s24, 1
      %s428 = smul.addr %s427, 8
      %s429 = smul.addr %s428, 8
      %s430 = scalar_lea.vmem %s13, %s429
      %p431 = scmp.lt.s32.totalorder %s24, 1
      %s432 = scalar_select %p431, %s24, 1
      %s433 = smul.addr %s432, 54
      %s434 = smul.addr %s433, 4
      %s435 = scalar_lea.vmem %s0, %s434
      %p436 = scmp.lt.s32.totalorder %s24, 1
      %s437 = scalar_select %p436, %s24, 1
      %s438 = smul.addr %s437, 8
      %s439 = smul.addr %s438, 8
      %s440 = scalar_lea.vmem %s13, %s439
      %v442 = vld [vmem:[%s435] sm:$0xf]
      %v443 = vld [vmem:[%s435 + $0x4] sm:$0xf]
      %v444 = vld [vmem:[%s435 + $0x8] sm:$0x1]
      %v445 = vld [vmem:[%s435 + $0xc] sm:$0xf]
      %v446 = vld [vmem:[%s435 + $0x10] sm:$0xf]
      %v447 = vld [vmem:[%s435 + $0x14] sm:$0x1]
      %v448 = vld [vmem:[%s435 + $0x18] sm:$0xf]
      %v449 = vld [vmem:[%s435 + $0x1c] sm:$0xf]
      %v450 = vld [vmem:[%s435 + $0x20] sm:$0x1]
      %v451 = vld [vmem:[%s435 + $0x24] sm:$0xf]
      %v452 = vld [vmem:[%s435 + $0x28] sm:$0xf]
      %v453 = vld [vmem:[%s435 + $0x2c] sm:$0x1]
      %v454 = vld [vmem:[%s435 + $0x30] sm:$0xf]
      %v455 = vld [vmem:[%s435 + $0x34] sm:$0xf]
      %v456 = vld [vmem:[%s435 + $0x38] sm:$0x1]
      %v457 = vld [vmem:[%s435 + $0x3c] sm:$0xf]
      %v458 = vld [vmem:[%s435 + $0x40] sm:$0xf]
      %v459 = vld [vmem:[%s435 + $0x44] sm:$0x1]
      %v460 = vld [vmem:[%s435 + $0x48] sm:$0xf]
      %v461 = vld [vmem:[%s435 + $0x4c] sm:$0xf]
      %v462 = vld [vmem:[%s435 + $0x50] sm:$0x1]
      %v463 = vld [vmem:[%s435 + $0x54] sm:$0xf]
      %v464 = vld [vmem:[%s435 + $0x58] sm:$0xf]
      %v465 = vld [vmem:[%s435 + $0x5c] sm:$0x1]
      %v466 = vld [vmem:[%s435 + $0x60] sm:$0xf]
      %v467 = vld [vmem:[%s435 + $0x64] sm:$0xf]
      %v468 = vld [vmem:[%s435 + $0x68] sm:$0x1]
      %v469 = vld [vmem:[%s435 + $0x6c] sm:$0xf]
      %v470 = vld [vmem:[%s435 + $0x70] sm:$0xf]
      %v471 = vld [vmem:[%s435 + $0x74] sm:$0x1]
      %v472 = vld [vmem:[%s435 + $0x78] sm:$0xf]
      %v473 = vld [vmem:[%s435 + $0x7c] sm:$0xf]
      %v474 = vld [vmem:[%s435 + $0x80] sm:$0x1]
      %v475 = vld [vmem:[%s435 + $0x84] sm:$0xf]
      %v476 = vld [vmem:[%s435 + $0x88] sm:$0xf]
      %v477 = vld [vmem:[%s435 + $0x8c] sm:$0x1]
      %v478 = vld [vmem:[%s435 + $0x90] sm:$0xf]
      %v479 = vld [vmem:[%s435 + $0x94] sm:$0xf]
      %v480 = vld [vmem:[%s435 + $0x98] sm:$0x1]
      %v481 = vld [vmem:[%s435 + $0x9c] sm:$0xf]
      %v482 = vld [vmem:[%s435 + $0xa0] sm:$0xf]
      %v483 = vld [vmem:[%s435 + $0xa4] sm:$0x1]
      %v484 = vld [vmem:[%s435 + $0xa8] sm:$0xf]
      %v485 = vld [vmem:[%s435 + $0xac] sm:$0xf]
      %v486 = vld [vmem:[%s435 + $0xb0] sm:$0x1]
      %v487 = vld [vmem:[%s435 + $0xb4] sm:$0xf]
      %v488 = vld [vmem:[%s435 + $0xb8] sm:$0xf]
      %v489 = vld [vmem:[%s435 + $0xbc] sm:$0x1]
      %v490 = vld [vmem:[%s435 + $0xc0] sm:$0xf]
      %v491 = vld [vmem:[%s435 + $0xc4] sm:$0xf]
      %v492 = vld [vmem:[%s435 + $0xc8] sm:$0x1]
      %v493 = vld [vmem:[%s435 + $0xcc] sm:$0xf]
      %v494 = vld [vmem:[%s435 + $0xd0] sm:$0xf]
      %v495 = vld [vmem:[%s435 + $0xd4] sm:$0x1]
      %v496 = vld [vmem:[%s1] sm:$0xf]
      %v497 = vld [vmem:[%s1 + $0x4] sm:$0xf]
      %v498 = vld [vmem:[%s1 + $0x8] sm:$0xf]
      %v499 = vld [vmem:[%s1 + $0xc] sm:$0xf]
      %v500 = vld [vmem:[%s1 + $0x10] sm:$0xf]
      %v501 = vld [vmem:[%s1 + $0x14] sm:$0xf]
      %v502 = vld [vmem:[%s1 + $0x18] sm:$0xf]
      %v503 = vld [vmem:[%s1 + $0x1c] sm:$0xf]
      %vm504 = vsmask.f32 3328
      %vm505 = vsmask.f32 7440
      %vm506 = vmor %vm504, %vm505
      %v508 = vshrl.u32 %v442, 16
      %v510 = vrot.slane %v508, 4
      %v511 = vshll.u32 %v442, 16
      %v513 = vrot.slane %v511, 5
      %v514 = vor.u32 %v510, %v513
      %v515 = vrot.slane %v514, 4
      %v517 = vshll.u32 %v443, 16
      %v519 = vrot.slane %v517, 5
      %v520 = vsel %vm506, %v515, %v519
      %v521 = vshrl.u32 %v443, 16
      %v523 = vrot.slane %v521, 4
      %v524 = vor.u32 %v523, %v519
      %v525 = vrot.slane %v524, 4
      %v527 = vshll.u32 %v444, 16
      %v529 = vrot.slane %v527, 5
      %v530 = vsel %vm506, %v525, %v529
      %v532 = vshrl.u32 %v445, 16
      %v534 = vrot.slane %v532, 4
      %v535 = vshll.u32 %v445, 16
      %v537 = vrot.slane %v535, 5
      %v538 = vor.u32 %v534, %v537
      %v539 = vrot.slane %v538, 4
      %v541 = vshll.u32 %v446, 16
      %v543 = vrot.slane %v541, 5
      %v544 = vsel %vm506, %v539, %v543
      %v545 = vshrl.u32 %v446, 16
      %v547 = vrot.slane %v545, 4
      %v548 = vor.u32 %v547, %v543
      %v549 = vrot.slane %v548, 4
      %v551 = vshll.u32 %v447, 16
      %v553 = vrot.slane %v551, 5
      %v554 = vsel %vm506, %v549, %v553
      %v556 = vshrl.u32 %v448, 16
      %v558 = vrot.slane %v556, 4
      %v559 = vshll.u32 %v448, 16
      %v561 = vrot.slane %v559, 5
      %v562 = vor.u32 %v558, %v561
      %v563 = vrot.slane %v562, 4
      %v565 = vshll.u32 %v449, 16
      %v567 = vrot.slane %v565, 5
      %v568 = vsel %vm506, %v563, %v567
      %v569 = vshrl.u32 %v449, 16
      %v571 = vrot.slane %v569, 4
      %v572 = vor.u32 %v571, %v567
      %v573 = vrot.slane %v572, 4
      %v575 = vshll.u32 %v450, 16
      %v577 = vrot.slane %v575, 5
      %v578 = vsel %vm506, %v573, %v577
      %v580 = vshrl.u32 %v451, 16
      %v582 = vrot.slane %v580, 4
      %v583 = vshll.u32 %v451, 16
      %v585 = vrot.slane %v583, 5
      %v586 = vor.u32 %v582, %v585
      %v587 = vrot.slane %v586, 4
      %v589 = vshll.u32 %v452, 16
      %v591 = vrot.slane %v589, 5
      %v592 = vsel %vm506, %v587, %v591
      %v593 = vshrl.u32 %v452, 16
      %v595 = vrot.slane %v593, 4
      %v596 = vor.u32 %v595, %v591
      %v597 = vrot.slane %v596, 4
      %v599 = vshll.u32 %v453, 16
      %v601 = vrot.slane %v599, 5
      %v602 = vsel %vm506, %v597, %v601
      %v604 = vshrl.u32 %v454, 16
      %v606 = vrot.slane %v604, 4
      %v607 = vshll.u32 %v454, 16
      %v609 = vrot.slane %v607, 5
      %v610 = vor.u32 %v606, %v609
      %v611 = vrot.slane %v610, 4
      %v613 = vshll.u32 %v455, 16
      %v615 = vrot.slane %v613, 5
      %v616 = vsel %vm506, %v611, %v615
      %v617 = vshrl.u32 %v455, 16
      %v619 = vrot.slane %v617, 4
      %v620 = vor.u32 %v619, %v615
      %v621 = vrot.slane %v620, 4
      %v623 = vshll.u32 %v456, 16
      %v625 = vrot.slane %v623, 5
      %v626 = vsel %vm506, %v621, %v625
      %v628 = vshrl.u32 %v457, 16
      %v630 = vrot.slane %v628, 4
      %v631 = vshll.u32 %v457, 16
      %v633 = vrot.slane %v631, 5
      %v634 = vor.u32 %v630, %v633
      %v635 = vrot.slane %v634, 4
      %v637 = vshll.u32 %v458, 16
      %v639 = vrot.slane %v637, 5
      %v640 = vsel %vm506, %v635, %v639
      %v641 = vshrl.u32 %v458, 16
      %v643 = vrot.slane %v641, 4
      %v644 = vor.u32 %v643, %v639
      %v645 = vrot.slane %v644, 4
      %v647 = vshll.u32 %v459, 16
      %v649 = vrot.slane %v647, 5
      %v650 = vsel %vm506, %v645, %v649
      %v652 = vshrl.u32 %v460, 16
      %v654 = vrot.slane %v652, 4
      %v655 = vshll.u32 %v460, 16
      %v657 = vrot.slane %v655, 5
      %v658 = vor.u32 %v654, %v657
      %v659 = vrot.slane %v658, 4
      %v661 = vshll.u32 %v461, 16
      %v663 = vrot.slane %v661, 5
      %v664 = vsel %vm506, %v659, %v663
      %v665 = vshrl.u32 %v461, 16
      %v667 = vrot.slane %v665, 4
      %v668 = vor.u32 %v667, %v663
      %v669 = vrot.slane %v668, 4
      %v671 = vshll.u32 %v462, 16
      %v673 = vrot.slane %v671, 5
      %v674 = vsel %vm506, %v669, %v673
      %v676 = vshrl.u32 %v463, 16
      %v678 = vrot.slane %v676, 4
      %v679 = vshll.u32 %v463, 16
      %v681 = vrot.slane %v679, 5
      %v682 = vor.u32 %v678, %v681
      %v683 = vrot.slane %v682, 4
      %v685 = vshll.u32 %v464, 16
      %v687 = vrot.slane %v685, 5
      %v688 = vsel %vm506, %v683, %v687
      %v689 = vshrl.u32 %v464, 16
      %v691 = vrot.slane %v689, 4
      %v692 = vor.u32 %v691, %v687
      %v693 = vrot.slane %v692, 4
      %v695 = vshll.u32 %v465, 16
      %v697 = vrot.slane %v695, 5
      %v698 = vsel %vm506, %v693, %v697
      %v700 = vshrl.u32 %v466, 16
      %v702 = vrot.slane %v700, 4
      %v703 = vshll.u32 %v466, 16
      %v705 = vrot.slane %v703, 5
      %v706 = vor.u32 %v702, %v705
      %v707 = vrot.slane %v706, 4
      %v709 = vshll.u32 %v467, 16
      %v711 = vrot.slane %v709, 5
      %v712 = vsel %vm506, %v707, %v711
      %v713 = vshrl.u32 %v467, 16
      %v715 = vrot.slane %v713, 4
      %v716 = vor.u32 %v715, %v711
      %v717 = vrot.slane %v716, 4
      %v719 = vshll.u32 %v468, 16
      %v721 = vrot.slane %v719, 5
      %v722 = vsel %vm506, %v717, %v721
      %v724 = vshrl.u32 %v469, 16
      %v726 = vrot.slane %v724, 4
      %v727 = vshll.u32 %v469, 16
      %v729 = vrot.slane %v727, 5
      %v730 = vor.u32 %v726, %v729
      %v731 = vrot.slane %v730, 4
      %v733 = vshll.u32 %v470, 16
      %v735 = vrot.slane %v733, 5
      %v736 = vsel %vm506, %v731, %v735
      %v737 = vshrl.u32 %v470, 16
      %v739 = vrot.slane %v737, 4
      %v740 = vor.u32 %v739, %v735
      %v741 = vrot.slane %v740, 4
      %v743 = vshll.u32 %v471, 16
      %v745 = vrot.slane %v743, 5
      %v746 = vsel %vm506, %v741, %v745
      %v748 = vshrl.u32 %v472, 16
      %v750 = vrot.slane %v748, 4
      %v751 = vshll.u32 %v472, 16
      %v753 = vrot.slane %v751, 5
      %v754 = vor.u32 %v750, %v753
      %v755 = vrot.slane %v754, 4
      %v757 = vshll.u32 %v473, 16
      %v759 = vrot.slane %v757, 5
      %v760 = vsel %vm506, %v755, %v759
      %v761 = vshrl.u32 %v473, 16
      %v763 = vrot.slane %v761, 4
      %v764 = vor.u32 %v763, %v759
      %v765 = vrot.slane %v764, 4
      %v767 = vshll.u32 %v474, 16
      %v769 = vrot.slane %v767, 5
      %v770 = vsel %vm506, %v765, %v769
      %v772 = vshrl.u32 %v475, 16
      %v774 = vrot.slane %v772, 4
      %v775 = vshll.u32 %v475, 16
      %v777 = vrot.slane %v775, 5
      %v778 = vor.u32 %v774, %v777
      %v779 = vrot.slane %v778, 4
      %v781 = vshll.u32 %v476, 16
      %v783 = vrot.slane %v781, 5
      %v784 = vsel %vm506, %v779, %v783
      %v785 = vshrl.u32 %v476, 16
      %v787 = vrot.slane %v785, 4
      %v788 = vor.u32 %v787, %v783
      %v789 = vrot.slane %v788, 4
      %v791 = vshll.u32 %v477, 16
      %v793 = vrot.slane %v791, 5
      %v794 = vsel %vm506, %v789, %v793
      %v796 = vshrl.u32 %v478, 16
      %v798 = vrot.slane %v796, 4
      %v799 = vshll.u32 %v478, 16
      %v801 = vrot.slane %v799, 5
      %v802 = vor.u32 %v798, %v801
      %v803 = vrot.slane %v802, 4
      %v805 = vshll.u32 %v479, 16
      %v807 = vrot.slane %v805, 5
      %v808 = vsel %vm506, %v803, %v807
      %v809 = vshrl.u32 %v479, 16
      %v811 = vrot.slane %v809, 4
      %v812 = vor.u32 %v811, %v807
      %v813 = vrot.slane %v812, 4
      %v815 = vshll.u32 %v480, 16
      %v817 = vrot.slane %v815, 5
      %v818 = vsel %vm506, %v813, %v817
      %v820 = vshrl.u32 %v481, 16
      %v822 = vrot.slane %v820, 4
      %v823 = vshll.u32 %v481, 16
      %v825 = vrot.slane %v823, 5
      %v826 = vor.u32 %v822, %v825
      %v827 = vrot.slane %v826, 4
      %v829 = vshll.u32 %v482, 16
      %v831 = vrot.slane %v829, 5
      %v832 = vsel %vm506, %v827, %v831
      %v833 = vshrl.u32 %v482, 16
      %v835 = vrot.slane %v833, 4
      %v836 = vor.u32 %v835, %v831
      %v837 = vrot.slane %v836, 4
      %v839 = vshll.u32 %v483, 16
      %v841 = vrot.slane %v839, 5
      %v842 = vsel %vm506, %v837, %v841
      %v844 = vshrl.u32 %v484, 16
      %v846 = vrot.slane %v844, 4
      %v847 = vshll.u32 %v484, 16
      %v849 = vrot.slane %v847, 5
      %v850 = vor.u32 %v846, %v849
      %v851 = vrot.slane %v850, 4
      %v853 = vshll.u32 %v485, 16
      %v855 = vrot.slane %v853, 5
      %v856 = vsel %vm506, %v851, %v855
      %v857 = vshrl.u32 %v485, 16
      %v859 = vrot.slane %v857, 4
      %v860 = vor.u32 %v859, %v855
      %v861 = vrot.slane %v860, 4
      %v863 = vshll.u32 %v486, 16
      %v865 = vrot.slane %v863, 5
      %v866 = vsel %vm506, %v861, %v865
      %v868 = vshrl.u32 %v487, 16
      %v870 = vrot.slane %v868, 4
      %v871 = vshll.u32 %v487, 16
      %v873 = vrot.slane %v871, 5
      %v874 = vor.u32 %v870, %v873
      %v875 = vrot.slane %v874, 4
      %v877 = vshll.u32 %v488, 16
      %v879 = vrot.slane %v877, 5
      %v880 = vsel %vm506, %v875, %v879
      %v881 = vshrl.u32 %v488, 16
      %v883 = vrot.slane %v881, 4
      %v884 = vor.u32 %v883, %v879
      %v885 = vrot.slane %v884, 4
      %v887 = vshll.u32 %v489, 16
      %v889 = vrot.slane %v887, 5
      %v890 = vsel %vm506, %v885, %v889
      %s891 = scalar_lea.vmem %s1, 32
      %v892 = vld [vmem:[%s891] sm:$0xf]
      %v893 = vld [vmem:[%s891 + $0x4] sm:$0xf]
      %v894 = vld [vmem:[%s891 + $0x8] sm:$0xf]
      %v895 = vld [vmem:[%s891 + $0xc] sm:$0xf]
      %v896 = vld [vmem:[%s891 + $0x10] sm:$0xf]
      %v897 = vld [vmem:[%s891 + $0x14] sm:$0xf]
      %v898 = vld [vmem:[%s891 + $0x18] sm:$0xf]
      %v899 = vld [vmem:[%s891 + $0x1c] sm:$0xf]
      %v900 = vunpack.c.l.b16 %v520
      %v901 = vunpack.c.l.b16 %v530
      %v902 = vunpack.c.l.b16 %v544
      %v903 = vunpack.c.l.b16 %v554
      %v904 = vunpack.c.l.b16 %v568
      %v905 = vunpack.c.l.b16 %v578
      %v906 = vunpack.c.l.b16 %v592
      %v907 = vunpack.c.l.b16 %v602
      %v908 = vunpack.c.l.b16 %v616
      %v909 = vunpack.c.l.b16 %v626
      %v910 = vunpack.c.l.b16 %v640
      %v911 = vunpack.c.l.b16 %v650
      %v912 = vunpack.c.l.b16 %v664
      %v913 = vunpack.c.l.b16 %v674
      %v914 = vunpack.c.l.b16 %v688
      %v915 = vunpack.c.l.b16 %v698
      %v916 = vunpack.c.l.b16 %v712
      %v917 = vunpack.c.l.b16 %v722
      %v918 = vunpack.c.l.b16 %v736
      %v919 = vunpack.c.l.b16 %v746
      %v920 = vunpack.c.l.b16 %v760
      %v921 = vunpack.c.l.b16 %v770
      %v922 = vunpack.c.l.b16 %v784
      %v923 = vunpack.c.l.b16 %v794
      %v924 = vunpack.c.l.b16 %v808
      %v925 = vunpack.c.l.b16 %v818
      %v926 = vunpack.c.l.b16 %v832
      %v927 = vunpack.c.l.b16 %v842
      %v928 = vunpack.c.l.b16 %v856
      %v929 = vunpack.c.l.b16 %v866
      %v930 = vunpack.c.l.b16 %v880
      %v931 = vunpack.c.l.b16 %v890
      %v932 = vpack.c.b16 %v901, %v900
      %v933 = vpack.c.b16 %v903, %v902
      %v934 = vpack.c.b16 %v905, %v904
      %v935 = vpack.c.b16 %v907, %v906
      %v936 = vpack.c.b16 %v909, %v908
      %v937 = vpack.c.b16 %v911, %v910
      %v938 = vpack.c.b16 %v913, %v912
      %v939 = vpack.c.b16 %v915, %v914
      %v940 = vpack.c.b16 %v917, %v916
      %v941 = vpack.c.b16 %v919, %v918
      %v942 = vpack.c.b16 %v921, %v920
      %v943 = vpack.c.b16 %v923, %v922
      %v944 = vpack.c.b16 %v925, %v924
      %v945 = vpack.c.b16 %v927, %v926
      %v946 = vpack.c.b16 %v929, %v928
      %v947 = vpack.c.b16 %v931, %v930
      %v956 = vunpack.c.l.b16 %v892
      %v957 = vunpack.c.l.b16 %v893
      %v958 = vunpack.c.l.b16 %v894
      %v959 = vunpack.c.l.b16 %v895
      %v960 = vunpack.c.l.b16 %v896
      %v961 = vunpack.c.l.b16 %v897
      %v962 = vunpack.c.l.b16 %v898
      %v963 = vunpack.c.l.b16 %v899
      %v964 = vpack.c.b16 %v957, %v956
      %v965 = vpack.c.b16 %v959, %v958
      %v966 = vpack.c.b16 %v961, %v960
      %v967 = vpack.c.b16 %v963, %v962
      %vm972 = vcmask 523264
      %v974 = vsel %vm972, %v932, 0
      %v977 = vsel %vm972, %v933, 0
      %v980 = vsel %vm972, %v934, 0
      %v983 = vsel %vm972, %v935, 0
      %v986 = vsel %vm972, %v936, 0
      %v989 = vsel %vm972, %v937, 0
      %v992 = vsel %vm972, %v938, 0
      %v995 = vsel %vm972, %v939, 0
      %v998 = vsel %vm972, %v940, 0
      %v1001 = vsel %vm972, %v941, 0
      %v1004 = vsel %vm972, %v942, 0
      %v1007 = vsel %vm972, %v943, 0
      %v1010 = vsel %vm972, %v944, 0
      %v1013 = vsel %vm972, %v945, 0
      %v1016 = vsel %vm972, %v946, 0
      %v1019 = vsel %vm972, %v947, 0
      %1021 = vmatprep.subr.bf16.mxu0 0
      %1022 = vmatpush1.bf16.msra.mxu0 0
      %1023 = vmatprep.subr.bf16.mxu0 0
      %1024 = vmatpush1.bf16.msra.mxu0 0
      %1025 = vmatprep.subr.bf16.mxu0 0
      %1026 = vmatpush1.bf16.msra.mxu0 0
      %1027 = vmatprep.subr.bf16.mxu0 0
      %1028 = vmatpush1.bf16.msra.mxu0 0
      %1029 = vmatprep.subr.bf16.mxu0 0
      %1030 = vmatpush1.bf16.msra.mxu0 %v967
      %1031 = vmatprep.subr.bf16.mxu0 0
      %1032 = vmatpush1.bf16.msra.mxu0 %v966
      %1033 = vmatprep.subr.bf16.mxu0 0
      %1034 = vmatpush1.bf16.msra.mxu0 %v965
      %1035 = vmatprep.subr.bf16.mxu0 0
      %1036 = vmatpush1.bf16.msra.mxu0 %v964
      %1037 = vmatprep.subr.bf16.mxu0 0
      %1038 = vmatpush2.bf16.msra.mxu0 0
      %1039 = vmatprep.subr.bf16.mxu0 0
      %1040 = vmatpush2.bf16.msra.mxu0 0
      %1041 = vmatprep.subr.bf16.mxu0 0
      %1042 = vmatpush2.bf16.msra.mxu0 0
      %1043 = vmatprep.subr.bf16.mxu0 0
      %1044 = vmatpush2.bf16.msra.mxu0 0
      %1045 = vmatprep.subr.bf16.mxu0 0
      %1046 = vmatpush2.bf16.msra.mxu0 0
      %1047 = vmatprep.subr.bf16.mxu0 0
      %1048 = vmatpush2.bf16.msra.mxu0 0
      %1049 = vmatprep.subr.bf16.mxu0 0
      %1050 = vmatpush2.bf16.msra.mxu0 0
      %1051 = vmatprep.subr.bf16.mxu0 0
      %1052 = vmatpush2.bf16.msra.mxu0 0
      %1053 = vmatprep.mubr.bf16.mxu0 0
      %1054 = vmatmul.mubr.bf16.gmra.mxu0 %v974
      %v1055 = vpop.f32.mrf.mxu0
      %v1056 = vadd.f32 0.0, %v1055
      %v1057 = vpop.f32.mrf.mxu0
      %v1058 = vpop.f32.mrf.mxu0
      %v1059 = vadd.f32 0.0, %v1058
      %v1060 = vpop.f32.mrf.mxu0
      %1061 = vmatprep.mubr.bf16.mxu0 0
      %1062 = vmatmul.mubr.bf16.gmra.mxu0 %v977
      %v1063 = vpop.f32.mrf.mxu0
      %v1064 = vadd.f32 0.0, %v1063
      %v1065 = vpop.f32.mrf.mxu0
      %v1066 = vpop.f32.mrf.mxu0
      %v1067 = vadd.f32 0.0, %v1066
      %v1068 = vpop.f32.mrf.mxu0
      %1069 = vmatprep.mubr.bf16.mxu0 0
      %1070 = vmatmul.mubr.bf16.gmra.mxu0 %v980
      %v1071 = vpop.f32.mrf.mxu0
      %v1072 = vadd.f32 0.0, %v1071
      %v1073 = vpop.f32.mrf.mxu0
      %v1074 = vpop.f32.mrf.mxu0
      %v1075 = vadd.f32 0.0, %v1074
      %v1076 = vpop.f32.mrf.mxu0
      %1077 = vmatprep.mubr.bf16.mxu0 0
      %1078 = vmatmul.mubr.bf16.gmra.mxu0 %v983
      %v1079 = vpop.f32.mrf.mxu0
      %v1080 = vadd.f32 0.0, %v1079
      %v1081 = vpop.f32.mrf.mxu0
      %v1082 = vpop.f32.mrf.mxu0
      %v1083 = vadd.f32 0.0, %v1082
      %v1084 = vpop.f32.mrf.mxu0
      %1085 = vmatprep.mubr.bf16.mxu0 0
      %1086 = vmatmul.mubr.bf16.gmra.mxu0 %v986
      %v1087 = vpop.f32.mrf.mxu0
      %v1088 = vadd.f32 0.0, %v1087
      %v1089 = vpop.f32.mrf.mxu0
      %v1090 = vpop.f32.mrf.mxu0
      %v1091 = vadd.f32 0.0, %v1090
      %v1092 = vpop.f32.mrf.mxu0
      %1093 = vmatprep.mubr.bf16.mxu0 0
      %1094 = vmatmul.mubr.bf16.gmra.mxu0 %v989
      %v1095 = vpop.f32.mrf.mxu0
      %v1096 = vadd.f32 0.0, %v1095
      %v1097 = vpop.f32.mrf.mxu0
      %v1098 = vpop.f32.mrf.mxu0
      %v1099 = vadd.f32 0.0, %v1098
      %v1100 = vpop.f32.mrf.mxu0
      %1101 = vmatprep.mubr.bf16.mxu0 0
      %1102 = vmatmul.mubr.bf16.gmra.mxu0 %v992
      %v1103 = vpop.f32.mrf.mxu0
      %v1104 = vadd.f32 0.0, %v1103
      %v1105 = vpop.f32.mrf.mxu0
      %v1106 = vpop.f32.mrf.mxu0
      %v1107 = vadd.f32 0.0, %v1106
      %v1108 = vpop.f32.mrf.mxu0
      %1109 = vmatprep.mubr.bf16.mxu0 0
      %1110 = vmatmul.mubr.bf16.gmra.mxu0 %v995
      %v1111 = vpop.f32.mrf.mxu0
      %v1112 = vadd.f32 0.0, %v1111
      %v1113 = vpop.f32.mrf.mxu0
      %v1114 = vpop.f32.mrf.mxu0
      %v1115 = vadd.f32 0.0, %v1114
      %v1116 = vpop.f32.mrf.mxu0
      %1117 = vmatprep.mubr.bf16.mxu0 0
      %1118 = vmatmul.mubr.bf16.gmra.mxu0 %v998
      %v1119 = vpop.f32.mrf.mxu0
      %v1120 = vadd.f32 0.0, %v1119
      %v1121 = vpop.f32.mrf.mxu0
      %v1122 = vpop.f32.mrf.mxu0
      %v1123 = vadd.f32 0.0, %v1122
      %v1124 = vpop.f32.mrf.mxu0
      %1125 = vmatprep.mubr.bf16.mxu0 0
      %1126 = vmatmul.mubr.bf16.gmra.mxu0 %v1001
      %v1127 = vpop.f32.mrf.mxu0
      %v1128 = vadd.f32 0.0, %v1127
      %v1129 = vpop.f32.mrf.mxu0
      %v1130 = vpop.f32.mrf.mxu0
      %v1131 = vadd.f32 0.0, %v1130
      %v1132 = vpop.f32.mrf.mxu0
      %1133 = vmatprep.mubr.bf16.mxu0 0
      %1134 = vmatmul.mubr.bf16.gmra.mxu0 %v1004
      %v1135 = vpop.f32.mrf.mxu0
      %v1136 = vadd.f32 0.0, %v1135
      %v1137 = vpop.f32.mrf.mxu0
      %v1138 = vpop.f32.mrf.mxu0
      %v1139 = vadd.f32 0.0, %v1138
      %v1140 = vpop.f32.mrf.mxu0
      %1141 = vmatprep.mubr.bf16.mxu0 0
      %1142 = vmatmul.mubr.bf16.gmra.mxu0 %v1007
      %v1143 = vpop.f32.mrf.mxu0
      %v1144 = vadd.f32 0.0, %v1143
      %v1145 = vpop.f32.mrf.mxu0
      %v1146 = vpop.f32.mrf.mxu0
      %v1147 = vadd.f32 0.0, %v1146
      %v1148 = vpop.f32.mrf.mxu0
      %1149 = vmatprep.mubr.bf16.mxu0 0
      %1150 = vmatmul.mubr.bf16.gmra.mxu0 %v1010
      %v1151 = vpop.f32.mrf.mxu0
      %v1152 = vadd.f32 0.0, %v1151
      %v1153 = vpop.f32.mrf.mxu0
      %v1154 = vpop.f32.mrf.mxu0
      %v1155 = vadd.f32 0.0, %v1154
      %v1156 = vpop.f32.mrf.mxu0
      %1157 = vmatprep.mubr.bf16.mxu0 0
      %1158 = vmatmul.mubr.bf16.gmra.mxu0 %v1013
      %v1159 = vpop.f32.mrf.mxu0
      %v1160 = vadd.f32 0.0, %v1159
      %v1161 = vpop.f32.mrf.mxu0
      %v1162 = vpop.f32.mrf.mxu0
      %v1163 = vadd.f32 0.0, %v1162
      %v1164 = vpop.f32.mrf.mxu0
      %1165 = vmatprep.mubr.bf16.mxu0 0
      %1166 = vmatmul.mubr.bf16.gmra.mxu0 %v1016
      %v1167 = vpop.f32.mrf.mxu0
      %v1168 = vadd.f32 0.0, %v1167
      %v1169 = vpop.f32.mrf.mxu0
      %v1170 = vpop.f32.mrf.mxu0
      %v1171 = vadd.f32 0.0, %v1170
      %v1172 = vpop.f32.mrf.mxu0
      %1173 = vmatprep.mubr.bf16.mxu0 0
      %1174 = vmatmul.mubr.bf16.gmra.mxu0 %v1019
      %v1175 = vpop.f32.mrf.mxu0
      %v1176 = vadd.f32 0.0, %v1175
      %v1177 = vpop.f32.mrf.mxu0
      %v1178 = vpop.f32.mrf.mxu0
      %v1179 = vadd.f32 0.0, %v1178
      %v1180 = vpop.f32.mrf.mxu0
      %1181 = vdwg.mxu0
      %v1214 = vunpack.c.l.b16 %v442
      %v1215 = vunpack.c.l.b16 %v443
      %v1216 = vunpack.c.l.b16 %v445
      %v1217 = vunpack.c.l.b16 %v446
      %v1218 = vunpack.c.l.b16 %v448
      %v1219 = vunpack.c.l.b16 %v449
      %v1220 = vunpack.c.l.b16 %v451
      %v1221 = vunpack.c.l.b16 %v452
      %v1222 = vunpack.c.l.b16 %v454
      %v1223 = vunpack.c.l.b16 %v455
      %v1224 = vunpack.c.l.b16 %v457
      %v1225 = vunpack.c.l.b16 %v458
      %v1226 = vunpack.c.l.b16 %v460
      %v1227 = vunpack.c.l.b16 %v461
      %v1228 = vunpack.c.l.b16 %v463
      %v1229 = vunpack.c.l.b16 %v464
      %v1230 = vunpack.c.l.b16 %v466
      %v1231 = vunpack.c.l.b16 %v467
      %v1232 = vunpack.c.l.b16 %v469
      %v1233 = vunpack.c.l.b16 %v470
      %v1234 = vunpack.c.l.b16 %v472
      %v1235 = vunpack.c.l.b16 %v473
      %v1236 = vunpack.c.l.b16 %v475
      %v1237 = vunpack.c.l.b16 %v476
      %v1238 = vunpack.c.l.b16 %v478
      %v1239 = vunpack.c.l.b16 %v479
      %v1240 = vunpack.c.l.b16 %v481
      %v1241 = vunpack.c.l.b16 %v482
      %v1242 = vunpack.c.l.b16 %v484
      %v1243 = vunpack.c.l.b16 %v485
      %v1244 = vunpack.c.l.b16 %v487
      %v1245 = vunpack.c.l.b16 %v488
      %v1246 = vpack.c.b16 %v1215, %v1214
      %v1247 = vpack.c.b16 %v1217, %v1216
      %v1248 = vpack.c.b16 %v1219, %v1218
      %v1249 = vpack.c.b16 %v1221, %v1220
      %v1250 = vpack.c.b16 %v1223, %v1222
      %v1251 = vpack.c.b16 %v1225, %v1224
      %v1252 = vpack.c.b16 %v1227, %v1226
      %v1253 = vpack.c.b16 %v1229, %v1228
      %v1254 = vpack.c.b16 %v1231, %v1230
      %v1255 = vpack.c.b16 %v1233, %v1232
      %v1256 = vpack.c.b16 %v1235, %v1234
      %v1257 = vpack.c.b16 %v1237, %v1236
      %v1258 = vpack.c.b16 %v1239, %v1238
      %v1259 = vpack.c.b16 %v1241, %v1240
      %v1260 = vpack.c.b16 %v1243, %v1242
      %v1261 = vpack.c.b16 %v1245, %v1244
      %v1270 = vunpack.c.l.b16 %v496
      %v1271 = vunpack.c.l.b16 %v497
      %v1272 = vunpack.c.l.b16 %v498
      %v1273 = vunpack.c.l.b16 %v499
      %v1274 = vunpack.c.l.b16 %v500
      %v1275 = vunpack.c.l.b16 %v501
      %v1276 = vunpack.c.l.b16 %v502
      %v1277 = vunpack.c.l.b16 %v503
      %v1278 = vpack.c.b16 %v1271, %v1270
      %v1279 = vpack.c.b16 %v1273, %v1272
      %v1280 = vpack.c.b16 %v1275, %v1274
      %v1281 = vpack.c.b16 %v1277, %v1276
      %v1287 = vsel %vm972, %v1246, 0
      %v1290 = vsel %vm972, %v1247, 0
      %v1293 = vsel %vm972, %v1248, 0
      %v1296 = vsel %vm972, %v1249, 0
      %v1299 = vsel %vm972, %v1250, 0
      %v1302 = vsel %vm972, %v1251, 0
      %v1305 = vsel %vm972, %v1252, 0
      %v1308 = vsel %vm972, %v1253, 0
      %v1311 = vsel %vm972, %v1254, 0
      %v1314 = vsel %vm972, %v1255, 0
      %v1317 = vsel %vm972, %v1256, 0
      %v1320 = vsel %vm972, %v1257, 0
      %v1323 = vsel %vm972, %v1258, 0
      %v1326 = vsel %vm972, %v1259, 0
      %v1329 = vsel %vm972, %v1260, 0
      %v1332 = vsel %vm972, %v1261, 0
      %1334 = vmatprep.subr.bf16.mxu0 0
      %1335 = vmatpush1.bf16.msra.mxu0 0
      %1336 = vmatprep.subr.bf16.mxu0 0
      %1337 = vmatpush1.bf16.msra.mxu0 0
      %1338 = vmatprep.subr.bf16.mxu0 0
      %1339 = vmatpush1.bf16.msra.mxu0 0
      %1340 = vmatprep.subr.bf16.mxu0 0
      %1341 = vmatpush1.bf16.msra.mxu0 0
      %1342 = vmatprep.subr.bf16.mxu0 0
      %1343 = vmatpush1.bf16.msra.mxu0 %v1281
      %1344 = vmatprep.subr.bf16.mxu0 0
      %1345 = vmatpush1.bf16.msra.mxu0 %v1280
      %1346 = vmatprep.subr.bf16.mxu0 0
      %1347 = vmatpush1.bf16.msra.mxu0 %v1279
      %1348 = vmatprep.subr.bf16.mxu0 0
      %1349 = vmatpush1.bf16.msra.mxu0 %v1278
      %1350 = vmatprep.subr.bf16.mxu0 0
      %1351 = vmatpush2.bf16.msra.mxu0 0
      %1352 = vmatprep.subr.bf16.mxu0 0
      %1353 = vmatpush2.bf16.msra.mxu0 0
      %1354 = vmatprep.subr.bf16.mxu0 0
      %1355 = vmatpush2.bf16.msra.mxu0 0
      %1356 = vmatprep.subr.bf16.mxu0 0
      %1357 = vmatpush2.bf16.msra.mxu0 0
      %1358 = vmatprep.subr.bf16.mxu0 0
      %1359 = vmatpush2.bf16.msra.mxu0 0
      %1360 = vmatprep.subr.bf16.mxu0 0
      %1361 = vmatpush2.bf16.msra.mxu0 0
      %1362 = vmatprep.subr.bf16.mxu0 0
      %1363 = vmatpush2.bf16.msra.mxu0 0
      %1364 = vmatprep.subr.bf16.mxu0 0
      %1365 = vmatpush2.bf16.msra.mxu0 0
      %1366 = vmatprep.mubr.bf16.mxu0 0
      %1367 = vmatmul.mubr.bf16.gmra.mxu0 %v1287
      %v1368 = vpop.f32.mrf.mxu0
      %v1369 = vadd.f32 %v1056, %v1368
      %v1370 = vpop.f32.mrf.mxu0
      %v1371 = vpop.f32.mrf.mxu0
      %v1372 = vadd.f32 %v1059, %v1371
      %v1373 = vpop.f32.mrf.mxu0
      %1374 = vmatprep.mubr.bf16.mxu0 0
      %1375 = vmatmul.mubr.bf16.gmra.mxu0 %v1290
      %v1376 = vpop.f32.mrf.mxu0
      %v1377 = vadd.f32 %v1064, %v1376
      %v1378 = vpop.f32.mrf.mxu0
      %v1379 = vpop.f32.mrf.mxu0
      %v1380 = vadd.f32 %v1067, %v1379
      %v1381 = vpop.f32.mrf.mxu0
      %1382 = vmatprep.mubr.bf16.mxu0 0
      %1383 = vmatmul.mubr.bf16.gmra.mxu0 %v1293
      %v1384 = vpop.f32.mrf.mxu0
      %v1385 = vadd.f32 %v1072, %v1384
      %v1386 = vpop.f32.mrf.mxu0
      %v1387 = vpop.f32.mrf.mxu0
      %v1388 = vadd.f32 %v1075, %v1387
      %v1389 = vpop.f32.mrf.mxu0
      %1390 = vmatprep.mubr.bf16.mxu0 0
      %1391 = vmatmul.mubr.bf16.gmra.mxu0 %v1296
      %v1392 = vpop.f32.mrf.mxu0
      %v1393 = vadd.f32 %v1080, %v1392
      %v1394 = vpop.f32.mrf.mxu0
      %v1395 = vpop.f32.mrf.mxu0
      %v1396 = vadd.f32 %v1083, %v1395
      %v1397 = vpop.f32.mrf.mxu0
      %1398 = vmatprep.mubr.bf16.mxu0 0
      %1399 = vmatmul.mubr.bf16.gmra.mxu0 %v1299
      %v1400 = vpop.f32.mrf.mxu0
      %v1401 = vadd.f32 %v1088, %v1400
      %v1402 = vpop.f32.mrf.mxu0
      %v1403 = vpop.f32.mrf.mxu0
      %v1404 = vadd.f32 %v1091, %v1403
      %v1405 = vpop.f32.mrf.mxu0
      %1406 = vmatprep.mubr.bf16.mxu0 0
      %1407 = vmatmul.mubr.bf16.gmra.mxu0 %v1302
      %v1408 = vpop.f32.mrf.mxu0
      %v1409 = vadd.f32 %v1096, %v1408
      %v1410 = vpop.f32.mrf.mxu0
      %v1411 = vpop.f32.mrf.mxu0
      %v1412 = vadd.f32 %v1099, %v1411
      %v1413 = vpop.f32.mrf.mxu0
      %1414 = vmatprep.mubr.bf16.mxu0 0
      %1415 = vmatmul.mubr.bf16.gmra.mxu0 %v1305
      %v1416 = vpop.f32.mrf.mxu0
      %v1417 = vadd.f32 %v1104, %v1416
      %v1418 = vpop.f32.mrf.mxu0
      %v1419 = vpop.f32.mrf.mxu0
      %v1420 = vadd.f32 %v1107, %v1419
      %v1421 = vpop.f32.mrf.mxu0
      %1422 = vmatprep.mubr.bf16.mxu0 0
      %1423 = vmatmul.mubr.bf16.gmra.mxu0 %v1308
      %v1424 = vpop.f32.mrf.mxu0
      %v1425 = vadd.f32 %v1112, %v1424
      %v1426 = vpop.f32.mrf.mxu0
      %v1427 = vpop.f32.mrf.mxu0
      %v1428 = vadd.f32 %v1115, %v1427
      %v1429 = vpop.f32.mrf.mxu0
      %1430 = vmatprep.mubr.bf16.mxu0 0
      %1431 = vmatmul.mubr.bf16.gmra.mxu0 %v1311
      %v1432 = vpop.f32.mrf.mxu0
      %v1433 = vadd.f32 %v1120, %v1432
      %v1434 = vpop.f32.mrf.mxu0
      %v1435 = vpop.f32.mrf.mxu0
      %v1436 = vadd.f32 %v1123, %v1435
      %v1437 = vpop.f32.mrf.mxu0
      %1438 = vmatprep.mubr.bf16.mxu0 0
      %1439 = vmatmul.mubr.bf16.gmra.mxu0 %v1314
      %v1440 = vpop.f32.mrf.mxu0
      %v1441 = vadd.f32 %v1128, %v1440
      %v1442 = vpop.f32.mrf.mxu0
      %v1443 = vpop.f32.mrf.mxu0
      %v1444 = vadd.f32 %v1131, %v1443
      %v1445 = vpop.f32.mrf.mxu0
      %1446 = vmatprep.mubr.bf16.mxu0 0
      %1447 = vmatmul.mubr.bf16.gmra.mxu0 %v1317
      %v1448 = vpop.f32.mrf.mxu0
      %v1449 = vadd.f32 %v1136, %v1448
      %v1450 = vpop.f32.mrf.mxu0
      %v1451 = vpop.f32.mrf.mxu0
      %v1452 = vadd.f32 %v1139, %v1451
      %v1453 = vpop.f32.mrf.mxu0
      %1454 = vmatprep.mubr.bf16.mxu0 0
      %1455 = vmatmul.mubr.bf16.gmra.mxu0 %v1320
      %v1456 = vpop.f32.mrf.mxu0
      %v1457 = vadd.f32 %v1144, %v1456
      %v1458 = vpop.f32.mrf.mxu0
      %v1459 = vpop.f32.mrf.mxu0
      %v1460 = vadd.f32 %v1147, %v1459
      %v1461 = vpop.f32.mrf.mxu0
      %1462 = vmatprep.mubr.bf16.mxu0 0
      %1463 = vmatmul.mubr.bf16.gmra.mxu0 %v1323
      %v1464 = vpop.f32.mrf.mxu0
      %v1465 = vadd.f32 %v1152, %v1464
      %v1466 = vpop.f32.mrf.mxu0
      %v1467 = vpop.f32.mrf.mxu0
      %v1468 = vadd.f32 %v1155, %v1467
      %v1469 = vpop.f32.mrf.mxu0
      %1470 = vmatprep.mubr.bf16.mxu0 0
      %1471 = vmatmul.mubr.bf16.gmra.mxu0 %v1326
      %v1472 = vpop.f32.mrf.mxu0
      %v1473 = vadd.f32 %v1160, %v1472
      %v1474 = vpop.f32.mrf.mxu0
      %v1475 = vpop.f32.mrf.mxu0
      %v1476 = vadd.f32 %v1163, %v1475
      %v1477 = vpop.f32.mrf.mxu0
      %1478 = vmatprep.mubr.bf16.mxu0 0
      %1479 = vmatmul.mubr.bf16.gmra.mxu0 %v1329
      %v1480 = vpop.f32.mrf.mxu0
      %v1481 = vadd.f32 %v1168, %v1480
      %v1482 = vpop.f32.mrf.mxu0
      %v1483 = vpop.f32.mrf.mxu0
      %v1484 = vadd.f32 %v1171, %v1483
      %v1485 = vpop.f32.mrf.mxu0
      %1486 = vmatprep.mubr.bf16.mxu0 0
      %1487 = vmatmul.mubr.bf16.gmra.mxu0 %v1332
      %v1488 = vpop.f32.mrf.mxu0
      %v1489 = vadd.f32 %v1176, %v1488
      %v1490 = vpop.f32.mrf.mxu0
      %v1491 = vpop.f32.mrf.mxu0
      %v1492 = vadd.f32 %v1179, %v1491
      %v1493 = vpop.f32.mrf.mxu0
      %1494 = vdwg.mxu0
      %vm1511 = vcmask 1042432
      %vm1512 = vcmask 1046532
      %vm1513 = vmor %vm1511, %vm1512
      %v1514 = vrot.slane %v442, 5
      %v1515 = vrot.slane %v1514, 4
      %v1516 = vrot.slane %v443, 5
      %v1517 = vsel %vm1513, %v1515, %v1516
      %v1518 = vrot.slane %v1516, 4
      %v1519 = vrot.slane %v444, 5
      %v1520 = vsel %vm1513, %v1518, %v1519
      %v1521 = vrot.slane %v445, 5
      %v1522 = vrot.slane %v1521, 4
      %v1523 = vrot.slane %v446, 5
      %v1524 = vsel %vm1513, %v1522, %v1523
      %v1525 = vrot.slane %v1523, 4
      %v1526 = vrot.slane %v447, 5
      %v1527 = vsel %vm1513, %v1525, %v1526
      %v1528 = vrot.slane %v448, 5
      %v1529 = vrot.slane %v1528, 4
      %v1530 = vrot.slane %v449, 5
      %v1531 = vsel %vm1513, %v1529, %v1530
      %v1532 = vrot.slane %v1530, 4
      %v1533 = vrot.slane %v450, 5
      %v1534 = vsel %vm1513, %v1532, %v1533
      %v1535 = vrot.slane %v451, 5
      %v1536 = vrot.slane %v1535, 4
      %v1537 = vrot.slane %v452, 5
      %v1538 = vsel %vm1513, %v1536, %v1537
      %v1539 = vrot.slane %v1537, 4
      %v1540 = vrot.slane %v453, 5
      %v1541 = vsel %vm1513, %v1539, %v1540
      %v1542 = vrot.slane %v454, 5
      %v1543 = vrot.slane %v1542, 4
      %v1544 = vrot.slane %v455, 5
      %v1545 = vsel %vm1513, %v1543, %v1544
      %v1546 = vrot.slane %v1544, 4
      %v1547 = vrot.slane %v456, 5
      %v1548 = vsel %vm1513, %v1546, %v1547
      %v1549 = vrot.slane %v457, 5
      %v1550 = vrot.slane %v1549, 4
      %v1551 = vrot.slane %v458, 5
      %v1552 = vsel %vm1513, %v1550, %v1551
      %v1553 = vrot.slane %v1551, 4
      %v1554 = vrot.slane %v459, 5
      %v1555 = vsel %vm1513, %v1553, %v1554
      %v1556 = vrot.slane %v460, 5
      %v1557 = vrot.slane %v1556, 4
      %v1558 = vrot.slane %v461, 5
      %v1559 = vsel %vm1513, %v1557, %v1558
      %v1560 = vrot.slane %v1558, 4
      %v1561 = vrot.slane %v462, 5
      %v1562 = vsel %vm1513, %v1560, %v1561
      %v1563 = vrot.slane %v463, 5
      %v1564 = vrot.slane %v1563, 4
      %v1565 = vrot.slane %v464, 5
      %v1566 = vsel %vm1513, %v1564, %v1565
      %v1567 = vrot.slane %v1565, 4
      %v1568 = vrot.slane %v465, 5
      %v1569 = vsel %vm1513, %v1567, %v1568
      %v1570 = vrot.slane %v466, 5
      %v1571 = vrot.slane %v1570, 4
      %v1572 = vrot.slane %v467, 5
      %v1573 = vsel %vm1513, %v1571, %v1572
      %v1574 = vrot.slane %v1572, 4
      %v1575 = vrot.slane %v468, 5
      %v1576 = vsel %vm1513, %v1574, %v1575
      %v1577 = vrot.slane %v469, 5
      %v1578 = vrot.slane %v1577, 4
      %v1579 = vrot.slane %v470, 5
      %v1580 = vsel %vm1513, %v1578, %v1579
      %v1581 = vrot.slane %v1579, 4
      %v1582 = vrot.slane %v471, 5
      %v1583 = vsel %vm1513, %v1581, %v1582
      %v1584 = vrot.slane %v472, 5
      %v1585 = vrot.slane %v1584, 4
      %v1586 = vrot.slane %v473, 5
      %v1587 = vsel %vm1513, %v1585, %v1586
      %v1588 = vrot.slane %v1586, 4
      %v1589 = vrot.slane %v474, 5
      %v1590 = vsel %vm1513, %v1588, %v1589
      %v1591 = vrot.slane %v475, 5
      %v1592 = vrot.slane %v1591, 4
      %v1593 = vrot.slane %v476, 5
      %v1594 = vsel %vm1513, %v1592, %v1593
      %v1595 = vrot.slane %v1593, 4
      %v1596 = vrot.slane %v477, 5
      %v1597 = vsel %vm1513, %v1595, %v1596
      %v1598 = vrot.slane %v478, 5
      %v1599 = vrot.slane %v1598, 4
      %v1600 = vrot.slane %v479, 5
      %v1601 = vsel %vm1513, %v1599, %v1600
      %v1602 = vrot.slane %v1600, 4
      %v1603 = vrot.slane %v480, 5
      %v1604 = vsel %vm1513, %v1602, %v1603
      %v1605 = vrot.slane %v481, 5
      %v1606 = vrot.slane %v1605, 4
      %v1607 = vrot.slane %v482, 5
      %v1608 = vsel %vm1513, %v1606, %v1607
      %v1609 = vrot.slane %v1607, 4
      %v1610 = vrot.slane %v483, 5
      %v1611 = vsel %vm1513, %v1609, %v1610
      %v1612 = vrot.slane %v484, 5
      %v1613 = vrot.slane %v1612, 4
      %v1614 = vrot.slane %v485, 5
      %v1615 = vsel %vm1513, %v1613, %v1614
      %v1616 = vrot.slane %v1614, 4
      %v1617 = vrot.slane %v486, 5
      %v1618 = vsel %vm1513, %v1616, %v1617
      %v1619 = vrot.slane %v487, 5
      %v1620 = vrot.slane %v1619, 4
      %v1621 = vrot.slane %v488, 5
      %v1622 = vsel %vm1513, %v1620, %v1621
      %v1623 = vrot.slane %v1621, 4
      %v1624 = vrot.slane %v489, 5
      %v1625 = vsel %vm1513, %v1623, %v1624
      %s1626 = scalar_lea.vmem %s1, 64
      %v1627 = vld [vmem:[%s1626] sm:$0xf]
      %v1628 = vld [vmem:[%s1626 + $0x4] sm:$0xf]
      %v1629 = vld [vmem:[%s1626 + $0x8] sm:$0xf]
      %v1630 = vld [vmem:[%s1626 + $0xc] sm:$0xf]
      %v1631 = vld [vmem:[%s1626 + $0x10] sm:$0xf]
      %v1632 = vld [vmem:[%s1626 + $0x14] sm:$0xf]
      %v1633 = vld [vmem:[%s1626 + $0x18] sm:$0xf]
      %v1634 = vld [vmem:[%s1626 + $0x1c] sm:$0xf]
      %v1635 = vunpack.c.l.b16 %v1517
      %v1636 = vunpack.c.l.b16 %v1520
      %v1637 = vunpack.c.l.b16 %v1524
      %v1638 = vunpack.c.l.b16 %v1527
      %v1639 = vunpack.c.l.b16 %v1531
      %v1640 = vunpack.c.l.b16 %v1534
      %v1641 = vunpack.c.l.b16 %v1538
      %v1642 = vunpack.c.l.b16 %v1541
      %v1643 = vunpack.c.l.b16 %v1545
      %v1644 = vunpack.c.l.b16 %v1548
      %v1645 = vunpack.c.l.b16 %v1552
      %v1646 = vunpack.c.l.b16 %v1555
      %v1647 = vunpack.c.l.b16 %v1559
      %v1648 = vunpack.c.l.b16 %v1562
      %v1649 = vunpack.c.l.b16 %v1566
      %v1650 = vunpack.c.l.b16 %v1569
      %v1651 = vunpack.c.l.b16 %v1573
      %v1652 = vunpack.c.l.b16 %v1576
      %v1653 = vunpack.c.l.b16 %v1580
      %v1654 = vunpack.c.l.b16 %v1583
      %v1655 = vunpack.c.l.b16 %v1587
      %v1656 = vunpack.c.l.b16 %v1590
      %v1657 = vunpack.c.l.b16 %v1594
      %v1658 = vunpack.c.l.b16 %v1597
      %v1659 = vunpack.c.l.b16 %v1601
      %v1660 = vunpack.c.l.b16 %v1604
      %v1661 = vunpack.c.l.b16 %v1608
      %v1662 = vunpack.c.l.b16 %v1611
      %v1663 = vunpack.c.l.b16 %v1615
      %v1664 = vunpack.c.l.b16 %v1618
      %v1665 = vunpack.c.l.b16 %v1622
      %v1666 = vunpack.c.l.b16 %v1625
      %v1667 = vpack.c.b16 %v1636, %v1635
      %v1668 = vpack.c.b16 %v1638, %v1637
      %v1669 = vpack.c.b16 %v1640, %v1639
      %v1670 = vpack.c.b16 %v1642, %v1641
      %v1671 = vpack.c.b16 %v1644, %v1643
      %v1672 = vpack.c.b16 %v1646, %v1645
      %v1673 = vpack.c.b16 %v1648, %v1647
      %v1674 = vpack.c.b16 %v1650, %v1649
      %v1675 = vpack.c.b16 %v1652, %v1651
      %v1676 = vpack.c.b16 %v1654, %v1653
      %v1677 = vpack.c.b16 %v1656, %v1655
      %v1678 = vpack.c.b16 %v1658, %v1657
      %v1679 = vpack.c.b16 %v1660, %v1659
      %v1680 = vpack.c.b16 %v1662, %v1661
      %v1681 = vpack.c.b16 %v1664, %v1663
      %v1682 = vpack.c.b16 %v1666, %v1665
      %v1691 = vunpack.c.l.b16 %v1627
      %v1692 = vunpack.c.l.b16 %v1628
      %v1693 = vunpack.c.l.b16 %v1629
      %v1694 = vunpack.c.l.b16 %v1630
      %v1695 = vunpack.c.l.b16 %v1631
      %v1696 = vunpack.c.l.b16 %v1632
      %v1697 = vunpack.c.l.b16 %v1633
      %v1698 = vunpack.c.l.b16 %v1634
      %v1699 = vpack.c.b16 %v1692, %v1691
      %v1700 = vpack.c.b16 %v1694, %v1693
      %v1701 = vpack.c.b16 %v1696, %v1695
      %v1702 = vpack.c.b16 %v1698, %v1697
      %v1708 = vsel %vm972, %v1667, 0
      %v1711 = vsel %vm972, %v1668, 0
      %v1714 = vsel %vm972, %v1669, 0
      %v1717 = vsel %vm972, %v1670, 0
      %v1720 = vsel %vm972, %v1671, 0
      %v1723 = vsel %vm972, %v1672, 0
      %v1726 = vsel %vm972, %v1673, 0
      %v1729 = vsel %vm972, %v1674, 0
      %v1732 = vsel %vm972, %v1675, 0
      %v1735 = vsel %vm972, %v1676, 0
      %v1738 = vsel %vm972, %v1677, 0
      %v1741 = vsel %vm972, %v1678, 0
      %v1744 = vsel %vm972, %v1679, 0
      %v1747 = vsel %vm972, %v1680, 0
      %v1750 = vsel %vm972, %v1681, 0
      %v1753 = vsel %vm972, %v1682, 0
      %1755 = vmatprep.subr.bf16.mxu0 0
      %1756 = vmatpush1.bf16.msra.mxu0 0
      %1757 = vmatprep.subr.bf16.mxu0 0
      %1758 = vmatpush1.bf16.msra.mxu0 0
      %1759 = vmatprep.subr.bf16.mxu0 0
      %1760 = vmatpush1.bf16.msra.mxu0 0
      %1761 = vmatprep.subr.bf16.mxu0 0
      %1762 = vmatpush1.bf16.msra.mxu0 0
      %1763 = vmatprep.subr.bf16.mxu0 0
      %1764 = vmatpush1.bf16.msra.mxu0 %v1702
      %1765 = vmatprep.subr.bf16.mxu0 0
      %1766 = vmatpush1.bf16.msra.mxu0 %v1701
      %1767 = vmatprep.subr.bf16.mxu0 0
      %1768 = vmatpush1.bf16.msra.mxu0 %v1700
      %1769 = vmatprep.subr.bf16.mxu0 0
      %1770 = vmatpush1.bf16.msra.mxu0 %v1699
      %1771 = vmatprep.subr.bf16.mxu0 0
      %1772 = vmatpush2.bf16.msra.mxu0 0
      %1773 = vmatprep.subr.bf16.mxu0 0
      %1774 = vmatpush2.bf16.msra.mxu0 0
      %1775 = vmatprep.subr.bf16.mxu0 0
      %1776 = vmatpush2.bf16.msra.mxu0 0
      %1777 = vmatprep.subr.bf16.mxu0 0
      %1778 = vmatpush2.bf16.msra.mxu0 0
      %1779 = vmatprep.subr.bf16.mxu0 0
      %1780 = vmatpush2.bf16.msra.mxu0 0
      %1781 = vmatprep.subr.bf16.mxu0 0
      %1782 = vmatpush2.bf16.msra.mxu0 0
      %1783 = vmatprep.subr.bf16.mxu0 0
      %1784 = vmatpush2.bf16.msra.mxu0 0
      %1785 = vmatprep.subr.bf16.mxu0 0
      %1786 = vmatpush2.bf16.msra.mxu0 0
      %1787 = vmatprep.mubr.bf16.mxu0 0
      %1788 = vmatmul.mubr.bf16.gmra.mxu0 %v1708
      %v1789 = vpop.f32.mrf.mxu0
      %v1790 = vadd.f32 0.0, %v1789
      %v1791 = vpop.f32.mrf.mxu0
      %v1792 = vpop.f32.mrf.mxu0
      %v1793 = vadd.f32 0.0, %v1792
      %v1794 = vpop.f32.mrf.mxu0
      %1795 = vmatprep.mubr.bf16.mxu0 0
      %1796 = vmatmul.mubr.bf16.gmra.mxu0 %v1711
      %v1797 = vpop.f32.mrf.mxu0
      %v1798 = vadd.f32 0.0, %v1797
      %v1799 = vpop.f32.mrf.mxu0
      %v1800 = vpop.f32.mrf.mxu0
      %v1801 = vadd.f32 0.0, %v1800
      %v1802 = vpop.f32.mrf.mxu0
      %1803 = vmatprep.mubr.bf16.mxu0 0
      %1804 = vmatmul.mubr.bf16.gmra.mxu0 %v1714
      %v1805 = vpop.f32.mrf.mxu0
      %v1806 = vadd.f32 0.0, %v1805
      %v1807 = vpop.f32.mrf.mxu0
      %v1808 = vpop.f32.mrf.mxu0
      %v1809 = vadd.f32 0.0, %v1808
      %v1810 = vpop.f32.mrf.mxu0
      %1811 = vmatprep.mubr.bf16.mxu0 0
      %1812 = vmatmul.mubr.bf16.gmra.mxu0 %v1717
      %v1813 = vpop.f32.mrf.mxu0
      %v1814 = vadd.f32 0.0, %v1813
      %v1815 = vpop.f32.mrf.mxu0
      %v1816 = vpop.f32.mrf.mxu0
      %v1817 = vadd.f32 0.0, %v1816
      %v1818 = vpop.f32.mrf.mxu0
      %1819 = vmatprep.mubr.bf16.mxu0 0
      %1820 = vmatmul.mubr.bf16.gmra.mxu0 %v1720
      %v1821 = vpop.f32.mrf.mxu0
      %v1822 = vadd.f32 0.0, %v1821
      %v1823 = vpop.f32.mrf.mxu0
      %v1824 = vpop.f32.mrf.mxu0
      %v1825 = vadd.f32 0.0, %v1824
      %v1826 = vpop.f32.mrf.mxu0
      %1827 = vmatprep.mubr.bf16.mxu0 0
      %1828 = vmatmul.mubr.bf16.gmra.mxu0 %v1723
      %v1829 = vpop.f32.mrf.mxu0
      %v1830 = vadd.f32 0.0, %v1829
      %v1831 = vpop.f32.mrf.mxu0
      %v1832 = vpop.f32.mrf.mxu0
      %v1833 = vadd.f32 0.0, %v1832
      %v1834 = vpop.f32.mrf.mxu0
      %1835 = vmatprep.mubr.bf16.mxu0 0
      %1836 = vmatmul.mubr.bf16.gmra.mxu0 %v1726
      %v1837 = vpop.f32.mrf.mxu0
      %v1838 = vadd.f32 0.0, %v1837
      %v1839 = vpop.f32.mrf.mxu0
      %v1840 = vpop.f32.mrf.mxu0
      %v1841 = vadd.f32 0.0, %v1840
      %v1842 = vpop.f32.mrf.mxu0
      %1843 = vmatprep.mubr.bf16.mxu0 0
      %1844 = vmatmul.mubr.bf16.gmra.mxu0 %v1729
      %v1845 = vpop.f32.mrf.mxu0
      %v1846 = vadd.f32 0.0, %v1845
      %v1847 = vpop.f32.mrf.mxu0
      %v1848 = vpop.f32.mrf.mxu0
      %v1849 = vadd.f32 0.0, %v1848
      %v1850 = vpop.f32.mrf.mxu0
      %1851 = vmatprep.mubr.bf16.mxu0 0
      %1852 = vmatmul.mubr.bf16.gmra.mxu0 %v1732
      %v1853 = vpop.f32.mrf.mxu0
      %v1854 = vadd.f32 0.0, %v1853
      %v1855 = vpop.f32.mrf.mxu0
      %v1856 = vpop.f32.mrf.mxu0
      %v1857 = vadd.f32 0.0, %v1856
      %v1858 = vpop.f32.mrf.mxu0
      %1859 = vmatprep.mubr.bf16.mxu0 0
      %1860 = vmatmul.mubr.bf16.gmra.mxu0 %v1735
      %v1861 = vpop.f32.mrf.mxu0
      %v1862 = vadd.f32 0.0, %v1861
      %v1863 = vpop.f32.mrf.mxu0
      %v1864 = vpop.f32.mrf.mxu0
      %v1865 = vadd.f32 0.0, %v1864
      %v1866 = vpop.f32.mrf.mxu0
      %1867 = vmatprep.mubr.bf16.mxu0 0
      %1868 = vmatmul.mubr.bf16.gmra.mxu0 %v1738
      %v1869 = vpop.f32.mrf.mxu0
      %v1870 = vadd.f32 0.0, %v1869
      %v1871 = vpop.f32.mrf.mxu0
      %v1872 = vpop.f32.mrf.mxu0
      %v1873 = vadd.f32 0.0, %v1872
      %v1874 = vpop.f32.mrf.mxu0
      %1875 = vmatprep.mubr.bf16.mxu0 0
      %1876 = vmatmul.mubr.bf16.gmra.mxu0 %v1741
      %v1877 = vpop.f32.mrf.mxu0
      %v1878 = vadd.f32 0.0, %v1877
      %v1879 = vpop.f32.mrf.mxu0
      %v1880 = vpop.f32.mrf.mxu0
      %v1881 = vadd.f32 0.0, %v1880
      %v1882 = vpop.f32.mrf.mxu0
      %1883 = vmatprep.mubr.bf16.mxu0 0
      %1884 = vmatmul.mubr.bf16.gmra.mxu0 %v1744
      %v1885 = vpop.f32.mrf.mxu0
      %v1886 = vadd.f32 0.0, %v1885
      %v1887 = vpop.f32.mrf.mxu0
      %v1888 = vpop.f32.mrf.mxu0
      %v1889 = vadd.f32 0.0, %v1888
      %v1890 = vpop.f32.mrf.mxu0
      %1891 = vmatprep.mubr.bf16.mxu0 0
      %1892 = vmatmul.mubr.bf16.gmra.mxu0 %v1747
      %v1893 = vpop.f32.mrf.mxu0
      %v1894 = vadd.f32 0.0, %v1893
      %v1895 = vpop.f32.mrf.mxu0
      %v1896 = vpop.f32.mrf.mxu0
      %v1897 = vadd.f32 0.0, %v1896
      %v1898 = vpop.f32.mrf.mxu0
      %1899 = vmatprep.mubr.bf16.mxu0 0
      %1900 = vmatmul.mubr.bf16.gmra.mxu0 %v1750
      %v1901 = vpop.f32.mrf.mxu0
      %v1902 = vadd.f32 0.0, %v1901
      %v1903 = vpop.f32.mrf.mxu0
      %v1904 = vpop.f32.mrf.mxu0
      %v1905 = vadd.f32 0.0, %v1904
      %v1906 = vpop.f32.mrf.mxu0
      %1907 = vmatprep.mubr.bf16.mxu0 0
      %1908 = vmatmul.mubr.bf16.gmra.mxu0 %v1753
      %v1909 = vpop.f32.mrf.mxu0
      %v1910 = vadd.f32 0.0, %v1909
      %v1911 = vpop.f32.mrf.mxu0
      %v1912 = vpop.f32.mrf.mxu0
      %v1913 = vadd.f32 0.0, %v1912
      %v1914 = vpop.f32.mrf.mxu0
      %1915 = vdwg.mxu0
      %v1916 = vadd.f32 %v1369, %v1790
      %v1917 = vadd.f32 %v1372, %v1793
      %v1918 = vadd.f32 %v1377, %v1798
      %v1919 = vadd.f32 %v1380, %v1801
      %v1920 = vadd.f32 %v1385, %v1806
      %v1921 = vadd.f32 %v1388, %v1809
      %v1922 = vadd.f32 %v1393, %v1814
      %v1923 = vadd.f32 %v1396, %v1817
      %v1924 = vadd.f32 %v1401, %v1822
      %v1925 = vadd.f32 %v1404, %v1825
      %v1926 = vadd.f32 %v1409, %v1830
      %v1927 = vadd.f32 %v1412, %v1833
      %v1928 = vadd.f32 %v1417, %v1838
      %v1929 = vadd.f32 %v1420, %v1841
      %v1930 = vadd.f32 %v1425, %v1846
      %v1931 = vadd.f32 %v1428, %v1849
      %v1932 = vadd.f32 %v1433, %v1854
      %v1933 = vadd.f32 %v1436, %v1857
      %v1934 = vadd.f32 %v1441, %v1862
      %v1935 = vadd.f32 %v1444, %v1865
      %v1936 = vadd.f32 %v1449, %v1870
      %v1937 = vadd.f32 %v1452, %v1873
      %v1938 = vadd.f32 %v1457, %v1878
      %v1939 = vadd.f32 %v1460, %v1881
      %v1940 = vadd.f32 %v1465, %v1886
      %v1941 = vadd.f32 %v1468, %v1889
      %v1942 = vadd.f32 %v1473, %v1894
      %v1943 = vadd.f32 %v1476, %v1897
      %v1944 = vadd.f32 %v1481, %v1902
      %v1945 = vadd.f32 %v1484, %v1905
      %v1946 = vadd.f32 %v1489, %v1910
      %v1947 = vadd.f32 %v1492, %v1913
      %s1948 = scalar_lea.vmem %s1, 96
      %v1949 = vld [vmem:[%s1948] sm:$0xf]
      %v1950 = vld [vmem:[%s1948 + $0x4] sm:$0xf]
      %v1951 = vld [vmem:[%s1948 + $0x8] sm:$0xf]
      %v1952 = vld [vmem:[%s1948 + $0xc] sm:$0xf]
      %v1953 = vld [vmem:[%s1948 + $0x10] sm:$0xf]
      %v1954 = vld [vmem:[%s1948 + $0x14] sm:$0xf]
      %v1955 = vld [vmem:[%s1948 + $0x18] sm:$0xf]
      %v1956 = vld [vmem:[%s1948 + $0x1c] sm:$0xf]
      %v1959 = vunpack.c.l.b16 %v490
      %v1960 = vunpack.c.l.b16 %v491
      %v1961 = vpack.c.b16 %v1960, %v1959
      %v1970 = vunpack.c.l.b16 %v1949
      %v1971 = vunpack.c.l.b16 %v1950
      %v1972 = vunpack.c.l.b16 %v1951
      %v1973 = vunpack.c.l.b16 %v1952
      %v1974 = vunpack.c.l.b16 %v1953
      %v1975 = vunpack.c.l.b16 %v1954
      %v1976 = vunpack.c.l.b16 %v1955
      %v1977 = vunpack.c.l.b16 %v1956
      %v1978 = vpack.c.b16 %v1971, %v1970
      %v1979 = vpack.c.b16 %v1973, %v1972
      %v1980 = vpack.c.b16 %v1975, %v1974
      %v1981 = vpack.c.b16 %v1977, %v1976
      %v1987 = vsel %vm972, %v1961, 0
      %1989 = vmatprep.subr.bf16.mxu0 0
      %1990 = vmatpush1.bf16.msra.mxu0 0
      %1991 = vmatprep.subr.bf16.mxu0 0
      %1992 = vmatpush1.bf16.msra.mxu0 0
      %1993 = vmatprep.subr.bf16.mxu0 0
      %1994 = vmatpush1.bf16.msra.mxu0 0
      %1995 = vmatprep.subr.bf16.mxu0 0
      %1996 = vmatpush1.bf16.msra.mxu0 0
      %1997 = vmatprep.subr.bf16.mxu0 0
      %1998 = vmatpush1.bf16.msra.mxu0 %v1981
      %1999 = vmatprep.subr.bf16.mxu0 0
      %2000 = vmatpush1.bf16.msra.mxu0 %v1980
      %2001 = vmatprep.subr.bf16.mxu0 0
      %2002 = vmatpush1.bf16.msra.mxu0 %v1979
      %2003 = vmatprep.subr.bf16.mxu0 0
      %2004 = vmatpush1.bf16.msra.mxu0 %v1978
      %2005 = vmatprep.subr.bf16.mxu0 0
      %2006 = vmatpush2.bf16.msra.mxu0 0
      %2007 = vmatprep.subr.bf16.mxu0 0
      %2008 = vmatpush2.bf16.msra.mxu0 0
      %2009 = vmatprep.subr.bf16.mxu0 0
      %2010 = vmatpush2.bf16.msra.mxu0 0
      %2011 = vmatprep.subr.bf16.mxu0 0
      %2012 = vmatpush2.bf16.msra.mxu0 0
      %2013 = vmatprep.subr.bf16.mxu0 0
      %2014 = vmatpush2.bf16.msra.mxu0 0
      %2015 = vmatprep.subr.bf16.mxu0 0
      %2016 = vmatpush2.bf16.msra.mxu0 0
      %2017 = vmatprep.subr.bf16.mxu0 0
      %2018 = vmatpush2.bf16.msra.mxu0 0
      %2019 = vmatprep.subr.bf16.mxu0 0
      %2020 = vmatpush2.bf16.msra.mxu0 0
      %2021 = vmatprep.mubr.bf16.mxu0 0
      %2022 = vmatmul.mubr.bf16.gmra.mxu0 %v1290
      %v2023 = vpop.f32.mrf.mxu0
      %v2024 = vadd.f32 0.0, %v2023
      %v2025 = vpop.f32.mrf.mxu0
      %v2026 = vpop.f32.mrf.mxu0
      %v2027 = vadd.f32 0.0, %v2026
      %v2028 = vpop.f32.mrf.mxu0
      %2029 = vmatprep.mubr.bf16.mxu0 0
      %2030 = vmatmul.mubr.bf16.gmra.mxu0 %v1293
      %v2031 = vpop.f32.mrf.mxu0
      %v2032 = vadd.f32 0.0, %v2031
      %v2033 = vpop.f32.mrf.mxu0
      %v2034 = vpop.f32.mrf.mxu0
      %v2035 = vadd.f32 0.0, %v2034
      %v2036 = vpop.f32.mrf.mxu0
      %2037 = vmatprep.mubr.bf16.mxu0 0
      %2038 = vmatmul.mubr.bf16.gmra.mxu0 %v1296
      %v2039 = vpop.f32.mrf.mxu0
      %v2040 = vadd.f32 0.0, %v2039
      %v2041 = vpop.f32.mrf.mxu0
      %v2042 = vpop.f32.mrf.mxu0
      %v2043 = vadd.f32 0.0, %v2042
      %v2044 = vpop.f32.mrf.mxu0
      %2045 = vmatprep.mubr.bf16.mxu0 0
      %2046 = vmatmul.mubr.bf16.gmra.mxu0 %v1299
      %v2047 = vpop.f32.mrf.mxu0
      %v2048 = vadd.f32 0.0, %v2047
      %v2049 = vpop.f32.mrf.mxu0
      %v2050 = vpop.f32.mrf.mxu0
      %v2051 = vadd.f32 0.0, %v2050
      %v2052 = vpop.f32.mrf.mxu0
      %2053 = vmatprep.mubr.bf16.mxu0 0
      %2054 = vmatmul.mubr.bf16.gmra.mxu0 %v1302
      %v2055 = vpop.f32.mrf.mxu0
      %v2056 = vadd.f32 0.0, %v2055
      %v2057 = vpop.f32.mrf.mxu0
      %v2058 = vpop.f32.mrf.mxu0
      %v2059 = vadd.f32 0.0, %v2058
      %v2060 = vpop.f32.mrf.mxu0
      %2061 = vmatprep.mubr.bf16.mxu0 0
      %2062 = vmatmul.mubr.bf16.gmra.mxu0 %v1305
      %v2063 = vpop.f32.mrf.mxu0
      %v2064 = vadd.f32 0.0, %v2063
      %v2065 = vpop.f32.mrf.mxu0
      %v2066 = vpop.f32.mrf.mxu0
      %v2067 = vadd.f32 0.0, %v2066
      %v2068 = vpop.f32.mrf.mxu0
      %2069 = vmatprep.mubr.bf16.mxu0 0
      %2070 = vmatmul.mubr.bf16.gmra.mxu0 %v1308
      %v2071 = vpop.f32.mrf.mxu0
      %v2072 = vadd.f32 0.0, %v2071
      %v2073 = vpop.f32.mrf.mxu0
      %v2074 = vpop.f32.mrf.mxu0
      %v2075 = vadd.f32 0.0, %v2074
      %v2076 = vpop.f32.mrf.mxu0
      %2077 = vmatprep.mubr.bf16.mxu0 0
      %2078 = vmatmul.mubr.bf16.gmra.mxu0 %v1311
      %v2079 = vpop.f32.mrf.mxu0
      %v2080 = vadd.f32 0.0, %v2079
      %v2081 = vpop.f32.mrf.mxu0
      %v2082 = vpop.f32.mrf.mxu0
      %v2083 = vadd.f32 0.0, %v2082
      %v2084 = vpop.f32.mrf.mxu0
      %2085 = vmatprep.mubr.bf16.mxu0 0
      %2086 = vmatmul.mubr.bf16.gmra.mxu0 %v1314
      %v2087 = vpop.f32.mrf.mxu0
      %v2088 = vadd.f32 0.0, %v2087
      %v2089 = vpop.f32.mrf.mxu0
      %v2090 = vpop.f32.mrf.mxu0
      %v2091 = vadd.f32 0.0, %v2090
      %v2092 = vpop.f32.mrf.mxu0
      %2093 = vmatprep.mubr.bf16.mxu0 0
      %2094 = vmatmul.mubr.bf16.gmra.mxu0 %v1317
      %v2095 = vpop.f32.mrf.mxu0
      %v2096 = vadd.f32 0.0, %v2095
      %v2097 = vpop.f32.mrf.mxu0
      %v2098 = vpop.f32.mrf.mxu0
      %v2099 = vadd.f32 0.0, %v2098
      %v2100 = vpop.f32.mrf.mxu0
      %2101 = vmatprep.mubr.bf16.mxu0 0
      %2102 = vmatmul.mubr.bf16.gmra.mxu0 %v1320
      %v2103 = vpop.f32.mrf.mxu0
      %v2104 = vadd.f32 0.0, %v2103
      %v2105 = vpop.f32.mrf.mxu0
      %v2106 = vpop.f32.mrf.mxu0
      %v2107 = vadd.f32 0.0, %v2106
      %v2108 = vpop.f32.mrf.mxu0
      %2109 = vmatprep.mubr.bf16.mxu0 0
      %2110 = vmatmul.mubr.bf16.gmra.mxu0 %v1323
      %v2111 = vpop.f32.mrf.mxu0
      %v2112 = vadd.f32 0.0, %v2111
      %v2113 = vpop.f32.mrf.mxu0
      %v2114 = vpop.f32.mrf.mxu0
      %v2115 = vadd.f32 0.0, %v2114
      %v2116 = vpop.f32.mrf.mxu0
      %2117 = vmatprep.mubr.bf16.mxu0 0
      %2118 = vmatmul.mubr.bf16.gmra.mxu0 %v1326
      %v2119 = vpop.f32.mrf.mxu0
      %v2120 = vadd.f32 0.0, %v2119
      %v2121 = vpop.f32.mrf.mxu0
      %v2122 = vpop.f32.mrf.mxu0
      %v2123 = vadd.f32 0.0, %v2122
      %v2124 = vpop.f32.mrf.mxu0
      %2125 = vmatprep.mubr.bf16.mxu0 0
      %2126 = vmatmul.mubr.bf16.gmra.mxu0 %v1329
      %v2127 = vpop.f32.mrf.mxu0
      %v2128 = vadd.f32 0.0, %v2127
      %v2129 = vpop.f32.mrf.mxu0
      %v2130 = vpop.f32.mrf.mxu0
      %v2131 = vadd.f32 0.0, %v2130
      %v2132 = vpop.f32.mrf.mxu0
      %2133 = vmatprep.mubr.bf16.mxu0 0
      %2134 = vmatmul.mubr.bf16.gmra.mxu0 %v1332
      %v2135 = vpop.f32.mrf.mxu0
      %v2136 = vadd.f32 0.0, %v2135
      %v2137 = vpop.f32.mrf.mxu0
      %v2138 = vpop.f32.mrf.mxu0
      %v2139 = vadd.f32 0.0, %v2138
      %v2140 = vpop.f32.mrf.mxu0
      %2141 = vmatprep.mubr.bf16.mxu0 0
      %2142 = vmatmul.mubr.bf16.gmra.mxu0 %v1987
      %v2143 = vpop.f32.mrf.mxu0
      %v2144 = vadd.f32 0.0, %v2143
      %v2145 = vpop.f32.mrf.mxu0
      %v2146 = vpop.f32.mrf.mxu0
      %v2147 = vadd.f32 0.0, %v2146
      %v2148 = vpop.f32.mrf.mxu0
      %2149 = vdwg.mxu0
      %v2150 = vadd.f32 %v1916, %v2024
      %v2151 = vadd.f32 %v1917, %v2027
      %v2152 = vadd.f32 %v1918, %v2032
      %v2153 = vadd.f32 %v1919, %v2035
      %v2154 = vadd.f32 %v1920, %v2040
      %v2155 = vadd.f32 %v1921, %v2043
      %v2156 = vadd.f32 %v1922, %v2048
      %v2157 = vadd.f32 %v1923, %v2051
      %v2158 = vadd.f32 %v1924, %v2056
      %v2159 = vadd.f32 %v1925, %v2059
      %v2160 = vadd.f32 %v1926, %v2064
      %v2161 = vadd.f32 %v1927, %v2067
      %v2162 = vadd.f32 %v1928, %v2072
      %v2163 = vadd.f32 %v1929, %v2075
      %v2164 = vadd.f32 %v1930, %v2080
      %v2165 = vadd.f32 %v1931, %v2083
      %v2166 = vadd.f32 %v1932, %v2088
      %v2167 = vadd.f32 %v1933, %v2091
      %v2168 = vadd.f32 %v1934, %v2096
      %v2169 = vadd.f32 %v1935, %v2099
      %v2170 = vadd.f32 %v1936, %v2104
      %v2171 = vadd.f32 %v1937, %v2107
      %v2172 = vadd.f32 %v1938, %v2112
      %v2173 = vadd.f32 %v1939, %v2115
      %v2174 = vadd.f32 %v1940, %v2120
      %v2175 = vadd.f32 %v1941, %v2123
      %v2176 = vadd.f32 %v1942, %v2128
      %v2177 = vadd.f32 %v1943, %v2131
      %v2178 = vadd.f32 %v1944, %v2136
      %v2179 = vadd.f32 %v1945, %v2139
      %v2180 = vadd.f32 %v1946, %v2144
      %v2181 = vadd.f32 %v1947, %v2147
      %v2183 = vshrl.u32 %v490, 16
      %v2185 = vrot.slane %v2183, 4
      %v2186 = vshll.u32 %v490, 16
      %v2188 = vrot.slane %v2186, 5
      %v2189 = vor.u32 %v2185, %v2188
      %v2190 = vrot.slane %v2189, 4
      %v2192 = vshll.u32 %v491, 16
      %v2194 = vrot.slane %v2192, 5
      %v2195 = vsel %vm506, %v2190, %v2194
      %v2196 = vshrl.u32 %v491, 16
      %v2198 = vrot.slane %v2196, 4
      %v2199 = vor.u32 %v2198, %v2194
      %v2200 = vrot.slane %v2199, 4
      %v2202 = vshll.u32 %v492, 16
      %v2204 = vrot.slane %v2202, 5
      %v2205 = vsel %vm506, %v2200, %v2204
      %s2206 = scalar_lea.vmem %s1, 128
      %v2207 = vld [vmem:[%s2206] sm:$0xf]
      %v2208 = vld [vmem:[%s2206 + $0x4] sm:$0xf]
      %v2209 = vld [vmem:[%s2206 + $0x8] sm:$0xf]
      %v2210 = vld [vmem:[%s2206 + $0xc] sm:$0xf]
      %v2211 = vld [vmem:[%s2206 + $0x10] sm:$0xf]
      %v2212 = vld [vmem:[%s2206 + $0x14] sm:$0xf]
      %v2213 = vld [vmem:[%s2206 + $0x18] sm:$0xf]
      %v2214 = vld [vmem:[%s2206 + $0x1c] sm:$0xf]
      %v2215 = vunpack.c.l.b16 %v2195
      %v2216 = vunpack.c.l.b16 %v2205
      %v2217 = vpack.c.b16 %v2216, %v2215
      %v2226 = vunpack.c.l.b16 %v2207
      %v2227 = vunpack.c.l.b16 %v2208
      %v2228 = vunpack.c.l.b16 %v2209
      %v2229 = vunpack.c.l.b16 %v2210
      %v2230 = vunpack.c.l.b16 %v2211
      %v2231 = vunpack.c.l.b16 %v2212
      %v2232 = vunpack.c.l.b16 %v2213
      %v2233 = vunpack.c.l.b16 %v2214
      %v2234 = vpack.c.b16 %v2227, %v2226
      %v2235 = vpack.c.b16 %v2229, %v2228
      %v2236 = vpack.c.b16 %v2231, %v2230
      %v2237 = vpack.c.b16 %v2233, %v2232
      %v2243 = vsel %vm972, %v2217, 0
      %2245 = vmatprep.subr.bf16.mxu0 0
      %2246 = vmatpush1.bf16.msra.mxu0 0
      %2247 = vmatprep.subr.bf16.mxu0 0
      %2248 = vmatpush1.bf16.msra.mxu0 0
      %2249 = vmatprep.subr.bf16.mxu0 0
      %2250 = vmatpush1.bf16.msra.mxu0 0
      %2251 = vmatprep.subr.bf16.mxu0 0
      %2252 = vmatpush1.bf16.msra.mxu0 0
      %2253 = vmatprep.subr.bf16.mxu0 0
      %2254 = vmatpush1.bf16.msra.mxu0 %v2237
      %2255 = vmatprep.subr.bf16.mxu0 0
      %2256 = vmatpush1.bf16.msra.mxu0 %v2236
      %2257 = vmatprep.subr.bf16.mxu0 0
      %2258 = vmatpush1.bf16.msra.mxu0 %v2235
      %2259 = vmatprep.subr.bf16.mxu0 0
      %2260 = vmatpush1.bf16.msra.mxu0 %v2234
      %2261 = vmatprep.subr.bf16.mxu0 0
      %2262 = vmatpush2.bf16.msra.mxu0 0
      %2263 = vmatprep.subr.bf16.mxu0 0
      %2264 = vmatpush2.bf16.msra.mxu0 0
      %2265 = vmatprep.subr.bf16.mxu0 0
      %2266 = vmatpush2.bf16.msra.mxu0 0
      %2267 = vmatprep.subr.bf16.mxu0 0
      %2268 = vmatpush2.bf16.msra.mxu0 0
      %2269 = vmatprep.subr.bf16.mxu0 0
      %2270 = vmatpush2.bf16.msra.mxu0 0
      %2271 = vmatprep.subr.bf16.mxu0 0
      %2272 = vmatpush2.bf16.msra.mxu0 0
      %2273 = vmatprep.subr.bf16.mxu0 0
      %2274 = vmatpush2.bf16.msra.mxu0 0
      %2275 = vmatprep.subr.bf16.mxu0 0
      %2276 = vmatpush2.bf16.msra.mxu0 0
      %2277 = vmatprep.mubr.bf16.mxu0 0
      %2278 = vmatmul.mubr.bf16.gmra.mxu0 %v977
      %v2279 = vpop.f32.mrf.mxu0
      %v2280 = vadd.f32 0.0, %v2279
      %v2281 = vpop.f32.mrf.mxu0
      %v2282 = vpop.f32.mrf.mxu0
      %v2283 = vadd.f32 0.0, %v2282
      %v2284 = vpop.f32.mrf.mxu0
      %2285 = vmatprep.mubr.bf16.mxu0 0
      %2286 = vmatmul.mubr.bf16.gmra.mxu0 %v980
      %v2287 = vpop.f32.mrf.mxu0
      %v2288 = vadd.f32 0.0, %v2287
      %v2289 = vpop.f32.mrf.mxu0
      %v2290 = vpop.f32.mrf.mxu0
      %v2291 = vadd.f32 0.0, %v2290
      %v2292 = vpop.f32.mrf.mxu0
      %2293 = vmatprep.mubr.bf16.mxu0 0
      %2294 = vmatmul.mubr.bf16.gmra.mxu0 %v983
      %v2295 = vpop.f32.mrf.mxu0
      %v2296 = vadd.f32 0.0, %v2295
      %v2297 = vpop.f32.mrf.mxu0
      %v2298 = vpop.f32.mrf.mxu0
      %v2299 = vadd.f32 0.0, %v2298
      %v2300 = vpop.f32.mrf.mxu0
      %2301 = vmatprep.mubr.bf16.mxu0 0
      %2302 = vmatmul.mubr.bf16.gmra.mxu0 %v986
      %v2303 = vpop.f32.mrf.mxu0
      %v2304 = vadd.f32 0.0, %v2303
      %v2305 = vpop.f32.mrf.mxu0
      %v2306 = vpop.f32.mrf.mxu0
      %v2307 = vadd.f32 0.0, %v2306
      %v2308 = vpop.f32.mrf.mxu0
      %2309 = vmatprep.mubr.bf16.mxu0 0
      %2310 = vmatmul.mubr.bf16.gmra.mxu0 %v989
      %v2311 = vpop.f32.mrf.mxu0
      %v2312 = vadd.f32 0.0, %v2311
      %v2313 = vpop.f32.mrf.mxu0
      %v2314 = vpop.f32.mrf.mxu0
      %v2315 = vadd.f32 0.0, %v2314
      %v2316 = vpop.f32.mrf.mxu0
      %2317 = vmatprep.mubr.bf16.mxu0 0
      %2318 = vmatmul.mubr.bf16.gmra.mxu0 %v992
      %v2319 = vpop.f32.mrf.mxu0
      %v2320 = vadd.f32 0.0, %v2319
      %v2321 = vpop.f32.mrf.mxu0
      %v2322 = vpop.f32.mrf.mxu0
      %v2323 = vadd.f32 0.0, %v2322
      %v2324 = vpop.f32.mrf.mxu0
      %2325 = vmatprep.mubr.bf16.mxu0 0
      %2326 = vmatmul.mubr.bf16.gmra.mxu0 %v995
      %v2327 = vpop.f32.mrf.mxu0
      %v2328 = vadd.f32 0.0, %v2327
      %v2329 = vpop.f32.mrf.mxu0
      %v2330 = vpop.f32.mrf.mxu0
      %v2331 = vadd.f32 0.0, %v2330
      %v2332 = vpop.f32.mrf.mxu0
      %2333 = vmatprep.mubr.bf16.mxu0 0
      %2334 = vmatmul.mubr.bf16.gmra.mxu0 %v998
      %v2335 = vpop.f32.mrf.mxu0
      %v2336 = vadd.f32 0.0, %v2335
      %v2337 = vpop.f32.mrf.mxu0
      %v2338 = vpop.f32.mrf.mxu0
      %v2339 = vadd.f32 0.0, %v2338
      %v2340 = vpop.f32.mrf.mxu0
      %2341 = vmatprep.mubr.bf16.mxu0 0
      %2342 = vmatmul.mubr.bf16.gmra.mxu0 %v1001
      %v2343 = vpop.f32.mrf.mxu0
      %v2344 = vadd.f32 0.0, %v2343
      %v2345 = vpop.f32.mrf.mxu0
      %v2346 = vpop.f32.mrf.mxu0
      %v2347 = vadd.f32 0.0, %v2346
      %v2348 = vpop.f32.mrf.mxu0
      %2349 = vmatprep.mubr.bf16.mxu0 0
      %2350 = vmatmul.mubr.bf16.gmra.mxu0 %v1004
      %v2351 = vpop.f32.mrf.mxu0
      %v2352 = vadd.f32 0.0, %v2351
      %v2353 = vpop.f32.mrf.mxu0
      %v2354 = vpop.f32.mrf.mxu0
      %v2355 = vadd.f32 0.0, %v2354
      %v2356 = vpop.f32.mrf.mxu0
      %2357 = vmatprep.mubr.bf16.mxu0 0
      %2358 = vmatmul.mubr.bf16.gmra.mxu0 %v1007
      %v2359 = vpop.f32.mrf.mxu0
      %v2360 = vadd.f32 0.0, %v2359
      %v2361 = vpop.f32.mrf.mxu0
      %v2362 = vpop.f32.mrf.mxu0
      %v2363 = vadd.f32 0.0, %v2362
      %v2364 = vpop.f32.mrf.mxu0
      %2365 = vmatprep.mubr.bf16.mxu0 0
      %2366 = vmatmul.mubr.bf16.gmra.mxu0 %v1010
      %v2367 = vpop.f32.mrf.mxu0
      %v2368 = vadd.f32 0.0, %v2367
      %v2369 = vpop.f32.mrf.mxu0
      %v2370 = vpop.f32.mrf.mxu0
      %v2371 = vadd.f32 0.0, %v2370
      %v2372 = vpop.f32.mrf.mxu0
      %2373 = vmatprep.mubr.bf16.mxu0 0
      %2374 = vmatmul.mubr.bf16.gmra.mxu0 %v1013
      %v2375 = vpop.f32.mrf.mxu0
      %v2376 = vadd.f32 0.0, %v2375
      %v2377 = vpop.f32.mrf.mxu0
      %v2378 = vpop.f32.mrf.mxu0
      %v2379 = vadd.f32 0.0, %v2378
      %v2380 = vpop.f32.mrf.mxu0
      %2381 = vmatprep.mubr.bf16.mxu0 0
      %2382 = vmatmul.mubr.bf16.gmra.mxu0 %v1016
      %v2383 = vpop.f32.mrf.mxu0
      %v2384 = vadd.f32 0.0, %v2383
      %v2385 = vpop.f32.mrf.mxu0
      %v2386 = vpop.f32.mrf.mxu0
      %v2387 = vadd.f32 0.0, %v2386
      %v2388 = vpop.f32.mrf.mxu0
      %2389 = vmatprep.mubr.bf16.mxu0 0
      %2390 = vmatmul.mubr.bf16.gmra.mxu0 %v1019
      %v2391 = vpop.f32.mrf.mxu0
      %v2392 = vadd.f32 0.0, %v2391
      %v2393 = vpop.f32.mrf.mxu0
      %v2394 = vpop.f32.mrf.mxu0
      %v2395 = vadd.f32 0.0, %v2394
      %v2396 = vpop.f32.mrf.mxu0
      %2397 = vmatprep.mubr.bf16.mxu0 0
      %2398 = vmatmul.mubr.bf16.gmra.mxu0 %v2243
      %v2399 = vpop.f32.mrf.mxu0
      %v2400 = vadd.f32 0.0, %v2399
      %v2401 = vpop.f32.mrf.mxu0
      %v2402 = vpop.f32.mrf.mxu0
      %v2403 = vadd.f32 0.0, %v2402
      %v2404 = vpop.f32.mrf.mxu0
      %2405 = vdwg.mxu0
      %v2406 = vadd.f32 %v2150, %v2280
      %v2407 = vadd.f32 %v2151, %v2283
      %v2408 = vadd.f32 %v2152, %v2288
      %v2409 = vadd.f32 %v2153, %v2291
      %v2410 = vadd.f32 %v2154, %v2296
      %v2411 = vadd.f32 %v2155, %v2299
      %v2412 = vadd.f32 %v2156, %v2304
      %v2413 = vadd.f32 %v2157, %v2307
      %v2414 = vadd.f32 %v2158, %v2312
      %v2415 = vadd.f32 %v2159, %v2315
      %v2416 = vadd.f32 %v2160, %v2320
      %v2417 = vadd.f32 %v2161, %v2323
      %v2418 = vadd.f32 %v2162, %v2328
      %v2419 = vadd.f32 %v2163, %v2331
      %v2420 = vadd.f32 %v2164, %v2336
      %v2421 = vadd.f32 %v2165, %v2339
      %v2422 = vadd.f32 %v2166, %v2344
      %v2423 = vadd.f32 %v2167, %v2347
      %v2424 = vadd.f32 %v2168, %v2352
      %v2425 = vadd.f32 %v2169, %v2355
      %v2426 = vadd.f32 %v2170, %v2360
      %v2427 = vadd.f32 %v2171, %v2363
      %v2428 = vadd.f32 %v2172, %v2368
      %v2429 = vadd.f32 %v2173, %v2371
      %v2430 = vadd.f32 %v2174, %v2376
      %v2431 = vadd.f32 %v2175, %v2379
      %v2432 = vadd.f32 %v2176, %v2384
      %v2433 = vadd.f32 %v2177, %v2387
      %v2434 = vadd.f32 %v2178, %v2392
      %v2435 = vadd.f32 %v2179, %v2395
      %v2436 = vadd.f32 %v2180, %v2400
      %v2437 = vadd.f32 %v2181, %v2403
      %v2439 = vrot.slane %v490, 5
      %v2440 = vrot.slane %v2439, 4
      %v2441 = vrot.slane %v491, 5
      %v2442 = vsel %vm1513, %v2440, %v2441
      %v2443 = vrot.slane %v2441, 4
      %v2444 = vrot.slane %v492, 5
      %v2445 = vsel %vm1513, %v2443, %v2444
      %s2446 = scalar_lea.vmem %s1, 160
      %v2447 = vld [vmem:[%s2446] sm:$0xf]
      %v2448 = vld [vmem:[%s2446 + $0x4] sm:$0xf]
      %v2449 = vld [vmem:[%s2446 + $0x8] sm:$0xf]
      %v2450 = vld [vmem:[%s2446 + $0xc] sm:$0xf]
      %v2451 = vld [vmem:[%s2446 + $0x10] sm:$0xf]
      %v2452 = vld [vmem:[%s2446 + $0x14] sm:$0xf]
      %v2453 = vld [vmem:[%s2446 + $0x18] sm:$0xf]
      %v2454 = vld [vmem:[%s2446 + $0x1c] sm:$0xf]
      %v2455 = vunpack.c.l.b16 %v2442
      %v2456 = vunpack.c.l.b16 %v2445
      %v2457 = vpack.c.b16 %v2456, %v2455
      %v2466 = vunpack.c.l.b16 %v2447
      %v2467 = vunpack.c.l.b16 %v2448
      %v2468 = vunpack.c.l.b16 %v2449
      %v2469 = vunpack.c.l.b16 %v2450
      %v2470 = vunpack.c.l.b16 %v2451
      %v2471 = vunpack.c.l.b16 %v2452
      %v2472 = vunpack.c.l.b16 %v2453
      %v2473 = vunpack.c.l.b16 %v2454
      %v2474 = vpack.c.b16 %v2467, %v2466
      %v2475 = vpack.c.b16 %v2469, %v2468
      %v2476 = vpack.c.b16 %v2471, %v2470
      %v2477 = vpack.c.b16 %v2473, %v2472
      %v2483 = vsel %vm972, %v2457, 0
      %2485 = vmatprep.subr.bf16.mxu0 0
      %2486 = vmatpush1.bf16.msra.mxu0 0
      %2487 = vmatprep.subr.bf16.mxu0 0
      %2488 = vmatpush1.bf16.msra.mxu0 0
      %2489 = vmatprep.subr.bf16.mxu0 0
      %2490 = vmatpush1.bf16.msra.mxu0 0
      %2491 = vmatprep.subr.bf16.mxu0 0
      %2492 = vmatpush1.bf16.msra.mxu0 0
      %2493 = vmatprep.subr.bf16.mxu0 0
      %2494 = vmatpush1.bf16.msra.mxu0 %v2477
      %2495 = vmatprep.subr.bf16.mxu0 0
      %2496 = vmatpush1.bf16.msra.mxu0 %v2476
      %2497 = vmatprep.subr.bf16.mxu0 0
      %2498 = vmatpush1.bf16.msra.mxu0 %v2475
      %2499 = vmatprep.subr.bf16.mxu0 0
      %2500 = vmatpush1.bf16.msra.mxu0 %v2474
      %2501 = vmatprep.subr.bf16.mxu0 0
      %2502 = vmatpush2.bf16.msra.mxu0 0
      %2503 = vmatprep.subr.bf16.mxu0 0
      %2504 = vmatpush2.bf16.msra.mxu0 0
      %2505 = vmatprep.subr.bf16.mxu0 0
      %2506 = vmatpush2.bf16.msra.mxu0 0
      %2507 = vmatprep.subr.bf16.mxu0 0
      %2508 = vmatpush2.bf16.msra.mxu0 0
      %2509 = vmatprep.subr.bf16.mxu0 0
      %2510 = vmatpush2.bf16.msra.mxu0 0
      %2511 = vmatprep.subr.bf16.mxu0 0
      %2512 = vmatpush2.bf16.msra.mxu0 0
      %2513 = vmatprep.subr.bf16.mxu0 0
      %2514 = vmatpush2.bf16.msra.mxu0 0
      %2515 = vmatprep.subr.bf16.mxu0 0
      %2516 = vmatpush2.bf16.msra.mxu0 0
      %2517 = vmatprep.mubr.bf16.mxu0 0
      %2518 = vmatmul.mubr.bf16.gmra.mxu0 %v1711
      %v2519 = vpop.f32.mrf.mxu0
      %v2520 = vadd.f32 0.0, %v2519
      %v2521 = vpop.f32.mrf.mxu0
      %v2522 = vpop.f32.mrf.mxu0
      %v2523 = vadd.f32 0.0, %v2522
      %v2524 = vpop.f32.mrf.mxu0
      %2525 = vmatprep.mubr.bf16.mxu0 0
      %2526 = vmatmul.mubr.bf16.gmra.mxu0 %v1714
      %v2527 = vpop.f32.mrf.mxu0
      %v2528 = vadd.f32 0.0, %v2527
      %v2529 = vpop.f32.mrf.mxu0
      %v2530 = vpop.f32.mrf.mxu0
      %v2531 = vadd.f32 0.0, %v2530
      %v2532 = vpop.f32.mrf.mxu0
      %2533 = vmatprep.mubr.bf16.mxu0 0
      %2534 = vmatmul.mubr.bf16.gmra.mxu0 %v1717
      %v2535 = vpop.f32.mrf.mxu0
      %v2536 = vadd.f32 0.0, %v2535
      %v2537 = vpop.f32.mrf.mxu0
      %v2538 = vpop.f32.mrf.mxu0
      %v2539 = vadd.f32 0.0, %v2538
      %v2540 = vpop.f32.mrf.mxu0
      %2541 = vmatprep.mubr.bf16.mxu0 0
      %2542 = vmatmul.mubr.bf16.gmra.mxu0 %v1720
      %v2543 = vpop.f32.mrf.mxu0
      %v2544 = vadd.f32 0.0, %v2543
      %v2545 = vpop.f32.mrf.mxu0
      %v2546 = vpop.f32.mrf.mxu0
      %v2547 = vadd.f32 0.0, %v2546
      %v2548 = vpop.f32.mrf.mxu0
      %2549 = vmatprep.mubr.bf16.mxu0 0
      %2550 = vmatmul.mubr.bf16.gmra.mxu0 %v1723
      %v2551 = vpop.f32.mrf.mxu0
      %v2552 = vadd.f32 0.0, %v2551
      %v2553 = vpop.f32.mrf.mxu0
      %v2554 = vpop.f32.mrf.mxu0
      %v2555 = vadd.f32 0.0, %v2554
      %v2556 = vpop.f32.mrf.mxu0
      %2557 = vmatprep.mubr.bf16.mxu0 0
      %2558 = vmatmul.mubr.bf16.gmra.mxu0 %v1726
      %v2559 = vpop.f32.mrf.mxu0
      %v2560 = vadd.f32 0.0, %v2559
      %v2561 = vpop.f32.mrf.mxu0
      %v2562 = vpop.f32.mrf.mxu0
      %v2563 = vadd.f32 0.0, %v2562
      %v2564 = vpop.f32.mrf.mxu0
      %2565 = vmatprep.mubr.bf16.mxu0 0
      %2566 = vmatmul.mubr.bf16.gmra.mxu0 %v1729
      %v2567 = vpop.f32.mrf.mxu0
      %v2568 = vadd.f32 0.0, %v2567
      %v2569 = vpop.f32.mrf.mxu0
      %v2570 = vpop.f32.mrf.mxu0
      %v2571 = vadd.f32 0.0, %v2570
      %v2572 = vpop.f32.mrf.mxu0
      %2573 = vmatprep.mubr.bf16.mxu0 0
      %2574 = vmatmul.mubr.bf16.gmra.mxu0 %v1732
      %v2575 = vpop.f32.mrf.mxu0
      %v2576 = vadd.f32 0.0, %v2575
      %v2577 = vpop.f32.mrf.mxu0
      %v2578 = vpop.f32.mrf.mxu0
      %v2579 = vadd.f32 0.0, %v2578
      %v2580 = vpop.f32.mrf.mxu0
      %2581 = vmatprep.mubr.bf16.mxu0 0
      %2582 = vmatmul.mubr.bf16.gmra.mxu0 %v1735
      %v2583 = vpop.f32.mrf.mxu0
      %v2584 = vadd.f32 0.0, %v2583
      %v2585 = vpop.f32.mrf.mxu0
      %v2586 = vpop.f32.mrf.mxu0
      %v2587 = vadd.f32 0.0, %v2586
      %v2588 = vpop.f32.mrf.mxu0
      %2589 = vmatprep.mubr.bf16.mxu0 0
      %2590 = vmatmul.mubr.bf16.gmra.mxu0 %v1738
      %v2591 = vpop.f32.mrf.mxu0
      %v2592 = vadd.f32 0.0, %v2591
      %v2593 = vpop.f32.mrf.mxu0
      %v2594 = vpop.f32.mrf.mxu0
      %v2595 = vadd.f32 0.0, %v2594
      %v2596 = vpop.f32.mrf.mxu0
      %2597 = vmatprep.mubr.bf16.mxu0 0
      %2598 = vmatmul.mubr.bf16.gmra.mxu0 %v1741
      %v2599 = vpop.f32.mrf.mxu0
      %v2600 = vadd.f32 0.0, %v2599
      %v2601 = vpop.f32.mrf.mxu0
      %v2602 = vpop.f32.mrf.mxu0
      %v2603 = vadd.f32 0.0, %v2602
      %v2604 = vpop.f32.mrf.mxu0
      %2605 = vmatprep.mubr.bf16.mxu0 0
      %2606 = vmatmul.mubr.bf16.gmra.mxu0 %v1744
      %v2607 = vpop.f32.mrf.mxu0
      %v2608 = vadd.f32 0.0, %v2607
      %v2609 = vpop.f32.mrf.mxu0
      %v2610 = vpop.f32.mrf.mxu0
      %v2611 = vadd.f32 0.0, %v2610
      %v2612 = vpop.f32.mrf.mxu0
      %2613 = vmatprep.mubr.bf16.mxu0 0
      %2614 = vmatmul.mubr.bf16.gmra.mxu0 %v1747
      %v2615 = vpop.f32.mrf.mxu0
      %v2616 = vadd.f32 0.0, %v2615
      %v2617 = vpop.f32.mrf.mxu0
      %v2618 = vpop.f32.mrf.mxu0
      %v2619 = vadd.f32 0.0, %v2618
      %v2620 = vpop.f32.mrf.mxu0
      %2621 = vmatprep.mubr.bf16.mxu0 0
      %2622 = vmatmul.mubr.bf16.gmra.mxu0 %v1750
      %v2623 = vpop.f32.mrf.mxu0
      %v2624 = vadd.f32 0.0, %v2623
      %v2625 = vpop.f32.mrf.mxu0
      %v2626 = vpop.f32.mrf.mxu0
      %v2627 = vadd.f32 0.0, %v2626
      %v2628 = vpop.f32.mrf.mxu0
      %2629 = vmatprep.mubr.bf16.mxu0 0
      %2630 = vmatmul.mubr.bf16.gmra.mxu0 %v1753
      %v2631 = vpop.f32.mrf.mxu0
      %v2632 = vadd.f32 0.0, %v2631
      %v2633 = vpop.f32.mrf.mxu0
      %v2634 = vpop.f32.mrf.mxu0
      %v2635 = vadd.f32 0.0, %v2634
      %v2636 = vpop.f32.mrf.mxu0
      %2637 = vmatprep.mubr.bf16.mxu0 0
      %2638 = vmatmul.mubr.bf16.gmra.mxu0 %v2483
      %v2639 = vpop.f32.mrf.mxu0
      %v2640 = vadd.f32 0.0, %v2639
      %v2641 = vpop.f32.mrf.mxu0
      %v2642 = vpop.f32.mrf.mxu0
      %v2643 = vadd.f32 0.0, %v2642
      %v2644 = vpop.f32.mrf.mxu0
      %2645 = vdwg.mxu0
      %v2646 = vadd.f32 %v2406, %v2520
      %v2647 = vadd.f32 %v2407, %v2523
      %v2648 = vadd.f32 %v2408, %v2528
      %v2649 = vadd.f32 %v2409, %v2531
      %v2650 = vadd.f32 %v2410, %v2536
      %v2651 = vadd.f32 %v2411, %v2539
      %v2652 = vadd.f32 %v2412, %v2544
      %v2653 = vadd.f32 %v2413, %v2547
      %v2654 = vadd.f32 %v2414, %v2552
      %v2655 = vadd.f32 %v2415, %v2555
      %v2656 = vadd.f32 %v2416, %v2560
      %v2657 = vadd.f32 %v2417, %v2563
      %v2658 = vadd.f32 %v2418, %v2568
      %v2659 = vadd.f32 %v2419, %v2571
      %v2660 = vadd.f32 %v2420, %v2576
      %v2661 = vadd.f32 %v2421, %v2579
      %v2662 = vadd.f32 %v2422, %v2584
      %v2663 = vadd.f32 %v2423, %v2587
      %v2664 = vadd.f32 %v2424, %v2592
      %v2665 = vadd.f32 %v2425, %v2595
      %v2666 = vadd.f32 %v2426, %v2600
      %v2667 = vadd.f32 %v2427, %v2603
      %v2668 = vadd.f32 %v2428, %v2608
      %v2669 = vadd.f32 %v2429, %v2611
      %v2670 = vadd.f32 %v2430, %v2616
      %v2671 = vadd.f32 %v2431, %v2619
      %v2672 = vadd.f32 %v2432, %v2624
      %v2673 = vadd.f32 %v2433, %v2627
      %v2674 = vadd.f32 %v2434, %v2632
      %v2675 = vadd.f32 %v2435, %v2635
      %v2676 = vadd.f32 %v2436, %v2640
      %v2677 = vadd.f32 %v2437, %v2643
      %s2678 = scalar_lea.vmem %s1, 192
      %v2679 = vld [vmem:[%s2678] sm:$0xf]
      %v2680 = vld [vmem:[%s2678 + $0x4] sm:$0xf]
      %v2681 = vld [vmem:[%s2678 + $0x8] sm:$0xf]
      %v2682 = vld [vmem:[%s2678 + $0xc] sm:$0xf]
      %v2683 = vld [vmem:[%s2678 + $0x10] sm:$0xf]
      %v2684 = vld [vmem:[%s2678 + $0x14] sm:$0xf]
      %v2685 = vld [vmem:[%s2678 + $0x18] sm:$0xf]
      %v2686 = vld [vmem:[%s2678 + $0x1c] sm:$0xf]
      %v2689 = vunpack.c.l.b16 %v493
      %v2690 = vunpack.c.l.b16 %v494
      %v2691 = vpack.c.b16 %v2690, %v2689
      %v2700 = vunpack.c.l.b16 %v2679
      %v2701 = vunpack.c.l.b16 %v2680
      %v2702 = vunpack.c.l.b16 %v2681
      %v2703 = vunpack.c.l.b16 %v2682
      %v2704 = vunpack.c.l.b16 %v2683
      %v2705 = vunpack.c.l.b16 %v2684
      %v2706 = vunpack.c.l.b16 %v2685
      %v2707 = vunpack.c.l.b16 %v2686
      %v2708 = vpack.c.b16 %v2701, %v2700
      %v2709 = vpack.c.b16 %v2703, %v2702
      %v2710 = vpack.c.b16 %v2705, %v2704
      %v2711 = vpack.c.b16 %v2707, %v2706
      %v2717 = vsel %vm972, %v2691, 0
      %2719 = vmatprep.subr.bf16.mxu0 0
      %2720 = vmatpush1.bf16.msra.mxu0 0
      %2721 = vmatprep.subr.bf16.mxu0 0
      %2722 = vmatpush1.bf16.msra.mxu0 0
      %2723 = vmatprep.subr.bf16.mxu0 0
      %2724 = vmatpush1.bf16.msra.mxu0 0
      %2725 = vmatprep.subr.bf16.mxu0 0
      %2726 = vmatpush1.bf16.msra.mxu0 0
      %2727 = vmatprep.subr.bf16.mxu0 0
      %2728 = vmatpush1.bf16.msra.mxu0 %v2711
      %2729 = vmatprep.subr.bf16.mxu0 0
      %2730 = vmatpush1.bf16.msra.mxu0 %v2710
      %2731 = vmatprep.subr.bf16.mxu0 0
      %2732 = vmatpush1.bf16.msra.mxu0 %v2709
      %2733 = vmatprep.subr.bf16.mxu0 0
      %2734 = vmatpush1.bf16.msra.mxu0 %v2708
      %2735 = vmatprep.subr.bf16.mxu0 0
      %2736 = vmatpush2.bf16.msra.mxu0 0
      %2737 = vmatprep.subr.bf16.mxu0 0
      %2738 = vmatpush2.bf16.msra.mxu0 0
      %2739 = vmatprep.subr.bf16.mxu0 0
      %2740 = vmatpush2.bf16.msra.mxu0 0
      %2741 = vmatprep.subr.bf16.mxu0 0
      %2742 = vmatpush2.bf16.msra.mxu0 0
      %2743 = vmatprep.subr.bf16.mxu0 0
      %2744 = vmatpush2.bf16.msra.mxu0 0
      %2745 = vmatprep.subr.bf16.mxu0 0
      %2746 = vmatpush2.bf16.msra.mxu0 0
      %2747 = vmatprep.subr.bf16.mxu0 0
      %2748 = vmatpush2.bf16.msra.mxu0 0
      %2749 = vmatprep.subr.bf16.mxu0 0
      %2750 = vmatpush2.bf16.msra.mxu0 0
      %2751 = vmatprep.mubr.bf16.mxu0 0
      %2752 = vmatmul.mubr.bf16.gmra.mxu0 %v1293
      %v2753 = vpop.f32.mrf.mxu0
      %v2754 = vadd.f32 0.0, %v2753
      %v2755 = vpop.f32.mrf.mxu0
      %v2756 = vpop.f32.mrf.mxu0
      %v2757 = vadd.f32 0.0, %v2756
      %v2758 = vpop.f32.mrf.mxu0
      %2759 = vmatprep.mubr.bf16.mxu0 0
      %2760 = vmatmul.mubr.bf16.gmra.mxu0 %v1296
      %v2761 = vpop.f32.mrf.mxu0
      %v2762 = vadd.f32 0.0, %v2761
      %v2763 = vpop.f32.mrf.mxu0
      %v2764 = vpop.f32.mrf.mxu0
      %v2765 = vadd.f32 0.0, %v2764
      %v2766 = vpop.f32.mrf.mxu0
      %2767 = vmatprep.mubr.bf16.mxu0 0
      %2768 = vmatmul.mubr.bf16.gmra.mxu0 %v1299
      %v2769 = vpop.f32.mrf.mxu0
      %v2770 = vadd.f32 0.0, %v2769
      %v2771 = vpop.f32.mrf.mxu0
      %v2772 = vpop.f32.mrf.mxu0
      %v2773 = vadd.f32 0.0, %v2772
      %v2774 = vpop.f32.mrf.mxu0
      %2775 = vmatprep.mubr.bf16.mxu0 0
      %2776 = vmatmul.mubr.bf16.gmra.mxu0 %v1302
      %v2777 = vpop.f32.mrf.mxu0
      %v2778 = vadd.f32 0.0, %v2777
      %v2779 = vpop.f32.mrf.mxu0
      %v2780 = vpop.f32.mrf.mxu0
      %v2781 = vadd.f32 0.0, %v2780
      %v2782 = vpop.f32.mrf.mxu0
      %2783 = vmatprep.mubr.bf16.mxu0 0
      %2784 = vmatmul.mubr.bf16.gmra.mxu0 %v1305
      %v2785 = vpop.f32.mrf.mxu0
      %v2786 = vadd.f32 0.0, %v2785
      %v2787 = vpop.f32.mrf.mxu0
      %v2788 = vpop.f32.mrf.mxu0
      %v2789 = vadd.f32 0.0, %v2788
      %v2790 = vpop.f32.mrf.mxu0
      %2791 = vmatprep.mubr.bf16.mxu0 0
      %2792 = vmatmul.mubr.bf16.gmra.mxu0 %v1308
      %v2793 = vpop.f32.mrf.mxu0
      %v2794 = vadd.f32 0.0, %v2793
      %v2795 = vpop.f32.mrf.mxu0
      %v2796 = vpop.f32.mrf.mxu0
      %v2797 = vadd.f32 0.0, %v2796
      %v2798 = vpop.f32.mrf.mxu0
      %2799 = vmatprep.mubr.bf16.mxu0 0
      %2800 = vmatmul.mubr.bf16.gmra.mxu0 %v1311
      %v2801 = vpop.f32.mrf.mxu0
      %v2802 = vadd.f32 0.0, %v2801
      %v2803 = vpop.f32.mrf.mxu0
      %v2804 = vpop.f32.mrf.mxu0
      %v2805 = vadd.f32 0.0, %v2804
      %v2806 = vpop.f32.mrf.mxu0
      %2807 = vmatprep.mubr.bf16.mxu0 0
      %2808 = vmatmul.mubr.bf16.gmra.mxu0 %v1314
      %v2809 = vpop.f32.mrf.mxu0
      %v2810 = vadd.f32 0.0, %v2809
      %v2811 = vpop.f32.mrf.mxu0
      %v2812 = vpop.f32.mrf.mxu0
      %v2813 = vadd.f32 0.0, %v2812
      %v2814 = vpop.f32.mrf.mxu0
      %2815 = vmatprep.mubr.bf16.mxu0 0
      %2816 = vmatmul.mubr.bf16.gmra.mxu0 %v1317
      %v2817 = vpop.f32.mrf.mxu0
      %v2818 = vadd.f32 0.0, %v2817
      %v2819 = vpop.f32.mrf.mxu0
      %v2820 = vpop.f32.mrf.mxu0
      %v2821 = vadd.f32 0.0, %v2820
      %v2822 = vpop.f32.mrf.mxu0
      %2823 = vmatprep.mubr.bf16.mxu0 0
      %2824 = vmatmul.mubr.bf16.gmra.mxu0 %v1320
      %v2825 = vpop.f32.mrf.mxu0
      %v2826 = vadd.f32 0.0, %v2825
      %v2827 = vpop.f32.mrf.mxu0
      %v2828 = vpop.f32.mrf.mxu0
      %v2829 = vadd.f32 0.0, %v2828
      %v2830 = vpop.f32.mrf.mxu0
      %2831 = vmatprep.mubr.bf16.mxu0 0
      %2832 = vmatmul.mubr.bf16.gmra.mxu0 %v1323
      %v2833 = vpop.f32.mrf.mxu0
      %v2834 = vadd.f32 0.0, %v2833
      %v2835 = vpop.f32.mrf.mxu0
      %v2836 = vpop.f32.mrf.mxu0
      %v2837 = vadd.f32 0.0, %v2836
      %v2838 = vpop.f32.mrf.mxu0
      %2839 = vmatprep.mubr.bf16.mxu0 0
      %2840 = vmatmul.mubr.bf16.gmra.mxu0 %v1326
      %v2841 = vpop.f32.mrf.mxu0
      %v2842 = vadd.f32 0.0, %v2841
      %v2843 = vpop.f32.mrf.mxu0
      %v2844 = vpop.f32.mrf.mxu0
      %v2845 = vadd.f32 0.0, %v2844
      %v2846 = vpop.f32.mrf.mxu0
      %2847 = vmatprep.mubr.bf16.mxu0 0
      %2848 = vmatmul.mubr.bf16.gmra.mxu0 %v1329
      %v2849 = vpop.f32.mrf.mxu0
      %v2850 = vadd.f32 0.0, %v2849
      %v2851 = vpop.f32.mrf.mxu0
      %v2852 = vpop.f32.mrf.mxu0
      %v2853 = vadd.f32 0.0, %v2852
      %v2854 = vpop.f32.mrf.mxu0
      %2855 = vmatprep.mubr.bf16.mxu0 0
      %2856 = vmatmul.mubr.bf16.gmra.mxu0 %v1332
      %v2857 = vpop.f32.mrf.mxu0
      %v2858 = vadd.f32 0.0, %v2857
      %v2859 = vpop.f32.mrf.mxu0
      %v2860 = vpop.f32.mrf.mxu0
      %v2861 = vadd.f32 0.0, %v2860
      %v2862 = vpop.f32.mrf.mxu0
      %2863 = vmatprep.mubr.bf16.mxu0 0
      %2864 = vmatmul.mubr.bf16.gmra.mxu0 %v1987
      %v2865 = vpop.f32.mrf.mxu0
      %v2866 = vadd.f32 0.0, %v2865
      %v2867 = vpop.f32.mrf.mxu0
      %v2868 = vpop.f32.mrf.mxu0
      %v2869 = vadd.f32 0.0, %v2868
      %v2870 = vpop.f32.mrf.mxu0
      %2871 = vmatprep.mubr.bf16.mxu0 0
      %2872 = vmatmul.mubr.bf16.gmra.mxu0 %v2717
      %v2873 = vpop.f32.mrf.mxu0
      %v2874 = vadd.f32 0.0, %v2873
      %v2875 = vpop.f32.mrf.mxu0
      %v2876 = vpop.f32.mrf.mxu0
      %v2877 = vadd.f32 0.0, %v2876
      %v2878 = vpop.f32.mrf.mxu0
      %2879 = vdwg.mxu0
      %v2880 = vadd.f32 %v2646, %v2754
      %v2881 = vadd.f32 %v2647, %v2757
      %v2882 = vadd.f32 %v2648, %v2762
      %v2883 = vadd.f32 %v2649, %v2765
      %v2884 = vadd.f32 %v2650, %v2770
      %v2885 = vadd.f32 %v2651, %v2773
      %v2886 = vadd.f32 %v2652, %v2778
      %v2887 = vadd.f32 %v2653, %v2781
      %v2888 = vadd.f32 %v2654, %v2786
      %v2889 = vadd.f32 %v2655, %v2789
      %v2890 = vadd.f32 %v2656, %v2794
      %v2891 = vadd.f32 %v2657, %v2797
      %v2892 = vadd.f32 %v2658, %v2802
      %v2893 = vadd.f32 %v2659, %v2805
      %v2894 = vadd.f32 %v2660, %v2810
      %v2895 = vadd.f32 %v2661, %v2813
      %v2896 = vadd.f32 %v2662, %v2818
      %v2897 = vadd.f32 %v2663, %v2821
      %v2898 = vadd.f32 %v2664, %v2826
      %v2899 = vadd.f32 %v2665, %v2829
      %v2900 = vadd.f32 %v2666, %v2834
      %v2901 = vadd.f32 %v2667, %v2837
      %v2902 = vadd.f32 %v2668, %v2842
      %v2903 = vadd.f32 %v2669, %v2845
      %v2904 = vadd.f32 %v2670, %v2850
      %v2905 = vadd.f32 %v2671, %v2853
      %v2906 = vadd.f32 %v2672, %v2858
      %v2907 = vadd.f32 %v2673, %v2861
      %v2908 = vadd.f32 %v2674, %v2866
      %v2909 = vadd.f32 %v2675, %v2869
      %v2910 = vadd.f32 %v2676, %v2874
      %v2911 = vadd.f32 %v2677, %v2877
      %v2913 = vshrl.u32 %v493, 16
      %v2915 = vrot.slane %v2913, 4
      %v2916 = vshll.u32 %v493, 16
      %v2918 = vrot.slane %v2916, 5
      %v2919 = vor.u32 %v2915, %v2918
      %v2920 = vrot.slane %v2919, 4
      %v2922 = vshll.u32 %v494, 16
      %v2924 = vrot.slane %v2922, 5
      %v2925 = vsel %vm506, %v2920, %v2924
      %v2926 = vshrl.u32 %v494, 16
      %v2928 = vrot.slane %v2926, 4
      %v2929 = vor.u32 %v2928, %v2924
      %v2930 = vrot.slane %v2929, 4
      %v2932 = vshll.u32 %v495, 16
      %v2934 = vrot.slane %v2932, 5
      %v2935 = vsel %vm506, %v2930, %v2934
      %s2936 = scalar_lea.vmem %s1, 224
      %v2937 = vld [vmem:[%s2936] sm:$0xf]
      %v2938 = vld [vmem:[%s2936 + $0x4] sm:$0xf]
      %v2939 = vld [vmem:[%s2936 + $0x8] sm:$0xf]
      %v2940 = vld [vmem:[%s2936 + $0xc] sm:$0xf]
      %v2941 = vld [vmem:[%s2936 + $0x10] sm:$0xf]
      %v2942 = vld [vmem:[%s2936 + $0x14] sm:$0xf]
      %v2943 = vld [vmem:[%s2936 + $0x18] sm:$0xf]
      %v2944 = vld [vmem:[%s2936 + $0x1c] sm:$0xf]
      %v2945 = vunpack.c.l.b16 %v2925
      %v2946 = vunpack.c.l.b16 %v2935
      %v2947 = vpack.c.b16 %v2946, %v2945
      %v2956 = vunpack.c.l.b16 %v2937
      %v2957 = vunpack.c.l.b16 %v2938
      %v2958 = vunpack.c.l.b16 %v2939
      %v2959 = vunpack.c.l.b16 %v2940
      %v2960 = vunpack.c.l.b16 %v2941
      %v2961 = vunpack.c.l.b16 %v2942
      %v2962 = vunpack.c.l.b16 %v2943
      %v2963 = vunpack.c.l.b16 %v2944
      %v2964 = vpack.c.b16 %v2957, %v2956
      %v2965 = vpack.c.b16 %v2959, %v2958
      %v2966 = vpack.c.b16 %v2961, %v2960
      %v2967 = vpack.c.b16 %v2963, %v2962
      %v2973 = vsel %vm972, %v2947, 0
      %2975 = vmatprep.subr.bf16.mxu0 0
      %2976 = vmatpush1.bf16.msra.mxu0 0
      %2977 = vmatprep.subr.bf16.mxu0 0
      %2978 = vmatpush1.bf16.msra.mxu0 0
      %2979 = vmatprep.subr.bf16.mxu0 0
      %2980 = vmatpush1.bf16.msra.mxu0 0
      %2981 = vmatprep.subr.bf16.mxu0 0
      %2982 = vmatpush1.bf16.msra.mxu0 0
      %2983 = vmatprep.subr.bf16.mxu0 0
      %2984 = vmatpush1.bf16.msra.mxu0 %v2967
      %2985 = vmatprep.subr.bf16.mxu0 0
      %2986 = vmatpush1.bf16.msra.mxu0 %v2966
      %2987 = vmatprep.subr.bf16.mxu0 0
      %2988 = vmatpush1.bf16.msra.mxu0 %v2965
      %2989 = vmatprep.subr.bf16.mxu0 0
      %2990 = vmatpush1.bf16.msra.mxu0 %v2964
      %2991 = vmatprep.subr.bf16.mxu0 0
      %2992 = vmatpush2.bf16.msra.mxu0 0
      %2993 = vmatprep.subr.bf16.mxu0 0
      %2994 = vmatpush2.bf16.msra.mxu0 0
      %2995 = vmatprep.subr.bf16.mxu0 0
      %2996 = vmatpush2.bf16.msra.mxu0 0
      %2997 = vmatprep.subr.bf16.mxu0 0
      %2998 = vmatpush2.bf16.msra.mxu0 0
      %2999 = vmatprep.subr.bf16.mxu0 0
      %3000 = vmatpush2.bf16.msra.mxu0 0
      %3001 = vmatprep.subr.bf16.mxu0 0
      %3002 = vmatpush2.bf16.msra.mxu0 0
      %3003 = vmatprep.subr.bf16.mxu0 0
      %3004 = vmatpush2.bf16.msra.mxu0 0
      %3005 = vmatprep.subr.bf16.mxu0 0
      %3006 = vmatpush2.bf16.msra.mxu0 0
      %3007 = vmatprep.mubr.bf16.mxu0 0
      %3008 = vmatmul.mubr.bf16.gmra.mxu0 %v980
      %v3009 = vpop.f32.mrf.mxu0
      %v3010 = vadd.f32 0.0, %v3009
      %v3011 = vpop.f32.mrf.mxu0
      %v3012 = vpop.f32.mrf.mxu0
      %v3013 = vadd.f32 0.0, %v3012
      %v3014 = vpop.f32.mrf.mxu0
      %3015 = vmatprep.mubr.bf16.mxu0 0
      %3016 = vmatmul.mubr.bf16.gmra.mxu0 %v983
      %v3017 = vpop.f32.mrf.mxu0
      %v3018 = vadd.f32 0.0, %v3017
      %v3019 = vpop.f32.mrf.mxu0
      %v3020 = vpop.f32.mrf.mxu0
      %v3021 = vadd.f32 0.0, %v3020
      %v3022 = vpop.f32.mrf.mxu0
      %3023 = vmatprep.mubr.bf16.mxu0 0
      %3024 = vmatmul.mubr.bf16.gmra.mxu0 %v986
      %v3025 = vpop.f32.mrf.mxu0
      %v3026 = vadd.f32 0.0, %v3025
      %v3027 = vpop.f32.mrf.mxu0
      %v3028 = vpop.f32.mrf.mxu0
      %v3029 = vadd.f32 0.0, %v3028
      %v3030 = vpop.f32.mrf.mxu0
      %3031 = vmatprep.mubr.bf16.mxu0 0
      %3032 = vmatmul.mubr.bf16.gmra.mxu0 %v989
      %v3033 = vpop.f32.mrf.mxu0
      %v3034 = vadd.f32 0.0, %v3033
      %v3035 = vpop.f32.mrf.mxu0
      %v3036 = vpop.f32.mrf.mxu0
      %v3037 = vadd.f32 0.0, %v3036
      %v3038 = vpop.f32.mrf.mxu0
      %3039 = vmatprep.mubr.bf16.mxu0 0
      %3040 = vmatmul.mubr.bf16.gmra.mxu0 %v992
      %v3041 = vpop.f32.mrf.mxu0
      %v3042 = vadd.f32 0.0, %v3041
      %v3043 = vpop.f32.mrf.mxu0
      %v3044 = vpop.f32.mrf.mxu0
      %v3045 = vadd.f32 0.0, %v3044
      %v3046 = vpop.f32.mrf.mxu0
      %3047 = vmatprep.mubr.bf16.mxu0 0
      %3048 = vmatmul.mubr.bf16.gmra.mxu0 %v995
      %v3049 = vpop.f32.mrf.mxu0
      %v3050 = vadd.f32 0.0, %v3049
      %v3051 = vpop.f32.mrf.mxu0
      %v3052 = vpop.f32.mrf.mxu0
      %v3053 = vadd.f32 0.0, %v3052
      %v3054 = vpop.f32.mrf.mxu0
      %3055 = vmatprep.mubr.bf16.mxu0 0
      %3056 = vmatmul.mubr.bf16.gmra.mxu0 %v998
      %v3057 = vpop.f32.mrf.mxu0
      %v3058 = vadd.f32 0.0, %v3057
      %v3059 = vpop.f32.mrf.mxu0
      %v3060 = vpop.f32.mrf.mxu0
      %v3061 = vadd.f32 0.0, %v3060
      %v3062 = vpop.f32.mrf.mxu0
      %3063 = vmatprep.mubr.bf16.mxu0 0
      %3064 = vmatmul.mubr.bf16.gmra.mxu0 %v1001
      %v3065 = vpop.f32.mrf.mxu0
      %v3066 = vadd.f32 0.0, %v3065
      %v3067 = vpop.f32.mrf.mxu0
      %v3068 = vpop.f32.mrf.mxu0
      %v3069 = vadd.f32 0.0, %v3068
      %v3070 = vpop.f32.mrf.mxu0
      %3071 = vmatprep.mubr.bf16.mxu0 0
      %3072 = vmatmul.mubr.bf16.gmra.mxu0 %v1004
      %v3073 = vpop.f32.mrf.mxu0
      %v3074 = vadd.f32 0.0, %v3073
      %v3075 = vpop.f32.mrf.mxu0
      %v3076 = vpop.f32.mrf.mxu0
      %v3077 = vadd.f32 0.0, %v3076
      %v3078 = vpop.f32.mrf.mxu0
      %3079 = vmatprep.mubr.bf16.mxu0 0
      %3080 = vmatmul.mubr.bf16.gmra.mxu0 %v1007
      %v3081 = vpop.f32.mrf.mxu0
      %v3082 = vadd.f32 0.0, %v3081
      %v3083 = vpop.f32.mrf.mxu0
      %v3084 = vpop.f32.mrf.mxu0
      %v3085 = vadd.f32 0.0, %v3084
      %v3086 = vpop.f32.mrf.mxu0
      %3087 = vmatprep.mubr.bf16.mxu0 0
      %3088 = vmatmul.mubr.bf16.gmra.mxu0 %v1010
      %v3089 = vpop.f32.mrf.mxu0
      %v3090 = vadd.f32 0.0, %v3089
      %v3091 = vpop.f32.mrf.mxu0
      %v3092 = vpop.f32.mrf.mxu0
      %v3093 = vadd.f32 0.0, %v3092
      %v3094 = vpop.f32.mrf.mxu0
      %3095 = vmatprep.mubr.bf16.mxu0 0
      %3096 = vmatmul.mubr.bf16.gmra.mxu0 %v1013
      %v3097 = vpop.f32.mrf.mxu0
      %v3098 = vadd.f32 0.0, %v3097
      %v3099 = vpop.f32.mrf.mxu0
      %v3100 = vpop.f32.mrf.mxu0
      %v3101 = vadd.f32 0.0, %v3100
      %v3102 = vpop.f32.mrf.mxu0
      %3103 = vmatprep.mubr.bf16.mxu0 0
      %3104 = vmatmul.mubr.bf16.gmra.mxu0 %v1016
      %v3105 = vpop.f32.mrf.mxu0
      %v3106 = vadd.f32 0.0, %v3105
      %v3107 = vpop.f32.mrf.mxu0
      %v3108 = vpop.f32.mrf.mxu0
      %v3109 = vadd.f32 0.0, %v3108
      %v3110 = vpop.f32.mrf.mxu0
      %3111 = vmatprep.mubr.bf16.mxu0 0
      %3112 = vmatmul.mubr.bf16.gmra.mxu0 %v1019
      %v3113 = vpop.f32.mrf.mxu0
      %v3114 = vadd.f32 0.0, %v3113
      %v3115 = vpop.f32.mrf.mxu0
      %v3116 = vpop.f32.mrf.mxu0
      %v3117 = vadd.f32 0.0, %v3116
      %v3118 = vpop.f32.mrf.mxu0
      %3119 = vmatprep.mubr.bf16.mxu0 0
      %3120 = vmatmul.mubr.bf16.gmra.mxu0 %v2243
      %v3121 = vpop.f32.mrf.mxu0
      %v3122 = vadd.f32 0.0, %v3121
      %v3123 = vpop.f32.mrf.mxu0
      %v3124 = vpop.f32.mrf.mxu0
      %v3125 = vadd.f32 0.0, %v3124
      %v3126 = vpop.f32.mrf.mxu0
      %3127 = vmatprep.mubr.bf16.mxu0 0
      %3128 = vmatmul.mubr.bf16.gmra.mxu0 %v2973
      %v3129 = vpop.f32.mrf.mxu0
      %v3130 = vadd.f32 0.0, %v3129
      %v3131 = vpop.f32.mrf.mxu0
      %v3132 = vpop.f32.mrf.mxu0
      %v3133 = vadd.f32 0.0, %v3132
      %v3134 = vpop.f32.mrf.mxu0
      %3135 = vdwg.mxu0
      %v3136 = vadd.f32 %v2880, %v3010
      %v3137 = vadd.f32 %v2881, %v3013
      %v3138 = vadd.f32 %v2882, %v3018
      %v3139 = vadd.f32 %v2883, %v3021
      %v3140 = vadd.f32 %v2884, %v3026
      %v3141 = vadd.f32 %v2885, %v3029
      %v3142 = vadd.f32 %v2886, %v3034
      %v3143 = vadd.f32 %v2887, %v3037
      %v3144 = vadd.f32 %v2888, %v3042
      %v3145 = vadd.f32 %v2889, %v3045
      %v3146 = vadd.f32 %v2890, %v3050
      %v3147 = vadd.f32 %v2891, %v3053
      %v3148 = vadd.f32 %v2892, %v3058
      %v3149 = vadd.f32 %v2893, %v3061
      %v3150 = vadd.f32 %v2894, %v3066
      %v3151 = vadd.f32 %v2895, %v3069
      %v3152 = vadd.f32 %v2896, %v3074
      %v3153 = vadd.f32 %v2897, %v3077
      %v3154 = vadd.f32 %v2898, %v3082
      %v3155 = vadd.f32 %v2899, %v3085
      %v3156 = vadd.f32 %v2900, %v3090
      %v3157 = vadd.f32 %v2901, %v3093
      %v3158 = vadd.f32 %v2902, %v3098
      %v3159 = vadd.f32 %v2903, %v3101
      %v3160 = vadd.f32 %v2904, %v3106
      %v3161 = vadd.f32 %v2905, %v3109
      %v3162 = vadd.f32 %v2906, %v3114
      %v3163 = vadd.f32 %v2907, %v3117
      %v3164 = vadd.f32 %v2908, %v3122
      %v3165 = vadd.f32 %v2909, %v3125
      %v3166 = vadd.f32 %v2910, %v3130
      %v3167 = vadd.f32 %v2911, %v3133
      %v3169 = vrot.slane %v493, 5
      %v3170 = vrot.slane %v3169, 4
      %v3171 = vrot.slane %v494, 5
      %v3172 = vsel %vm1513, %v3170, %v3171
      %v3173 = vrot.slane %v3171, 4
      %v3174 = vrot.slane %v495, 5
      %v3175 = vsel %vm1513, %v3173, %v3174
      %s3176 = scalar_lea.vmem %s1, 256
      %v3177 = vld [vmem:[%s3176] sm:$0xf]
      %v3178 = vld [vmem:[%s3176 + $0x4] sm:$0xf]
      %v3179 = vld [vmem:[%s3176 + $0x8] sm:$0xf]
      %v3180 = vld [vmem:[%s3176 + $0xc] sm:$0xf]
      %v3181 = vld [vmem:[%s3176 + $0x10] sm:$0xf]
      %v3182 = vld [vmem:[%s3176 + $0x14] sm:$0xf]
      %v3183 = vld [vmem:[%s3176 + $0x18] sm:$0xf]
      %v3184 = vld [vmem:[%s3176 + $0x1c] sm:$0xf]
      %v3185 = vunpack.c.l.b16 %v3172
      %v3186 = vunpack.c.l.b16 %v3175
      %v3187 = vpack.c.b16 %v3186, %v3185
      %v3196 = vunpack.c.l.b16 %v3177
      %v3197 = vunpack.c.l.b16 %v3178
      %v3198 = vunpack.c.l.b16 %v3179
      %v3199 = vunpack.c.l.b16 %v3180
      %v3200 = vunpack.c.l.b16 %v3181
      %v3201 = vunpack.c.l.b16 %v3182
      %v3202 = vunpack.c.l.b16 %v3183
      %v3203 = vunpack.c.l.b16 %v3184
      %v3204 = vpack.c.b16 %v3197, %v3196
      %v3205 = vpack.c.b16 %v3199, %v3198
      %v3206 = vpack.c.b16 %v3201, %v3200
      %v3207 = vpack.c.b16 %v3203, %v3202
      %v3213 = vsel %vm972, %v3187, 0
      %3215 = vmatprep.subr.bf16.mxu0 0
      %3216 = vmatpush1.bf16.msra.mxu0 0
      %3217 = vmatprep.subr.bf16.mxu0 0
      %3218 = vmatpush1.bf16.msra.mxu0 0
      %3219 = vmatprep.subr.bf16.mxu0 0
      %3220 = vmatpush1.bf16.msra.mxu0 0
      %3221 = vmatprep.subr.bf16.mxu0 0
      %3222 = vmatpush1.bf16.msra.mxu0 0
      %3223 = vmatprep.subr.bf16.mxu0 0
      %3224 = vmatpush1.bf16.msra.mxu0 %v3207
      %3225 = vmatprep.subr.bf16.mxu0 0
      %3226 = vmatpush1.bf16.msra.mxu0 %v3206
      %3227 = vmatprep.subr.bf16.mxu0 0
      %3228 = vmatpush1.bf16.msra.mxu0 %v3205
      %3229 = vmatprep.subr.bf16.mxu0 0
      %3230 = vmatpush1.bf16.msra.mxu0 %v3204
      %3231 = vmatprep.subr.bf16.mxu0 0
      %3232 = vmatpush2.bf16.msra.mxu0 0
      %3233 = vmatprep.subr.bf16.mxu0 0
      %3234 = vmatpush2.bf16.msra.mxu0 0
      %3235 = vmatprep.subr.bf16.mxu0 0
      %3236 = vmatpush2.bf16.msra.mxu0 0
      %3237 = vmatprep.subr.bf16.mxu0 0
      %3238 = vmatpush2.bf16.msra.mxu0 0
      %3239 = vmatprep.subr.bf16.mxu0 0
      %3240 = vmatpush2.bf16.msra.mxu0 0
      %3241 = vmatprep.subr.bf16.mxu0 0
      %3242 = vmatpush2.bf16.msra.mxu0 0
      %3243 = vmatprep.subr.bf16.mxu0 0
      %3244 = vmatpush2.bf16.msra.mxu0 0
      %3245 = vmatprep.subr.bf16.mxu0 0
      %3246 = vmatpush2.bf16.msra.mxu0 0
      %3247 = vmatprep.mubr.bf16.mxu0 0
      %3248 = vmatmul.mubr.bf16.gmra.mxu0 %v1714
      %v3249 = vpop.f32.mrf.mxu0
      %v3250 = vadd.f32 0.0, %v3249
      %v3251 = vpop.f32.mrf.mxu0
      %v3252 = vpop.f32.mrf.mxu0
      %v3253 = vadd.f32 0.0, %v3252
      %v3254 = vpop.f32.mrf.mxu0
      %3255 = vmatprep.mubr.bf16.mxu0 0
      %3256 = vmatmul.mubr.bf16.gmra.mxu0 %v1717
      %v3257 = vpop.f32.mrf.mxu0
      %v3258 = vadd.f32 0.0, %v3257
      %v3259 = vpop.f32.mrf.mxu0
      %v3260 = vpop.f32.mrf.mxu0
      %v3261 = vadd.f32 0.0, %v3260
      %v3262 = vpop.f32.mrf.mxu0
      %3263 = vmatprep.mubr.bf16.mxu0 0
      %3264 = vmatmul.mubr.bf16.gmra.mxu0 %v1720
      %v3265 = vpop.f32.mrf.mxu0
      %v3266 = vadd.f32 0.0, %v3265
      %v3267 = vpop.f32.mrf.mxu0
      %v3268 = vpop.f32.mrf.mxu0
      %v3269 = vadd.f32 0.0, %v3268
      %v3270 = vpop.f32.mrf.mxu0
      %3271 = vmatprep.mubr.bf16.mxu0 0
      %3272 = vmatmul.mubr.bf16.gmra.mxu0 %v1723
      %v3273 = vpop.f32.mrf.mxu0
      %v3274 = vadd.f32 0.0, %v3273
      %v3275 = vpop.f32.mrf.mxu0
      %v3276 = vpop.f32.mrf.mxu0
      %v3277 = vadd.f32 0.0, %v3276
      %v3278 = vpop.f32.mrf.mxu0
      %3279 = vmatprep.mubr.bf16.mxu0 0
      %3280 = vmatmul.mubr.bf16.gmra.mxu0 %v1726
      %v3281 = vpop.f32.mrf.mxu0
      %v3282 = vadd.f32 0.0, %v3281
      %v3283 = vpop.f32.mrf.mxu0
      %v3284 = vpop.f32.mrf.mxu0
      %v3285 = vadd.f32 0.0, %v3284
      %v3286 = vpop.f32.mrf.mxu0
      %3287 = vmatprep.mubr.bf16.mxu0 0
      %3288 = vmatmul.mubr.bf16.gmra.mxu0 %v1729
      %v3289 = vpop.f32.mrf.mxu0
      %v3290 = vadd.f32 0.0, %v3289
      %v3291 = vpop.f32.mrf.mxu0
      %v3292 = vpop.f32.mrf.mxu0
      %v3293 = vadd.f32 0.0, %v3292
      %v3294 = vpop.f32.mrf.mxu0
      %3295 = vmatprep.mubr.bf16.mxu0 0
      %3296 = vmatmul.mubr.bf16.gmra.mxu0 %v1732
      %v3297 = vpop.f32.mrf.mxu0
      %v3298 = vadd.f32 0.0, %v3297
      %v3299 = vpop.f32.mrf.mxu0
      %v3300 = vpop.f32.mrf.mxu0
      %v3301 = vadd.f32 0.0, %v3300
      %v3302 = vpop.f32.mrf.mxu0
      %3303 = vmatprep.mubr.bf16.mxu0 0
      %3304 = vmatmul.mubr.bf16.gmra.mxu0 %v1735
      %v3305 = vpop.f32.mrf.mxu0
      %v3306 = vadd.f32 0.0, %v3305
      %v3307 = vpop.f32.mrf.mxu0
      %v3308 = vpop.f32.mrf.mxu0
      %v3309 = vadd.f32 0.0, %v3308
      %v3310 = vpop.f32.mrf.mxu0
      %3311 = vmatprep.mubr.bf16.mxu0 0
      %3312 = vmatmul.mubr.bf16.gmra.mxu0 %v1738
      %v3313 = vpop.f32.mrf.mxu0
      %v3314 = vadd.f32 0.0, %v3313
      %v3315 = vpop.f32.mrf.mxu0
      %v3316 = vpop.f32.mrf.mxu0
      %v3317 = vadd.f32 0.0, %v3316
      %v3318 = vpop.f32.mrf.mxu0
      %3319 = vmatprep.mubr.bf16.mxu0 0
      %3320 = vmatmul.mubr.bf16.gmra.mxu0 %v1741
      %v3321 = vpop.f32.mrf.mxu0
      %v3322 = vadd.f32 0.0, %v3321
      %v3323 = vpop.f32.mrf.mxu0
      %v3324 = vpop.f32.mrf.mxu0
      %v3325 = vadd.f32 0.0, %v3324
      %v3326 = vpop.f32.mrf.mxu0
      %3327 = vmatprep.mubr.bf16.mxu0 0
      %3328 = vmatmul.mubr.bf16.gmra.mxu0 %v1744
      %v3329 = vpop.f32.mrf.mxu0
      %v3330 = vadd.f32 0.0, %v3329
      %v3331 = vpop.f32.mrf.mxu0
      %v3332 = vpop.f32.mrf.mxu0
      %v3333 = vadd.f32 0.0, %v3332
      %v3334 = vpop.f32.mrf.mxu0
      %3335 = vmatprep.mubr.bf16.mxu0 0
      %3336 = vmatmul.mubr.bf16.gmra.mxu0 %v1747
      %v3337 = vpop.f32.mrf.mxu0
      %v3338 = vadd.f32 0.0, %v3337
      %v3339 = vpop.f32.mrf.mxu0
      %v3340 = vpop.f32.mrf.mxu0
      %v3341 = vadd.f32 0.0, %v3340
      %v3342 = vpop.f32.mrf.mxu0
      %3343 = vmatprep.mubr.bf16.mxu0 0
      %3344 = vmatmul.mubr.bf16.gmra.mxu0 %v1750
      %v3345 = vpop.f32.mrf.mxu0
      %v3346 = vadd.f32 0.0, %v3345
      %v3347 = vpop.f32.mrf.mxu0
      %v3348 = vpop.f32.mrf.mxu0
      %v3349 = vadd.f32 0.0, %v3348
      %v3350 = vpop.f32.mrf.mxu0
      %3351 = vmatprep.mubr.bf16.mxu0 0
      %3352 = vmatmul.mubr.bf16.gmra.mxu0 %v1753
      %v3353 = vpop.f32.mrf.mxu0
      %v3354 = vadd.f32 0.0, %v3353
      %v3355 = vpop.f32.mrf.mxu0
      %v3356 = vpop.f32.mrf.mxu0
      %v3357 = vadd.f32 0.0, %v3356
      %v3358 = vpop.f32.mrf.mxu0
      %3359 = vmatprep.mubr.bf16.mxu0 0
      %3360 = vmatmul.mubr.bf16.gmra.mxu0 %v2483
      %v3361 = vpop.f32.mrf.mxu0
      %v3362 = vadd.f32 0.0, %v3361
      %v3363 = vpop.f32.mrf.mxu0
      %v3364 = vpop.f32.mrf.mxu0
      %v3365 = vadd.f32 0.0, %v3364
      %v3366 = vpop.f32.mrf.mxu0
      %3367 = vmatprep.mubr.bf16.mxu0 0
      %3368 = vmatmul.mubr.bf16.gmra.mxu0 %v3213
      %v3369 = vpop.f32.mrf.mxu0
      %v3370 = vadd.f32 0.0, %v3369
      %v3371 = vpop.f32.mrf.mxu0
      %v3372 = vpop.f32.mrf.mxu0
      %v3373 = vadd.f32 0.0, %v3372
      %v3374 = vpop.f32.mrf.mxu0
      %3375 = vdwg.mxu0
      %v3376 = vadd.f32 %v3136, %v3250
      %v3377 = vadd.f32 %v3137, %v3253
      %v3378 = vadd.f32 %v3138, %v3258
      %v3379 = vadd.f32 %v3139, %v3261
      %v3380 = vadd.f32 %v3140, %v3266
      %v3381 = vadd.f32 %v3141, %v3269
      %v3382 = vadd.f32 %v3142, %v3274
      %v3383 = vadd.f32 %v3143, %v3277
      %v3384 = vadd.f32 %v3144, %v3282
      %v3385 = vadd.f32 %v3145, %v3285
      %v3386 = vadd.f32 %v3146, %v3290
      %v3387 = vadd.f32 %v3147, %v3293
      %v3388 = vadd.f32 %v3148, %v3298
      %v3389 = vadd.f32 %v3149, %v3301
      %v3390 = vadd.f32 %v3150, %v3306
      %v3391 = vadd.f32 %v3151, %v3309
      %v3392 = vadd.f32 %v3152, %v3314
      %v3393 = vadd.f32 %v3153, %v3317
      %v3394 = vadd.f32 %v3154, %v3322
      %v3395 = vadd.f32 %v3155, %v3325
      %v3396 = vadd.f32 %v3156, %v3330
      %v3397 = vadd.f32 %v3157, %v3333
      %v3398 = vadd.f32 %v3158, %v3338
      %v3399 = vadd.f32 %v3159, %v3341
      %v3400 = vadd.f32 %v3160, %v3346
      %v3401 = vadd.f32 %v3161, %v3349
      %v3402 = vadd.f32 %v3162, %v3354
      %v3403 = vadd.f32 %v3163, %v3357
      %v3404 = vadd.f32 %v3164, %v3362
      %v3405 = vadd.f32 %v3165, %v3365
      %v3406 = vadd.f32 %v3166, %v3370
      %v3407 = vadd.f32 %v3167, %v3373
      %v3408 = vld [vmem:[%s2] sm:$0x1]
      %v3410 = vlaneseq
      %v3411 = vshrl.u32 %v3410, 7
      %v3412 = vsub.s32 0, %v3411
      %v3413 = vrot.slane %v3408, %v3412
      %v3415 = vadd.f32 %v3376, %v3413
      %v3416 = vadd.f32 %v3377, %v3413
      %v3417 = vadd.f32 %v3378, %v3413
      %v3418 = vadd.f32 %v3379, %v3413
      %v3419 = vadd.f32 %v3380, %v3413
      %v3420 = vadd.f32 %v3381, %v3413
      %v3421 = vadd.f32 %v3382, %v3413
      %v3422 = vadd.f32 %v3383, %v3413
      %v3423 = vadd.f32 %v3384, %v3413
      %v3424 = vadd.f32 %v3385, %v3413
      %v3425 = vadd.f32 %v3386, %v3413
      %v3426 = vadd.f32 %v3387, %v3413
      %v3427 = vadd.f32 %v3388, %v3413
      %v3428 = vadd.f32 %v3389, %v3413
      %v3429 = vadd.f32 %v3390, %v3413
      %v3430 = vadd.f32 %v3391, %v3413
      %v3431 = vadd.f32 %v3392, %v3413
      %v3432 = vadd.f32 %v3393, %v3413
      %v3433 = vadd.f32 %v3394, %v3413
      %v3434 = vadd.f32 %v3395, %v3413
      %v3435 = vadd.f32 %v3396, %v3413
      %v3436 = vadd.f32 %v3397, %v3413
      %v3437 = vadd.f32 %v3398, %v3413
      %v3438 = vadd.f32 %v3399, %v3413
      %v3439 = vadd.f32 %v3400, %v3413
      %v3440 = vadd.f32 %v3401, %v3413
      %v3441 = vadd.f32 %v3402, %v3413
      %v3442 = vadd.f32 %v3403, %v3413
      %v3443 = vadd.f32 %v3404, %v3413
      %v3444 = vadd.f32 %v3405, %v3413
      %v3445 = vadd.f32 %v3406, %v3413
      %v3446 = vadd.f32 %v3407, %v3413
      %vm3447 = vcmask 261120
      %v3448 = vsel %vm3447, %v3415, 0.0
      %v3449 = vsel %vm3447, %v3416, 0.0
      %v3450 = vadd.f32 %v3448, %v3449
      %v3451 = vsel %vm3447, %v3417, 0.0
      %v3452 = vadd.f32 %v3450, %v3451
      %v3453 = vsel %vm3447, %v3418, 0.0
      %v3454 = vadd.f32 %v3452, %v3453
      %v3455 = vsel %vm3447, %v3419, 0.0
      %v3456 = vadd.f32 %v3454, %v3455
      %v3457 = vsel %vm3447, %v3420, 0.0
      %v3458 = vadd.f32 %v3456, %v3457
      %v3459 = vsel %vm3447, %v3421, 0.0
      %v3460 = vadd.f32 %v3458, %v3459
      %v3461 = vsel %vm3447, %v3422, 0.0
      %v3462 = vadd.f32 %v3460, %v3461
      %v3463 = vsel %vm3447, %v3423, 0.0
      %v3464 = vadd.f32 %v3462, %v3463
      %v3465 = vsel %vm3447, %v3424, 0.0
      %v3466 = vadd.f32 %v3464, %v3465
      %v3467 = vsel %vm3447, %v3425, 0.0
      %v3468 = vadd.f32 %v3466, %v3467
      %v3469 = vsel %vm3447, %v3426, 0.0
      %v3470 = vadd.f32 %v3468, %v3469
      %v3471 = vsel %vm3447, %v3427, 0.0
      %v3472 = vadd.f32 %v3470, %v3471
      %v3473 = vsel %vm3447, %v3428, 0.0
      %v3474 = vadd.f32 %v3472, %v3473
      %v3475 = vsel %vm3447, %v3429, 0.0
      %v3476 = vadd.f32 %v3474, %v3475
      %v3477 = vsel %vm3447, %v3430, 0.0
      %v3478 = vadd.f32 %v3476, %v3477
      %v3479 = vsel %vm3447, %v3431, 0.0
      %v3480 = vadd.f32 %v3478, %v3479
      %v3481 = vsel %vm3447, %v3432, 0.0
      %v3482 = vadd.f32 %v3480, %v3481
      %v3483 = vsel %vm3447, %v3433, 0.0
      %v3484 = vadd.f32 %v3482, %v3483
      %v3485 = vsel %vm3447, %v3434, 0.0
      %v3486 = vadd.f32 %v3484, %v3485
      %v3487 = vsel %vm3447, %v3435, 0.0
      %v3488 = vadd.f32 %v3486, %v3487
      %v3489 = vsel %vm3447, %v3436, 0.0
      %v3490 = vadd.f32 %v3488, %v3489
      %v3491 = vsel %vm3447, %v3437, 0.0
      %v3492 = vadd.f32 %v3490, %v3491
      %v3493 = vsel %vm3447, %v3438, 0.0
      %v3494 = vadd.f32 %v3492, %v3493
      %v3495 = vsel %vm3447, %v3439, 0.0
      %v3496 = vadd.f32 %v3494, %v3495
      %v3497 = vsel %vm3447, %v3440, 0.0
      %v3498 = vadd.f32 %v3496, %v3497
      %v3499 = vsel %vm3447, %v3441, 0.0
      %v3500 = vadd.f32 %v3498, %v3499
      %v3501 = vsel %vm3447, %v3442, 0.0
      %v3502 = vadd.f32 %v3500, %v3501
      %v3503 = vsel %vm3447, %v3443, 0.0
      %v3504 = vadd.f32 %v3502, %v3503
      %v3505 = vsel %vm3447, %v3444, 0.0
      %v3506 = vadd.f32 %v3504, %v3505
      %v3507 = vsel %vm3447, %v3445, 0.0
      %v3508 = vadd.f32 %v3506, %v3507
      %v3509 = vsel %vm3447, %v3446, 0.0
      %v3510 = vadd.f32 %v3508, %v3509
      %v3511 = vrot.slane %v3510, 4
      %v3512 = vadd.f32 %v3510, %v3511
      %v3513 = vrot.slane %v3512, 2
      %v3514 = vadd.f32 %v3512, %v3513
      %v3515 = vrot.slane %v3514, 1
      %v3516 = vadd.f32 %v3514, %v3515
      %v3517 = vmul.f32 %v3415, %v3415
      %v3518 = vmul.f32 %v3416, %v3416
      %v3519 = vmul.f32 %v3417, %v3417
      %v3520 = vmul.f32 %v3418, %v3418
      %v3521 = vmul.f32 %v3419, %v3419
      %v3522 = vmul.f32 %v3420, %v3420
      %v3523 = vmul.f32 %v3421, %v3421
      %v3524 = vmul.f32 %v3422, %v3422
      %v3525 = vmul.f32 %v3423, %v3423
      %v3526 = vmul.f32 %v3424, %v3424
      %v3527 = vmul.f32 %v3425, %v3425
      %v3528 = vmul.f32 %v3426, %v3426
      %v3529 = vmul.f32 %v3427, %v3427
      %v3530 = vmul.f32 %v3428, %v3428
      %v3531 = vmul.f32 %v3429, %v3429
      %v3532 = vmul.f32 %v3430, %v3430
      %v3533 = vmul.f32 %v3431, %v3431
      %v3534 = vmul.f32 %v3432, %v3432
      %v3535 = vmul.f32 %v3433, %v3433
      %v3536 = vmul.f32 %v3434, %v3434
      %v3537 = vmul.f32 %v3435, %v3435
      %v3538 = vmul.f32 %v3436, %v3436
      %v3539 = vmul.f32 %v3437, %v3437
      %v3540 = vmul.f32 %v3438, %v3438
      %v3541 = vmul.f32 %v3439, %v3439
      %v3542 = vmul.f32 %v3440, %v3440
      %v3543 = vmul.f32 %v3441, %v3441
      %v3544 = vmul.f32 %v3442, %v3442
      %v3545 = vmul.f32 %v3443, %v3443
      %v3546 = vmul.f32 %v3444, %v3444
      %v3547 = vmul.f32 %v3445, %v3445
      %v3548 = vmul.f32 %v3446, %v3446
      %v3549 = vsel %vm3447, %v3517, 0.0
      %v3550 = vsel %vm3447, %v3518, 0.0
      %v3551 = vadd.f32 %v3549, %v3550
      %v3552 = vsel %vm3447, %v3519, 0.0
      %v3553 = vadd.f32 %v3551, %v3552
      %v3554 = vsel %vm3447, %v3520, 0.0
      %v3555 = vadd.f32 %v3553, %v3554
      %v3556 = vsel %vm3447, %v3521, 0.0
      %v3557 = vadd.f32 %v3555, %v3556
      %v3558 = vsel %vm3447, %v3522, 0.0
      %v3559 = vadd.f32 %v3557, %v3558
      %v3560 = vsel %vm3447, %v3523, 0.0
      %v3561 = vadd.f32 %v3559, %v3560
      %v3562 = vsel %vm3447, %v3524, 0.0
      %v3563 = vadd.f32 %v3561, %v3562
      %v3564 = vsel %vm3447, %v3525, 0.0
      %v3565 = vadd.f32 %v3563, %v3564
      %v3566 = vsel %vm3447, %v3526, 0.0
      %v3567 = vadd.f32 %v3565, %v3566
      %v3568 = vsel %vm3447, %v3527, 0.0
      %v3569 = vadd.f32 %v3567, %v3568
      %v3570 = vsel %vm3447, %v3528, 0.0
      %v3571 = vadd.f32 %v3569, %v3570
      %v3572 = vsel %vm3447, %v3529, 0.0
      %v3573 = vadd.f32 %v3571, %v3572
      %v3574 = vsel %vm3447, %v3530, 0.0
      %v3575 = vadd.f32 %v3573, %v3574
      %v3576 = vsel %vm3447, %v3531, 0.0
      %v3577 = vadd.f32 %v3575, %v3576
      %v3578 = vsel %vm3447, %v3532, 0.0
      %v3579 = vadd.f32 %v3577, %v3578
      %v3580 = vsel %vm3447, %v3533, 0.0
      %v3581 = vadd.f32 %v3579, %v3580
      %v3582 = vsel %vm3447, %v3534, 0.0
      %v3583 = vadd.f32 %v3581, %v3582
      %v3584 = vsel %vm3447, %v3535, 0.0
      %v3585 = vadd.f32 %v3583, %v3584
      %v3586 = vsel %vm3447, %v3536, 0.0
      %v3587 = vadd.f32 %v3585, %v3586
      %v3588 = vsel %vm3447, %v3537, 0.0
      %v3589 = vadd.f32 %v3587, %v3588
      %v3590 = vsel %vm3447, %v3538, 0.0
      %v3591 = vadd.f32 %v3589, %v3590
      %v3592 = vsel %vm3447, %v3539, 0.0
      %v3593 = vadd.f32 %v3591, %v3592
      %v3594 = vsel %vm3447, %v3540, 0.0
      %v3595 = vadd.f32 %v3593, %v3594
      %v3596 = vsel %vm3447, %v3541, 0.0
      %v3597 = vadd.f32 %v3595, %v3596
      %v3598 = vsel %vm3447, %v3542, 0.0
      %v3599 = vadd.f32 %v3597, %v3598
      %v3600 = vsel %vm3447, %v3543, 0.0
      %v3601 = vadd.f32 %v3599, %v3600
      %v3602 = vsel %vm3447, %v3544, 0.0
      %v3603 = vadd.f32 %v3601, %v3602
      %v3604 = vsel %vm3447, %v3545, 0.0
      %v3605 = vadd.f32 %v3603, %v3604
      %v3606 = vsel %vm3447, %v3546, 0.0
      %v3607 = vadd.f32 %v3605, %v3606
      %v3608 = vsel %vm3447, %v3547, 0.0
      %v3609 = vadd.f32 %v3607, %v3608
      %v3610 = vsel %vm3447, %v3548, 0.0
      %v3611 = vadd.f32 %v3609, %v3610
      %v3612 = vrot.slane %v3611, 4
      %v3613 = vadd.f32 %v3611, %v3612
      %v3614 = vrot.slane %v3613, 2
      %v3615 = vadd.f32 %v3613, %v3614
      %v3616 = vrot.slane %v3615, 1
      %v3617 = vadd.f32 %v3615, %v3616
      %v3618 = vld [vmem:[%s5] sm:$0xff]
      %v3619 = vld [vmem:[%s5 + $0x8] sm:$0xff]
      %v3620 = vld [vmem:[%s5 + $0x10] sm:$0xff]
      %v3621 = vld [vmem:[%s5 + $0x18] sm:$0xff]
      %v3623 = vsel %vm3447, %v3516, 0
      %3625 = vmatprep.subr.mxu0 0.0
      %3626 = vmatpush1.msra.mxu0 0.0
      %3627 = vmatprep.subr.mxu0 0.0
      %3628 = vmatpush1.msra.mxu0 0.0
      %3629 = vmatprep.subr.mxu0 0.0
      %3630 = vmatpush1.msra.mxu0 0.0
      %3631 = vmatprep.subr.mxu0 0.0
      %3632 = vmatpush1.msra.mxu0 0.0
      %3633 = vmatprep.subr.mxu0 0.0
      %3634 = vmatpush1.msra.mxu0 0.0
      %3635 = vmatprep.subr.mxu0 0.0
      %3636 = vmatpush1.msra.mxu0 0.0
      %3637 = vmatprep.subr.mxu0 0.0
      %3638 = vmatpush1.msra.mxu0 0.0
      %3639 = vmatprep.subr.mxu0 0.0
      %3640 = vmatpush1.msra.mxu0 0.0
      %3641 = vmatprep.subr.mxu0 0.0
      %3642 = vmatpush1.msra.mxu0 0.0
      %3643 = vmatprep.subr.mxu0 0.0
      %3644 = vmatpush1.msra.mxu0 0.0
      %3645 = vmatprep.subr.mxu0 0.0
      %3646 = vmatpush1.msra.mxu0 0.0
      %3647 = vmatprep.subr.mxu0 0.0
      %3648 = vmatpush1.msra.mxu0 0.0
      %3649 = vmatprep.subr.mxu0 0.0
      %3650 = vmatpush1.msra.mxu0 %v3621
      %3651 = vmatprep.subr.mxu0 0.0
      %3652 = vmatpush1.msra.mxu0 %v3620
      %3653 = vmatprep.subr.mxu0 0.0
      %3654 = vmatpush1.msra.mxu0 %v3619
      %3655 = vmatprep.subr.mxu0 0.0
      %3656 = vmatpush1.msra.mxu0 %v3618
      %3657 = vmatprep.subr.mxu0 0.0
      %3658 = vmatpush2.msra.mxu0 0.0
      %3659 = vmatprep.subr.mxu0 0.0
      %3660 = vmatpush2.msra.mxu0 0.0
      %3661 = vmatprep.subr.mxu0 0.0
      %3662 = vmatpush2.msra.mxu0 0.0
      %3663 = vmatprep.subr.mxu0 0.0
      %3664 = vmatpush2.msra.mxu0 0.0
      %3665 = vmatprep.subr.mxu0 0.0
      %3666 = vmatpush2.msra.mxu0 0.0
      %3667 = vmatprep.subr.mxu0 0.0
      %3668 = vmatpush2.msra.mxu0 0.0
      %3669 = vmatprep.subr.mxu0 0.0
      %3670 = vmatpush2.msra.mxu0 0.0
      %3671 = vmatprep.subr.mxu0 0.0
      %3672 = vmatpush2.msra.mxu0 0.0
      %3673 = vmatprep.subr.mxu0 0.0
      %3674 = vmatpush2.msra.mxu0 0.0
      %3675 = vmatprep.subr.mxu0 0.0
      %3676 = vmatpush2.msra.mxu0 0.0
      %3677 = vmatprep.subr.mxu0 0.0
      %3678 = vmatpush2.msra.mxu0 0.0
      %3679 = vmatprep.subr.mxu0 0.0
      %3680 = vmatpush2.msra.mxu0 0.0
      %3681 = vmatprep.subr.mxu0 0.0
      %3682 = vmatpush2.msra.mxu0 0.0
      %3683 = vmatprep.subr.mxu0 0.0
      %3684 = vmatpush2.msra.mxu0 0.0
      %3685 = vmatprep.subr.mxu0 0.0
      %3686 = vmatpush2.msra.mxu0 0.0
      %3687 = vmatprep.subr.mxu0 0.0
      %3688 = vmatpush2.msra.mxu0 0.0
      %3689 = vmatprep.mubr.f32.mxu0 0.0
      %3690 = vmatmul.mubr.f32.gmra.mxu0 %v3623
      %v3691 = vpop.f32.mrf.mxu0
      %v3692 = vadd.f32 0.0, %v3691
      %v3693 = vpop.f32.mrf.mxu0
      %3694 = vdwg.mxu0
      %v3696 = vsel %vm3447, %v3617, 0
      %3698 = vmatprep.subr.mxu0 0.0
      %3699 = vmatpush1.msra.mxu0 0.0
      %3700 = vmatprep.subr.mxu0 0.0
      %3701 = vmatpush1.msra.mxu0 0.0
      %3702 = vmatprep.subr.mxu0 0.0
      %3703 = vmatpush1.msra.mxu0 0.0
      %3704 = vmatprep.subr.mxu0 0.0
      %3705 = vmatpush1.msra.mxu0 0.0
      %3706 = vmatprep.subr.mxu0 0.0
      %3707 = vmatpush1.msra.mxu0 0.0
      %3708 = vmatprep.subr.mxu0 0.0
      %3709 = vmatpush1.msra.mxu0 0.0
      %3710 = vmatprep.subr.mxu0 0.0
      %3711 = vmatpush1.msra.mxu0 0.0
      %3712 = vmatprep.subr.mxu0 0.0
      %3713 = vmatpush1.msra.mxu0 0.0
      %3714 = vmatprep.subr.mxu0 0.0
      %3715 = vmatpush1.msra.mxu0 0.0
      %3716 = vmatprep.subr.mxu0 0.0
      %3717 = vmatpush1.msra.mxu0 0.0
      %3718 = vmatprep.subr.mxu0 0.0
      %3719 = vmatpush1.msra.mxu0 0.0
      %3720 = vmatprep.subr.mxu0 0.0
      %3721 = vmatpush1.msra.mxu0 0.0
      %3722 = vmatprep.subr.mxu0 0.0
      %3723 = vmatpush1.msra.mxu0 %v3621
      %3724 = vmatprep.subr.mxu0 0.0
      %3725 = vmatpush1.msra.mxu0 %v3620
      %3726 = vmatprep.subr.mxu0 0.0
      %3727 = vmatpush1.msra.mxu0 %v3619
      %3728 = vmatprep.subr.mxu0 0.0
      %3729 = vmatpush1.msra.mxu0 %v3618
      %3730 = vmatprep.subr.mxu0 0.0
      %3731 = vmatpush2.msra.mxu0 0.0
      %3732 = vmatprep.subr.mxu0 0.0
      %3733 = vmatpush2.msra.mxu0 0.0
      %3734 = vmatprep.subr.mxu0 0.0
      %3735 = vmatpush2.msra.mxu0 0.0
      %3736 = vmatprep.subr.mxu0 0.0
      %3737 = vmatpush2.msra.mxu0 0.0
      %3738 = vmatprep.subr.mxu0 0.0
      %3739 = vmatpush2.msra.mxu0 0.0
      %3740 = vmatprep.subr.mxu0 0.0
      %3741 = vmatpush2.msra.mxu0 0.0
      %3742 = vmatprep.subr.mxu0 0.0
      %3743 = vmatpush2.msra.mxu0 0.0
      %3744 = vmatprep.subr.mxu0 0.0
      %3745 = vmatpush2.msra.mxu0 0.0
      %3746 = vmatprep.subr.mxu0 0.0
      %3747 = vmatpush2.msra.mxu0 0.0
      %3748 = vmatprep.subr.mxu0 0.0
      %3749 = vmatpush2.msra.mxu0 0.0
      %3750 = vmatprep.subr.mxu0 0.0
      %3751 = vmatpush2.msra.mxu0 0.0
      %3752 = vmatprep.subr.mxu0 0.0
      %3753 = vmatpush2.msra.mxu0 0.0
      %3754 = vmatprep.subr.mxu0 0.0
      %3755 = vmatpush2.msra.mxu0 0.0
      %3756 = vmatprep.subr.mxu0 0.0
      %3757 = vmatpush2.msra.mxu0 0.0
      %3758 = vmatprep.subr.mxu0 0.0
      %3759 = vmatpush2.msra.mxu0 0.0
      %3760 = vmatprep.subr.mxu0 0.0
      %3761 = vmatpush2.msra.mxu0 0.0
      %3762 = vmatprep.mubr.f32.mxu0 0.0
      %3763 = vmatmul.mubr.f32.gmra.mxu0 %v3696
      %v3764 = vpop.f32.mrf.mxu0
      %v3765 = vadd.f32 0.0, %v3764
      %v3766 = vpop.f32.mrf.mxu0
      %3767 = vdwg.mxu0
      %v3768 = vrcp.pop 1024.0
      %v3769 = vmul.f32 %v3692, %v3768
      %v3770 = vmul.f32 %v3765, %v3768
      %v3771 = vmul.f32 %v3769, %v3769
      %v3772 = vsub.f32 %v3770, %v3771
      %v3773 = vmax.f32 %v3772, 0.0
      %v3774 = vadd.f32 %v3773, 1e-05
      %v3775 = vrsqrt.pop %v3774
      %v3776 = vld [vmem:[%s6] sm:$0xff]
      %vm3777 = vcmask 64512
      %v3779 = vsel %vm3777, %v3769, 0
      %3781 = vmatprep.subr.mxu0 0.0
      %3782 = vmatpush1.msra.mxu0 0.0
      %3783 = vmatprep.subr.mxu0 0.0
      %3784 = vmatpush1.msra.mxu0 0.0
      %3785 = vmatprep.subr.mxu0 0.0
      %3786 = vmatpush1.msra.mxu0 0.0
      %3787 = vmatprep.subr.mxu0 0.0
      %3788 = vmatpush1.msra.mxu0 0.0
      %3789 = vmatprep.subr.mxu0 0.0
      %3790 = vmatpush1.msra.mxu0 0.0
      %3791 = vmatprep.subr.mxu0 0.0
      %3792 = vmatpush1.msra.mxu0 0.0
      %3793 = vmatprep.subr.mxu0 0.0
      %3794 = vmatpush1.msra.mxu0 0.0
      %3795 = vmatprep.subr.mxu0 0.0
      %3796 = vmatpush1.msra.mxu0 0.0
      %3797 = vmatprep.subr.mxu0 0.0
      %3798 = vmatpush1.msra.mxu0 0.0
      %3799 = vmatprep.subr.mxu0 0.0
      %3800 = vmatpush1.msra.mxu0 0.0
      %3801 = vmatprep.subr.mxu0 0.0
      %3802 = vmatpush1.msra.mxu0 0.0
      %3803 = vmatprep.subr.mxu0 0.0
      %3804 = vmatpush1.msra.mxu0 0.0
      %3805 = vmatprep.subr.mxu0 0.0
      %3806 = vmatpush1.msra.mxu0 0.0
      %3807 = vmatprep.subr.mxu0 0.0
      %3808 = vmatpush1.msra.mxu0 0.0
      %3809 = vmatprep.subr.mxu0 0.0
      %3810 = vmatpush1.msra.mxu0 0.0
      %3811 = vmatprep.subr.mxu0 0.0
      %3812 = vmatpush1.msra.mxu0 %v3776
      %3813 = vmatprep.subr.mxu0 0.0
      %3814 = vmatpush2.msra.mxu0 0.0
      %3815 = vmatprep.subr.mxu0 0.0
      %3816 = vmatpush2.msra.mxu0 0.0
      %3817 = vmatprep.subr.mxu0 0.0
      %3818 = vmatpush2.msra.mxu0 0.0
      %3819 = vmatprep.subr.mxu0 0.0
      %3820 = vmatpush2.msra.mxu0 0.0
      %3821 = vmatprep.subr.mxu0 0.0
      %3822 = vmatpush2.msra.mxu0 0.0
      %3823 = vmatprep.subr.mxu0 0.0
      %3824 = vmatpush2.msra.mxu0 0.0
      %3825 = vmatprep.subr.mxu0 0.0
      %3826 = vmatpush2.msra.mxu0 0.0
      %3827 = vmatprep.subr.mxu0 0.0
      %3828 = vmatpush2.msra.mxu0 0.0
      %3829 = vmatprep.subr.mxu0 0.0
      %3830 = vmatpush2.msra.mxu0 0.0
      %3831 = vmatprep.subr.mxu0 0.0
      %3832 = vmatpush2.msra.mxu0 0.0
      %3833 = vmatprep.subr.mxu0 0.0
      %3834 = vmatpush2.msra.mxu0 0.0
      %3835 = vmatprep.subr.mxu0 0.0
      %3836 = vmatpush2.msra.mxu0 0.0
      %3837 = vmatprep.subr.mxu0 0.0
      %3838 = vmatpush2.msra.mxu0 0.0
      %3839 = vmatprep.subr.mxu0 0.0
      %3840 = vmatpush2.msra.mxu0 0.0
      %3841 = vmatprep.subr.mxu0 0.0
      %3842 = vmatpush2.msra.mxu0 0.0
      %3843 = vmatprep.subr.mxu0 0.0
      %3844 = vmatpush2.msra.mxu0 0.0
      %3845 = vmatprep.mubr.f32.mxu0 0.0
      %3846 = vmatmul.mubr.f32.gmra.mxu0 %v3779
      %v3847 = vpop.f32.mrf.mxu0
      %v3848 = vadd.f32 0.0, %v3847
      %v3849 = vpop.f32.mrf.mxu0
      %3850 = vdwg.mxu0
      %v3852 = vsel %vm3777, %v3775, 0
      %3854 = vmatprep.subr.mxu0 0.0
      %3855 = vmatpush1.msra.mxu0 0.0
      %3856 = vmatprep.subr.mxu0 0.0
      %3857 = vmatpush1.msra.mxu0 0.0
      %3858 = vmatprep.subr.mxu0 0.0
      %3859 = vmatpush1.msra.mxu0 0.0
      %3860 = vmatprep.subr.mxu0 0.0
      %3861 = vmatpush1.msra.mxu0 0.0
      %3862 = vmatprep.subr.mxu0 0.0
      %3863 = vmatpush1.msra.mxu0 0.0
      %3864 = vmatprep.subr.mxu0 0.0
      %3865 = vmatpush1.msra.mxu0 0.0
      %3866 = vmatprep.subr.mxu0 0.0
      %3867 = vmatpush1.msra.mxu0 0.0
      %3868 = vmatprep.subr.mxu0 0.0
      %3869 = vmatpush1.msra.mxu0 0.0
      %3870 = vmatprep.subr.mxu0 0.0
      %3871 = vmatpush1.msra.mxu0 0.0
      %3872 = vmatprep.subr.mxu0 0.0
      %3873 = vmatpush1.msra.mxu0 0.0
      %3874 = vmatprep.subr.mxu0 0.0
      %3875 = vmatpush1.msra.mxu0 0.0
      %3876 = vmatprep.subr.mxu0 0.0
      %3877 = vmatpush1.msra.mxu0 0.0
      %3878 = vmatprep.subr.mxu0 0.0
      %3879 = vmatpush1.msra.mxu0 0.0
      %3880 = vmatprep.subr.mxu0 0.0
      %3881 = vmatpush1.msra.mxu0 0.0
      %3882 = vmatprep.subr.mxu0 0.0
      %3883 = vmatpush1.msra.mxu0 0.0
      %3884 = vmatprep.subr.mxu0 0.0
      %3885 = vmatpush1.msra.mxu0 %v3776
      %3886 = vmatprep.subr.mxu0 0.0
      %3887 = vmatpush2.msra.mxu0 0.0
      %3888 = vmatprep.subr.mxu0 0.0
      %3889 = vmatpush2.msra.mxu0 0.0
      %3890 = vmatprep.subr.mxu0 0.0
      %3891 = vmatpush2.msra.mxu0 0.0
      %3892 = vmatprep.subr.mxu0 0.0
      %3893 = vmatpush2.msra.mxu0 0.0
      %3894 = vmatprep.subr.mxu0 0.0
      %3895 = vmatpush2.msra.mxu0 0.0
      %3896 = vmatprep.subr.mxu0 0.0
      %3897 = vmatpush2.msra.mxu0 0.0
      %3898 = vmatprep.subr.mxu0 0.0
      %3899 = vmatpush2.msra.mxu0 0.0
      %3900 = vmatprep.subr.mxu0 0.0
      %3901 = vmatpush2.msra.mxu0 0.0
      %3902 = vmatprep.subr.mxu0 0.0
      %3903 = vmatpush2.msra.mxu0 0.0
      %3904 = vmatprep.subr.mxu0 0.0
      %3905 = vmatpush2.msra.mxu0 0.0
      %3906 = vmatprep.subr.mxu0 0.0
      %3907 = vmatpush2.msra.mxu0 0.0
      %3908 = vmatprep.subr.mxu0 0.0
      %3909 = vmatpush2.msra.mxu0 0.0
      %3910 = vmatprep.subr.mxu0 0.0
      %3911 = vmatpush2.msra.mxu0 0.0
      %3912 = vmatprep.subr.mxu0 0.0
      %3913 = vmatpush2.msra.mxu0 0.0
      %3914 = vmatprep.subr.mxu0 0.0
      %3915 = vmatpush2.msra.mxu0 0.0
      %3916 = vmatprep.subr.mxu0 0.0
      %3917 = vmatpush2.msra.mxu0 0.0
      %3918 = vmatprep.mubr.f32.mxu0 0.0
      %3919 = vmatmul.mubr.f32.gmra.mxu0 %v3852
      %v3920 = vpop.f32.mrf.mxu0
      %v3921 = vadd.f32 0.0, %v3920
      %v3922 = vpop.f32.mrf.mxu0
      %3923 = vdwg.mxu0
      %v3924 = vlaneseq
      %v3925 = vshrl.u32 %v3924, 7
      %v3926 = vsub.s32 0, %v3925
      %v3927 = vrot.slane %v3848, %v3926
      %v3928 = vsub.f32 %v3415, %v3927
      %v3929 = vsub.f32 %v3416, %v3927
      %v3930 = vsub.f32 %v3417, %v3927
      %v3931 = vsub.f32 %v3418, %v3927
      %v3932 = vsub.f32 %v3419, %v3927
      %v3933 = vsub.f32 %v3420, %v3927
      %v3934 = vsub.f32 %v3421, %v3927
      %v3935 = vsub.f32 %v3422, %v3927
      %v3936 = vsub.f32 %v3423, %v3927
      %v3937 = vsub.f32 %v3424, %v3927
      %v3938 = vsub.f32 %v3425, %v3927
      %v3939 = vsub.f32 %v3426, %v3927
      %v3940 = vsub.f32 %v3427, %v3927
      %v3941 = vsub.f32 %v3428, %v3927
      %v3942 = vsub.f32 %v3429, %v3927
      %v3943 = vsub.f32 %v3430, %v3927
      %v3944 = vsub.f32 %v3431, %v3927
      %v3945 = vsub.f32 %v3432, %v3927
      %v3946 = vsub.f32 %v3433, %v3927
      %v3947 = vsub.f32 %v3434, %v3927
      %v3948 = vsub.f32 %v3435, %v3927
      %v3949 = vsub.f32 %v3436, %v3927
      %v3950 = vsub.f32 %v3437, %v3927
      %v3951 = vsub.f32 %v3438, %v3927
      %v3952 = vsub.f32 %v3439, %v3927
      %v3953 = vsub.f32 %v3440, %v3927
      %v3954 = vsub.f32 %v3441, %v3927
      %v3955 = vsub.f32 %v3442, %v3927
      %v3956 = vsub.f32 %v3443, %v3927
      %v3957 = vsub.f32 %v3444, %v3927
      %v3958 = vsub.f32 %v3445, %v3927
      %v3959 = vsub.f32 %v3446, %v3927
      %v3960 = vld [vmem:[%s3] sm:$0x1]
      %v3961 = vmul.f32 %v3921, %v3960
      %v3962 = vlaneseq
      %v3963 = vshrl.u32 %v3962, 7
      %v3964 = vsub.s32 0, %v3963
      %v3965 = vrot.slane %v3961, %v3964
      %v3966 = vmul.f32 %v3928, %v3965
      %v3967 = vmul.f32 %v3929, %v3965
      %v3968 = vmul.f32 %v3930, %v3965
      %v3969 = vmul.f32 %v3931, %v3965
      %v3970 = vmul.f32 %v3932, %v3965
      %v3971 = vmul.f32 %v3933, %v3965
      %v3972 = vmul.f32 %v3934, %v3965
      %v3973 = vmul.f32 %v3935, %v3965
      %v3974 = vmul.f32 %v3936, %v3965
      %v3975 = vmul.f32 %v3937, %v3965
      %v3976 = vmul.f32 %v3938, %v3965
      %v3977 = vmul.f32 %v3939, %v3965
      %v3978 = vmul.f32 %v3940, %v3965
      %v3979 = vmul.f32 %v3941, %v3965
      %v3980 = vmul.f32 %v3942, %v3965
      %v3981 = vmul.f32 %v3943, %v3965
      %v3982 = vmul.f32 %v3944, %v3965
      %v3983 = vmul.f32 %v3945, %v3965
      %v3984 = vmul.f32 %v3946, %v3965
      %v3985 = vmul.f32 %v3947, %v3965
      %v3986 = vmul.f32 %v3948, %v3965
      %v3987 = vmul.f32 %v3949, %v3965
      %v3988 = vmul.f32 %v3950, %v3965
      %v3989 = vmul.f32 %v3951, %v3965
      %v3990 = vmul.f32 %v3952, %v3965
      %v3991 = vmul.f32 %v3953, %v3965
      %v3992 = vmul.f32 %v3954, %v3965
      %v3993 = vmul.f32 %v3955, %v3965
      %v3994 = vmul.f32 %v3956, %v3965
      %v3995 = vmul.f32 %v3957, %v3965
      %v3996 = vmul.f32 %v3958, %v3965
      %v3997 = vmul.f32 %v3959, %v3965
      %v3998 = vld [vmem:[%s4] sm:$0x1]
      %v4000 = vlaneseq
      %v4001 = vshrl.u32 %v4000, 7
      %v4002 = vsub.s32 0, %v4001
      %v4003 = vrot.slane %v3998, %v4002
      %v4005 = vadd.f32 %v3966, %v4003
      %v4006 = vadd.f32 %v3967, %v4003
      %v4007 = vadd.f32 %v3968, %v4003
      %v4008 = vadd.f32 %v3969, %v4003
      %v4009 = vadd.f32 %v3970, %v4003
      %v4010 = vadd.f32 %v3971, %v4003
      %v4011 = vadd.f32 %v3972, %v4003
      %v4012 = vadd.f32 %v3973, %v4003
      %v4013 = vadd.f32 %v3974, %v4003
      %v4014 = vadd.f32 %v3975, %v4003
      %v4015 = vadd.f32 %v3976, %v4003
      %v4016 = vadd.f32 %v3977, %v4003
      %v4017 = vadd.f32 %v3978, %v4003
      %v4018 = vadd.f32 %v3979, %v4003
      %v4019 = vadd.f32 %v3980, %v4003
      %v4020 = vadd.f32 %v3981, %v4003
      %v4021 = vadd.f32 %v3982, %v4003
      %v4022 = vadd.f32 %v3983, %v4003
      %v4023 = vadd.f32 %v3984, %v4003
      %v4024 = vadd.f32 %v3985, %v4003
      %v4025 = vadd.f32 %v3986, %v4003
      %v4026 = vadd.f32 %v3987, %v4003
      %v4027 = vadd.f32 %v3988, %v4003
      %v4028 = vadd.f32 %v3989, %v4003
      %v4029 = vadd.f32 %v3990, %v4003
      %v4030 = vadd.f32 %v3991, %v4003
      %v4031 = vadd.f32 %v3992, %v4003
      %v4032 = vadd.f32 %v3993, %v4003
      %v4033 = vadd.f32 %v3994, %v4003
      %v4034 = vadd.f32 %v3995, %v4003
      %v4035 = vadd.f32 %v3996, %v4003
      %v4036 = vadd.f32 %v3997, %v4003
      %v4037 = vmax.f32 %v4005, 0.0
      %v4038 = vmax.f32 %v4006, 0.0
      %v4039 = vmax.f32 %v4007, 0.0
      %v4040 = vmax.f32 %v4008, 0.0
      %v4041 = vmax.f32 %v4009, 0.0
      %v4042 = vmax.f32 %v4010, 0.0
      %v4043 = vmax.f32 %v4011, 0.0
      %v4044 = vmax.f32 %v4012, 0.0
      %v4045 = vmax.f32 %v4013, 0.0
      %v4046 = vmax.f32 %v4014, 0.0
      %v4047 = vmax.f32 %v4015, 0.0
      %v4048 = vmax.f32 %v4016, 0.0
      %v4049 = vmax.f32 %v4017, 0.0
      %v4050 = vmax.f32 %v4018, 0.0
      %v4051 = vmax.f32 %v4019, 0.0
      %v4052 = vmax.f32 %v4020, 0.0
      %v4053 = vmax.f32 %v4021, 0.0
      %v4054 = vmax.f32 %v4022, 0.0
      %v4055 = vmax.f32 %v4023, 0.0
      %v4056 = vmax.f32 %v4024, 0.0
      %v4057 = vmax.f32 %v4025, 0.0
      %v4058 = vmax.f32 %v4026, 0.0
      %v4059 = vmax.f32 %v4027, 0.0
      %v4060 = vmax.f32 %v4028, 0.0
      %v4061 = vmax.f32 %v4029, 0.0
      %v4062 = vmax.f32 %v4030, 0.0
      %v4063 = vmax.f32 %v4031, 0.0
      %v4064 = vmax.f32 %v4032, 0.0
      %v4065 = vmax.f32 %v4033, 0.0
      %v4066 = vmax.f32 %v4034, 0.0
      %v4067 = vmax.f32 %v4035, 0.0
      %v4068 = vmax.f32 %v4036, 0.0
      %vm4069 = vcmask 257024
      %4070 = vst.msk [vmem:[#allocation2] sm:$0xf] %vm4069, 0
      %4071 = vst.msk [vmem:[#allocation2 + $0x4] sm:$0xf] %vm4069, 0
      %vm4072 = vcmask 253952
      %4073 = vst.msk [vmem:[#allocation2 + $0x8] sm:$0x1] %vm4072, 0
      %4074 = vst.msk [vmem:[#allocation2 + $0xc] sm:$0xf] %vm4069, 0
      %4075 = vst.msk [vmem:[#allocation2 + $0x10] sm:$0xf] %vm4069, 0
      %4076 = vst.msk [vmem:[#allocation2 + $0x14] sm:$0x1] %vm4072, 0
      %4077 = vst.msk [vmem:[#allocation2 + $0x18] sm:$0xf] %vm4069, 0
      %4078 = vst.msk [vmem:[#allocation2 + $0x1c] sm:$0xf] %vm4069, 0
      %4079 = vst.msk [vmem:[#allocation2 + $0x20] sm:$0x1] %vm4072, 0
      %4080 = vst.msk [vmem:[#allocation2 + $0x24] sm:$0xf] %vm4069, 0
      %4081 = vst.msk [vmem:[#allocation2 + $0x28] sm:$0xf] %vm4069, 0
      %4082 = vst.msk [vmem:[#allocation2 + $0x2c] sm:$0x1] %vm4072, 0
      %4083 = vst.msk [vmem:[#allocation2 + $0x30] sm:$0xf] %vm4069, 0
      %4084 = vst.msk [vmem:[#allocation2 + $0x34] sm:$0xf] %vm4069, 0
      %4085 = vst.msk [vmem:[#allocation2 + $0x38] sm:$0x1] %vm4072, 0
      %4086 = vst.msk [vmem:[#allocation2 + $0x3c] sm:$0xf] %vm4069, 0
      %4087 = vst.msk [vmem:[#allocation2 + $0x40] sm:$0xf] %vm4069, 0
      %4088 = vst.msk [vmem:[#allocation2 + $0x44] sm:$0x1] %vm4072, 0
      %4089 = vst.msk [vmem:[#allocation2 + $0x48] sm:$0xf] %vm4069, 0
      %4090 = vst.msk [vmem:[#allocation2 + $0x4c] sm:$0xf] %vm4069, 0
      %4091 = vst.msk [vmem:[#allocation2 + $0x50] sm:$0x1] %vm4072, 0
      %4092 = vst.msk [vmem:[#allocation2 + $0x54] sm:$0xf] %vm4069, 0
      %4093 = vst.msk [vmem:[#allocation2 + $0x58] sm:$0xf] %vm4069, 0
      %4094 = vst.msk [vmem:[#allocation2 + $0x5c] sm:$0x1] %vm4072, 0
      %4095 = vst.msk [vmem:[#allocation2 + $0x60] sm:$0xf] %vm4069, 0
      %4096 = vst.msk [vmem:[#allocation2 + $0x64] sm:$0xf] %vm4069, 0
      %4097 = vst.msk [vmem:[#allocation2 + $0x68] sm:$0x1] %vm4072, 0
      %4098 = vst.msk [vmem:[#allocation2 + $0x6c] sm:$0xf] %vm4069, 0
      %4099 = vst.msk [vmem:[#allocation2 + $0x70] sm:$0xf] %vm4069, 0
      %4100 = vst.msk [vmem:[#allocation2 + $0x74] sm:$0x1] %vm4072, 0
      %4101 = vst.msk [vmem:[#allocation2 + $0x78] sm:$0xf] %vm4069, 0
      %4102 = vst.msk [vmem:[#allocation2 + $0x7c] sm:$0xf] %vm4069, 0
      %4103 = vst.msk [vmem:[#allocation2 + $0x80] sm:$0x1] %vm4072, 0
      %4104 = vst.msk [vmem:[#allocation2 + $0x84] sm:$0xf] %vm4069, 0
      %4105 = vst.msk [vmem:[#allocation2 + $0x88] sm:$0xf] %vm4069, 0
      %4106 = vst.msk [vmem:[#allocation2 + $0x8c] sm:$0x1] %vm4072, 0
      %4107 = vst.msk [vmem:[#allocation2 + $0x90] sm:$0xf] %vm4069, 0
      %4108 = vst.msk [vmem:[#allocation2 + $0x94] sm:$0xf] %vm4069, 0
      %4109 = vst.msk [vmem:[#allocation2 + $0x98] sm:$0x1] %vm4072, 0
      %4110 = vst.msk [vmem:[#allocation2 + $0x9c] sm:$0xf] %vm4069, 0
      %4111 = vst.msk [vmem:[#allocation2 + $0xa0] sm:$0xf] %vm4069, 0
      %4112 = vst.msk [vmem:[#allocation2 + $0xa4] sm:$0x1] %vm4072, 0
      %4113 = vst.msk [vmem:[#allocation2 + $0xa8] sm:$0xf] %vm4069, 0
      %4114 = vst.msk [vmem:[#allocation2 + $0xac] sm:$0xf] %vm4069, 0
      %4115 = vst.msk [vmem:[#allocation2 + $0xb0] sm:$0x1] %vm4072, 0
      %4116 = vst.msk [vmem:[#allocation2 + $0xb4] sm:$0xf] %vm4069, 0
      %4117 = vst.msk [vmem:[#allocation2 + $0xb8] sm:$0xf] %vm4069, 0
      %4118 = vst.msk [vmem:[#allocation2 + $0xbc] sm:$0x1] %vm4072, 0
      %4119 = vst.msk [vmem:[#allocation2 + $0xc0] sm:$0xf] %vm4069, 0
      %4120 = vst.msk [vmem:[#allocation2 + $0xc4] sm:$0xf] %vm4069, 0
      %4121 = vst.msk [vmem:[#allocation2 + $0xc8] sm:$0x1] %vm4072, 0
      %4122 = vst.msk [vmem:[#allocation2 + $0xcc] sm:$0xf] %vm4069, 0
      %4123 = vst.msk [vmem:[#allocation2 + $0xd0] sm:$0xf] %vm4069, 0
      %4124 = vst.msk [vmem:[#allocation2 + $0xd4] sm:$0x1] %vm4072, 0
      %v4125 = vpack.c.bf16 %v4038, %v4037
      %v4126 = vpack.c.bf16 %v4040, %v4039
      %v4127 = vpack.c.bf16 %v4042, %v4041
      %v4128 = vpack.c.bf16 %v4044, %v4043
      %v4129 = vpack.c.bf16 %v4046, %v4045
      %v4130 = vpack.c.bf16 %v4048, %v4047
      %v4131 = vpack.c.bf16 %v4050, %v4049
      %v4132 = vpack.c.bf16 %v4052, %v4051
      %v4133 = vpack.c.bf16 %v4054, %v4053
      %v4134 = vpack.c.bf16 %v4056, %v4055
      %v4135 = vpack.c.bf16 %v4058, %v4057
      %v4136 = vpack.c.bf16 %v4060, %v4059
      %v4137 = vpack.c.bf16 %v4062, %v4061
      %v4138 = vpack.c.bf16 %v4064, %v4063
      %v4139 = vpack.c.bf16 %v4066, %v4065
      %v4140 = vpack.c.bf16 %v4068, %v4067
      %v4157 = vunpack.c.l.b16 %v4125
      %v4158 = vunpack.c.h.b16 %v4125
      %v4159 = vunpack.c.l.b16 %v4126
      %v4160 = vunpack.c.h.b16 %v4126
      %v4161 = vunpack.c.l.b16 %v4127
      %v4162 = vunpack.c.h.b16 %v4127
      %v4163 = vunpack.c.l.b16 %v4128
      %v4164 = vunpack.c.h.b16 %v4128
      %v4165 = vunpack.c.l.b16 %v4129
      %v4166 = vunpack.c.h.b16 %v4129
      %v4167 = vunpack.c.l.b16 %v4130
      %v4168 = vunpack.c.h.b16 %v4130
      %v4169 = vunpack.c.l.b16 %v4131
      %v4170 = vunpack.c.h.b16 %v4131
      %v4171 = vunpack.c.l.b16 %v4132
      %v4172 = vunpack.c.h.b16 %v4132
      %v4173 = vunpack.c.l.b16 %v4133
      %v4174 = vunpack.c.h.b16 %v4133
      %v4175 = vunpack.c.l.b16 %v4134
      %v4176 = vunpack.c.h.b16 %v4134
      %v4177 = vunpack.c.l.b16 %v4135
      %v4178 = vunpack.c.h.b16 %v4135
      %v4179 = vunpack.c.l.b16 %v4136
      %v4180 = vunpack.c.h.b16 %v4136
      %v4181 = vunpack.c.l.b16 %v4137
      %v4182 = vunpack.c.h.b16 %v4137
      %v4183 = vunpack.c.l.b16 %v4138
      %v4184 = vunpack.c.h.b16 %v4138
      %v4185 = vunpack.c.l.b16 %v4139
      %v4186 = vunpack.c.h.b16 %v4139
      %v4187 = vunpack.c.l.b16 %v4140
      %v4188 = vunpack.c.h.b16 %v4140
      %v4189 = vpack.c.b16 %v4157, %v4157
      %v4190 = vpack.c.b16 %v4158, %v4158
      %v4191 = vpack.c.b16 %v4159, %v4159
      %v4192 = vpack.c.b16 %v4160, %v4160
      %v4193 = vpack.c.b16 %v4161, %v4161
      %v4194 = vpack.c.b16 %v4162, %v4162
      %v4195 = vpack.c.b16 %v4163, %v4163
      %v4196 = vpack.c.b16 %v4164, %v4164
      %v4197 = vpack.c.b16 %v4165, %v4165
      %v4198 = vpack.c.b16 %v4166, %v4166
      %v4199 = vpack.c.b16 %v4167, %v4167
      %v4200 = vpack.c.b16 %v4168, %v4168
      %v4201 = vpack.c.b16 %v4169, %v4169
      %v4202 = vpack.c.b16 %v4170, %v4170
      %v4203 = vpack.c.b16 %v4171, %v4171
      %v4204 = vpack.c.b16 %v4172, %v4172
      %v4205 = vpack.c.b16 %v4173, %v4173
      %v4206 = vpack.c.b16 %v4174, %v4174
      %v4207 = vpack.c.b16 %v4175, %v4175
      %v4208 = vpack.c.b16 %v4176, %v4176
      %v4209 = vpack.c.b16 %v4177, %v4177
      %v4210 = vpack.c.b16 %v4178, %v4178
      %v4211 = vpack.c.b16 %v4179, %v4179
      %v4212 = vpack.c.b16 %v4180, %v4180
      %v4213 = vpack.c.b16 %v4181, %v4181
      %v4214 = vpack.c.b16 %v4182, %v4182
      %v4215 = vpack.c.b16 %v4183, %v4183
      %v4216 = vpack.c.b16 %v4184, %v4184
      %v4217 = vpack.c.b16 %v4185, %v4185
      %v4218 = vpack.c.b16 %v4186, %v4186
      %v4219 = vpack.c.b16 %v4187, %v4187
      %v4220 = vpack.c.b16 %v4188, %v4188
      %vm4221 = vsmask.f32 256
      %vm4222 = vsmask.f32 4368
      %vm4223 = vmor %vm4221, %vm4222
      %v4225 = vshrl.u32 %v4189, 16
      %v4227 = vrot.slane %v4225, 7
      %v4228 = vshll.u32 %v4189, 16
      %v4230 = vor.u32 %v4227, %v4228
      %v4231 = vrot.slane %v4227, 4
      %v4233 = vshrl.u32 %v4190, 16
      %v4235 = vrot.slane %v4233, 7
      %v4236 = vshll.u32 %v4190, 16
      %v4238 = vor.u32 %v4235, %v4236
      %v4239 = vsel %vm4223, %v4231, %v4238
      %v4240 = vrot.slane %v4235, 4
      %v4242 = vshrl.u32 %v4191, 16
      %v4244 = vrot.slane %v4242, 7
      %v4245 = vshll.u32 %v4191, 16
      %v4247 = vor.u32 %v4244, %v4245
      %v4248 = vrot.slane %v4244, 4
      %v4250 = vshrl.u32 %v4192, 16
      %v4252 = vrot.slane %v4250, 7
      %v4253 = vshll.u32 %v4192, 16
      %v4255 = vor.u32 %v4252, %v4253
      %v4256 = vsel %vm4223, %v4248, %v4255
      %v4257 = vrot.slane %v4252, 4
      %v4259 = vshrl.u32 %v4193, 16
      %v4261 = vrot.slane %v4259, 7
      %v4262 = vshll.u32 %v4193, 16
      %v4264 = vor.u32 %v4261, %v4262
      %v4265 = vrot.slane %v4261, 4
      %v4267 = vshrl.u32 %v4194, 16
      %v4269 = vrot.slane %v4267, 7
      %v4270 = vshll.u32 %v4194, 16
      %v4272 = vor.u32 %v4269, %v4270
      %v4273 = vsel %vm4223, %v4265, %v4272
      %v4274 = vrot.slane %v4269, 4
      %v4276 = vshrl.u32 %v4195, 16
      %v4278 = vrot.slane %v4276, 7
      %v4279 = vshll.u32 %v4195, 16
      %v4281 = vor.u32 %v4278, %v4279
      %v4282 = vrot.slane %v4278, 4
      %v4284 = vshrl.u32 %v4196, 16
      %v4286 = vrot.slane %v4284, 7
      %v4287 = vshll.u32 %v4196, 16
      %v4289 = vor.u32 %v4286, %v4287
      %v4290 = vsel %vm4223, %v4282, %v4289
      %v4291 = vrot.slane %v4286, 4
      %v4293 = vshrl.u32 %v4197, 16
      %v4295 = vrot.slane %v4293, 7
      %v4296 = vshll.u32 %v4197, 16
      %v4298 = vor.u32 %v4295, %v4296
      %v4299 = vrot.slane %v4295, 4
      %v4301 = vshrl.u32 %v4198, 16
      %v4303 = vrot.slane %v4301, 7
      %v4304 = vshll.u32 %v4198, 16
      %v4306 = vor.u32 %v4303, %v4304
      %v4307 = vsel %vm4223, %v4299, %v4306
      %v4308 = vrot.slane %v4303, 4
      %v4310 = vshrl.u32 %v4199, 16
      %v4312 = vrot.slane %v4310, 7
      %v4313 = vshll.u32 %v4199, 16
      %v4315 = vor.u32 %v4312, %v4313
      %v4316 = vrot.slane %v4312, 4
      %v4318 = vshrl.u32 %v4200, 16
      %v4320 = vrot.slane %v4318, 7
      %v4321 = vshll.u32 %v4200, 16
      %v4323 = vor.u32 %v4320, %v4321
      %v4324 = vsel %vm4223, %v4316, %v4323
      %v4325 = vrot.slane %v4320, 4
      %v4327 = vshrl.u32 %v4201, 16
      %v4329 = vrot.slane %v4327, 7
      %v4330 = vshll.u32 %v4201, 16
      %v4332 = vor.u32 %v4329, %v4330
      %v4333 = vrot.slane %v4329, 4
      %v4335 = vshrl.u32 %v4202, 16
      %v4337 = vrot.slane %v4335, 7
      %v4338 = vshll.u32 %v4202, 16
      %v4340 = vor.u32 %v4337, %v4338
      %v4341 = vsel %vm4223, %v4333, %v4340
      %v4342 = vrot.slane %v4337, 4
      %v4344 = vshrl.u32 %v4203, 16
      %v4346 = vrot.slane %v4344, 7
      %v4347 = vshll.u32 %v4203, 16
      %v4349 = vor.u32 %v4346, %v4347
      %v4350 = vrot.slane %v4346, 4
      %v4352 = vshrl.u32 %v4204, 16
      %v4354 = vrot.slane %v4352, 7
      %v4355 = vshll.u32 %v4204, 16
      %v4357 = vor.u32 %v4354, %v4355
      %v4358 = vsel %vm4223, %v4350, %v4357
      %v4359 = vrot.slane %v4354, 4
      %v4361 = vshrl.u32 %v4205, 16
      %v4363 = vrot.slane %v4361, 7
      %v4364 = vshll.u32 %v4205, 16
      %v4366 = vor.u32 %v4363, %v4364
      %v4367 = vrot.slane %v4363, 4
      %v4369 = vshrl.u32 %v4206, 16
      %v4371 = vrot.slane %v4369, 7
      %v4372 = vshll.u32 %v4206, 16
      %v4374 = vor.u32 %v4371, %v4372
      %v4375 = vsel %vm4223, %v4367, %v4374
      %v4376 = vrot.slane %v4371, 4
      %v4378 = vshrl.u32 %v4207, 16
      %v4380 = vrot.slane %v4378, 7
      %v4381 = vshll.u32 %v4207, 16
      %v4383 = vor.u32 %v4380, %v4381
      %v4384 = vrot.slane %v4380, 4
      %v4386 = vshrl.u32 %v4208, 16
      %v4388 = vrot.slane %v4386, 7
      %v4389 = vshll.u32 %v4208, 16
      %v4391 = vor.u32 %v4388, %v4389
      %v4392 = vsel %vm4223, %v4384, %v4391
      %v4393 = vrot.slane %v4388, 4
      %v4395 = vshrl.u32 %v4209, 16
      %v4397 = vrot.slane %v4395, 7
      %v4398 = vshll.u32 %v4209, 16
      %v4400 = vor.u32 %v4397, %v4398
      %v4401 = vrot.slane %v4397, 4
      %v4403 = vshrl.u32 %v4210, 16
      %v4405 = vrot.slane %v4403, 7
      %v4406 = vshll.u32 %v4210, 16
      %v4408 = vor.u32 %v4405, %v4406
      %v4409 = vsel %vm4223, %v4401, %v4408
      %v4410 = vrot.slane %v4405, 4
      %v4412 = vshrl.u32 %v4211, 16
      %v4414 = vrot.slane %v4412, 7
      %v4415 = vshll.u32 %v4211, 16
      %v4417 = vor.u32 %v4414, %v4415
      %v4418 = vrot.slane %v4414, 4
      %v4420 = vshrl.u32 %v4212, 16
      %v4422 = vrot.slane %v4420, 7
      %v4423 = vshll.u32 %v4212, 16
      %v4425 = vor.u32 %v4422, %v4423
      %v4426 = vsel %vm4223, %v4418, %v4425
      %v4427 = vrot.slane %v4422, 4
      %v4429 = vshrl.u32 %v4213, 16
      %v4431 = vrot.slane %v4429, 7
      %v4432 = vshll.u32 %v4213, 16
      %v4434 = vor.u32 %v4431, %v4432
      %v4435 = vrot.slane %v4431, 4
      %v4437 = vshrl.u32 %v4214, 16
      %v4439 = vrot.slane %v4437, 7
      %v4440 = vshll.u32 %v4214, 16
      %v4442 = vor.u32 %v4439, %v4440
      %v4443 = vsel %vm4223, %v4435, %v4442
      %v4444 = vrot.slane %v4439, 4
      %v4446 = vshrl.u32 %v4215, 16
      %v4448 = vrot.slane %v4446, 7
      %v4449 = vshll.u32 %v4215, 16
      %v4451 = vor.u32 %v4448, %v4449
      %v4452 = vrot.slane %v4448, 4
      %v4454 = vshrl.u32 %v4216, 16
      %v4456 = vrot.slane %v4454, 7
      %v4457 = vshll.u32 %v4216, 16
      %v4459 = vor.u32 %v4456, %v4457
      %v4460 = vsel %vm4223, %v4452, %v4459
      %v4461 = vrot.slane %v4456, 4
      %v4463 = vshrl.u32 %v4217, 16
      %v4465 = vrot.slane %v4463, 7
      %v4466 = vshll.u32 %v4217, 16
      %v4468 = vor.u32 %v4465, %v4466
      %v4469 = vrot.slane %v4465, 4
      %v4471 = vshrl.u32 %v4218, 16
      %v4473 = vrot.slane %v4471, 7
      %v4474 = vshll.u32 %v4218, 16
      %v4476 = vor.u32 %v4473, %v4474
      %v4477 = vsel %vm4223, %v4469, %v4476
      %v4478 = vrot.slane %v4473, 4
      %v4480 = vshrl.u32 %v4219, 16
      %v4482 = vrot.slane %v4480, 7
      %v4483 = vshll.u32 %v4219, 16
      %v4485 = vor.u32 %v4482, %v4483
      %v4486 = vrot.slane %v4482, 4
      %v4488 = vshrl.u32 %v4220, 16
      %v4490 = vrot.slane %v4488, 7
      %v4491 = vshll.u32 %v4220, 16
      %v4493 = vor.u32 %v4490, %v4491
      %v4494 = vsel %vm4223, %v4486, %v4493
      %v4495 = vrot.slane %v4490, 4
      %s4544 = scalar_lea.vmem [#allocation2], 12
      %vm4545 = vcmask 257024
      %vm4546 = vsmask.f32 7938
      %vm4547 = vmand %vm4545, %vm4546
      %v4548 = vld [vmem:[%s4544] sm:$0xf]
      %v4549 = vsel %vm4547, %v4230, %v4548
      %4550 = vst [vmem:[%s4544] sm:$0xf] %v4549
      %4551 = vst.msk [vmem:[%s4544 + $0x4] sm:$0xf] %vm4069, %v4239
      %vm4552 = vcmask 253952
      %vm4553 = vmand %vm4552, %vm4221
      %v4554 = vld [vmem:[%s4544 + $0x8] sm:$0x1]
      %v4555 = vsel %vm4553, %v4240, %v4554
      %4556 = vst [vmem:[%s4544 + $0x8] sm:$0x1] %v4555
      %v4557 = vld [vmem:[%s4544 + $0xc] sm:$0xf]
      %v4558 = vsel %vm4547, %v4247, %v4557
      %4559 = vst [vmem:[%s4544 + $0xc] sm:$0xf] %v4558
      %4560 = vst.msk [vmem:[%s4544 + $0x10] sm:$0xf] %vm4069, %v4256
      %v4561 = vld [vmem:[%s4544 + $0x14] sm:$0x1]
      %v4562 = vsel %vm4553, %v4257, %v4561
      %4563 = vst [vmem:[%s4544 + $0x14] sm:$0x1] %v4562
      %v4564 = vld [vmem:[%s4544 + $0x18] sm:$0xf]
      %v4565 = vsel %vm4547, %v4264, %v4564
      %4566 = vst [vmem:[%s4544 + $0x18] sm:$0xf] %v4565
      %4567 = vst.msk [vmem:[%s4544 + $0x1c] sm:$0xf] %vm4069, %v4273
      %v4568 = vld [vmem:[%s4544 + $0x20] sm:$0x1]
      %v4569 = vsel %vm4553, %v4274, %v4568
      %4570 = vst [vmem:[%s4544 + $0x20] sm:$0x1] %v4569
      %v4571 = vld [vmem:[%s4544 + $0x24] sm:$0xf]
      %v4572 = vsel %vm4547, %v4281, %v4571
      %4573 = vst [vmem:[%s4544 + $0x24] sm:$0xf] %v4572
      %4574 = vst.msk [vmem:[%s4544 + $0x28] sm:$0xf] %vm4069, %v4290
      %v4575 = vld [vmem:[%s4544 + $0x2c] sm:$0x1]
      %v4576 = vsel %vm4553, %v4291, %v4575
      %4577 = vst [vmem:[%s4544 + $0x2c] sm:$0x1] %v4576
      %v4578 = vld [vmem:[%s4544 + $0x30] sm:$0xf]
      %v4579 = vsel %vm4547, %v4298, %v4578
      %4580 = vst [vmem:[%s4544 + $0x30] sm:$0xf] %v4579
      %4581 = vst.msk [vmem:[%s4544 + $0x34] sm:$0xf] %vm4069, %v4307
      %v4582 = vld [vmem:[%s4544 + $0x38] sm:$0x1]
      %v4583 = vsel %vm4553, %v4308, %v4582
      %4584 = vst [vmem:[%s4544 + $0x38] sm:$0x1] %v4583
      %v4585 = vld [vmem:[%s4544 + $0x3c] sm:$0xf]
      %v4586 = vsel %vm4547, %v4315, %v4585
      %4587 = vst [vmem:[%s4544 + $0x3c] sm:$0xf] %v4586
      %4588 = vst.msk [vmem:[%s4544 + $0x40] sm:$0xf] %vm4069, %v4324
      %v4589 = vld [vmem:[%s4544 + $0x44] sm:$0x1]
      %v4590 = vsel %vm4553, %v4325, %v4589
      %4591 = vst [vmem:[%s4544 + $0x44] sm:$0x1] %v4590
      %v4592 = vld [vmem:[%s4544 + $0x48] sm:$0xf]
      %v4593 = vsel %vm4547, %v4332, %v4592
      %4594 = vst [vmem:[%s4544 + $0x48] sm:$0xf] %v4593
      %4595 = vst.msk [vmem:[%s4544 + $0x4c] sm:$0xf] %vm4069, %v4341
      %v4596 = vld [vmem:[%s4544 + $0x50] sm:$0x1]
      %v4597 = vsel %vm4553, %v4342, %v4596
      %4598 = vst [vmem:[%s4544 + $0x50] sm:$0x1] %v4597
      %v4599 = vld [vmem:[%s4544 + $0x54] sm:$0xf]
      %v4600 = vsel %vm4547, %v4349, %v4599
      %4601 = vst [vmem:[%s4544 + $0x54] sm:$0xf] %v4600
      %4602 = vst.msk [vmem:[%s4544 + $0x58] sm:$0xf] %vm4069, %v4358
      %v4603 = vld [vmem:[%s4544 + $0x5c] sm:$0x1]
      %v4604 = vsel %vm4553, %v4359, %v4603
      %4605 = vst [vmem:[%s4544 + $0x5c] sm:$0x1] %v4604
      %v4606 = vld [vmem:[%s4544 + $0x60] sm:$0xf]
      %v4607 = vsel %vm4547, %v4366, %v4606
      %4608 = vst [vmem:[%s4544 + $0x60] sm:$0xf] %v4607
      %4609 = vst.msk [vmem:[%s4544 + $0x64] sm:$0xf] %vm4069, %v4375
      %v4610 = vld [vmem:[%s4544 + $0x68] sm:$0x1]
      %v4611 = vsel %vm4553, %v4376, %v4610
      %4612 = vst [vmem:[%s4544 + $0x68] sm:$0x1] %v4611
      %v4613 = vld [vmem:[%s4544 + $0x6c] sm:$0xf]
      %v4614 = vsel %vm4547, %v4383, %v4613
      %4615 = vst [vmem:[%s4544 + $0x6c] sm:$0xf] %v4614
      %4616 = vst.msk [vmem:[%s4544 + $0x70] sm:$0xf] %vm4069, %v4392
      %v4617 = vld [vmem:[%s4544 + $0x74] sm:$0x1]
      %v4618 = vsel %vm4553, %v4393, %v4617
      %4619 = vst [vmem:[%s4544 + $0x74] sm:$0x1] %v4618
      %v4620 = vld [vmem:[%s4544 + $0x78] sm:$0xf]
      %v4621 = vsel %vm4547, %v4400, %v4620
      %4622 = vst [vmem:[%s4544 + $0x78] sm:$0xf] %v4621
      %4623 = vst.msk [vmem:[%s4544 + $0x7c] sm:$0xf] %vm4069, %v4409
      %v4624 = vld [vmem:[%s4544 + $0x80] sm:$0x1]
      %v4625 = vsel %vm4553, %v4410, %v4624
      %4626 = vst [vmem:[%s4544 + $0x80] sm:$0x1] %v4625
      %v4627 = vld [vmem:[%s4544 + $0x84] sm:$0xf]
      %v4628 = vsel %vm4547, %v4417, %v4627
      %4629 = vst [vmem:[%s4544 + $0x84] sm:$0xf] %v4628
      %4630 = vst.msk [vmem:[%s4544 + $0x88] sm:$0xf] %vm4069, %v4426
      %v4631 = vld [vmem:[%s4544 + $0x8c] sm:$0x1]
      %v4632 = vsel %vm4553, %v4427, %v4631
      %4633 = vst [vmem:[%s4544 + $0x8c] sm:$0x1] %v4632
      %v4634 = vld [vmem:[%s4544 + $0x90] sm:$0xf]
      %v4635 = vsel %vm4547, %v4434, %v4634
      %4636 = vst [vmem:[%s4544 + $0x90] sm:$0xf] %v4635
      %4637 = vst.msk [vmem:[%s4544 + $0x94] sm:$0xf] %vm4069, %v4443
      %v4638 = vld [vmem:[%s4544 + $0x98] sm:$0x1]
      %v4639 = vsel %vm4553, %v4444, %v4638
      %4640 = vst [vmem:[%s4544 + $0x98] sm:$0x1] %v4639
      %v4641 = vld [vmem:[%s4544 + $0x9c] sm:$0xf]
      %v4642 = vsel %vm4547, %v4451, %v4641
      %4643 = vst [vmem:[%s4544 + $0x9c] sm:$0xf] %v4642
      %4644 = vst.msk [vmem:[%s4544 + $0xa0] sm:$0xf] %vm4069, %v4460
      %v4645 = vld [vmem:[%s4544 + $0xa4] sm:$0x1]
      %v4646 = vsel %vm4553, %v4461, %v4645
      %4647 = vst [vmem:[%s4544 + $0xa4] sm:$0x1] %v4646
      %v4648 = vld [vmem:[%s4544 + $0xa8] sm:$0xf]
      %v4649 = vsel %vm4547, %v4468, %v4648
      %4650 = vst [vmem:[%s4544 + $0xa8] sm:$0xf] %v4649
      %4651 = vst.msk [vmem:[%s4544 + $0xac] sm:$0xf] %vm4069, %v4477
      %v4652 = vld [vmem:[%s4544 + $0xb0] sm:$0x1]
      %v4653 = vsel %vm4553, %v4478, %v4652
      %4654 = vst [vmem:[%s4544 + $0xb0] sm:$0x1] %v4653
      %v4655 = vld [vmem:[%s4544 + $0xb4] sm:$0xf]
      %v4656 = vsel %vm4547, %v4485, %v4655
      %4657 = vst [vmem:[%s4544 + $0xb4] sm:$0xf] %v4656
      %4658 = vst.msk [vmem:[%s4544 + $0xb8] sm:$0xf] %vm4069, %v4494
      %v4659 = vld [vmem:[%s4544 + $0xbc] sm:$0x1]
      %v4660 = vsel %vm4553, %v4495, %v4659
      %4661 = vst [vmem:[%s4544 + $0xbc] sm:$0x1] %v4660
      %v4662 = vld [vmem:[#allocation2] sm:$0xf]
      %v4663 = vld [vmem:[#allocation2 + $0x4] sm:$0xf]
      %v4664 = vld [vmem:[#allocation2 + $0xc] sm:$0xf]
      %v4665 = vld [vmem:[#allocation2 + $0x10] sm:$0xf]
      %v4666 = vld [vmem:[#allocation2 + $0x18] sm:$0xf]
      %v4667 = vld [vmem:[#allocation2 + $0x1c] sm:$0xf]
      %v4668 = vld [vmem:[#allocation2 + $0x24] sm:$0xf]
      %v4669 = vld [vmem:[#allocation2 + $0x28] sm:$0xf]
      %v4670 = vld [vmem:[#allocation2 + $0x30] sm:$0xf]
      %v4671 = vld [vmem:[#allocation2 + $0x34] sm:$0xf]
      %v4672 = vld [vmem:[#allocation2 + $0x3c] sm:$0xf]
      %v4673 = vld [vmem:[#allocation2 + $0x40] sm:$0xf]
      %v4674 = vld [vmem:[#allocation2 + $0x48] sm:$0xf]
      %v4675 = vld [vmem:[#allocation2 + $0x4c] sm:$0xf]
      %v4676 = vld [vmem:[#allocation2 + $0x54] sm:$0xf]
      %v4677 = vld [vmem:[#allocation2 + $0x58] sm:$0xf]
      %v4678 = vld [vmem:[#allocation2 + $0x60] sm:$0xf]
      %v4679 = vld [vmem:[#allocation2 + $0x64] sm:$0xf]
      %v4680 = vld [vmem:[#allocation2 + $0x6c] sm:$0xf]
      %v4681 = vld [vmem:[#allocation2 + $0x70] sm:$0xf]
      %v4682 = vld [vmem:[#allocation2 + $0x78] sm:$0xf]
      %v4683 = vld [vmem:[#allocation2 + $0x7c] sm:$0xf]
      %v4684 = vld [vmem:[#allocation2 + $0x84] sm:$0xf]
      %v4685 = vld [vmem:[#allocation2 + $0x88] sm:$0xf]
      %v4686 = vld [vmem:[#allocation2 + $0x90] sm:$0xf]
      %v4687 = vld [vmem:[#allocation2 + $0x94] sm:$0xf]
      %v4688 = vld [vmem:[#allocation2 + $0x9c] sm:$0xf]
      %v4689 = vld [vmem:[#allocation2 + $0xa0] sm:$0xf]
      %v4690 = vld [vmem:[#allocation2 + $0xa8] sm:$0xf]
      %v4691 = vld [vmem:[#allocation2 + $0xac] sm:$0xf]
      %v4692 = vld [vmem:[#allocation2 + $0xb4] sm:$0xf]
      %v4693 = vld [vmem:[#allocation2 + $0xb8] sm:$0xf]
      %v4694 = vld [vmem:[%s7] sm:$0xf]
      %v4695 = vld [vmem:[%s7 + $0x4] sm:$0xf]
      %v4696 = vld [vmem:[%s7 + $0x8] sm:$0xf]
      %v4697 = vld [vmem:[%s7 + $0xc] sm:$0xf]
      %v4698 = vld [vmem:[#allocation2 + $0x8] sm:$0x1]
      %v4699 = vld [vmem:[#allocation2 + $0x14] sm:$0x1]
      %v4700 = vld [vmem:[#allocation2 + $0x20] sm:$0x1]
      %v4701 = vld [vmem:[#allocation2 + $0x2c] sm:$0x1]
      %v4702 = vld [vmem:[#allocation2 + $0x38] sm:$0x1]
      %v4703 = vld [vmem:[#allocation2 + $0x44] sm:$0x1]
      %v4704 = vld [vmem:[#allocation2 + $0x50] sm:$0x1]
      %v4705 = vld [vmem:[#allocation2 + $0x5c] sm:$0x1]
      %v4706 = vld [vmem:[#allocation2 + $0x68] sm:$0x1]
      %v4707 = vld [vmem:[#allocation2 + $0x74] sm:$0x1]
      %v4708 = vld [vmem:[#allocation2 + $0x80] sm:$0x1]
      %v4709 = vld [vmem:[#allocation2 + $0x8c] sm:$0x1]
      %v4710 = vld [vmem:[#allocation2 + $0x98] sm:$0x1]
      %v4711 = vld [vmem:[#allocation2 + $0xa4] sm:$0x1]
      %v4712 = vld [vmem:[#allocation2 + $0xb0] sm:$0x1]
      %v4713 = vld [vmem:[#allocation2 + $0xbc] sm:$0x1]
      %v4715 = vshrl.u32 %v4662, 16
      %v4717 = vrot.slane %v4715, 4
      %v4718 = vshll.u32 %v4662, 16
      %v4720 = vrot.slane %v4718, 5
      %v4721 = vor.u32 %v4717, %v4720
      %v4722 = vrot.slane %v4721, 4
      %v4724 = vshll.u32 %v4663, 16
      %v4726 = vrot.slane %v4724, 5
      %v4727 = vsel %vm506, %v4722, %v4726
      %v4728 = vshrl.u32 %v4663, 16
      %v4730 = vrot.slane %v4728, 4
      %v4731 = vor.u32 %v4730, %v4726
      %v4732 = vrot.slane %v4731, 4
      %v4734 = vshll.u32 %v4698, 16
      %v4736 = vrot.slane %v4734, 5
      %v4737 = vsel %vm506, %v4732, %v4736
      %v4739 = vshrl.u32 %v4664, 16
      %v4741 = vrot.slane %v4739, 4
      %v4742 = vshll.u32 %v4664, 16
      %v4744 = vrot.slane %v4742, 5
      %v4745 = vor.u32 %v4741, %v4744
      %v4746 = vrot.slane %v4745, 4
      %v4748 = vshll.u32 %v4665, 16
      %v4750 = vrot.slane %v4748, 5
      %v4751 = vsel %vm506, %v4746, %v4750
      %v4752 = vshrl.u32 %v4665, 16
      %v4754 = vrot.slane %v4752, 4
      %v4755 = vor.u32 %v4754, %v4750
      %v4756 = vrot.slane %v4755, 4
      %v4758 = vshll.u32 %v4699, 16
      %v4760 = vrot.slane %v4758, 5
      %v4761 = vsel %vm506, %v4756, %v4760
      %v4763 = vshrl.u32 %v4666, 16
      %v4765 = vrot.slane %v4763, 4
      %v4766 = vshll.u32 %v4666, 16
      %v4768 = vrot.slane %v4766, 5
      %v4769 = vor.u32 %v4765, %v4768
      %v4770 = vrot.slane %v4769, 4
      %v4772 = vshll.u32 %v4667, 16
      %v4774 = vrot.slane %v4772, 5
      %v4775 = vsel %vm506, %v4770, %v4774
      %v4776 = vshrl.u32 %v4667, 16
      %v4778 = vrot.slane %v4776, 4
      %v4779 = vor.u32 %v4778, %v4774
      %v4780 = vrot.slane %v4779, 4
      %v4782 = vshll.u32 %v4700, 16
      %v4784 = vrot.slane %v4782, 5
      %v4785 = vsel %vm506, %v4780, %v4784
      %v4787 = vshrl.u32 %v4668, 16
      %v4789 = vrot.slane %v4787, 4
      %v4790 = vshll.u32 %v4668, 16
      %v4792 = vrot.slane %v4790, 5
      %v4793 = vor.u32 %v4789, %v4792
      %v4794 = vrot.slane %v4793, 4
      %v4796 = vshll.u32 %v4669, 16
      %v4798 = vrot.slane %v4796, 5
      %v4799 = vsel %vm506, %v4794, %v4798
      %v4800 = vshrl.u32 %v4669, 16
      %v4802 = vrot.slane %v4800, 4
      %v4803 = vor.u32 %v4802, %v4798
      %v4804 = vrot.slane %v4803, 4
      %v4806 = vshll.u32 %v4701, 16
      %v4808 = vrot.slane %v4806, 5
      %v4809 = vsel %vm506, %v4804, %v4808
      %v4811 = vshrl.u32 %v4670, 16
      %v4813 = vrot.slane %v4811, 4
      %v4814 = vshll.u32 %v4670, 16
      %v4816 = vrot.slane %v4814, 5
      %v4817 = vor.u32 %v4813, %v4816
      %v4818 = vrot.slane %v4817, 4
      %v4820 = vshll.u32 %v4671, 16
      %v4822 = vrot.slane %v4820, 5
      %v4823 = vsel %vm506, %v4818, %v4822
      %v4824 = vshrl.u32 %v4671, 16
      %v4826 = vrot.slane %v4824, 4
      %v4827 = vor.u32 %v4826, %v4822
      %v4828 = vrot.slane %v4827, 4
      %v4830 = vshll.u32 %v4702, 16
      %v4832 = vrot.slane %v4830, 5
      %v4833 = vsel %vm506, %v4828, %v4832
      %v4835 = vshrl.u32 %v4672, 16
      %v4837 = vrot.slane %v4835, 4
      %v4838 = vshll.u32 %v4672, 16
      %v4840 = vrot.slane %v4838, 5
      %v4841 = vor.u32 %v4837, %v4840
      %v4842 = vrot.slane %v4841, 4
      %v4844 = vshll.u32 %v4673, 16
      %v4846 = vrot.slane %v4844, 5
      %v4847 = vsel %vm506, %v4842, %v4846
      %v4848 = vshrl.u32 %v4673, 16
      %v4850 = vrot.slane %v4848, 4
      %v4851 = vor.u32 %v4850, %v4846
      %v4852 = vrot.slane %v4851, 4
      %v4854 = vshll.u32 %v4703, 16
      %v4856 = vrot.slane %v4854, 5
      %v4857 = vsel %vm506, %v4852, %v4856
      %v4859 = vshrl.u32 %v4674, 16
      %v4861 = vrot.slane %v4859, 4
      %v4862 = vshll.u32 %v4674, 16
      %v4864 = vrot.slane %v4862, 5
      %v4865 = vor.u32 %v4861, %v4864
      %v4866 = vrot.slane %v4865, 4
      %v4868 = vshll.u32 %v4675, 16
      %v4870 = vrot.slane %v4868, 5
      %v4871 = vsel %vm506, %v4866, %v4870
      %v4872 = vshrl.u32 %v4675, 16
      %v4874 = vrot.slane %v4872, 4
      %v4875 = vor.u32 %v4874, %v4870
      %v4876 = vrot.slane %v4875, 4
      %v4878 = vshll.u32 %v4704, 16
      %v4880 = vrot.slane %v4878, 5
      %v4881 = vsel %vm506, %v4876, %v4880
      %v4883 = vshrl.u32 %v4676, 16
      %v4885 = vrot.slane %v4883, 4
      %v4886 = vshll.u32 %v4676, 16
      %v4888 = vrot.slane %v4886, 5
      %v4889 = vor.u32 %v4885, %v4888
      %v4890 = vrot.slane %v4889, 4
      %v4892 = vshll.u32 %v4677, 16
      %v4894 = vrot.slane %v4892, 5
      %v4895 = vsel %vm506, %v4890, %v4894
      %v4896 = vshrl.u32 %v4677, 16
      %v4898 = vrot.slane %v4896, 4
      %v4899 = vor.u32 %v4898, %v4894
      %v4900 = vrot.slane %v4899, 4
      %v4902 = vshll.u32 %v4705, 16
      %v4904 = vrot.slane %v4902, 5
      %v4905 = vsel %vm506, %v4900, %v4904
      %v4907 = vshrl.u32 %v4678, 16
      %v4909 = vrot.slane %v4907, 4
      %v4910 = vshll.u32 %v4678, 16
      %v4912 = vrot.slane %v4910, 5
      %v4913 = vor.u32 %v4909, %v4912
      %v4914 = vrot.slane %v4913, 4
      %v4916 = vshll.u32 %v4679, 16
      %v4918 = vrot.slane %v4916, 5
      %v4919 = vsel %vm506, %v4914, %v4918
      %v4920 = vshrl.u32 %v4679, 16
      %v4922 = vrot.slane %v4920, 4
      %v4923 = vor.u32 %v4922, %v4918
      %v4924 = vrot.slane %v4923, 4
      %v4926 = vshll.u32 %v4706, 16
      %v4928 = vrot.slane %v4926, 5
      %v4929 = vsel %vm506, %v4924, %v4928
      %v4931 = vshrl.u32 %v4680, 16
      %v4933 = vrot.slane %v4931, 4
      %v4934 = vshll.u32 %v4680, 16
      %v4936 = vrot.slane %v4934, 5
      %v4937 = vor.u32 %v4933, %v4936
      %v4938 = vrot.slane %v4937, 4
      %v4940 = vshll.u32 %v4681, 16
      %v4942 = vrot.slane %v4940, 5
      %v4943 = vsel %vm506, %v4938, %v4942
      %v4944 = vshrl.u32 %v4681, 16
      %v4946 = vrot.slane %v4944, 4
      %v4947 = vor.u32 %v4946, %v4942
      %v4948 = vrot.slane %v4947, 4
      %v4950 = vshll.u32 %v4707, 16
      %v4952 = vrot.slane %v4950, 5
      %v4953 = vsel %vm506, %v4948, %v4952
      %v4955 = vshrl.u32 %v4682, 16
      %v4957 = vrot.slane %v4955, 4
      %v4958 = vshll.u32 %v4682, 16
      %v4960 = vrot.slane %v4958, 5
      %v4961 = vor.u32 %v4957, %v4960
      %v4962 = vrot.slane %v4961, 4
      %v4964 = vshll.u32 %v4683, 16
      %v4966 = vrot.slane %v4964, 5
      %v4967 = vsel %vm506, %v4962, %v4966
      %v4968 = vshrl.u32 %v4683, 16
      %v4970 = vrot.slane %v4968, 4
      %v4971 = vor.u32 %v4970, %v4966
      %v4972 = vrot.slane %v4971, 4
      %v4974 = vshll.u32 %v4708, 16
      %v4976 = vrot.slane %v4974, 5
      %v4977 = vsel %vm506, %v4972, %v4976
      %v4979 = vshrl.u32 %v4684, 16
      %v4981 = vrot.slane %v4979, 4
      %v4982 = vshll.u32 %v4684, 16
      %v4984 = vrot.slane %v4982, 5
      %v4985 = vor.u32 %v4981, %v4984
      %v4986 = vrot.slane %v4985, 4
      %v4988 = vshll.u32 %v4685, 16
      %v4990 = vrot.slane %v4988, 5
      %v4991 = vsel %vm506, %v4986, %v4990
      %v4992 = vshrl.u32 %v4685, 16
      %v4994 = vrot.slane %v4992, 4
      %v4995 = vor.u32 %v4994, %v4990
      %v4996 = vrot.slane %v4995, 4
      %v4998 = vshll.u32 %v4709, 16
      %v5000 = vrot.slane %v4998, 5
      %v5001 = vsel %vm506, %v4996, %v5000
      %v5003 = vshrl.u32 %v4686, 16
      %v5005 = vrot.slane %v5003, 4
      %v5006 = vshll.u32 %v4686, 16
      %v5008 = vrot.slane %v5006, 5
      %v5009 = vor.u32 %v5005, %v5008
      %v5010 = vrot.slane %v5009, 4
      %v5012 = vshll.u32 %v4687, 16
      %v5014 = vrot.slane %v5012, 5
      %v5015 = vsel %vm506, %v5010, %v5014
      %v5016 = vshrl.u32 %v4687, 16
      %v5018 = vrot.slane %v5016, 4
      %v5019 = vor.u32 %v5018, %v5014
      %v5020 = vrot.slane %v5019, 4
      %v5022 = vshll.u32 %v4710, 16
      %v5024 = vrot.slane %v5022, 5
      %v5025 = vsel %vm506, %v5020, %v5024
      %v5027 = vshrl.u32 %v4688, 16
      %v5029 = vrot.slane %v5027, 4
      %v5030 = vshll.u32 %v4688, 16
      %v5032 = vrot.slane %v5030, 5
      %v5033 = vor.u32 %v5029, %v5032
      %v5034 = vrot.slane %v5033, 4
      %v5036 = vshll.u32 %v4689, 16
      %v5038 = vrot.slane %v5036, 5
      %v5039 = vsel %vm506, %v5034, %v5038
      %v5040 = vshrl.u32 %v4689, 16
      %v5042 = vrot.slane %v5040, 4
      %v5043 = vor.u32 %v5042, %v5038
      %v5044 = vrot.slane %v5043, 4
      %v5046 = vshll.u32 %v4711, 16
      %v5048 = vrot.slane %v5046, 5
      %v5049 = vsel %vm506, %v5044, %v5048
      %v5051 = vshrl.u32 %v4690, 16
      %v5053 = vrot.slane %v5051, 4
      %v5054 = vshll.u32 %v4690, 16
      %v5056 = vrot.slane %v5054, 5
      %v5057 = vor.u32 %v5053, %v5056
      %v5058 = vrot.slane %v5057, 4
      %v5060 = vshll.u32 %v4691, 16
      %v5062 = vrot.slane %v5060, 5
      %v5063 = vsel %vm506, %v5058, %v5062
      %v5064 = vshrl.u32 %v4691, 16
      %v5066 = vrot.slane %v5064, 4
      %v5067 = vor.u32 %v5066, %v5062
      %v5068 = vrot.slane %v5067, 4
      %v5070 = vshll.u32 %v4712, 16
      %v5072 = vrot.slane %v5070, 5
      %v5073 = vsel %vm506, %v5068, %v5072
      %v5075 = vshrl.u32 %v4692, 16
      %v5077 = vrot.slane %v5075, 4
      %v5078 = vshll.u32 %v4692, 16
      %v5080 = vrot.slane %v5078, 5
      %v5081 = vor.u32 %v5077, %v5080
      %v5082 = vrot.slane %v5081, 4
      %v5084 = vshll.u32 %v4693, 16
      %v5086 = vrot.slane %v5084, 5
      %v5087 = vsel %vm506, %v5082, %v5086
      %v5088 = vshrl.u32 %v4693, 16
      %v5090 = vrot.slane %v5088, 4
      %v5091 = vor.u32 %v5090, %v5086
      %v5092 = vrot.slane %v5091, 4
      %v5094 = vshll.u32 %v4713, 16
      %v5096 = vrot.slane %v5094, 5
      %v5097 = vsel %vm506, %v5092, %v5096
      %s5098 = scalar_lea.vmem %s7, 16
      %v5099 = vld [vmem:[%s5098] sm:$0xf]
      %v5100 = vld [vmem:[%s5098 + $0x4] sm:$0xf]
      %v5101 = vld [vmem:[%s5098 + $0x8] sm:$0xf]
      %v5102 = vld [vmem:[%s5098 + $0xc] sm:$0xf]
      %v5103 = vunpack.c.l.b16 %v4727
      %v5104 = vunpack.c.l.b16 %v4737
      %v5105 = vunpack.c.l.b16 %v4751
      %v5106 = vunpack.c.l.b16 %v4761
      %v5107 = vunpack.c.l.b16 %v4775
      %v5108 = vunpack.c.l.b16 %v4785
      %v5109 = vunpack.c.l.b16 %v4799
      %v5110 = vunpack.c.l.b16 %v4809
      %v5111 = vunpack.c.l.b16 %v4823
      %v5112 = vunpack.c.l.b16 %v4833
      %v5113 = vunpack.c.l.b16 %v4847
      %v5114 = vunpack.c.l.b16 %v4857
      %v5115 = vunpack.c.l.b16 %v4871
      %v5116 = vunpack.c.l.b16 %v4881
      %v5117 = vunpack.c.l.b16 %v4895
      %v5118 = vunpack.c.l.b16 %v4905
      %v5119 = vunpack.c.l.b16 %v4919
      %v5120 = vunpack.c.l.b16 %v4929
      %v5121 = vunpack.c.l.b16 %v4943
      %v5122 = vunpack.c.l.b16 %v4953
      %v5123 = vunpack.c.l.b16 %v4967
      %v5124 = vunpack.c.l.b16 %v4977
      %v5125 = vunpack.c.l.b16 %v4991
      %v5126 = vunpack.c.l.b16 %v5001
      %v5127 = vunpack.c.l.b16 %v5015
      %v5128 = vunpack.c.l.b16 %v5025
      %v5129 = vunpack.c.l.b16 %v5039
      %v5130 = vunpack.c.l.b16 %v5049
      %v5131 = vunpack.c.l.b16 %v5063
      %v5132 = vunpack.c.l.b16 %v5073
      %v5133 = vunpack.c.l.b16 %v5087
      %v5134 = vunpack.c.l.b16 %v5097
      %v5135 = vpack.c.b16 %v5104, %v5103
      %v5136 = vpack.c.b16 %v5106, %v5105
      %v5137 = vpack.c.b16 %v5108, %v5107
      %v5138 = vpack.c.b16 %v5110, %v5109
      %v5139 = vpack.c.b16 %v5112, %v5111
      %v5140 = vpack.c.b16 %v5114, %v5113
      %v5141 = vpack.c.b16 %v5116, %v5115
      %v5142 = vpack.c.b16 %v5118, %v5117
      %v5143 = vpack.c.b16 %v5120, %v5119
      %v5144 = vpack.c.b16 %v5122, %v5121
      %v5145 = vpack.c.b16 %v5124, %v5123
      %v5146 = vpack.c.b16 %v5126, %v5125
      %v5147 = vpack.c.b16 %v5128, %v5127
      %v5148 = vpack.c.b16 %v5130, %v5129
      %v5149 = vpack.c.b16 %v5132, %v5131
      %v5150 = vpack.c.b16 %v5134, %v5133
      %v5155 = vunpack.c.l.b16 %v5099
      %v5156 = vunpack.c.l.b16 %v5100
      %v5157 = vunpack.c.l.b16 %v5101
      %v5158 = vunpack.c.l.b16 %v5102
      %v5159 = vpack.c.b16 %v5156, %v5155
      %v5160 = vpack.c.b16 %v5158, %v5157
      %v5164 = vsel %vm3447, %v5135, 0
      %v5167 = vsel %vm3447, %v5136, 0
      %v5170 = vsel %vm3447, %v5137, 0
      %v5173 = vsel %vm3447, %v5138, 0
      %v5176 = vsel %vm3447, %v5139, 0
      %v5179 = vsel %vm3447, %v5140, 0
      %v5182 = vsel %vm3447, %v5141, 0
      %v5185 = vsel %vm3447, %v5142, 0
      %v5188 = vsel %vm3447, %v5143, 0
      %v5191 = vsel %vm3447, %v5144, 0
      %v5194 = vsel %vm3447, %v5145, 0
      %v5197 = vsel %vm3447, %v5146, 0
      %v5200 = vsel %vm3447, %v5147, 0
      %v5203 = vsel %vm3447, %v5148, 0
      %v5206 = vsel %vm3447, %v5149, 0
      %v5209 = vsel %vm3447, %v5150, 0
      %5211 = vmatprep.subr.bf16.mxu0 0
      %5212 = vmatpush1.bf16.msra.mxu0 0
      %5213 = vmatprep.subr.bf16.mxu0 0
      %5214 = vmatpush1.bf16.msra.mxu0 0
      %5215 = vmatprep.subr.bf16.mxu0 0
      %5216 = vmatpush1.bf16.msra.mxu0 0
      %5217 = vmatprep.subr.bf16.mxu0 0
      %5218 = vmatpush1.bf16.msra.mxu0 0
      %5219 = vmatprep.subr.bf16.mxu0 0
      %5220 = vmatpush1.bf16.msra.mxu0 0
      %5221 = vmatprep.subr.bf16.mxu0 0
      %5222 = vmatpush1.bf16.msra.mxu0 0
      %5223 = vmatprep.subr.bf16.mxu0 0
      %5224 = vmatpush1.bf16.msra.mxu0 %v5160
      %5225 = vmatprep.subr.bf16.mxu0 0
      %5226 = vmatpush1.bf16.msra.mxu0 %v5159
      %5227 = vmatprep.subr.bf16.mxu0 0
      %5228 = vmatpush2.bf16.msra.mxu0 0
      %5229 = vmatprep.subr.bf16.mxu0 0
      %5230 = vmatpush2.bf16.msra.mxu0 0
      %5231 = vmatprep.subr.bf16.mxu0 0
      %5232 = vmatpush2.bf16.msra.mxu0 0
      %5233 = vmatprep.subr.bf16.mxu0 0
      %5234 = vmatpush2.bf16.msra.mxu0 0
      %5235 = vmatprep.subr.bf16.mxu0 0
      %5236 = vmatpush2.bf16.msra.mxu0 0
      %5237 = vmatprep.subr.bf16.mxu0 0
      %5238 = vmatpush2.bf16.msra.mxu0 0
      %5239 = vmatprep.subr.bf16.mxu0 0
      %5240 = vmatpush2.bf16.msra.mxu0 0
      %5241 = vmatprep.subr.bf16.mxu0 0
      %5242 = vmatpush2.bf16.msra.mxu0 0
      %5243 = vmatprep.mubr.bf16.mxu0 0
      %5244 = vmatmul.mubr.bf16.gmra.mxu0 %v5164
      %v5245 = vpop.f32.mrf.mxu0
      %v5246 = vadd.f32 0.0, %v5245
      %v5247 = vpop.f32.mrf.mxu0
      %v5248 = vpop.f32.mrf.mxu0
      %v5249 = vadd.f32 0.0, %v5248
      %v5250 = vpop.f32.mrf.mxu0
      %5251 = vmatprep.mubr.bf16.mxu0 0
      %5252 = vmatmul.mubr.bf16.gmra.mxu0 %v5167
      %v5253 = vpop.f32.mrf.mxu0
      %v5254 = vadd.f32 0.0, %v5253
      %v5255 = vpop.f32.mrf.mxu0
      %v5256 = vpop.f32.mrf.mxu0
      %v5257 = vadd.f32 0.0, %v5256
      %v5258 = vpop.f32.mrf.mxu0
      %5259 = vmatprep.mubr.bf16.mxu0 0
      %5260 = vmatmul.mubr.bf16.gmra.mxu0 %v5170
      %v5261 = vpop.f32.mrf.mxu0
      %v5262 = vadd.f32 0.0, %v5261
      %v5263 = vpop.f32.mrf.mxu0
      %v5264 = vpop.f32.mrf.mxu0
      %v5265 = vadd.f32 0.0, %v5264
      %v5266 = vpop.f32.mrf.mxu0
      %5267 = vmatprep.mubr.bf16.mxu0 0
      %5268 = vmatmul.mubr.bf16.gmra.mxu0 %v5173
      %v5269 = vpop.f32.mrf.mxu0
      %v5270 = vadd.f32 0.0, %v5269
      %v5271 = vpop.f32.mrf.mxu0
      %v5272 = vpop.f32.mrf.mxu0
      %v5273 = vadd.f32 0.0, %v5272
      %v5274 = vpop.f32.mrf.mxu0
      %5275 = vmatprep.mubr.bf16.mxu0 0
      %5276 = vmatmul.mubr.bf16.gmra.mxu0 %v5176
      %v5277 = vpop.f32.mrf.mxu0
      %v5278 = vadd.f32 0.0, %v5277
      %v5279 = vpop.f32.mrf.mxu0
      %v5280 = vpop.f32.mrf.mxu0
      %v5281 = vadd.f32 0.0, %v5280
      %v5282 = vpop.f32.mrf.mxu0
      %5283 = vmatprep.mubr.bf16.mxu0 0
      %5284 = vmatmul.mubr.bf16.gmra.mxu0 %v5179
      %v5285 = vpop.f32.mrf.mxu0
      %v5286 = vadd.f32 0.0, %v5285
      %v5287 = vpop.f32.mrf.mxu0
      %v5288 = vpop.f32.mrf.mxu0
      %v5289 = vadd.f32 0.0, %v5288
      %v5290 = vpop.f32.mrf.mxu0
      %5291 = vmatprep.mubr.bf16.mxu0 0
      %5292 = vmatmul.mubr.bf16.gmra.mxu0 %v5182
      %v5293 = vpop.f32.mrf.mxu0
      %v5294 = vadd.f32 0.0, %v5293
      %v5295 = vpop.f32.mrf.mxu0
      %v5296 = vpop.f32.mrf.mxu0
      %v5297 = vadd.f32 0.0, %v5296
      %v5298 = vpop.f32.mrf.mxu0
      %5299 = vmatprep.mubr.bf16.mxu0 0
      %5300 = vmatmul.mubr.bf16.gmra.mxu0 %v5185
      %v5301 = vpop.f32.mrf.mxu0
      %v5302 = vadd.f32 0.0, %v5301
      %v5303 = vpop.f32.mrf.mxu0
      %v5304 = vpop.f32.mrf.mxu0
      %v5305 = vadd.f32 0.0, %v5304
      %v5306 = vpop.f32.mrf.mxu0
      %5307 = vmatprep.mubr.bf16.mxu0 0
      %5308 = vmatmul.mubr.bf16.gmra.mxu0 %v5188
      %v5309 = vpop.f32.mrf.mxu0
      %v5310 = vadd.f32 0.0, %v5309
      %v5311 = vpop.f32.mrf.mxu0
      %v5312 = vpop.f32.mrf.mxu0
      %v5313 = vadd.f32 0.0, %v5312
      %v5314 = vpop.f32.mrf.mxu0
      %5315 = vmatprep.mubr.bf16.mxu0 0
      %5316 = vmatmul.mubr.bf16.gmra.mxu0 %v5191
      %v5317 = vpop.f32.mrf.mxu0
      %v5318 = vadd.f32 0.0, %v5317
      %v5319 = vpop.f32.mrf.mxu0
      %v5320 = vpop.f32.mrf.mxu0
      %v5321 = vadd.f32 0.0, %v5320
      %v5322 = vpop.f32.mrf.mxu0
      %5323 = vmatprep.mubr.bf16.mxu0 0
      %5324 = vmatmul.mubr.bf16.gmra.mxu0 %v5194
      %v5325 = vpop.f32.mrf.mxu0
      %v5326 = vadd.f32 0.0, %v5325
      %v5327 = vpop.f32.mrf.mxu0
      %v5328 = vpop.f32.mrf.mxu0
      %v5329 = vadd.f32 0.0, %v5328
      %v5330 = vpop.f32.mrf.mxu0
      %5331 = vmatprep.mubr.bf16.mxu0 0
      %5332 = vmatmul.mubr.bf16.gmra.mxu0 %v5197
      %v5333 = vpop.f32.mrf.mxu0
      %v5334 = vadd.f32 0.0, %v5333
      %v5335 = vpop.f32.mrf.mxu0
      %v5336 = vpop.f32.mrf.mxu0
      %v5337 = vadd.f32 0.0, %v5336
      %v5338 = vpop.f32.mrf.mxu0
      %5339 = vmatprep.mubr.bf16.mxu0 0
      %5340 = vmatmul.mubr.bf16.gmra.mxu0 %v5200
      %v5341 = vpop.f32.mrf.mxu0
      %v5342 = vadd.f32 0.0, %v5341
      %v5343 = vpop.f32.mrf.mxu0
      %v5344 = vpop.f32.mrf.mxu0
      %v5345 = vadd.f32 0.0, %v5344
      %v5346 = vpop.f32.mrf.mxu0
      %5347 = vmatprep.mubr.bf16.mxu0 0
      %5348 = vmatmul.mubr.bf16.gmra.mxu0 %v5203
      %v5349 = vpop.f32.mrf.mxu0
      %v5350 = vadd.f32 0.0, %v5349
      %v5351 = vpop.f32.mrf.mxu0
      %v5352 = vpop.f32.mrf.mxu0
      %v5353 = vadd.f32 0.0, %v5352
      %v5354 = vpop.f32.mrf.mxu0
      %5355 = vmatprep.mubr.bf16.mxu0 0
      %5356 = vmatmul.mubr.bf16.gmra.mxu0 %v5206
      %v5357 = vpop.f32.mrf.mxu0
      %v5358 = vadd.f32 0.0, %v5357
      %v5359 = vpop.f32.mrf.mxu0
      %v5360 = vpop.f32.mrf.mxu0
      %v5361 = vadd.f32 0.0, %v5360
      %v5362 = vpop.f32.mrf.mxu0
      %5363 = vmatprep.mubr.bf16.mxu0 0
      %5364 = vmatmul.mubr.bf16.gmra.mxu0 %v5209
      %v5365 = vpop.f32.mrf.mxu0
      %v5366 = vadd.f32 0.0, %v5365
      %v5367 = vpop.f32.mrf.mxu0
      %v5368 = vpop.f32.mrf.mxu0
      %v5369 = vadd.f32 0.0, %v5368
      %v5370 = vpop.f32.mrf.mxu0
      %5371 = vdwg.mxu0
      %v5404 = vunpack.c.l.b16 %v4662
      %v5405 = vunpack.c.l.b16 %v4663
      %v5406 = vunpack.c.l.b16 %v4664
      %v5407 = vunpack.c.l.b16 %v4665
      %v5408 = vunpack.c.l.b16 %v4666
      %v5409 = vunpack.c.l.b16 %v4667
      %v5410 = vunpack.c.l.b16 %v4668
      %v5411 = vunpack.c.l.b16 %v4669
      %v5412 = vunpack.c.l.b16 %v4670
      %v5413 = vunpack.c.l.b16 %v4671
      %v5414 = vunpack.c.l.b16 %v4672
      %v5415 = vunpack.c.l.b16 %v4673
      %v5416 = vunpack.c.l.b16 %v4674
      %v5417 = vunpack.c.l.b16 %v4675
      %v5418 = vunpack.c.l.b16 %v4676
      %v5419 = vunpack.c.l.b16 %v4677
      %v5420 = vunpack.c.l.b16 %v4678
      %v5421 = vunpack.c.l.b16 %v4679
      %v5422 = vunpack.c.l.b16 %v4680
      %v5423 = vunpack.c.l.b16 %v4681
      %v5424 = vunpack.c.l.b16 %v4682
      %v5425 = vunpack.c.l.b16 %v4683
      %v5426 = vunpack.c.l.b16 %v4684
      %v5427 = vunpack.c.l.b16 %v4685
      %v5428 = vunpack.c.l.b16 %v4686
      %v5429 = vunpack.c.l.b16 %v4687
      %v5430 = vunpack.c.l.b16 %v4688
      %v5431 = vunpack.c.l.b16 %v4689
      %v5432 = vunpack.c.l.b16 %v4690
      %v5433 = vunpack.c.l.b16 %v4691
      %v5434 = vunpack.c.l.b16 %v4692
      %v5435 = vunpack.c.l.b16 %v4693
      %v5436 = vpack.c.b16 %v5405, %v5404
      %v5437 = vpack.c.b16 %v5407, %v5406
      %v5438 = vpack.c.b16 %v5409, %v5408
      %v5439 = vpack.c.b16 %v5411, %v5410
      %v5440 = vpack.c.b16 %v5413, %v5412
      %v5441 = vpack.c.b16 %v5415, %v5414
      %v5442 = vpack.c.b16 %v5417, %v5416
      %v5443 = vpack.c.b16 %v5419, %v5418
      %v5444 = vpack.c.b16 %v5421, %v5420
      %v5445 = vpack.c.b16 %v5423, %v5422
      %v5446 = vpack.c.b16 %v5425, %v5424
      %v5447 = vpack.c.b16 %v5427, %v5426
      %v5448 = vpack.c.b16 %v5429, %v5428
      %v5449 = vpack.c.b16 %v5431, %v5430
      %v5450 = vpack.c.b16 %v5433, %v5432
      %v5451 = vpack.c.b16 %v5435, %v5434
      %v5456 = vunpack.c.l.b16 %v4694
      %v5457 = vunpack.c.l.b16 %v4695
      %v5458 = vunpack.c.l.b16 %v4696
      %v5459 = vunpack.c.l.b16 %v4697
      %v5460 = vpack.c.b16 %v5457, %v5456
      %v5461 = vpack.c.b16 %v5459, %v5458
      %v5465 = vsel %vm3447, %v5436, 0
      %v5468 = vsel %vm3447, %v5437, 0
      %v5471 = vsel %vm3447, %v5438, 0
      %v5474 = vsel %vm3447, %v5439, 0
      %v5477 = vsel %vm3447, %v5440, 0
      %v5480 = vsel %vm3447, %v5441, 0
      %v5483 = vsel %vm3447, %v5442, 0
      %v5486 = vsel %vm3447, %v5443, 0
      %v5489 = vsel %vm3447, %v5444, 0
      %v5492 = vsel %vm3447, %v5445, 0
      %v5495 = vsel %vm3447, %v5446, 0
      %v5498 = vsel %vm3447, %v5447, 0
      %v5501 = vsel %vm3447, %v5448, 0
      %v5504 = vsel %vm3447, %v5449, 0
      %v5507 = vsel %vm3447, %v5450, 0
      %v5510 = vsel %vm3447, %v5451, 0
      %5512 = vmatprep.subr.bf16.mxu0 0
      %5513 = vmatpush1.bf16.msra.mxu0 0
      %5514 = vmatprep.subr.bf16.mxu0 0
      %5515 = vmatpush1.bf16.msra.mxu0 0
      %5516 = vmatprep.subr.bf16.mxu0 0
      %5517 = vmatpush1.bf16.msra.mxu0 0
      %5518 = vmatprep.subr.bf16.mxu0 0
      %5519 = vmatpush1.bf16.msra.mxu0 0
      %5520 = vmatprep.subr.bf16.mxu0 0
      %5521 = vmatpush1.bf16.msra.mxu0 0
      %5522 = vmatprep.subr.bf16.mxu0 0
      %5523 = vmatpush1.bf16.msra.mxu0 0
      %5524 = vmatprep.subr.bf16.mxu0 0
      %5525 = vmatpush1.bf16.msra.mxu0 %v5461
      %5526 = vmatprep.subr.bf16.mxu0 0
      %5527 = vmatpush1.bf16.msra.mxu0 %v5460
      %5528 = vmatprep.subr.bf16.mxu0 0
      %5529 = vmatpush2.bf16.msra.mxu0 0
      %5530 = vmatprep.subr.bf16.mxu0 0
      %5531 = vmatpush2.bf16.msra.mxu0 0
      %5532 = vmatprep.subr.bf16.mxu0 0
      %5533 = vmatpush2.bf16.msra.mxu0 0
      %5534 = vmatprep.subr.bf16.mxu0 0
      %5535 = vmatpush2.bf16.msra.mxu0 0
      %5536 = vmatprep.subr.bf16.mxu0 0
      %5537 = vmatpush2.bf16.msra.mxu0 0
      %5538 = vmatprep.subr.bf16.mxu0 0
      %5539 = vmatpush2.bf16.msra.mxu0 0
      %5540 = vmatprep.subr.bf16.mxu0 0
      %5541 = vmatpush2.bf16.msra.mxu0 0
      %5542 = vmatprep.subr.bf16.mxu0 0
      %5543 = vmatpush2.bf16.msra.mxu0 0
      %5544 = vmatprep.mubr.bf16.mxu0 0
      %5545 = vmatmul.mubr.bf16.gmra.mxu0 %v5465
      %v5546 = vpop.f32.mrf.mxu0
      %v5547 = vadd.f32 %v5246, %v5546
      %v5548 = vpop.f32.mrf.mxu0
      %v5549 = vpop.f32.mrf.mxu0
      %v5550 = vadd.f32 %v5249, %v5549
      %v5551 = vpop.f32.mrf.mxu0
      %5552 = vmatprep.mubr.bf16.mxu0 0
      %5553 = vmatmul.mubr.bf16.gmra.mxu0 %v5468
      %v5554 = vpop.f32.mrf.mxu0
      %v5555 = vadd.f32 %v5254, %v5554
      %v5556 = vpop.f32.mrf.mxu0
      %v5557 = vpop.f32.mrf.mxu0
      %v5558 = vadd.f32 %v5257, %v5557
      %v5559 = vpop.f32.mrf.mxu0
      %5560 = vmatprep.mubr.bf16.mxu0 0
      %5561 = vmatmul.mubr.bf16.gmra.mxu0 %v5471
      %v5562 = vpop.f32.mrf.mxu0
      %v5563 = vadd.f32 %v5262, %v5562
      %v5564 = vpop.f32.mrf.mxu0
      %v5565 = vpop.f32.mrf.mxu0
      %v5566 = vadd.f32 %v5265, %v5565
      %v5567 = vpop.f32.mrf.mxu0
      %5568 = vmatprep.mubr.bf16.mxu0 0
      %5569 = vmatmul.mubr.bf16.gmra.mxu0 %v5474
      %v5570 = vpop.f32.mrf.mxu0
      %v5571 = vadd.f32 %v5270, %v5570
      %v5572 = vpop.f32.mrf.mxu0
      %v5573 = vpop.f32.mrf.mxu0
      %v5574 = vadd.f32 %v5273, %v5573
      %v5575 = vpop.f32.mrf.mxu0
      %5576 = vmatprep.mubr.bf16.mxu0 0
      %5577 = vmatmul.mubr.bf16.gmra.mxu0 %v5477
      %v5578 = vpop.f32.mrf.mxu0
      %v5579 = vadd.f32 %v5278, %v5578
      %v5580 = vpop.f32.mrf.mxu0
      %v5581 = vpop.f32.mrf.mxu0
      %v5582 = vadd.f32 %v5281, %v5581
      %v5583 = vpop.f32.mrf.mxu0
      %5584 = vmatprep.mubr.bf16.mxu0 0
      %5585 = vmatmul.mubr.bf16.gmra.mxu0 %v5480
      %v5586 = vpop.f32.mrf.mxu0
      %v5587 = vadd.f32 %v5286, %v5586
      %v5588 = vpop.f32.mrf.mxu0
      %v5589 = vpop.f32.mrf.mxu0
      %v5590 = vadd.f32 %v5289, %v5589
      %v5591 = vpop.f32.mrf.mxu0
      %5592 = vmatprep.mubr.bf16.mxu0 0
      %5593 = vmatmul.mubr.bf16.gmra.mxu0 %v5483
      %v5594 = vpop.f32.mrf.mxu0
      %v5595 = vadd.f32 %v5294, %v5594
      %v5596 = vpop.f32.mrf.mxu0
      %v5597 = vpop.f32.mrf.mxu0
      %v5598 = vadd.f32 %v5297, %v5597
      %v5599 = vpop.f32.mrf.mxu0
      %5600 = vmatprep.mubr.bf16.mxu0 0
      %5601 = vmatmul.mubr.bf16.gmra.mxu0 %v5486
      %v5602 = vpop.f32.mrf.mxu0
      %v5603 = vadd.f32 %v5302, %v5602
      %v5604 = vpop.f32.mrf.mxu0
      %v5605 = vpop.f32.mrf.mxu0
      %v5606 = vadd.f32 %v5305, %v5605
      %v5607 = vpop.f32.mrf.mxu0
      %5608 = vmatprep.mubr.bf16.mxu0 0
      %5609 = vmatmul.mubr.bf16.gmra.mxu0 %v5489
      %v5610 = vpop.f32.mrf.mxu0
      %v5611 = vadd.f32 %v5310, %v5610
      %v5612 = vpop.f32.mrf.mxu0
      %v5613 = vpop.f32.mrf.mxu0
      %v5614 = vadd.f32 %v5313, %v5613
      %v5615 = vpop.f32.mrf.mxu0
      %5616 = vmatprep.mubr.bf16.mxu0 0
      %5617 = vmatmul.mubr.bf16.gmra.mxu0 %v5492
      %v5618 = vpop.f32.mrf.mxu0
      %v5619 = vadd.f32 %v5318, %v5618
      %v5620 = vpop.f32.mrf.mxu0
      %v5621 = vpop.f32.mrf.mxu0
      %v5622 = vadd.f32 %v5321, %v5621
      %v5623 = vpop.f32.mrf.mxu0
      %5624 = vmatprep.mubr.bf16.mxu0 0
      %5625 = vmatmul.mubr.bf16.gmra.mxu0 %v5495
      %v5626 = vpop.f32.mrf.mxu0
      %v5627 = vadd.f32 %v5326, %v5626
      %v5628 = vpop.f32.mrf.mxu0
      %v5629 = vpop.f32.mrf.mxu0
      %v5630 = vadd.f32 %v5329, %v5629
      %v5631 = vpop.f32.mrf.mxu0
      %5632 = vmatprep.mubr.bf16.mxu0 0
      %5633 = vmatmul.mubr.bf16.gmra.mxu0 %v5498
      %v5634 = vpop.f32.mrf.mxu0
      %v5635 = vadd.f32 %v5334, %v5634
      %v5636 = vpop.f32.mrf.mxu0
      %v5637 = vpop.f32.mrf.mxu0
      %v5638 = vadd.f32 %v5337, %v5637
      %v5639 = vpop.f32.mrf.mxu0
      %5640 = vmatprep.mubr.bf16.mxu0 0
      %5641 = vmatmul.mubr.bf16.gmra.mxu0 %v5501
      %v5642 = vpop.f32.mrf.mxu0
      %v5643 = vadd.f32 %v5342, %v5642
      %v5644 = vpop.f32.mrf.mxu0
      %v5645 = vpop.f32.mrf.mxu0
      %v5646 = vadd.f32 %v5345, %v5645
      %v5647 = vpop.f32.mrf.mxu0
      %5648 = vmatprep.mubr.bf16.mxu0 0
      %5649 = vmatmul.mubr.bf16.gmra.mxu0 %v5504
      %v5650 = vpop.f32.mrf.mxu0
      %v5651 = vadd.f32 %v5350, %v5650
      %v5652 = vpop.f32.mrf.mxu0
      %v5653 = vpop.f32.mrf.mxu0
      %v5654 = vadd.f32 %v5353, %v5653
      %v5655 = vpop.f32.mrf.mxu0
      %5656 = vmatprep.mubr.bf16.mxu0 0
      %5657 = vmatmul.mubr.bf16.gmra.mxu0 %v5507
      %v5658 = vpop.f32.mrf.mxu0
      %v5659 = vadd.f32 %v5358, %v5658
      %v5660 = vpop.f32.mrf.mxu0
      %v5661 = vpop.f32.mrf.mxu0
      %v5662 = vadd.f32 %v5361, %v5661
      %v5663 = vpop.f32.mrf.mxu0
      %5664 = vmatprep.mubr.bf16.mxu0 0
      %5665 = vmatmul.mubr.bf16.gmra.mxu0 %v5510
      %v5666 = vpop.f32.mrf.mxu0
      %v5667 = vadd.f32 %v5366, %v5666
      %v5668 = vpop.f32.mrf.mxu0
      %v5669 = vpop.f32.mrf.mxu0
      %v5670 = vadd.f32 %v5369, %v5669
      %v5671 = vpop.f32.mrf.mxu0
      %5672 = vdwg.mxu0
      %v5673 = vld [vmem:[#allocation2] sm:$0xe]
      %v5674 = vld [vmem:[#allocation2 + $0xc] sm:$0xe]
      %v5675 = vld [vmem:[#allocation2 + $0x18] sm:$0xe]
      %v5676 = vld [vmem:[#allocation2 + $0x24] sm:$0xe]
      %v5677 = vld [vmem:[#allocation2 + $0x30] sm:$0xe]
      %v5678 = vld [vmem:[#allocation2 + $0x3c] sm:$0xe]
      %v5679 = vld [vmem:[#allocation2 + $0x48] sm:$0xe]
      %v5680 = vld [vmem:[#allocation2 + $0x54] sm:$0xe]
      %v5681 = vld [vmem:[#allocation2 + $0x60] sm:$0xe]
      %v5682 = vld [vmem:[#allocation2 + $0x6c] sm:$0xe]
      %v5683 = vld [vmem:[#allocation2 + $0x78] sm:$0xe]
      %v5684 = vld [vmem:[#allocation2 + $0x84] sm:$0xe]
      %v5685 = vld [vmem:[#allocation2 + $0x90] sm:$0xe]
      %v5686 = vld [vmem:[#allocation2 + $0x9c] sm:$0xe]
      %v5687 = vld [vmem:[#allocation2 + $0xa8] sm:$0xe]
      %v5688 = vld [vmem:[#allocation2 + $0xb4] sm:$0xe]
      %v5721 = vrot.slane %v5673, 5
      %v5722 = vrot.slane %v5721, 4
      %v5723 = vrot.slane %v4663, 5
      %v5724 = vsel %vm1513, %v5722, %v5723
      %v5725 = vrot.slane %v5723, 4
      %v5726 = vrot.slane %v4698, 5
      %v5727 = vsel %vm1513, %v5725, %v5726
      %v5728 = vrot.slane %v5674, 5
      %v5729 = vrot.slane %v5728, 4
      %v5730 = vrot.slane %v4665, 5
      %v5731 = vsel %vm1513, %v5729, %v5730
      %v5732 = vrot.slane %v5730, 4
      %v5733 = vrot.slane %v4699, 5
      %v5734 = vsel %vm1513, %v5732, %v5733
      %v5735 = vrot.slane %v5675, 5
      %v5736 = vrot.slane %v5735, 4
      %v5737 = vrot.slane %v4667, 5
      %v5738 = vsel %vm1513, %v5736, %v5737
      %v5739 = vrot.slane %v5737, 4
      %v5740 = vrot.slane %v4700, 5
      %v5741 = vsel %vm1513, %v5739, %v5740
      %v5742 = vrot.slane %v5676, 5
      %v5743 = vrot.slane %v5742, 4
      %v5744 = vrot.slane %v4669, 5
      %v5745 = vsel %vm1513, %v5743, %v5744
      %v5746 = vrot.slane %v5744, 4
      %v5747 = vrot.slane %v4701, 5
      %v5748 = vsel %vm1513, %v5746, %v5747
      %v5749 = vrot.slane %v5677, 5
      %v5750 = vrot.slane %v5749, 4
      %v5751 = vrot.slane %v4671, 5
      %v5752 = vsel %vm1513, %v5750, %v5751
      %v5753 = vrot.slane %v5751, 4
      %v5754 = vrot.slane %v4702, 5
      %v5755 = vsel %vm1513, %v5753, %v5754
      %v5756 = vrot.slane %v5678, 5
      %v5757 = vrot.slane %v5756, 4
      %v5758 = vrot.slane %v4673, 5
      %v5759 = vsel %vm1513, %v5757, %v5758
      %v5760 = vrot.slane %v5758, 4
      %v5761 = vrot.slane %v4703, 5
      %v5762 = vsel %vm1513, %v5760, %v5761
      %v5763 = vrot.slane %v5679, 5
      %v5764 = vrot.slane %v5763, 4
      %v5765 = vrot.slane %v4675, 5
      %v5766 = vsel %vm1513, %v5764, %v5765
      %v5767 = vrot.slane %v5765, 4
      %v5768 = vrot.slane %v4704, 5
      %v5769 = vsel %vm1513, %v5767, %v5768
      %v5770 = vrot.slane %v5680, 5
      %v5771 = vrot.slane %v5770, 4
      %v5772 = vrot.slane %v4677, 5
      %v5773 = vsel %vm1513, %v5771, %v5772
      %v5774 = vrot.slane %v5772, 4
      %v5775 = vrot.slane %v4705, 5
      %v5776 = vsel %vm1513, %v5774, %v5775
      %v5777 = vrot.slane %v5681, 5
      %v5778 = vrot.slane %v5777, 4
      %v5779 = vrot.slane %v4679, 5
      %v5780 = vsel %vm1513, %v5778, %v5779
      %v5781 = vrot.slane %v5779, 4
      %v5782 = vrot.slane %v4706, 5
      %v5783 = vsel %vm1513, %v5781, %v5782
      %v5784 = vrot.slane %v5682, 5
      %v5785 = vrot.slane %v5784, 4
      %v5786 = vrot.slane %v4681, 5
      %v5787 = vsel %vm1513, %v5785, %v5786
      %v5788 = vrot.slane %v5786, 4
      %v5789 = vrot.slane %v4707, 5
      %v5790 = vsel %vm1513, %v5788, %v5789
      %v5791 = vrot.slane %v5683, 5
      %v5792 = vrot.slane %v5791, 4
      %v5793 = vrot.slane %v4683, 5
      %v5794 = vsel %vm1513, %v5792, %v5793
      %v5795 = vrot.slane %v5793, 4
      %v5796 = vrot.slane %v4708, 5
      %v5797 = vsel %vm1513, %v5795, %v5796
      %v5798 = vrot.slane %v5684, 5
      %v5799 = vrot.slane %v5798, 4
      %v5800 = vrot.slane %v4685, 5
      %v5801 = vsel %vm1513, %v5799, %v5800
      %v5802 = vrot.slane %v5800, 4
      %v5803 = vrot.slane %v4709, 5
      %v5804 = vsel %vm1513, %v5802, %v5803
      %v5805 = vrot.slane %v5685, 5
      %v5806 = vrot.slane %v5805, 4
      %v5807 = vrot.slane %v4687, 5
      %v5808 = vsel %vm1513, %v5806, %v5807
      %v5809 = vrot.slane %v5807, 4
      %v5810 = vrot.slane %v4710, 5
      %v5811 = vsel %vm1513, %v5809, %v5810
      %v5812 = vrot.slane %v5686, 5
      %v5813 = vrot.slane %v5812, 4
      %v5814 = vrot.slane %v4689, 5
      %v5815 = vsel %vm1513, %v5813, %v5814
      %v5816 = vrot.slane %v5814, 4
      %v5817 = vrot.slane %v4711, 5
      %v5818 = vsel %vm1513, %v5816, %v5817
      %v5819 = vrot.slane %v5687, 5
      %v5820 = vrot.slane %v5819, 4
      %v5821 = vrot.slane %v4691, 5
      %v5822 = vsel %vm1513, %v5820, %v5821
      %v5823 = vrot.slane %v5821, 4
      %v5824 = vrot.slane %v4712, 5
      %v5825 = vsel %vm1513, %v5823, %v5824
      %v5826 = vrot.slane %v5688, 5
      %v5827 = vrot.slane %v5826, 4
      %v5828 = vrot.slane %v4693, 5
      %v5829 = vsel %vm1513, %v5827, %v5828
      %v5830 = vrot.slane %v5828, 4
      %v5831 = vrot.slane %v4713, 5
      %v5832 = vsel %vm1513, %v5830, %v5831
      %s5833 = scalar_lea.vmem %s7, 32
      %v5834 = vld [vmem:[%s5833] sm:$0xf]
      %v5835 = vld [vmem:[%s5833 + $0x4] sm:$0xf]
      %v5836 = vld [vmem:[%s5833 + $0x8] sm:$0xf]
      %v5837 = vld [vmem:[%s5833 + $0xc] sm:$0xf]
      %v5838 = vunpack.c.l.b16 %v5724
      %v5839 = vunpack.c.l.b16 %v5727
      %v5840 = vunpack.c.l.b16 %v5731
      %v5841 = vunpack.c.l.b16 %v5734
      %v5842 = vunpack.c.l.b16 %v5738
      %v5843 = vunpack.c.l.b16 %v5741
      %v5844 = vunpack.c.l.b16 %v5745
      %v5845 = vunpack.c.l.b16 %v5748
      %v5846 = vunpack.c.l.b16 %v5752
      %v5847 = vunpack.c.l.b16 %v5755
      %v5848 = vunpack.c.l.b16 %v5759
      %v5849 = vunpack.c.l.b16 %v5762
      %v5850 = vunpack.c.l.b16 %v5766
      %v5851 = vunpack.c.l.b16 %v5769
      %v5852 = vunpack.c.l.b16 %v5773
      %v5853 = vunpack.c.l.b16 %v5776
      %v5854 = vunpack.c.l.b16 %v5780
      %v5855 = vunpack.c.l.b16 %v5783
      %v5856 = vunpack.c.l.b16 %v5787
      %v5857 = vunpack.c.l.b16 %v5790
      %v5858 = vunpack.c.l.b16 %v5794
      %v5859 = vunpack.c.l.b16 %v5797
      %v5860 = vunpack.c.l.b16 %v5801
      %v5861 = vunpack.c.l.b16 %v5804
      %v5862 = vunpack.c.l.b16 %v5808
      %v5863 = vunpack.c.l.b16 %v5811
      %v5864 = vunpack.c.l.b16 %v5815
      %v5865 = vunpack.c.l.b16 %v5818
      %v5866 = vunpack.c.l.b16 %v5822
      %v5867 = vunpack.c.l.b16 %v5825
      %v5868 = vunpack.c.l.b16 %v5829
      %v5869 = vunpack.c.l.b16 %v5832
      %v5870 = vpack.c.b16 %v5839, %v5838
      %v5871 = vpack.c.b16 %v5841, %v5840
      %v5872 = vpack.c.b16 %v5843, %v5842
      %v5873 = vpack.c.b16 %v5845, %v5844
      %v5874 = vpack.c.b16 %v5847, %v5846
      %v5875 = vpack.c.b16 %v5849, %v5848
      %v5876 = vpack.c.b16 %v5851, %v5850
      %v5877 = vpack.c.b16 %v5853, %v5852
      %v5878 = vpack.c.b16 %v5855, %v5854
      %v5879 = vpack.c.b16 %v5857, %v5856
      %v5880 = vpack.c.b16 %v5859, %v5858
      %v5881 = vpack.c.b16 %v5861, %v5860
      %v5882 = vpack.c.b16 %v5863, %v5862
      %v5883 = vpack.c.b16 %v5865, %v5864
      %v5884 = vpack.c.b16 %v5867, %v5866
      %v5885 = vpack.c.b16 %v5869, %v5868
      %v5890 = vunpack.c.l.b16 %v5834
      %v5891 = vunpack.c.l.b16 %v5835
      %v5892 = vunpack.c.l.b16 %v5836
      %v5893 = vunpack.c.l.b16 %v5837
      %v5894 = vpack.c.b16 %v5891, %v5890
      %v5895 = vpack.c.b16 %v5893, %v5892
      %v5899 = vsel %vm3447, %v5870, 0
      %v5902 = vsel %vm3447, %v5871, 0
      %v5905 = vsel %vm3447, %v5872, 0
      %v5908 = vsel %vm3447, %v5873, 0
      %v5911 = vsel %vm3447, %v5874, 0
      %v5914 = vsel %vm3447, %v5875, 0
      %v5917 = vsel %vm3447, %v5876, 0
      %v5920 = vsel %vm3447, %v5877, 0
      %v5923 = vsel %vm3447, %v5878, 0
      %v5926 = vsel %vm3447, %v5879, 0
      %v5929 = vsel %vm3447, %v5880, 0
      %v5932 = vsel %vm3447, %v5881, 0
      %v5935 = vsel %vm3447, %v5882, 0
      %v5938 = vsel %vm3447, %v5883, 0
      %v5941 = vsel %vm3447, %v5884, 0
      %v5944 = vsel %vm3447, %v5885, 0
      %5946 = vmatprep.subr.bf16.mxu0 0
      %5947 = vmatpush1.bf16.msra.mxu0 0
      %5948 = vmatprep.subr.bf16.mxu0 0
      %5949 = vmatpush1.bf16.msra.mxu0 0
      %5950 = vmatprep.subr.bf16.mxu0 0
      %5951 = vmatpush1.bf16.msra.mxu0 0
      %5952 = vmatprep.subr.bf16.mxu0 0
      %5953 = vmatpush1.bf16.msra.mxu0 0
      %5954 = vmatprep.subr.bf16.mxu0 0
      %5955 = vmatpush1.bf16.msra.mxu0 0
      %5956 = vmatprep.subr.bf16.mxu0 0
      %5957 = vmatpush1.bf16.msra.mxu0 0
      %5958 = vmatprep.subr.bf16.mxu0 0
      %5959 = vmatpush1.bf16.msra.mxu0 %v5895
      %5960 = vmatprep.subr.bf16.mxu0 0
      %5961 = vmatpush1.bf16.msra.mxu0 %v5894
      %5962 = vmatprep.subr.bf16.mxu0 0
      %5963 = vmatpush2.bf16.msra.mxu0 0
      %5964 = vmatprep.subr.bf16.mxu0 0
      %5965 = vmatpush2.bf16.msra.mxu0 0
      %5966 = vmatprep.subr.bf16.mxu0 0
      %5967 = vmatpush2.bf16.msra.mxu0 0
      %5968 = vmatprep.subr.bf16.mxu0 0
      %5969 = vmatpush2.bf16.msra.mxu0 0
      %5970 = vmatprep.subr.bf16.mxu0 0
      %5971 = vmatpush2.bf16.msra.mxu0 0
      %5972 = vmatprep.subr.bf16.mxu0 0
      %5973 = vmatpush2.bf16.msra.mxu0 0
      %5974 = vmatprep.subr.bf16.mxu0 0
      %5975 = vmatpush2.bf16.msra.mxu0 0
      %5976 = vmatprep.subr.bf16.mxu0 0
      %5977 = vmatpush2.bf16.msra.mxu0 0
      %5978 = vmatprep.mubr.bf16.mxu0 0
      %5979 = vmatmul.mubr.bf16.gmra.mxu0 %v5899
      %v5980 = vpop.f32.mrf.mxu0
      %v5981 = vadd.f32 0.0, %v5980
      %v5982 = vpop.f32.mrf.mxu0
      %v5983 = vpop.f32.mrf.mxu0
      %v5984 = vadd.f32 0.0, %v5983
      %v5985 = vpop.f32.mrf.mxu0
      %5986 = vmatprep.mubr.bf16.mxu0 0
      %5987 = vmatmul.mubr.bf16.gmra.mxu0 %v5902
      %v5988 = vpop.f32.mrf.mxu0
      %v5989 = vadd.f32 0.0, %v5988
      %v5990 = vpop.f32.mrf.mxu0
      %v5991 = vpop.f32.mrf.mxu0
      %v5992 = vadd.f32 0.0, %v5991
      %v5993 = vpop.f32.mrf.mxu0
      %5994 = vmatprep.mubr.bf16.mxu0 0
      %5995 = vmatmul.mubr.bf16.gmra.mxu0 %v5905
      %v5996 = vpop.f32.mrf.mxu0
      %v5997 = vadd.f32 0.0, %v5996
      %v5998 = vpop.f32.mrf.mxu0
      %v5999 = vpop.f32.mrf.mxu0
      %v6000 = vadd.f32 0.0, %v5999
      %v6001 = vpop.f32.mrf.mxu0
      %6002 = vmatprep.mubr.bf16.mxu0 0
      %6003 = vmatmul.mubr.bf16.gmra.mxu0 %v5908
      %v6004 = vpop.f32.mrf.mxu0
      %v6005 = vadd.f32 0.0, %v6004
      %v6006 = vpop.f32.mrf.mxu0
      %v6007 = vpop.f32.mrf.mxu0
      %v6008 = vadd.f32 0.0, %v6007
      %v6009 = vpop.f32.mrf.mxu0
      %6010 = vmatprep.mubr.bf16.mxu0 0
      %6011 = vmatmul.mubr.bf16.gmra.mxu0 %v5911
      %v6012 = vpop.f32.mrf.mxu0
      %v6013 = vadd.f32 0.0, %v6012
      %v6014 = vpop.f32.mrf.mxu0
      %v6015 = vpop.f32.mrf.mxu0
      %v6016 = vadd.f32 0.0, %v6015
      %v6017 = vpop.f32.mrf.mxu0
      %6018 = vmatprep.mubr.bf16.mxu0 0
      %6019 = vmatmul.mubr.bf16.gmra.mxu0 %v5914
      %v6020 = vpop.f32.mrf.mxu0
      %v6021 = vadd.f32 0.0, %v6020
      %v6022 = vpop.f32.mrf.mxu0
      %v6023 = vpop.f32.mrf.mxu0
      %v6024 = vadd.f32 0.0, %v6023
      %v6025 = vpop.f32.mrf.mxu0
      %6026 = vmatprep.mubr.bf16.mxu0 0
      %6027 = vmatmul.mubr.bf16.gmra.mxu0 %v5917
      %v6028 = vpop.f32.mrf.mxu0
      %v6029 = vadd.f32 0.0, %v6028
      %v6030 = vpop.f32.mrf.mxu0
      %v6031 = vpop.f32.mrf.mxu0
      %v6032 = vadd.f32 0.0, %v6031
      %v6033 = vpop.f32.mrf.mxu0
      %6034 = vmatprep.mubr.bf16.mxu0 0
      %6035 = vmatmul.mubr.bf16.gmra.mxu0 %v5920
      %v6036 = vpop.f32.mrf.mxu0
      %v6037 = vadd.f32 0.0, %v6036
      %v6038 = vpop.f32.mrf.mxu0
      %v6039 = vpop.f32.mrf.mxu0
      %v6040 = vadd.f32 0.0, %v6039
      %v6041 = vpop.f32.mrf.mxu0
      %6042 = vmatprep.mubr.bf16.mxu0 0
      %6043 = vmatmul.mubr.bf16.gmra.mxu0 %v5923
      %v6044 = vpop.f32.mrf.mxu0
      %v6045 = vadd.f32 0.0, %v6044
      %v6046 = vpop.f32.mrf.mxu0
      %v6047 = vpop.f32.mrf.mxu0
      %v6048 = vadd.f32 0.0, %v6047
      %v6049 = vpop.f32.mrf.mxu0
      %6050 = vmatprep.mubr.bf16.mxu0 0
      %6051 = vmatmul.mubr.bf16.gmra.mxu0 %v5926
      %v6052 = vpop.f32.mrf.mxu0
      %v6053 = vadd.f32 0.0, %v6052
      %v6054 = vpop.f32.mrf.mxu0
      %v6055 = vpop.f32.mrf.mxu0
      %v6056 = vadd.f32 0.0, %v6055
      %v6057 = vpop.f32.mrf.mxu0
      %6058 = vmatprep.mubr.bf16.mxu0 0
      %6059 = vmatmul.mubr.bf16.gmra.mxu0 %v5929
      %v6060 = vpop.f32.mrf.mxu0
      %v6061 = vadd.f32 0.0, %v6060
      %v6062 = vpop.f32.mrf.mxu0
      %v6063 = vpop.f32.mrf.mxu0
      %v6064 = vadd.f32 0.0, %v6063
      %v6065 = vpop.f32.mrf.mxu0
      %6066 = vmatprep.mubr.bf16.mxu0 0
      %6067 = vmatmul.mubr.bf16.gmra.mxu0 %v5932
      %v6068 = vpop.f32.mrf.mxu0
      %v6069 = vadd.f32 0.0, %v6068
      %v6070 = vpop.f32.mrf.mxu0
      %v6071 = vpop.f32.mrf.mxu0
      %v6072 = vadd.f32 0.0, %v6071
      %v6073 = vpop.f32.mrf.mxu0
      %6074 = vmatprep.mubr.bf16.mxu0 0
      %6075 = vmatmul.mubr.bf16.gmra.mxu0 %v5935
      %v6076 = vpop.f32.mrf.mxu0
      %v6077 = vadd.f32 0.0, %v6076
      %v6078 = vpop.f32.mrf.mxu0
      %v6079 = vpop.f32.mrf.mxu0
      %v6080 = vadd.f32 0.0, %v6079
      %v6081 = vpop.f32.mrf.mxu0
      %6082 = vmatprep.mubr.bf16.mxu0 0
      %6083 = vmatmul.mubr.bf16.gmra.mxu0 %v5938
      %v6084 = vpop.f32.mrf.mxu0
      %v6085 = vadd.f32 0.0, %v6084
      %v6086 = vpop.f32.mrf.mxu0
      %v6087 = vpop.f32.mrf.mxu0
      %v6088 = vadd.f32 0.0, %v6087
      %v6089 = vpop.f32.mrf.mxu0
      %6090 = vmatprep.mubr.bf16.mxu0 0
      %6091 = vmatmul.mubr.bf16.gmra.mxu0 %v5941
      %v6092 = vpop.f32.mrf.mxu0
      %v6093 = vadd.f32 0.0, %v6092
      %v6094 = vpop.f32.mrf.mxu0
      %v6095 = vpop.f32.mrf.mxu0
      %v6096 = vadd.f32 0.0, %v6095
      %v6097 = vpop.f32.mrf.mxu0
      %6098 = vmatprep.mubr.bf16.mxu0 0
      %6099 = vmatmul.mubr.bf16.gmra.mxu0 %v5944
      %v6100 = vpop.f32.mrf.mxu0
      %v6101 = vadd.f32 0.0, %v6100
      %v6102 = vpop.f32.mrf.mxu0
      %v6103 = vpop.f32.mrf.mxu0
      %v6104 = vadd.f32 0.0, %v6103
      %v6105 = vpop.f32.mrf.mxu0
      %6106 = vdwg.mxu0
      %v6107 = vadd.f32 %v5547, %v5981
      %v6108 = vadd.f32 %v5550, %v5984
      %v6109 = vadd.f32 %v5555, %v5989
      %v6110 = vadd.f32 %v5558, %v5992
      %v6111 = vadd.f32 %v5563, %v5997
      %v6112 = vadd.f32 %v5566, %v6000
      %v6113 = vadd.f32 %v5571, %v6005
      %v6114 = vadd.f32 %v5574, %v6008
      %v6115 = vadd.f32 %v5579, %v6013
      %v6116 = vadd.f32 %v5582, %v6016
      %v6117 = vadd.f32 %v5587, %v6021
      %v6118 = vadd.f32 %v5590, %v6024
      %v6119 = vadd.f32 %v5595, %v6029
      %v6120 = vadd.f32 %v5598, %v6032
      %v6121 = vadd.f32 %v5603, %v6037
      %v6122 = vadd.f32 %v5606, %v6040
      %v6123 = vadd.f32 %v5611, %v6045
      %v6124 = vadd.f32 %v5614, %v6048
      %v6125 = vadd.f32 %v5619, %v6053
      %v6126 = vadd.f32 %v5622, %v6056
      %v6127 = vadd.f32 %v5627, %v6061
      %v6128 = vadd.f32 %v5630, %v6064
      %v6129 = vadd.f32 %v5635, %v6069
      %v6130 = vadd.f32 %v5638, %v6072
      %v6131 = vadd.f32 %v5643, %v6077
      %v6132 = vadd.f32 %v5646, %v6080
      %v6133 = vadd.f32 %v5651, %v6085
      %v6134 = vadd.f32 %v5654, %v6088
      %v6135 = vadd.f32 %v5659, %v6093
      %v6136 = vadd.f32 %v5662, %v6096
      %v6137 = vadd.f32 %v5667, %v6101
      %v6138 = vadd.f32 %v5670, %v6104
      %v6139 = vld [vmem:[%s4544] sm:$0xf]
      %v6140 = vld [vmem:[%s4544 + $0x4] sm:$0xf]
      %v6141 = vld [vmem:[%s4544 + $0xc] sm:$0xf]
      %v6142 = vld [vmem:[%s4544 + $0x10] sm:$0xf]
      %v6143 = vld [vmem:[%s4544 + $0x18] sm:$0xf]
      %v6144 = vld [vmem:[%s4544 + $0x1c] sm:$0xf]
      %v6145 = vld [vmem:[%s4544 + $0x24] sm:$0xf]
      %v6146 = vld [vmem:[%s4544 + $0x28] sm:$0xf]
      %v6147 = vld [vmem:[%s4544 + $0x30] sm:$0xf]
      %v6148 = vld [vmem:[%s4544 + $0x34] sm:$0xf]
      %v6149 = vld [vmem:[%s4544 + $0x3c] sm:$0xf]
      %v6150 = vld [vmem:[%s4544 + $0x40] sm:$0xf]
      %v6151 = vld [vmem:[%s4544 + $0x48] sm:$0xf]
      %v6152 = vld [vmem:[%s4544 + $0x4c] sm:$0xf]
      %v6153 = vld [vmem:[%s4544 + $0x54] sm:$0xf]
      %v6154 = vld [vmem:[%s4544 + $0x58] sm:$0xf]
      %v6155 = vld [vmem:[%s4544 + $0x60] sm:$0xf]
      %v6156 = vld [vmem:[%s4544 + $0x64] sm:$0xf]
      %v6157 = vld [vmem:[%s4544 + $0x6c] sm:$0xf]
      %v6158 = vld [vmem:[%s4544 + $0x70] sm:$0xf]
      %v6159 = vld [vmem:[%s4544 + $0x78] sm:$0xf]
      %v6160 = vld [vmem:[%s4544 + $0x7c] sm:$0xf]
      %v6161 = vld [vmem:[%s4544 + $0x84] sm:$0xf]
      %v6162 = vld [vmem:[%s4544 + $0x88] sm:$0xf]
      %v6163 = vld [vmem:[%s4544 + $0x90] sm:$0xf]
      %v6164 = vld [vmem:[%s4544 + $0x94] sm:$0xf]
      %v6165 = vld [vmem:[%s4544 + $0x9c] sm:$0xf]
      %v6166 = vld [vmem:[%s4544 + $0xa0] sm:$0xf]
      %v6167 = vld [vmem:[%s4544 + $0xa8] sm:$0xf]
      %v6168 = vld [vmem:[%s4544 + $0xac] sm:$0xf]
      %v6169 = vld [vmem:[%s4544 + $0xb4] sm:$0xf]
      %v6170 = vld [vmem:[%s4544 + $0xb8] sm:$0xf]
      %s6171 = scalar_lea.vmem %s7, 48
      %v6172 = vld [vmem:[%s6171] sm:$0xf]
      %v6173 = vld [vmem:[%s6171 + $0x4] sm:$0xf]
      %v6174 = vld [vmem:[%s6171 + $0x8] sm:$0xf]
      %v6175 = vld [vmem:[%s6171 + $0xc] sm:$0xf]
      %v6208 = vunpack.c.l.b16 %v6139
      %v6209 = vunpack.c.l.b16 %v6140
      %v6210 = vunpack.c.l.b16 %v6141
      %v6211 = vunpack.c.l.b16 %v6142
      %v6212 = vunpack.c.l.b16 %v6143
      %v6213 = vunpack.c.l.b16 %v6144
      %v6214 = vunpack.c.l.b16 %v6145
      %v6215 = vunpack.c.l.b16 %v6146
      %v6216 = vunpack.c.l.b16 %v6147
      %v6217 = vunpack.c.l.b16 %v6148
      %v6218 = vunpack.c.l.b16 %v6149
      %v6219 = vunpack.c.l.b16 %v6150
      %v6220 = vunpack.c.l.b16 %v6151
      %v6221 = vunpack.c.l.b16 %v6152
      %v6222 = vunpack.c.l.b16 %v6153
      %v6223 = vunpack.c.l.b16 %v6154
      %v6224 = vunpack.c.l.b16 %v6155
      %v6225 = vunpack.c.l.b16 %v6156
      %v6226 = vunpack.c.l.b16 %v6157
      %v6227 = vunpack.c.l.b16 %v6158
      %v6228 = vunpack.c.l.b16 %v6159
      %v6229 = vunpack.c.l.b16 %v6160
      %v6230 = vunpack.c.l.b16 %v6161
      %v6231 = vunpack.c.l.b16 %v6162
      %v6232 = vunpack.c.l.b16 %v6163
      %v6233 = vunpack.c.l.b16 %v6164
      %v6234 = vunpack.c.l.b16 %v6165
      %v6235 = vunpack.c.l.b16 %v6166
      %v6236 = vunpack.c.l.b16 %v6167
      %v6237 = vunpack.c.l.b16 %v6168
      %v6238 = vunpack.c.l.b16 %v6169
      %v6239 = vunpack.c.l.b16 %v6170
      %v6240 = vpack.c.b16 %v6209, %v6208
      %v6241 = vpack.c.b16 %v6211, %v6210
      %v6242 = vpack.c.b16 %v6213, %v6212
      %v6243 = vpack.c.b16 %v6215, %v6214
      %v6244 = vpack.c.b16 %v6217, %v6216
      %v6245 = vpack.c.b16 %v6219, %v6218
      %v6246 = vpack.c.b16 %v6221, %v6220
      %v6247 = vpack.c.b16 %v6223, %v6222
      %v6248 = vpack.c.b16 %v6225, %v6224
      %v6249 = vpack.c.b16 %v6227, %v6226
      %v6250 = vpack.c.b16 %v6229, %v6228
      %v6251 = vpack.c.b16 %v6231, %v6230
      %v6252 = vpack.c.b16 %v6233, %v6232
      %v6253 = vpack.c.b16 %v6235, %v6234
      %v6254 = vpack.c.b16 %v6237, %v6236
      %v6255 = vpack.c.b16 %v6239, %v6238
      %v6260 = vunpack.c.l.b16 %v6172
      %v6261 = vunpack.c.l.b16 %v6173
      %v6262 = vunpack.c.l.b16 %v6174
      %v6263 = vunpack.c.l.b16 %v6175
      %v6264 = vpack.c.b16 %v6261, %v6260
      %v6265 = vpack.c.b16 %v6263, %v6262
      %v6269 = vsel %vm3447, %v6240, 0
      %v6272 = vsel %vm3447, %v6241, 0
      %v6275 = vsel %vm3447, %v6242, 0
      %v6278 = vsel %vm3447, %v6243, 0
      %v6281 = vsel %vm3447, %v6244, 0
      %v6284 = vsel %vm3447, %v6245, 0
      %v6287 = vsel %vm3447, %v6246, 0
      %v6290 = vsel %vm3447, %v6247, 0
      %v6293 = vsel %vm3447, %v6248, 0
      %v6296 = vsel %vm3447, %v6249, 0
      %v6299 = vsel %vm3447, %v6250, 0
      %v6302 = vsel %vm3447, %v6251, 0
      %v6305 = vsel %vm3447, %v6252, 0
      %v6308 = vsel %vm3447, %v6253, 0
      %v6311 = vsel %vm3447, %v6254, 0
      %v6314 = vsel %vm3447, %v6255, 0
      %6316 = vmatprep.subr.bf16.mxu0 0
      %6317 = vmatpush1.bf16.msra.mxu0 0
      %6318 = vmatprep.subr.bf16.mxu0 0
      %6319 = vmatpush1.bf16.msra.mxu0 0
      %6320 = vmatprep.subr.bf16.mxu0 0
      %6321 = vmatpush1.bf16.msra.mxu0 0
      %6322 = vmatprep.subr.bf16.mxu0 0
      %6323 = vmatpush1.bf16.msra.mxu0 0
      %6324 = vmatprep.subr.bf16.mxu0 0
      %6325 = vmatpush1.bf16.msra.mxu0 0
      %6326 = vmatprep.subr.bf16.mxu0 0
      %6327 = vmatpush1.bf16.msra.mxu0 0
      %6328 = vmatprep.subr.bf16.mxu0 0
      %6329 = vmatpush1.bf16.msra.mxu0 %v6265
      %6330 = vmatprep.subr.bf16.mxu0 0
      %6331 = vmatpush1.bf16.msra.mxu0 %v6264
      %6332 = vmatprep.subr.bf16.mxu0 0
      %6333 = vmatpush2.bf16.msra.mxu0 0
      %6334 = vmatprep.subr.bf16.mxu0 0
      %6335 = vmatpush2.bf16.msra.mxu0 0
      %6336 = vmatprep.subr.bf16.mxu0 0
      %6337 = vmatpush2.bf16.msra.mxu0 0
      %6338 = vmatprep.subr.bf16.mxu0 0
      %6339 = vmatpush2.bf16.msra.mxu0 0
      %6340 = vmatprep.subr.bf16.mxu0 0
      %6341 = vmatpush2.bf16.msra.mxu0 0
      %6342 = vmatprep.subr.bf16.mxu0 0
      %6343 = vmatpush2.bf16.msra.mxu0 0
      %6344 = vmatprep.subr.bf16.mxu0 0
      %6345 = vmatpush2.bf16.msra.mxu0 0
      %6346 = vmatprep.subr.bf16.mxu0 0
      %6347 = vmatpush2.bf16.msra.mxu0 0
      %6348 = vmatprep.mubr.bf16.mxu0 0
      %6349 = vmatmul.mubr.bf16.gmra.mxu0 %v6269
      %v6350 = vpop.f32.mrf.mxu0
      %v6351 = vadd.f32 0.0, %v6350
      %v6352 = vpop.f32.mrf.mxu0
      %v6353 = vpop.f32.mrf.mxu0
      %v6354 = vadd.f32 0.0, %v6353
      %v6355 = vpop.f32.mrf.mxu0
      %6356 = vmatprep.mubr.bf16.mxu0 0
      %6357 = vmatmul.mubr.bf16.gmra.mxu0 %v6272
      %v6358 = vpop.f32.mrf.mxu0
      %v6359 = vadd.f32 0.0, %v6358
      %v6360 = vpop.f32.mrf.mxu0
      %v6361 = vpop.f32.mrf.mxu0
      %v6362 = vadd.f32 0.0, %v6361
      %v6363 = vpop.f32.mrf.mxu0
      %6364 = vmatprep.mubr.bf16.mxu0 0
      %6365 = vmatmul.mubr.bf16.gmra.mxu0 %v6275
      %v6366 = vpop.f32.mrf.mxu0
      %v6367 = vadd.f32 0.0, %v6366
      %v6368 = vpop.f32.mrf.mxu0
      %v6369 = vpop.f32.mrf.mxu0
      %v6370 = vadd.f32 0.0, %v6369
      %v6371 = vpop.f32.mrf.mxu0
      %6372 = vmatprep.mubr.bf16.mxu0 0
      %6373 = vmatmul.mubr.bf16.gmra.mxu0 %v6278
      %v6374 = vpop.f32.mrf.mxu0
      %v6375 = vadd.f32 0.0, %v6374
      %v6376 = vpop.f32.mrf.mxu0
      %v6377 = vpop.f32.mrf.mxu0
      %v6378 = vadd.f32 0.0, %v6377
      %v6379 = vpop.f32.mrf.mxu0
      %6380 = vmatprep.mubr.bf16.mxu0 0
      %6381 = vmatmul.mubr.bf16.gmra.mxu0 %v6281
      %v6382 = vpop.f32.mrf.mxu0
      %v6383 = vadd.f32 0.0, %v6382
      %v6384 = vpop.f32.mrf.mxu0
      %v6385 = vpop.f32.mrf.mxu0
      %v6386 = vadd.f32 0.0, %v6385
      %v6387 = vpop.f32.mrf.mxu0
      %6388 = vmatprep.mubr.bf16.mxu0 0
      %6389 = vmatmul.mubr.bf16.gmra.mxu0 %v6284
      %v6390 = vpop.f32.mrf.mxu0
      %v6391 = vadd.f32 0.0, %v6390
      %v6392 = vpop.f32.mrf.mxu0
      %v6393 = vpop.f32.mrf.mxu0
      %v6394 = vadd.f32 0.0, %v6393
      %v6395 = vpop.f32.mrf.mxu0
      %6396 = vmatprep.mubr.bf16.mxu0 0
      %6397 = vmatmul.mubr.bf16.gmra.mxu0 %v6287
      %v6398 = vpop.f32.mrf.mxu0
      %v6399 = vadd.f32 0.0, %v6398
      %v6400 = vpop.f32.mrf.mxu0
      %v6401 = vpop.f32.mrf.mxu0
      %v6402 = vadd.f32 0.0, %v6401
      %v6403 = vpop.f32.mrf.mxu0
      %6404 = vmatprep.mubr.bf16.mxu0 0
      %6405 = vmatmul.mubr.bf16.gmra.mxu0 %v6290
      %v6406 = vpop.f32.mrf.mxu0
      %v6407 = vadd.f32 0.0, %v6406
      %v6408 = vpop.f32.mrf.mxu0
      %v6409 = vpop.f32.mrf.mxu0
      %v6410 = vadd.f32 0.0, %v6409
      %v6411 = vpop.f32.mrf.mxu0
      %6412 = vmatprep.mubr.bf16.mxu0 0
      %6413 = vmatmul.mubr.bf16.gmra.mxu0 %v6293
      %v6414 = vpop.f32.mrf.mxu0
      %v6415 = vadd.f32 0.0, %v6414
      %v6416 = vpop.f32.mrf.mxu0
      %v6417 = vpop.f32.mrf.mxu0
      %v6418 = vadd.f32 0.0, %v6417
      %v6419 = vpop.f32.mrf.mxu0
      %6420 = vmatprep.mubr.bf16.mxu0 0
      %6421 = vmatmul.mubr.bf16.gmra.mxu0 %v6296
      %v6422 = vpop.f32.mrf.mxu0
      %v6423 = vadd.f32 0.0, %v6422
      %v6424 = vpop.f32.mrf.mxu0
      %v6425 = vpop.f32.mrf.mxu0
      %v6426 = vadd.f32 0.0, %v6425
      %v6427 = vpop.f32.mrf.mxu0
      %6428 = vmatprep.mubr.bf16.mxu0 0
      %6429 = vmatmul.mubr.bf16.gmra.mxu0 %v6299
      %v6430 = vpop.f32.mrf.mxu0
      %v6431 = vadd.f32 0.0, %v6430
      %v6432 = vpop.f32.mrf.mxu0
      %v6433 = vpop.f32.mrf.mxu0
      %v6434 = vadd.f32 0.0, %v6433
      %v6435 = vpop.f32.mrf.mxu0
      %6436 = vmatprep.mubr.bf16.mxu0 0
      %6437 = vmatmul.mubr.bf16.gmra.mxu0 %v6302
      %v6438 = vpop.f32.mrf.mxu0
      %v6439 = vadd.f32 0.0, %v6438
      %v6440 = vpop.f32.mrf.mxu0
      %v6441 = vpop.f32.mrf.mxu0
      %v6442 = vadd.f32 0.0, %v6441
      %v6443 = vpop.f32.mrf.mxu0
      %6444 = vmatprep.mubr.bf16.mxu0 0
      %6445 = vmatmul.mubr.bf16.gmra.mxu0 %v6305
      %v6446 = vpop.f32.mrf.mxu0
      %v6447 = vadd.f32 0.0, %v6446
      %v6448 = vpop.f32.mrf.mxu0
      %v6449 = vpop.f32.mrf.mxu0
      %v6450 = vadd.f32 0.0, %v6449
      %v6451 = vpop.f32.mrf.mxu0
      %6452 = vmatprep.mubr.bf16.mxu0 0
      %6453 = vmatmul.mubr.bf16.gmra.mxu0 %v6308
      %v6454 = vpop.f32.mrf.mxu0
      %v6455 = vadd.f32 0.0, %v6454
      %v6456 = vpop.f32.mrf.mxu0
      %v6457 = vpop.f32.mrf.mxu0
      %v6458 = vadd.f32 0.0, %v6457
      %v6459 = vpop.f32.mrf.mxu0
      %6460 = vmatprep.mubr.bf16.mxu0 0
      %6461 = vmatmul.mubr.bf16.gmra.mxu0 %v6311
      %v6462 = vpop.f32.mrf.mxu0
      %v6463 = vadd.f32 0.0, %v6462
      %v6464 = vpop.f32.mrf.mxu0
      %v6465 = vpop.f32.mrf.mxu0
      %v6466 = vadd.f32 0.0, %v6465
      %v6467 = vpop.f32.mrf.mxu0
      %6468 = vmatprep.mubr.bf16.mxu0 0
      %6469 = vmatmul.mubr.bf16.gmra.mxu0 %v6314
      %v6470 = vpop.f32.mrf.mxu0
      %v6471 = vadd.f32 0.0, %v6470
      %v6472 = vpop.f32.mrf.mxu0
      %v6473 = vpop.f32.mrf.mxu0
      %v6474 = vadd.f32 0.0, %v6473
      %v6475 = vpop.f32.mrf.mxu0
      %6476 = vdwg.mxu0
      %v6477 = vadd.f32 %v6107, %v6351
      %v6478 = vadd.f32 %v6108, %v6354
      %v6479 = vadd.f32 %v6109, %v6359
      %v6480 = vadd.f32 %v6110, %v6362
      %v6481 = vadd.f32 %v6111, %v6367
      %v6482 = vadd.f32 %v6112, %v6370
      %v6483 = vadd.f32 %v6113, %v6375
      %v6484 = vadd.f32 %v6114, %v6378
      %v6485 = vadd.f32 %v6115, %v6383
      %v6486 = vadd.f32 %v6116, %v6386
      %v6487 = vadd.f32 %v6117, %v6391
      %v6488 = vadd.f32 %v6118, %v6394
      %v6489 = vadd.f32 %v6119, %v6399
      %v6490 = vadd.f32 %v6120, %v6402
      %v6491 = vadd.f32 %v6121, %v6407
      %v6492 = vadd.f32 %v6122, %v6410
      %v6493 = vadd.f32 %v6123, %v6415
      %v6494 = vadd.f32 %v6124, %v6418
      %v6495 = vadd.f32 %v6125, %v6423
      %v6496 = vadd.f32 %v6126, %v6426
      %v6497 = vadd.f32 %v6127, %v6431
      %v6498 = vadd.f32 %v6128, %v6434
      %v6499 = vadd.f32 %v6129, %v6439
      %v6500 = vadd.f32 %v6130, %v6442
      %v6501 = vadd.f32 %v6131, %v6447
      %v6502 = vadd.f32 %v6132, %v6450
      %v6503 = vadd.f32 %v6133, %v6455
      %v6504 = vadd.f32 %v6134, %v6458
      %v6505 = vadd.f32 %v6135, %v6463
      %v6506 = vadd.f32 %v6136, %v6466
      %v6507 = vadd.f32 %v6137, %v6471
      %v6508 = vadd.f32 %v6138, %v6474
      %v6509 = vld [vmem:[%s4544] sm:$0xf]
      %v6510 = vld [vmem:[%s4544 + $0x4] sm:$0xf]
      %v6511 = vld [vmem:[%s4544 + $0x8] sm:$0x1]
      %v6512 = vld [vmem:[%s4544 + $0xc] sm:$0xf]
      %v6513 = vld [vmem:[%s4544 + $0x10] sm:$0xf]
      %v6514 = vld [vmem:[%s4544 + $0x14] sm:$0x1]
      %v6515 = vld [vmem:[%s4544 + $0x18] sm:$0xf]
      %v6516 = vld [vmem:[%s4544 + $0x1c] sm:$0xf]
      %v6517 = vld [vmem:[%s4544 + $0x20] sm:$0x1]
      %v6518 = vld [vmem:[%s4544 + $0x24] sm:$0xf]
      %v6519 = vld [vmem:[%s4544 + $0x28] sm:$0xf]
      %v6520 = vld [vmem:[%s4544 + $0x2c] sm:$0x1]
      %v6521 = vld [vmem:[%s4544 + $0x30] sm:$0xf]
      %v6522 = vld [vmem:[%s4544 + $0x34] sm:$0xf]
      %v6523 = vld [vmem:[%s4544 + $0x38] sm:$0x1]
      %v6524 = vld [vmem:[%s4544 + $0x3c] sm:$0xf]
      %v6525 = vld [vmem:[%s4544 + $0x40] sm:$0xf]
      %v6526 = vld [vmem:[%s4544 + $0x44] sm:$0x1]
      %v6527 = vld [vmem:[%s4544 + $0x48] sm:$0xf]
      %v6528 = vld [vmem:[%s4544 + $0x4c] sm:$0xf]
      %v6529 = vld [vmem:[%s4544 + $0x50] sm:$0x1]
      %v6530 = vld [vmem:[%s4544 + $0x54] sm:$0xf]
      %v6531 = vld [vmem:[%s4544 + $0x58] sm:$0xf]
      %v6532 = vld [vmem:[%s4544 + $0x5c] sm:$0x1]
      %v6533 = vld [vmem:[%s4544 + $0x60] sm:$0xf]
      %v6534 = vld [vmem:[%s4544 + $0x64] sm:$0xf]
      %v6535 = vld [vmem:[%s4544 + $0x68] sm:$0x1]
      %v6536 = vld [vmem:[%s4544 + $0x6c] sm:$0xf]
      %v6537 = vld [vmem:[%s4544 + $0x70] sm:$0xf]
      %v6538 = vld [vmem:[%s4544 + $0x74] sm:$0x1]
      %v6539 = vld [vmem:[%s4544 + $0x78] sm:$0xf]
      %v6540 = vld [vmem:[%s4544 + $0x7c] sm:$0xf]
      %v6541 = vld [vmem:[%s4544 + $0x80] sm:$0x1]
      %v6542 = vld [vmem:[%s4544 + $0x84] sm:$0xf]
      %v6543 = vld [vmem:[%s4544 + $0x88] sm:$0xf]
      %v6544 = vld [vmem:[%s4544 + $0x8c] sm:$0x1]
      %v6545 = vld [vmem:[%s4544 + $0x90] sm:$0xf]
      %v6546 = vld [vmem:[%s4544 + $0x94] sm:$0xf]
      %v6547 = vld [vmem:[%s4544 + $0x98] sm:$0x1]
      %v6548 = vld [vmem:[%s4544 + $0x9c] sm:$0xf]
      %v6549 = vld [vmem:[%s4544 + $0xa0] sm:$0xf]
      %v6550 = vld [vmem:[%s4544 + $0xa4] sm:$0x1]
      %v6551 = vld [vmem:[%s4544 + $0xa8] sm:$0xf]
      %v6552 = vld [vmem:[%s4544 + $0xac] sm:$0xf]
      %v6553 = vld [vmem:[%s4544 + $0xb0] sm:$0x1]
      %v6554 = vld [vmem:[%s4544 + $0xb4] sm:$0xf]
      %v6555 = vld [vmem:[%s4544 + $0xb8] sm:$0xf]
      %v6556 = vld [vmem:[%s4544 + $0xbc] sm:$0x1]
      %v6558 = vshrl.u32 %v6509, 16
      %v6560 = vrot.slane %v6558, 4
      %v6561 = vshll.u32 %v6509, 16
      %v6563 = vrot.slane %v6561, 5
      %v6564 = vor.u32 %v6560, %v6563
      %v6565 = vrot.slane %v6564, 4
      %v6567 = vshll.u32 %v6510, 16
      %v6569 = vrot.slane %v6567, 5
      %v6570 = vsel %vm506, %v6565, %v6569
      %v6571 = vshrl.u32 %v6510, 16
      %v6573 = vrot.slane %v6571, 4
      %v6574 = vor.u32 %v6573, %v6569
      %v6575 = vrot.slane %v6574, 4
      %v6577 = vshll.u32 %v6511, 16
      %v6579 = vrot.slane %v6577, 5
      %v6580 = vsel %vm506, %v6575, %v6579
      %v6582 = vshrl.u32 %v6512, 16
      %v6584 = vrot.slane %v6582, 4
      %v6585 = vshll.u32 %v6512, 16
      %v6587 = vrot.slane %v6585, 5
      %v6588 = vor.u32 %v6584, %v6587
      %v6589 = vrot.slane %v6588, 4
      %v6591 = vshll.u32 %v6513, 16
      %v6593 = vrot.slane %v6591, 5
      %v6594 = vsel %vm506, %v6589, %v6593
      %v6595 = vshrl.u32 %v6513, 16
      %v6597 = vrot.slane %v6595, 4
      %v6598 = vor.u32 %v6597, %v6593
      %v6599 = vrot.slane %v6598, 4
      %v6601 = vshll.u32 %v6514, 16
      %v6603 = vrot.slane %v6601, 5
      %v6604 = vsel %vm506, %v6599, %v6603
      %v6606 = vshrl.u32 %v6515, 16
      %v6608 = vrot.slane %v6606, 4
      %v6609 = vshll.u32 %v6515, 16
      %v6611 = vrot.slane %v6609, 5
      %v6612 = vor.u32 %v6608, %v6611
      %v6613 = vrot.slane %v6612, 4
      %v6615 = vshll.u32 %v6516, 16
      %v6617 = vrot.slane %v6615, 5
      %v6618 = vsel %vm506, %v6613, %v6617
      %v6619 = vshrl.u32 %v6516, 16
      %v6621 = vrot.slane %v6619, 4
      %v6622 = vor.u32 %v6621, %v6617
      %v6623 = vrot.slane %v6622, 4
      %v6625 = vshll.u32 %v6517, 16
      %v6627 = vrot.slane %v6625, 5
      %v6628 = vsel %vm506, %v6623, %v6627
      %v6630 = vshrl.u32 %v6518, 16
      %v6632 = vrot.slane %v6630, 4
      %v6633 = vshll.u32 %v6518, 16
      %v6635 = vrot.slane %v6633, 5
      %v6636 = vor.u32 %v6632, %v6635
      %v6637 = vrot.slane %v6636, 4
      %v6639 = vshll.u32 %v6519, 16
      %v6641 = vrot.slane %v6639, 5
      %v6642 = vsel %vm506, %v6637, %v6641
      %v6643 = vshrl.u32 %v6519, 16
      %v6645 = vrot.slane %v6643, 4
      %v6646 = vor.u32 %v6645, %v6641
      %v6647 = vrot.slane %v6646, 4
      %v6649 = vshll.u32 %v6520, 16
      %v6651 = vrot.slane %v6649, 5
      %v6652 = vsel %vm506, %v6647, %v6651
      %v6654 = vshrl.u32 %v6521, 16
      %v6656 = vrot.slane %v6654, 4
      %v6657 = vshll.u32 %v6521, 16
      %v6659 = vrot.slane %v6657, 5
      %v6660 = vor.u32 %v6656, %v6659
      %v6661 = vrot.slane %v6660, 4
      %v6663 = vshll.u32 %v6522, 16
      %v6665 = vrot.slane %v6663, 5
      %v6666 = vsel %vm506, %v6661, %v6665
      %v6667 = vshrl.u32 %v6522, 16
      %v6669 = vrot.slane %v6667, 4
      %v6670 = vor.u32 %v6669, %v6665
      %v6671 = vrot.slane %v6670, 4
      %v6673 = vshll.u32 %v6523, 16
      %v6675 = vrot.slane %v6673, 5
      %v6676 = vsel %vm506, %v6671, %v6675
      %v6678 = vshrl.u32 %v6524, 16
      %v6680 = vrot.slane %v6678, 4
      %v6681 = vshll.u32 %v6524, 16
      %v6683 = vrot.slane %v6681, 5
      %v6684 = vor.u32 %v6680, %v6683
      %v6685 = vrot.slane %v6684, 4
      %v6687 = vshll.u32 %v6525, 16
      %v6689 = vrot.slane %v6687, 5
      %v6690 = vsel %vm506, %v6685, %v6689
      %v6691 = vshrl.u32 %v6525, 16
      %v6693 = vrot.slane %v6691, 4
      %v6694 = vor.u32 %v6693, %v6689
      %v6695 = vrot.slane %v6694, 4
      %v6697 = vshll.u32 %v6526, 16
      %v6699 = vrot.slane %v6697, 5
      %v6700 = vsel %vm506, %v6695, %v6699
      %v6702 = vshrl.u32 %v6527, 16
      %v6704 = vrot.slane %v6702, 4
      %v6705 = vshll.u32 %v6527, 16
      %v6707 = vrot.slane %v6705, 5
      %v6708 = vor.u32 %v6704, %v6707
      %v6709 = vrot.slane %v6708, 4
      %v6711 = vshll.u32 %v6528, 16
      %v6713 = vrot.slane %v6711, 5
      %v6714 = vsel %vm506, %v6709, %v6713
      %v6715 = vshrl.u32 %v6528, 16
      %v6717 = vrot.slane %v6715, 4
      %v6718 = vor.u32 %v6717, %v6713
      %v6719 = vrot.slane %v6718, 4
      %v6721 = vshll.u32 %v6529, 16
      %v6723 = vrot.slane %v6721, 5
      %v6724 = vsel %vm506, %v6719, %v6723
      %v6726 = vshrl.u32 %v6530, 16
      %v6728 = vrot.slane %v6726, 4
      %v6729 = vshll.u32 %v6530, 16
      %v6731 = vrot.slane %v6729, 5
      %v6732 = vor.u32 %v6728, %v6731
      %v6733 = vrot.slane %v6732, 4
      %v6735 = vshll.u32 %v6531, 16
      %v6737 = vrot.slane %v6735, 5
      %v6738 = vsel %vm506, %v6733, %v6737
      %v6739 = vshrl.u32 %v6531, 16
      %v6741 = vrot.slane %v6739, 4
      %v6742 = vor.u32 %v6741, %v6737
      %v6743 = vrot.slane %v6742, 4
      %v6745 = vshll.u32 %v6532, 16
      %v6747 = vrot.slane %v6745, 5
      %v6748 = vsel %vm506, %v6743, %v6747
      %v6750 = vshrl.u32 %v6533, 16
      %v6752 = vrot.slane %v6750, 4
      %v6753 = vshll.u32 %v6533, 16
      %v6755 = vrot.slane %v6753, 5
      %v6756 = vor.u32 %v6752, %v6755
      %v6757 = vrot.slane %v6756, 4
      %v6759 = vshll.u32 %v6534, 16
      %v6761 = vrot.slane %v6759, 5
      %v6762 = vsel %vm506, %v6757, %v6761
      %v6763 = vshrl.u32 %v6534, 16
      %v6765 = vrot.slane %v6763, 4
      %v6766 = vor.u32 %v6765, %v6761
      %v6767 = vrot.slane %v6766, 4
      %v6769 = vshll.u32 %v6535, 16
      %v6771 = vrot.slane %v6769, 5
      %v6772 = vsel %vm506, %v6767, %v6771
      %v6774 = vshrl.u32 %v6536, 16
      %v6776 = vrot.slane %v6774, 4
      %v6777 = vshll.u32 %v6536, 16
      %v6779 = vrot.slane %v6777, 5
      %v6780 = vor.u32 %v6776, %v6779
      %v6781 = vrot.slane %v6780, 4
      %v6783 = vshll.u32 %v6537, 16
      %v6785 = vrot.slane %v6783, 5
      %v6786 = vsel %vm506, %v6781, %v6785
      %v6787 = vshrl.u32 %v6537, 16
      %v6789 = vrot.slane %v6787, 4
      %v6790 = vor.u32 %v6789, %v6785
      %v6791 = vrot.slane %v6790, 4
      %v6793 = vshll.u32 %v6538, 16
      %v6795 = vrot.slane %v6793, 5
      %v6796 = vsel %vm506, %v6791, %v6795
      %v6798 = vshrl.u32 %v6539, 16
      %v6800 = vrot.slane %v6798, 4
      %v6801 = vshll.u32 %v6539, 16
      %v6803 = vrot.slane %v6801, 5
      %v6804 = vor.u32 %v6800, %v6803
      %v6805 = vrot.slane %v6804, 4
      %v6807 = vshll.u32 %v6540, 16
      %v6809 = vrot.slane %v6807, 5
      %v6810 = vsel %vm506, %v6805, %v6809
      %v6811 = vshrl.u32 %v6540, 16
      %v6813 = vrot.slane %v6811, 4
      %v6814 = vor.u32 %v6813, %v6809
      %v6815 = vrot.slane %v6814, 4
      %v6817 = vshll.u32 %v6541, 16
      %v6819 = vrot.slane %v6817, 5
      %v6820 = vsel %vm506, %v6815, %v6819
      %v6822 = vshrl.u32 %v6542, 16
      %v6824 = vrot.slane %v6822, 4
      %v6825 = vshll.u32 %v6542, 16
      %v6827 = vrot.slane %v6825, 5
      %v6828 = vor.u32 %v6824, %v6827
      %v6829 = vrot.slane %v6828, 4
      %v6831 = vshll.u32 %v6543, 16
      %v6833 = vrot.slane %v6831, 5
      %v6834 = vsel %vm506, %v6829, %v6833
      %v6835 = vshrl.u32 %v6543, 16
      %v6837 = vrot.slane %v6835, 4
      %v6838 = vor.u32 %v6837, %v6833
      %v6839 = vrot.slane %v6838, 4
      %v6841 = vshll.u32 %v6544, 16
      %v6843 = vrot.slane %v6841, 5
      %v6844 = vsel %vm506, %v6839, %v6843
      %v6846 = vshrl.u32 %v6545, 16
      %v6848 = vrot.slane %v6846, 4
      %v6849 = vshll.u32 %v6545, 16
      %v6851 = vrot.slane %v6849, 5
      %v6852 = vor.u32 %v6848, %v6851
      %v6853 = vrot.slane %v6852, 4
      %v6855 = vshll.u32 %v6546, 16
      %v6857 = vrot.slane %v6855, 5
      %v6858 = vsel %vm506, %v6853, %v6857
      %v6859 = vshrl.u32 %v6546, 16
      %v6861 = vrot.slane %v6859, 4
      %v6862 = vor.u32 %v6861, %v6857
      %v6863 = vrot.slane %v6862, 4
      %v6865 = vshll.u32 %v6547, 16
      %v6867 = vrot.slane %v6865, 5
      %v6868 = vsel %vm506, %v6863, %v6867
      %v6870 = vshrl.u32 %v6548, 16
      %v6872 = vrot.slane %v6870, 4
      %v6873 = vshll.u32 %v6548, 16
      %v6875 = vrot.slane %v6873, 5
      %v6876 = vor.u32 %v6872, %v6875
      %v6877 = vrot.slane %v6876, 4
      %v6879 = vshll.u32 %v6549, 16
      %v6881 = vrot.slane %v6879, 5
      %v6882 = vsel %vm506, %v6877, %v6881
      %v6883 = vshrl.u32 %v6549, 16
      %v6885 = vrot.slane %v6883, 4
      %v6886 = vor.u32 %v6885, %v6881
      %v6887 = vrot.slane %v6886, 4
      %v6889 = vshll.u32 %v6550, 16
      %v6891 = vrot.slane %v6889, 5
      %v6892 = vsel %vm506, %v6887, %v6891
      %v6894 = vshrl.u32 %v6551, 16
      %v6896 = vrot.slane %v6894, 4
      %v6897 = vshll.u32 %v6551, 16
      %v6899 = vrot.slane %v6897, 5
      %v6900 = vor.u32 %v6896, %v6899
      %v6901 = vrot.slane %v6900, 4
      %v6903 = vshll.u32 %v6552, 16
      %v6905 = vrot.slane %v6903, 5
      %v6906 = vsel %vm506, %v6901, %v6905
      %v6907 = vshrl.u32 %v6552, 16
      %v6909 = vrot.slane %v6907, 4
      %v6910 = vor.u32 %v6909, %v6905
      %v6911 = vrot.slane %v6910, 4
      %v6913 = vshll.u32 %v6553, 16
      %v6915 = vrot.slane %v6913, 5
      %v6916 = vsel %vm506, %v6911, %v6915
      %v6918 = vshrl.u32 %v6554, 16
      %v6920 = vrot.slane %v6918, 4
      %v6921 = vshll.u32 %v6554, 16
      %v6923 = vrot.slane %v6921, 5
      %v6924 = vor.u32 %v6920, %v6923
      %v6925 = vrot.slane %v6924, 4
      %v6927 = vshll.u32 %v6555, 16
      %v6929 = vrot.slane %v6927, 5
      %v6930 = vsel %vm506, %v6925, %v6929
      %v6931 = vshrl.u32 %v6555, 16
      %v6933 = vrot.slane %v6931, 4
      %v6934 = vor.u32 %v6933, %v6929
      %v6935 = vrot.slane %v6934, 4
      %v6937 = vshll.u32 %v6556, 16
      %v6939 = vrot.slane %v6937, 5
      %v6940 = vsel %vm506, %v6935, %v6939
      %s6941 = scalar_lea.vmem %s7, 64
      %v6942 = vld [vmem:[%s6941] sm:$0xf]
      %v6943 = vld [vmem:[%s6941 + $0x4] sm:$0xf]
      %v6944 = vld [vmem:[%s6941 + $0x8] sm:$0xf]
      %v6945 = vld [vmem:[%s6941 + $0xc] sm:$0xf]
      %v6946 = vunpack.c.l.b16 %v6570
      %v6947 = vunpack.c.l.b16 %v6580
      %v6948 = vunpack.c.l.b16 %v6594
      %v6949 = vunpack.c.l.b16 %v6604
      %v6950 = vunpack.c.l.b16 %v6618
      %v6951 = vunpack.c.l.b16 %v6628
      %v6952 = vunpack.c.l.b16 %v6642
      %v6953 = vunpack.c.l.b16 %v6652
      %v6954 = vunpack.c.l.b16 %v6666
      %v6955 = vunpack.c.l.b16 %v6676
      %v6956 = vunpack.c.l.b16 %v6690
      %v6957 = vunpack.c.l.b16 %v6700
      %v6958 = vunpack.c.l.b16 %v6714
      %v6959 = vunpack.c.l.b16 %v6724
      %v6960 = vunpack.c.l.b16 %v6738
      %v6961 = vunpack.c.l.b16 %v6748
      %v6962 = vunpack.c.l.b16 %v6762
      %v6963 = vunpack.c.l.b16 %v6772
      %v6964 = vunpack.c.l.b16 %v6786
      %v6965 = vunpack.c.l.b16 %v6796
      %v6966 = vunpack.c.l.b16 %v6810
      %v6967 = vunpack.c.l.b16 %v6820
      %v6968 = vunpack.c.l.b16 %v6834
      %v6969 = vunpack.c.l.b16 %v6844
      %v6970 = vunpack.c.l.b16 %v6858
      %v6971 = vunpack.c.l.b16 %v6868
      %v6972 = vunpack.c.l.b16 %v6882
      %v6973 = vunpack.c.l.b16 %v6892
      %v6974 = vunpack.c.l.b16 %v6906
      %v6975 = vunpack.c.l.b16 %v6916
      %v6976 = vunpack.c.l.b16 %v6930
      %v6977 = vunpack.c.l.b16 %v6940
      %v6978 = vpack.c.b16 %v6947, %v6946
      %v6979 = vpack.c.b16 %v6949, %v6948
      %v6980 = vpack.c.b16 %v6951, %v6950
      %v6981 = vpack.c.b16 %v6953, %v6952
      %v6982 = vpack.c.b16 %v6955, %v6954
      %v6983 = vpack.c.b16 %v6957, %v6956
      %v6984 = vpack.c.b16 %v6959, %v6958
      %v6985 = vpack.c.b16 %v6961, %v6960
      %v6986 = vpack.c.b16 %v6963, %v6962
      %v6987 = vpack.c.b16 %v6965, %v6964
      %v6988 = vpack.c.b16 %v6967, %v6966
      %v6989 = vpack.c.b16 %v6969, %v6968
      %v6990 = vpack.c.b16 %v6971, %v6970
      %v6991 = vpack.c.b16 %v6973, %v6972
      %v6992 = vpack.c.b16 %v6975, %v6974
      %v6993 = vpack.c.b16 %v6977, %v6976
      %v6998 = vunpack.c.l.b16 %v6942
      %v6999 = vunpack.c.l.b16 %v6943
      %v7000 = vunpack.c.l.b16 %v6944
      %v7001 = vunpack.c.l.b16 %v6945
      %v7002 = vpack.c.b16 %v6999, %v6998
      %v7003 = vpack.c.b16 %v7001, %v7000
      %v7007 = vsel %vm3447, %v6978, 0
      %v7010 = vsel %vm3447, %v6979, 0
      %v7013 = vsel %vm3447, %v6980, 0
      %v7016 = vsel %vm3447, %v6981, 0
      %v7019 = vsel %vm3447, %v6982, 0
      %v7022 = vsel %vm3447, %v6983, 0
      %v7025 = vsel %vm3447, %v6984, 0
      %v7028 = vsel %vm3447, %v6985, 0
      %v7031 = vsel %vm3447, %v6986, 0
      %v7034 = vsel %vm3447, %v6987, 0
      %v7037 = vsel %vm3447, %v6988, 0
      %v7040 = vsel %vm3447, %v6989, 0
      %v7043 = vsel %vm3447, %v6990, 0
      %v7046 = vsel %vm3447, %v6991, 0
      %v7049 = vsel %vm3447, %v6992, 0
      %v7052 = vsel %vm3447, %v6993, 0
      %7054 = vmatprep.subr.bf16.mxu0 0
      %7055 = vmatpush1.bf16.msra.mxu0 0
      %7056 = vmatprep.subr.bf16.mxu0 0
      %7057 = vmatpush1.bf16.msra.mxu0 0
      %7058 = vmatprep.subr.bf16.mxu0 0
      %7059 = vmatpush1.bf16.msra.mxu0 0
      %7060 = vmatprep.subr.bf16.mxu0 0
      %7061 = vmatpush1.bf16.msra.mxu0 0
      %7062 = vmatprep.subr.bf16.mxu0 0
      %7063 = vmatpush1.bf16.msra.mxu0 0
      %7064 = vmatprep.subr.bf16.mxu0 0
      %7065 = vmatpush1.bf16.msra.mxu0 0
      %7066 = vmatprep.subr.bf16.mxu0 0
      %7067 = vmatpush1.bf16.msra.mxu0 %v7003
      %7068 = vmatprep.subr.bf16.mxu0 0
      %7069 = vmatpush1.bf16.msra.mxu0 %v7002
      %7070 = vmatprep.subr.bf16.mxu0 0
      %7071 = vmatpush2.bf16.msra.mxu0 0
      %7072 = vmatprep.subr.bf16.mxu0 0
      %7073 = vmatpush2.bf16.msra.mxu0 0
      %7074 = vmatprep.subr.bf16.mxu0 0
      %7075 = vmatpush2.bf16.msra.mxu0 0
      %7076 = vmatprep.subr.bf16.mxu0 0
      %7077 = vmatpush2.bf16.msra.mxu0 0
      %7078 = vmatprep.subr.bf16.mxu0 0
      %7079 = vmatpush2.bf16.msra.mxu0 0
      %7080 = vmatprep.subr.bf16.mxu0 0
      %7081 = vmatpush2.bf16.msra.mxu0 0
      %7082 = vmatprep.subr.bf16.mxu0 0
      %7083 = vmatpush2.bf16.msra.mxu0 0
      %7084 = vmatprep.subr.bf16.mxu0 0
      %7085 = vmatpush2.bf16.msra.mxu0 0
      %7086 = vmatprep.mubr.bf16.mxu0 0
      %7087 = vmatmul.mubr.bf16.gmra.mxu0 %v7007
      %v7088 = vpop.f32.mrf.mxu0
      %v7089 = vadd.f32 0.0, %v7088
      %v7090 = vpop.f32.mrf.mxu0
      %v7091 = vpop.f32.mrf.mxu0
      %v7092 = vadd.f32 0.0, %v7091
      %v7093 = vpop.f32.mrf.mxu0
      %7094 = vmatprep.mubr.bf16.mxu0 0
      %7095 = vmatmul.mubr.bf16.gmra.mxu0 %v7010
      %v7096 = vpop.f32.mrf.mxu0
      %v7097 = vadd.f32 0.0, %v7096
      %v7098 = vpop.f32.mrf.mxu0
      %v7099 = vpop.f32.mrf.mxu0
      %v7100 = vadd.f32 0.0, %v7099
      %v7101 = vpop.f32.mrf.mxu0
      %7102 = vmatprep.mubr.bf16.mxu0 0
      %7103 = vmatmul.mubr.bf16.gmra.mxu0 %v7013
      %v7104 = vpop.f32.mrf.mxu0
      %v7105 = vadd.f32 0.0, %v7104
      %v7106 = vpop.f32.mrf.mxu0
      %v7107 = vpop.f32.mrf.mxu0
      %v7108 = vadd.f32 0.0, %v7107
      %v7109 = vpop.f32.mrf.mxu0
      %7110 = vmatprep.mubr.bf16.mxu0 0
      %7111 = vmatmul.mubr.bf16.gmra.mxu0 %v7016
      %v7112 = vpop.f32.mrf.mxu0
      %v7113 = vadd.f32 0.0, %v7112
      %v7114 = vpop.f32.mrf.mxu0
      %v7115 = vpop.f32.mrf.mxu0
      %v7116 = vadd.f32 0.0, %v7115
      %v7117 = vpop.f32.mrf.mxu0
      %7118 = vmatprep.mubr.bf16.mxu0 0
      %7119 = vmatmul.mubr.bf16.gmra.mxu0 %v7019
      %v7120 = vpop.f32.mrf.mxu0
      %v7121 = vadd.f32 0.0, %v7120
      %v7122 = vpop.f32.mrf.mxu0
      %v7123 = vpop.f32.mrf.mxu0
      %v7124 = vadd.f32 0.0, %v7123
      %v7125 = vpop.f32.mrf.mxu0
      %7126 = vmatprep.mubr.bf16.mxu0 0
      %7127 = vmatmul.mubr.bf16.gmra.mxu0 %v7022
      %v7128 = vpop.f32.mrf.mxu0
      %v7129 = vadd.f32 0.0, %v7128
      %v7130 = vpop.f32.mrf.mxu0
      %v7131 = vpop.f32.mrf.mxu0
      %v7132 = vadd.f32 0.0, %v7131
      %v7133 = vpop.f32.mrf.mxu0
      %7134 = vmatprep.mubr.bf16.mxu0 0
      %7135 = vmatmul.mubr.bf16.gmra.mxu0 %v7025
      %v7136 = vpop.f32.mrf.mxu0
      %v7137 = vadd.f32 0.0, %v7136
      %v7138 = vpop.f32.mrf.mxu0
      %v7139 = vpop.f32.mrf.mxu0
      %v7140 = vadd.f32 0.0, %v7139
      %v7141 = vpop.f32.mrf.mxu0
      %7142 = vmatprep.mubr.bf16.mxu0 0
      %7143 = vmatmul.mubr.bf16.gmra.mxu0 %v7028
      %v7144 = vpop.f32.mrf.mxu0
      %v7145 = vadd.f32 0.0, %v7144
      %v7146 = vpop.f32.mrf.mxu0
      %v7147 = vpop.f32.mrf.mxu0
      %v7148 = vadd.f32 0.0, %v7147
      %v7149 = vpop.f32.mrf.mxu0
      %7150 = vmatprep.mubr.bf16.mxu0 0
      %7151 = vmatmul.mubr.bf16.gmra.mxu0 %v7031
      %v7152 = vpop.f32.mrf.mxu0
      %v7153 = vadd.f32 0.0, %v7152
      %v7154 = vpop.f32.mrf.mxu0
      %v7155 = vpop.f32.mrf.mxu0
      %v7156 = vadd.f32 0.0, %v7155
      %v7157 = vpop.f32.mrf.mxu0
      %7158 = vmatprep.mubr.bf16.mxu0 0
      %7159 = vmatmul.mubr.bf16.gmra.mxu0 %v7034
      %v7160 = vpop.f32.mrf.mxu0
      %v7161 = vadd.f32 0.0, %v7160
      %v7162 = vpop.f32.mrf.mxu0
      %v7163 = vpop.f32.mrf.mxu0
      %v7164 = vadd.f32 0.0, %v7163
      %v7165 = vpop.f32.mrf.mxu0
      %7166 = vmatprep.mubr.bf16.mxu0 0
      %7167 = vmatmul.mubr.bf16.gmra.mxu0 %v7037
      %v7168 = vpop.f32.mrf.mxu0
      %v7169 = vadd.f32 0.0, %v7168
      %v7170 = vpop.f32.mrf.mxu0
      %v7171 = vpop.f32.mrf.mxu0
      %v7172 = vadd.f32 0.0, %v7171
      %v7173 = vpop.f32.mrf.mxu0
      %7174 = vmatprep.mubr.bf16.mxu0 0
      %7175 = vmatmul.mubr.bf16.gmra.mxu0 %v7040
      %v7176 = vpop.f32.mrf.mxu0
      %v7177 = vadd.f32 0.0, %v7176
      %v7178 = vpop.f32.mrf.mxu0
      %v7179 = vpop.f32.mrf.mxu0
      %v7180 = vadd.f32 0.0, %v7179
      %v7181 = vpop.f32.mrf.mxu0
      %7182 = vmatprep.mubr.bf16.mxu0 0
      %7183 = vmatmul.mubr.bf16.gmra.mxu0 %v7043
      %v7184 = vpop.f32.mrf.mxu0
      %v7185 = vadd.f32 0.0, %v7184
      %v7186 = vpop.f32.mrf.mxu0
      %v7187 = vpop.f32.mrf.mxu0
      %v7188 = vadd.f32 0.0, %v7187
      %v7189 = vpop.f32.mrf.mxu0
      %7190 = vmatprep.mubr.bf16.mxu0 0
      %7191 = vmatmul.mubr.bf16.gmra.mxu0 %v7046
      %v7192 = vpop.f32.mrf.mxu0
      %v7193 = vadd.f32 0.0, %v7192
      %v7194 = vpop.f32.mrf.mxu0
      %v7195 = vpop.f32.mrf.mxu0
      %v7196 = vadd.f32 0.0, %v7195
      %v7197 = vpop.f32.mrf.mxu0
      %7198 = vmatprep.mubr.bf16.mxu0 0
      %7199 = vmatmul.mubr.bf16.gmra.mxu0 %v7049
      %v7200 = vpop.f32.mrf.mxu0
      %v7201 = vadd.f32 0.0, %v7200
      %v7202 = vpop.f32.mrf.mxu0
      %v7203 = vpop.f32.mrf.mxu0
      %v7204 = vadd.f32 0.0, %v7203
      %v7205 = vpop.f32.mrf.mxu0
      %7206 = vmatprep.mubr.bf16.mxu0 0
      %7207 = vmatmul.mubr.bf16.gmra.mxu0 %v7052
      %v7208 = vpop.f32.mrf.mxu0
      %v7209 = vadd.f32 0.0, %v7208
      %v7210 = vpop.f32.mrf.mxu0
      %v7211 = vpop.f32.mrf.mxu0
      %v7212 = vadd.f32 0.0, %v7211
      %v7213 = vpop.f32.mrf.mxu0
      %7214 = vdwg.mxu0
      %v7215 = vadd.f32 %v6477, %v7089
      %v7216 = vadd.f32 %v6478, %v7092
      %v7217 = vadd.f32 %v6479, %v7097
      %v7218 = vadd.f32 %v6480, %v7100
      %v7219 = vadd.f32 %v6481, %v7105
      %v7220 = vadd.f32 %v6482, %v7108
      %v7221 = vadd.f32 %v6483, %v7113
      %v7222 = vadd.f32 %v6484, %v7116
      %v7223 = vadd.f32 %v6485, %v7121
      %v7224 = vadd.f32 %v6486, %v7124
      %v7225 = vadd.f32 %v6487, %v7129
      %v7226 = vadd.f32 %v6488, %v7132
      %v7227 = vadd.f32 %v6489, %v7137
      %v7228 = vadd.f32 %v6490, %v7140
      %v7229 = vadd.f32 %v6491, %v7145
      %v7230 = vadd.f32 %v6492, %v7148
      %v7231 = vadd.f32 %v6493, %v7153
      %v7232 = vadd.f32 %v6494, %v7156
      %v7233 = vadd.f32 %v6495, %v7161
      %v7234 = vadd.f32 %v6496, %v7164
      %v7235 = vadd.f32 %v6497, %v7169
      %v7236 = vadd.f32 %v6498, %v7172
      %v7237 = vadd.f32 %v6499, %v7177
      %v7238 = vadd.f32 %v6500, %v7180
      %v7239 = vadd.f32 %v6501, %v7185
      %v7240 = vadd.f32 %v6502, %v7188
      %v7241 = vadd.f32 %v6503, %v7193
      %v7242 = vadd.f32 %v6504, %v7196
      %v7243 = vadd.f32 %v6505, %v7201
      %v7244 = vadd.f32 %v6506, %v7204
      %v7245 = vadd.f32 %v6507, %v7209
      %v7246 = vadd.f32 %v6508, %v7212
      %v7247 = vld [vmem:[%s4544] sm:$0xe]
      %v7248 = vld [vmem:[%s4544 + $0xc] sm:$0xe]
      %v7249 = vld [vmem:[%s4544 + $0x18] sm:$0xe]
      %v7250 = vld [vmem:[%s4544 + $0x24] sm:$0xe]
      %v7251 = vld [vmem:[%s4544 + $0x30] sm:$0xe]
      %v7252 = vld [vmem:[%s4544 + $0x3c] sm:$0xe]
      %v7253 = vld [vmem:[%s4544 + $0x48] sm:$0xe]
      %v7254 = vld [vmem:[%s4544 + $0x54] sm:$0xe]
      %v7255 = vld [vmem:[%s4544 + $0x60] sm:$0xe]
      %v7256 = vld [vmem:[%s4544 + $0x6c] sm:$0xe]
      %v7257 = vld [vmem:[%s4544 + $0x78] sm:$0xe]
      %v7258 = vld [vmem:[%s4544 + $0x84] sm:$0xe]
      %v7259 = vld [vmem:[%s4544 + $0x90] sm:$0xe]
      %v7260 = vld [vmem:[%s4544 + $0x9c] sm:$0xe]
      %v7261 = vld [vmem:[%s4544 + $0xa8] sm:$0xe]
      %v7262 = vld [vmem:[%s4544 + $0xb4] sm:$0xe]
      %v7311 = vrot.slane %v7247, 5
      %v7312 = vrot.slane %v7311, 4
      %v7313 = vrot.slane %v6510, 5
      %v7314 = vsel %vm1513, %v7312, %v7313
      %v7315 = vrot.slane %v7313, 4
      %v7316 = vrot.slane %v6511, 5
      %v7317 = vsel %vm1513, %v7315, %v7316
      %v7318 = vrot.slane %v7248, 5
      %v7319 = vrot.slane %v7318, 4
      %v7320 = vrot.slane %v6513, 5
      %v7321 = vsel %vm1513, %v7319, %v7320
      %v7322 = vrot.slane %v7320, 4
      %v7323 = vrot.slane %v6514, 5
      %v7324 = vsel %vm1513, %v7322, %v7323
      %v7325 = vrot.slane %v7249, 5
      %v7326 = vrot.slane %v7325, 4
      %v7327 = vrot.slane %v6516, 5
      %v7328 = vsel %vm1513, %v7326, %v7327
      %v7329 = vrot.slane %v7327, 4
      %v7330 = vrot.slane %v6517, 5
      %v7331 = vsel %vm1513, %v7329, %v7330
      %v7332 = vrot.slane %v7250, 5
      %v7333 = vrot.slane %v7332, 4
      %v7334 = vrot.slane %v6519, 5
      %v7335 = vsel %vm1513, %v7333, %v7334
      %v7336 = vrot.slane %v7334, 4
      %v7337 = vrot.slane %v6520, 5
      %v7338 = vsel %vm1513, %v7336, %v7337
      %v7339 = vrot.slane %v7251, 5
      %v7340 = vrot.slane %v7339, 4
      %v7341 = vrot.slane %v6522, 5
      %v7342 = vsel %vm1513, %v7340, %v7341
      %v7343 = vrot.slane %v7341, 4
      %v7344 = vrot.slane %v6523, 5
      %v7345 = vsel %vm1513, %v7343, %v7344
      %v7346 = vrot.slane %v7252, 5
      %v7347 = vrot.slane %v7346, 4
      %v7348 = vrot.slane %v6525, 5
      %v7349 = vsel %vm1513, %v7347, %v7348
      %v7350 = vrot.slane %v7348, 4
      %v7351 = vrot.slane %v6526, 5
      %v7352 = vsel %vm1513, %v7350, %v7351
      %v7353 = vrot.slane %v7253, 5
      %v7354 = vrot.slane %v7353, 4
      %v7355 = vrot.slane %v6528, 5
      %v7356 = vsel %vm1513, %v7354, %v7355
      %v7357 = vrot.slane %v7355, 4
      %v7358 = vrot.slane %v6529, 5
      %v7359 = vsel %vm1513, %v7357, %v7358
      %v7360 = vrot.slane %v7254, 5
      %v7361 = vrot.slane %v7360, 4
      %v7362 = vrot.slane %v6531, 5
      %v7363 = vsel %vm1513, %v7361, %v7362
      %v7364 = vrot.slane %v7362, 4
      %v7365 = vrot.slane %v6532, 5
      %v7366 = vsel %vm1513, %v7364, %v7365
      %v7367 = vrot.slane %v7255, 5
      %v7368 = vrot.slane %v7367, 4
      %v7369 = vrot.slane %v6534, 5
      %v7370 = vsel %vm1513, %v7368, %v7369
      %v7371 = vrot.slane %v7369, 4
      %v7372 = vrot.slane %v6535, 5
      %v7373 = vsel %vm1513, %v7371, %v7372
      %v7374 = vrot.slane %v7256, 5
      %v7375 = vrot.slane %v7374, 4
      %v7376 = vrot.slane %v6537, 5
      %v7377 = vsel %vm1513, %v7375, %v7376
      %v7378 = vrot.slane %v7376, 4
      %v7379 = vrot.slane %v6538, 5
      %v7380 = vsel %vm1513, %v7378, %v7379
      %v7381 = vrot.slane %v7257, 5
      %v7382 = vrot.slane %v7381, 4
      %v7383 = vrot.slane %v6540, 5
      %v7384 = vsel %vm1513, %v7382, %v7383
      %v7385 = vrot.slane %v7383, 4
      %v7386 = vrot.slane %v6541, 5
      %v7387 = vsel %vm1513, %v7385, %v7386
      %v7388 = vrot.slane %v7258, 5
      %v7389 = vrot.slane %v7388, 4
      %v7390 = vrot.slane %v6543, 5
      %v7391 = vsel %vm1513, %v7389, %v7390
      %v7392 = vrot.slane %v7390, 4
      %v7393 = vrot.slane %v6544, 5
      %v7394 = vsel %vm1513, %v7392, %v7393
      %v7395 = vrot.slane %v7259, 5
      %v7396 = vrot.slane %v7395, 4
      %v7397 = vrot.slane %v6546, 5
      %v7398 = vsel %vm1513, %v7396, %v7397
      %v7399 = vrot.slane %v7397, 4
      %v7400 = vrot.slane %v6547, 5
      %v7401 = vsel %vm1513, %v7399, %v7400
      %v7402 = vrot.slane %v7260, 5
      %v7403 = vrot.slane %v7402, 4
      %v7404 = vrot.slane %v6549, 5
      %v7405 = vsel %vm1513, %v7403, %v7404
      %v7406 = vrot.slane %v7404, 4
      %v7407 = vrot.slane %v6550, 5
      %v7408 = vsel %vm1513, %v7406, %v7407
      %v7409 = vrot.slane %v7261, 5
      %v7410 = vrot.slane %v7409, 4
      %v7411 = vrot.slane %v6552, 5
      %v7412 = vsel %vm1513, %v7410, %v7411
      %v7413 = vrot.slane %v7411, 4
      %v7414 = vrot.slane %v6553, 5
      %v7415 = vsel %vm1513, %v7413, %v7414
      %v7416 = vrot.slane %v7262, 5
      %v7417 = vrot.slane %v7416, 4
      %v7418 = vrot.slane %v6555, 5
      %v7419 = vsel %vm1513, %v7417, %v7418
      %v7420 = vrot.slane %v7418, 4
      %v7421 = vrot.slane %v6556, 5
      %v7422 = vsel %vm1513, %v7420, %v7421
      %s7423 = scalar_lea.vmem %s7, 80
      %v7424 = vld [vmem:[%s7423] sm:$0xf]
      %v7425 = vld [vmem:[%s7423 + $0x4] sm:$0xf]
      %v7426 = vld [vmem:[%s7423 + $0x8] sm:$0xf]
      %v7427 = vld [vmem:[%s7423 + $0xc] sm:$0xf]
      %v7428 = vunpack.c.l.b16 %v7314
      %v7429 = vunpack.c.l.b16 %v7317
      %v7430 = vunpack.c.l.b16 %v7321
      %v7431 = vunpack.c.l.b16 %v7324
      %v7432 = vunpack.c.l.b16 %v7328
      %v7433 = vunpack.c.l.b16 %v7331
      %v7434 = vunpack.c.l.b16 %v7335
      %v7435 = vunpack.c.l.b16 %v7338
      %v7436 = vunpack.c.l.b16 %v7342
      %v7437 = vunpack.c.l.b16 %v7345
      %v7438 = vunpack.c.l.b16 %v7349
      %v7439 = vunpack.c.l.b16 %v7352
      %v7440 = vunpack.c.l.b16 %v7356
      %v7441 = vunpack.c.l.b16 %v7359
      %v7442 = vunpack.c.l.b16 %v7363
      %v7443 = vunpack.c.l.b16 %v7366
      %v7444 = vunpack.c.l.b16 %v7370
      %v7445 = vunpack.c.l.b16 %v7373
      %v7446 = vunpack.c.l.b16 %v7377
      %v7447 = vunpack.c.l.b16 %v7380
      %v7448 = vunpack.c.l.b16 %v7384
      %v7449 = vunpack.c.l.b16 %v7387
      %v7450 = vunpack.c.l.b16 %v7391
      %v7451 = vunpack.c.l.b16 %v7394
      %v7452 = vunpack.c.l.b16 %v7398
      %v7453 = vunpack.c.l.b16 %v7401
      %v7454 = vunpack.c.l.b16 %v7405
      %v7455 = vunpack.c.l.b16 %v7408
      %v7456 = vunpack.c.l.b16 %v7412
      %v7457 = vunpack.c.l.b16 %v7415
      %v7458 = vunpack.c.l.b16 %v7419
      %v7459 = vunpack.c.l.b16 %v7422
      %v7460 = vpack.c.b16 %v7429, %v7428
      %v7461 = vpack.c.b16 %v7431, %v7430
      %v7462 = vpack.c.b16 %v7433, %v7432
      %v7463 = vpack.c.b16 %v7435, %v7434
      %v7464 = vpack.c.b16 %v7437, %v7436
      %v7465 = vpack.c.b16 %v7439, %v7438
      %v7466 = vpack.c.b16 %v7441, %v7440
      %v7467 = vpack.c.b16 %v7443, %v7442
      %v7468 = vpack.c.b16 %v7445, %v7444
      %v7469 = vpack.c.b16 %v7447, %v7446
      %v7470 = vpack.c.b16 %v7449, %v7448
      %v7471 = vpack.c.b16 %v7451, %v7450
      %v7472 = vpack.c.b16 %v7453, %v7452
      %v7473 = vpack.c.b16 %v7455, %v7454
      %v7474 = vpack.c.b16 %v7457, %v7456
      %v7475 = vpack.c.b16 %v7459, %v7458
      %v7480 = vunpack.c.l.b16 %v7424
      %v7481 = vunpack.c.l.b16 %v7425
      %v7482 = vunpack.c.l.b16 %v7426
      %v7483 = vunpack.c.l.b16 %v7427
      %v7484 = vpack.c.b16 %v7481, %v7480
      %v7485 = vpack.c.b16 %v7483, %v7482
      %v7489 = vsel %vm3447, %v7460, 0
      %v7492 = vsel %vm3447, %v7461, 0
      %v7495 = vsel %vm3447, %v7462, 0
      %v7498 = vsel %vm3447, %v7463, 0
      %v7501 = vsel %vm3447, %v7464, 0
      %v7504 = vsel %vm3447, %v7465, 0
      %v7507 = vsel %vm3447, %v7466, 0
      %v7510 = vsel %vm3447, %v7467, 0
      %v7513 = vsel %vm3447, %v7468, 0
      %v7516 = vsel %vm3447, %v7469, 0
      %v7519 = vsel %vm3447, %v7470, 0
      %v7522 = vsel %vm3447, %v7471, 0
      %v7525 = vsel %vm3447, %v7472, 0
      %v7528 = vsel %vm3447, %v7473, 0
      %v7531 = vsel %vm3447, %v7474, 0
      %v7534 = vsel %vm3447, %v7475, 0
      %7536 = vmatprep.subr.bf16.mxu0 0
      %7537 = vmatpush1.bf16.msra.mxu0 0
      %7538 = vmatprep.subr.bf16.mxu0 0
      %7539 = vmatpush1.bf16.msra.mxu0 0
      %7540 = vmatprep.subr.bf16.mxu0 0
      %7541 = vmatpush1.bf16.msra.mxu0 0
      %7542 = vmatprep.subr.bf16.mxu0 0
      %7543 = vmatpush1.bf16.msra.mxu0 0
      %7544 = vmatprep.subr.bf16.mxu0 0
      %7545 = vmatpush1.bf16.msra.mxu0 0
      %7546 = vmatprep.subr.bf16.mxu0 0
      %7547 = vmatpush1.bf16.msra.mxu0 0
      %7548 = vmatprep.subr.bf16.mxu0 0
      %7549 = vmatpush1.bf16.msra.mxu0 %v7485
      %7550 = vmatprep.subr.bf16.mxu0 0
      %7551 = vmatpush1.bf16.msra.mxu0 %v7484
      %7552 = vmatprep.subr.bf16.mxu0 0
      %7553 = vmatpush2.bf16.msra.mxu0 0
      %7554 = vmatprep.subr.bf16.mxu0 0
      %7555 = vmatpush2.bf16.msra.mxu0 0
      %7556 = vmatprep.subr.bf16.mxu0 0
      %7557 = vmatpush2.bf16.msra.mxu0 0
      %7558 = vmatprep.subr.bf16.mxu0 0
      %7559 = vmatpush2.bf16.msra.mxu0 0
      %7560 = vmatprep.subr.bf16.mxu0 0
      %7561 = vmatpush2.bf16.msra.mxu0 0
      %7562 = vmatprep.subr.bf16.mxu0 0
      %7563 = vmatpush2.bf16.msra.mxu0 0
      %7564 = vmatprep.subr.bf16.mxu0 0
      %7565 = vmatpush2.bf16.msra.mxu0 0
      %7566 = vmatprep.subr.bf16.mxu0 0
      %7567 = vmatpush2.bf16.msra.mxu0 0
      %7568 = vmatprep.mubr.bf16.mxu0 0
      %7569 = vmatmul.mubr.bf16.gmra.mxu0 %v7489
      %v7570 = vpop.f32.mrf.mxu0
      %v7571 = vadd.f32 0.0, %v7570
      %v7572 = vpop.f32.mrf.mxu0
      %v7573 = vpop.f32.mrf.mxu0
      %v7574 = vadd.f32 0.0, %v7573
      %v7575 = vpop.f32.mrf.mxu0
      %7576 = vmatprep.mubr.bf16.mxu0 0
      %7577 = vmatmul.mubr.bf16.gmra.mxu0 %v7492
      %v7578 = vpop.f32.mrf.mxu0
      %v7579 = vadd.f32 0.0, %v7578
      %v7580 = vpop.f32.mrf.mxu0
      %v7581 = vpop.f32.mrf.mxu0
      %v7582 = vadd.f32 0.0, %v7581
      %v7583 = vpop.f32.mrf.mxu0
      %7584 = vmatprep.mubr.bf16.mxu0 0
      %7585 = vmatmul.mubr.bf16.gmra.mxu0 %v7495
      %v7586 = vpop.f32.mrf.mxu0
      %v7587 = vadd.f32 0.0, %v7586
      %v7588 = vpop.f32.mrf.mxu0
      %v7589 = vpop.f32.mrf.mxu0
      %v7590 = vadd.f32 0.0, %v7589
      %v7591 = vpop.f32.mrf.mxu0
      %7592 = vmatprep.mubr.bf16.mxu0 0
      %7593 = vmatmul.mubr.bf16.gmra.mxu0 %v7498
      %v7594 = vpop.f32.mrf.mxu0
      %v7595 = vadd.f32 0.0, %v7594
      %v7596 = vpop.f32.mrf.mxu0
      %v7597 = vpop.f32.mrf.mxu0
      %v7598 = vadd.f32 0.0, %v7597
      %v7599 = vpop.f32.mrf.mxu0
      %7600 = vmatprep.mubr.bf16.mxu0 0
      %7601 = vmatmul.mubr.bf16.gmra.mxu0 %v7501
      %v7602 = vpop.f32.mrf.mxu0
      %v7603 = vadd.f32 0.0, %v7602
      %v7604 = vpop.f32.mrf.mxu0
      %v7605 = vpop.f32.mrf.mxu0
      %v7606 = vadd.f32 0.0, %v7605
      %v7607 = vpop.f32.mrf.mxu0
      %7608 = vmatprep.mubr.bf16.mxu0 0
      %7609 = vmatmul.mubr.bf16.gmra.mxu0 %v7504
      %v7610 = vpop.f32.mrf.mxu0
      %v7611 = vadd.f32 0.0, %v7610
      %v7612 = vpop.f32.mrf.mxu0
      %v7613 = vpop.f32.mrf.mxu0
      %v7614 = vadd.f32 0.0, %v7613
      %v7615 = vpop.f32.mrf.mxu0
      %7616 = vmatprep.mubr.bf16.mxu0 0
      %7617 = vmatmul.mubr.bf16.gmra.mxu0 %v7507
      %v7618 = vpop.f32.mrf.mxu0
      %v7619 = vadd.f32 0.0, %v7618
      %v7620 = vpop.f32.mrf.mxu0
      %v7621 = vpop.f32.mrf.mxu0
      %v7622 = vadd.f32 0.0, %v7621
      %v7623 = vpop.f32.mrf.mxu0
      %7624 = vmatprep.mubr.bf16.mxu0 0
      %7625 = vmatmul.mubr.bf16.gmra.mxu0 %v7510
      %v7626 = vpop.f32.mrf.mxu0
      %v7627 = vadd.f32 0.0, %v7626
      %v7628 = vpop.f32.mrf.mxu0
      %v7629 = vpop.f32.mrf.mxu0
      %v7630 = vadd.f32 0.0, %v7629
      %v7631 = vpop.f32.mrf.mxu0
      %7632 = vmatprep.mubr.bf16.mxu0 0
      %7633 = vmatmul.mubr.bf16.gmra.mxu0 %v7513
      %v7634 = vpop.f32.mrf.mxu0
      %v7635 = vadd.f32 0.0, %v7634
      %v7636 = vpop.f32.mrf.mxu0
      %v7637 = vpop.f32.mrf.mxu0
      %v7638 = vadd.f32 0.0, %v7637
      %v7639 = vpop.f32.mrf.mxu0
      %7640 = vmatprep.mubr.bf16.mxu0 0
      %7641 = vmatmul.mubr.bf16.gmra.mxu0 %v7516
      %v7642 = vpop.f32.mrf.mxu0
      %v7643 = vadd.f32 0.0, %v7642
      %v7644 = vpop.f32.mrf.mxu0
      %v7645 = vpop.f32.mrf.mxu0
      %v7646 = vadd.f32 0.0, %v7645
      %v7647 = vpop.f32.mrf.mxu0
      %7648 = vmatprep.mubr.bf16.mxu0 0
      %7649 = vmatmul.mubr.bf16.gmra.mxu0 %v7519
      %v7650 = vpop.f32.mrf.mxu0
      %v7651 = vadd.f32 0.0, %v7650
      %v7652 = vpop.f32.mrf.mxu0
      %v7653 = vpop.f32.mrf.mxu0
      %v7654 = vadd.f32 0.0, %v7653
      %v7655 = vpop.f32.mrf.mxu0
      %7656 = vmatprep.mubr.bf16.mxu0 0
      %7657 = vmatmul.mubr.bf16.gmra.mxu0 %v7522
      %v7658 = vpop.f32.mrf.mxu0
      %v7659 = vadd.f32 0.0, %v7658
      %v7660 = vpop.f32.mrf.mxu0
      %v7661 = vpop.f32.mrf.mxu0
      %v7662 = vadd.f32 0.0, %v7661
      %v7663 = vpop.f32.mrf.mxu0
      %7664 = vmatprep.mubr.bf16.mxu0 0
      %7665 = vmatmul.mubr.bf16.gmra.mxu0 %v7525
      %v7666 = vpop.f32.mrf.mxu0
      %v7667 = vadd.f32 0.0, %v7666
      %v7668 = vpop.f32.mrf.mxu0
      %v7669 = vpop.f32.mrf.mxu0
      %v7670 = vadd.f32 0.0, %v7669
      %v7671 = vpop.f32.mrf.mxu0
      %7672 = vmatprep.mubr.bf16.mxu0 0
      %7673 = vmatmul.mubr.bf16.gmra.mxu0 %v7528
      %v7674 = vpop.f32.mrf.mxu0
      %v7675 = vadd.f32 0.0, %v7674
      %v7676 = vpop.f32.mrf.mxu0
      %v7677 = vpop.f32.mrf.mxu0
      %v7678 = vadd.f32 0.0, %v7677
      %v7679 = vpop.f32.mrf.mxu0
      %7680 = vmatprep.mubr.bf16.mxu0 0
      %7681 = vmatmul.mubr.bf16.gmra.mxu0 %v7531
      %v7682 = vpop.f32.mrf.mxu0
      %v7683 = vadd.f32 0.0, %v7682
      %v7684 = vpop.f32.mrf.mxu0
      %v7685 = vpop.f32.mrf.mxu0
      %v7686 = vadd.f32 0.0, %v7685
      %v7687 = vpop.f32.mrf.mxu0
      %7688 = vmatprep.mubr.bf16.mxu0 0
      %7689 = vmatmul.mubr.bf16.gmra.mxu0 %v7534
      %v7690 = vpop.f32.mrf.mxu0
      %v7691 = vadd.f32 0.0, %v7690
      %v7692 = vpop.f32.mrf.mxu0
      %v7693 = vpop.f32.mrf.mxu0
      %v7694 = vadd.f32 0.0, %v7693
      %v7695 = vpop.f32.mrf.mxu0
      %7696 = vdwg.mxu0
      %v7697 = vadd.f32 %v7215, %v7571
      %v7698 = vadd.f32 %v7216, %v7574
      %v7699 = vadd.f32 %v7217, %v7579
      %v7700 = vadd.f32 %v7218, %v7582
      %v7701 = vadd.f32 %v7219, %v7587
      %v7702 = vadd.f32 %v7220, %v7590
      %v7703 = vadd.f32 %v7221, %v7595
      %v7704 = vadd.f32 %v7222, %v7598
      %v7705 = vadd.f32 %v7223, %v7603
      %v7706 = vadd.f32 %v7224, %v7606
      %v7707 = vadd.f32 %v7225, %v7611
      %v7708 = vadd.f32 %v7226, %v7614
      %v7709 = vadd.f32 %v7227, %v7619
      %v7710 = vadd.f32 %v7228, %v7622
      %v7711 = vadd.f32 %v7229, %v7627
      %v7712 = vadd.f32 %v7230, %v7630
      %v7713 = vadd.f32 %v7231, %v7635
      %v7714 = vadd.f32 %v7232, %v7638
      %v7715 = vadd.f32 %v7233, %v7643
      %v7716 = vadd.f32 %v7234, %v7646
      %v7717 = vadd.f32 %v7235, %v7651
      %v7718 = vadd.f32 %v7236, %v7654
      %v7719 = vadd.f32 %v7237, %v7659
      %v7720 = vadd.f32 %v7238, %v7662
      %v7721 = vadd.f32 %v7239, %v7667
      %v7722 = vadd.f32 %v7240, %v7670
      %v7723 = vadd.f32 %v7241, %v7675
      %v7724 = vadd.f32 %v7242, %v7678
      %v7725 = vadd.f32 %v7243, %v7683
      %v7726 = vadd.f32 %v7244, %v7686
      %v7727 = vadd.f32 %v7245, %v7691
      %v7728 = vadd.f32 %v7246, %v7694
      %s7729 = scalar_lea.vmem [#allocation2], 24
      %v7730 = vld [vmem:[%s7729] sm:$0xf]
      %v7731 = vld [vmem:[%s7729 + $0x4] sm:$0xf]
      %v7732 = vld [vmem:[%s7729 + $0xc] sm:$0xf]
      %v7733 = vld [vmem:[%s7729 + $0x10] sm:$0xf]
      %v7734 = vld [vmem:[%s7729 + $0x18] sm:$0xf]
      %v7735 = vld [vmem:[%s7729 + $0x1c] sm:$0xf]
      %v7736 = vld [vmem:[%s7729 + $0x24] sm:$0xf]
      %v7737 = vld [vmem:[%s7729 + $0x28] sm:$0xf]
      %v7738 = vld [vmem:[%s7729 + $0x30] sm:$0xf]
      %v7739 = vld [vmem:[%s7729 + $0x34] sm:$0xf]
      %v7740 = vld [vmem:[%s7729 + $0x3c] sm:$0xf]
      %v7741 = vld [vmem:[%s7729 + $0x40] sm:$0xf]
      %v7742 = vld [vmem:[%s7729 + $0x48] sm:$0xf]
      %v7743 = vld [vmem:[%s7729 + $0x4c] sm:$0xf]
      %v7744 = vld [vmem:[%s7729 + $0x54] sm:$0xf]
      %v7745 = vld [vmem:[%s7729 + $0x58] sm:$0xf]
      %v7746 = vld [vmem:[%s7729 + $0x60] sm:$0xf]
      %v7747 = vld [vmem:[%s7729 + $0x64] sm:$0xf]
      %v7748 = vld [vmem:[%s7729 + $0x6c] sm:$0xf]
      %v7749 = vld [vmem:[%s7729 + $0x70] sm:$0xf]
      %v7750 = vld [vmem:[%s7729 + $0x78] sm:$0xf]
      %v7751 = vld [vmem:[%s7729 + $0x7c] sm:$0xf]
      %v7752 = vld [vmem:[%s7729 + $0x84] sm:$0xf]
      %v7753 = vld [vmem:[%s7729 + $0x88] sm:$0xf]
      %v7754 = vld [vmem:[%s7729 + $0x90] sm:$0xf]
      %v7755 = vld [vmem:[%s7729 + $0x94] sm:$0xf]
      %v7756 = vld [vmem:[%s7729 + $0x9c] sm:$0xf]
      %v7757 = vld [vmem:[%s7729 + $0xa0] sm:$0xf]
      %v7758 = vld [vmem:[%s7729 + $0xa8] sm:$0xf]
      %v7759 = vld [vmem:[%s7729 + $0xac] sm:$0xf]
      %v7760 = vld [vmem:[%s7729 + $0xb4] sm:$0xf]
      %v7761 = vld [vmem:[%s7729 + $0xb8] sm:$0xf]
      %s7762 = scalar_lea.vmem %s7, 96
      %v7763 = vld [vmem:[%s7762] sm:$0xf]
      %v7764 = vld [vmem:[%s7762 + $0x4] sm:$0xf]
      %v7765 = vld [vmem:[%s7762 + $0x8] sm:$0xf]
      %v7766 = vld [vmem:[%s7762 + $0xc] sm:$0xf]
      %v7799 = vunpack.c.l.b16 %v7730
      %v7800 = vunpack.c.l.b16 %v7731
      %v7801 = vunpack.c.l.b16 %v7732
      %v7802 = vunpack.c.l.b16 %v7733
      %v7803 = vunpack.c.l.b16 %v7734
      %v7804 = vunpack.c.l.b16 %v7735
      %v7805 = vunpack.c.l.b16 %v7736
      %v7806 = vunpack.c.l.b16 %v7737
      %v7807 = vunpack.c.l.b16 %v7738
      %v7808 = vunpack.c.l.b16 %v7739
      %v7809 = vunpack.c.l.b16 %v7740
      %v7810 = vunpack.c.l.b16 %v7741
      %v7811 = vunpack.c.l.b16 %v7742
      %v7812 = vunpack.c.l.b16 %v7743
      %v7813 = vunpack.c.l.b16 %v7744
      %v7814 = vunpack.c.l.b16 %v7745
      %v7815 = vunpack.c.l.b16 %v7746
      %v7816 = vunpack.c.l.b16 %v7747
      %v7817 = vunpack.c.l.b16 %v7748
      %v7818 = vunpack.c.l.b16 %v7749
      %v7819 = vunpack.c.l.b16 %v7750
      %v7820 = vunpack.c.l.b16 %v7751
      %v7821 = vunpack.c.l.b16 %v7752
      %v7822 = vunpack.c.l.b16 %v7753
      %v7823 = vunpack.c.l.b16 %v7754
      %v7824 = vunpack.c.l.b16 %v7755
      %v7825 = vunpack.c.l.b16 %v7756
      %v7826 = vunpack.c.l.b16 %v7757
      %v7827 = vunpack.c.l.b16 %v7758
      %v7828 = vunpack.c.l.b16 %v7759
      %v7829 = vunpack.c.l.b16 %v7760
      %v7830 = vunpack.c.l.b16 %v7761
      %v7831 = vpack.c.b16 %v7800, %v7799
      %v7832 = vpack.c.b16 %v7802, %v7801
      %v7833 = vpack.c.b16 %v7804, %v7803
      %v7834 = vpack.c.b16 %v7806, %v7805
      %v7835 = vpack.c.b16 %v7808, %v7807
      %v7836 = vpack.c.b16 %v7810, %v7809
      %v7837 = vpack.c.b16 %v7812, %v7811
      %v7838 = vpack.c.b16 %v7814, %v7813
      %v7839 = vpack.c.b16 %v7816, %v7815
      %v7840 = vpack.c.b16 %v7818, %v7817
      %v7841 = vpack.c.b16 %v7820, %v7819
      %v7842 = vpack.c.b16 %v7822, %v7821
      %v7843 = vpack.c.b16 %v7824, %v7823
      %v7844 = vpack.c.b16 %v7826, %v7825
      %v7845 = vpack.c.b16 %v7828, %v7827
      %v7846 = vpack.c.b16 %v7830, %v7829
      %v7851 = vunpack.c.l.b16 %v7763
      %v7852 = vunpack.c.l.b16 %v7764
      %v7853 = vunpack.c.l.b16 %v7765
      %v7854 = vunpack.c.l.b16 %v7766
      %v7855 = vpack.c.b16 %v7852, %v7851
      %v7856 = vpack.c.b16 %v7854, %v7853
      %v7860 = vsel %vm3447, %v7831, 0
      %v7863 = vsel %vm3447, %v7832, 0
      %v7866 = vsel %vm3447, %v7833, 0
      %v7869 = vsel %vm3447, %v7834, 0
      %v7872 = vsel %vm3447, %v7835, 0
      %v7875 = vsel %vm3447, %v7836, 0
      %v7878 = vsel %vm3447, %v7837, 0
      %v7881 = vsel %vm3447, %v7838, 0
      %v7884 = vsel %vm3447, %v7839, 0
      %v7887 = vsel %vm3447, %v7840, 0
      %v7890 = vsel %vm3447, %v7841, 0
      %v7893 = vsel %vm3447, %v7842, 0
      %v7896 = vsel %vm3447, %v7843, 0
      %v7899 = vsel %vm3447, %v7844, 0
      %v7902 = vsel %vm3447, %v7845, 0
      %v7905 = vsel %vm3447, %v7846, 0
      %7907 = vmatprep.subr.bf16.mxu0 0
      %7908 = vmatpush1.bf16.msra.mxu0 0
      %7909 = vmatprep.subr.bf16.mxu0 0
      %7910 = vmatpush1.bf16.msra.mxu0 0
      %7911 = vmatprep.subr.bf16.mxu0 0
      %7912 = vmatpush1.bf16.msra.mxu0 0
      %7913 = vmatprep.subr.bf16.mxu0 0
      %7914 = vmatpush1.bf16.msra.mxu0 0
      %7915 = vmatprep.subr.bf16.mxu0 0
      %7916 = vmatpush1.bf16.msra.mxu0 0
      %7917 = vmatprep.subr.bf16.mxu0 0
      %7918 = vmatpush1.bf16.msra.mxu0 0
      %7919 = vmatprep.subr.bf16.mxu0 0
      %7920 = vmatpush1.bf16.msra.mxu0 %v7856
      %7921 = vmatprep.subr.bf16.mxu0 0
      %7922 = vmatpush1.bf16.msra.mxu0 %v7855
      %7923 = vmatprep.subr.bf16.mxu0 0
      %7924 = vmatpush2.bf16.msra.mxu0 0
      %7925 = vmatprep.subr.bf16.mxu0 0
      %7926 = vmatpush2.bf16.msra.mxu0 0
      %7927 = vmatprep.subr.bf16.mxu0 0
      %7928 = vmatpush2.bf16.msra.mxu0 0
      %7929 = vmatprep.subr.bf16.mxu0 0
      %7930 = vmatpush2.bf16.msra.mxu0 0
      %7931 = vmatprep.subr.bf16.mxu0 0
      %7932 = vmatpush2.bf16.msra.mxu0 0
      %7933 = vmatprep.subr.bf16.mxu0 0
      %7934 = vmatpush2.bf16.msra.mxu0 0
      %7935 = vmatprep.subr.bf16.mxu0 0
      %7936 = vmatpush2.bf16.msra.mxu0 0
      %7937 = vmatprep.subr.bf16.mxu0 0
      %7938 = vmatpush2.bf16.msra.mxu0 0
      %7939 = vmatprep.mubr.bf16.mxu0 0
      %7940 = vmatmul.mubr.bf16.gmra.mxu0 %v7860
      %v7941 = vpop.f32.mrf.mxu0
      %v7942 = vadd.f32 0.0, %v7941
      %v7943 = vpop.f32.mrf.mxu0
      %v7944 = vpop.f32.mrf.mxu0
      %v7945 = vadd.f32 0.0, %v7944
      %v7946 = vpop.f32.mrf.mxu0
      %7947 = vmatprep.mubr.bf16.mxu0 0
      %7948 = vmatmul.mubr.bf16.gmra.mxu0 %v7863
      %v7949 = vpop.f32.mrf.mxu0
      %v7950 = vadd.f32 0.0, %v7949
      %v7951 = vpop.f32.mrf.mxu0
      %v7952 = vpop.f32.mrf.mxu0
      %v7953 = vadd.f32 0.0, %v7952
      %v7954 = vpop.f32.mrf.mxu0
      %7955 = vmatprep.mubr.bf16.mxu0 0
      %7956 = vmatmul.mubr.bf16.gmra.mxu0 %v7866
      %v7957 = vpop.f32.mrf.mxu0
      %v7958 = vadd.f32 0.0, %v7957
      %v7959 = vpop.f32.mrf.mxu0
      %v7960 = vpop.f32.mrf.mxu0
      %v7961 = vadd.f32 0.0, %v7960
      %v7962 = vpop.f32.mrf.mxu0
      %7963 = vmatprep.mubr.bf16.mxu0 0
      %7964 = vmatmul.mubr.bf16.gmra.mxu0 %v7869
      %v7965 = vpop.f32.mrf.mxu0
      %v7966 = vadd.f32 0.0, %v7965
      %v7967 = vpop.f32.mrf.mxu0
      %v7968 = vpop.f32.mrf.mxu0
      %v7969 = vadd.f32 0.0, %v7968
      %v7970 = vpop.f32.mrf.mxu0
      %7971 = vmatprep.mubr.bf16.mxu0 0
      %7972 = vmatmul.mubr.bf16.gmra.mxu0 %v7872
      %v7973 = vpop.f32.mrf.mxu0
      %v7974 = vadd.f32 0.0, %v7973
      %v7975 = vpop.f32.mrf.mxu0
      %v7976 = vpop.f32.mrf.mxu0
      %v7977 = vadd.f32 0.0, %v7976
      %v7978 = vpop.f32.mrf.mxu0
      %7979 = vmatprep.mubr.bf16.mxu0 0
      %7980 = vmatmul.mubr.bf16.gmra.mxu0 %v7875
      %v7981 = vpop.f32.mrf.mxu0
      %v7982 = vadd.f32 0.0, %v7981
      %v7983 = vpop.f32.mrf.mxu0
      %v7984 = vpop.f32.mrf.mxu0
      %v7985 = vadd.f32 0.0, %v7984
      %v7986 = vpop.f32.mrf.mxu0
      %7987 = vmatprep.mubr.bf16.mxu0 0
      %7988 = vmatmul.mubr.bf16.gmra.mxu0 %v7878
      %v7989 = vpop.f32.mrf.mxu0
      %v7990 = vadd.f32 0.0, %v7989
      %v7991 = vpop.f32.mrf.mxu0
      %v7992 = vpop.f32.mrf.mxu0
      %v7993 = vadd.f32 0.0, %v7992
      %v7994 = vpop.f32.mrf.mxu0
      %7995 = vmatprep.mubr.bf16.mxu0 0
      %7996 = vmatmul.mubr.bf16.gmra.mxu0 %v7881
      %v7997 = vpop.f32.mrf.mxu0
      %v7998 = vadd.f32 0.0, %v7997
      %v7999 = vpop.f32.mrf.mxu0
      %v8000 = vpop.f32.mrf.mxu0
      %v8001 = vadd.f32 0.0, %v8000
      %v8002 = vpop.f32.mrf.mxu0
      %8003 = vmatprep.mubr.bf16.mxu0 0
      %8004 = vmatmul.mubr.bf16.gmra.mxu0 %v7884
      %v8005 = vpop.f32.mrf.mxu0
      %v8006 = vadd.f32 0.0, %v8005
      %v8007 = vpop.f32.mrf.mxu0
      %v8008 = vpop.f32.mrf.mxu0
      %v8009 = vadd.f32 0.0, %v8008
      %v8010 = vpop.f32.mrf.mxu0
      %8011 = vmatprep.mubr.bf16.mxu0 0
      %8012 = vmatmul.mubr.bf16.gmra.mxu0 %v7887
      %v8013 = vpop.f32.mrf.mxu0
      %v8014 = vadd.f32 0.0, %v8013
      %v8015 = vpop.f32.mrf.mxu0
      %v8016 = vpop.f32.mrf.mxu0
      %v8017 = vadd.f32 0.0, %v8016
      %v8018 = vpop.f32.mrf.mxu0
      %8019 = vmatprep.mubr.bf16.mxu0 0
      %8020 = vmatmul.mubr.bf16.gmra.mxu0 %v7890
      %v8021 = vpop.f32.mrf.mxu0
      %v8022 = vadd.f32 0.0, %v8021
      %v8023 = vpop.f32.mrf.mxu0
      %v8024 = vpop.f32.mrf.mxu0
      %v8025 = vadd.f32 0.0, %v8024
      %v8026 = vpop.f32.mrf.mxu0
      %8027 = vmatprep.mubr.bf16.mxu0 0
      %8028 = vmatmul.mubr.bf16.gmra.mxu0 %v7893
      %v8029 = vpop.f32.mrf.mxu0
      %v8030 = vadd.f32 0.0, %v8029
      %v8031 = vpop.f32.mrf.mxu0
      %v8032 = vpop.f32.mrf.mxu0
      %v8033 = vadd.f32 0.0, %v8032
      %v8034 = vpop.f32.mrf.mxu0
      %8035 = vmatprep.mubr.bf16.mxu0 0
      %8036 = vmatmul.mubr.bf16.gmra.mxu0 %v7896
      %v8037 = vpop.f32.mrf.mxu0
      %v8038 = vadd.f32 0.0, %v8037
      %v8039 = vpop.f32.mrf.mxu0
      %v8040 = vpop.f32.mrf.mxu0
      %v8041 = vadd.f32 0.0, %v8040
      %v8042 = vpop.f32.mrf.mxu0
      %8043 = vmatprep.mubr.bf16.mxu0 0
      %8044 = vmatmul.mubr.bf16.gmra.mxu0 %v7899
      %v8045 = vpop.f32.mrf.mxu0
      %v8046 = vadd.f32 0.0, %v8045
      %v8047 = vpop.f32.mrf.mxu0
      %v8048 = vpop.f32.mrf.mxu0
      %v8049 = vadd.f32 0.0, %v8048
      %v8050 = vpop.f32.mrf.mxu0
      %8051 = vmatprep.mubr.bf16.mxu0 0
      %8052 = vmatmul.mubr.bf16.gmra.mxu0 %v7902
      %v8053 = vpop.f32.mrf.mxu0
      %v8054 = vadd.f32 0.0, %v8053
      %v8055 = vpop.f32.mrf.mxu0
      %v8056 = vpop.f32.mrf.mxu0
      %v8057 = vadd.f32 0.0, %v8056
      %v8058 = vpop.f32.mrf.mxu0
      %8059 = vmatprep.mubr.bf16.mxu0 0
      %8060 = vmatmul.mubr.bf16.gmra.mxu0 %v7905
      %v8061 = vpop.f32.mrf.mxu0
      %v8062 = vadd.f32 0.0, %v8061
      %v8063 = vpop.f32.mrf.mxu0
      %v8064 = vpop.f32.mrf.mxu0
      %v8065 = vadd.f32 0.0, %v8064
      %v8066 = vpop.f32.mrf.mxu0
      %8067 = vdwg.mxu0
      %v8068 = vadd.f32 %v7697, %v7942
      %v8069 = vadd.f32 %v7698, %v7945
      %v8070 = vadd.f32 %v7699, %v7950
      %v8071 = vadd.f32 %v7700, %v7953
      %v8072 = vadd.f32 %v7701, %v7958
      %v8073 = vadd.f32 %v7702, %v7961
      %v8074 = vadd.f32 %v7703, %v7966
      %v8075 = vadd.f32 %v7704, %v7969
      %v8076 = vadd.f32 %v7705, %v7974
      %v8077 = vadd.f32 %v7706, %v7977
      %v8078 = vadd.f32 %v7707, %v7982
      %v8079 = vadd.f32 %v7708, %v7985
      %v8080 = vadd.f32 %v7709, %v7990
      %v8081 = vadd.f32 %v7710, %v7993
      %v8082 = vadd.f32 %v7711, %v7998
      %v8083 = vadd.f32 %v7712, %v8001
      %v8084 = vadd.f32 %v7713, %v8006
      %v8085 = vadd.f32 %v7714, %v8009
      %v8086 = vadd.f32 %v7715, %v8014
      %v8087 = vadd.f32 %v7716, %v8017
      %v8088 = vadd.f32 %v7717, %v8022
      %v8089 = vadd.f32 %v7718, %v8025
      %v8090 = vadd.f32 %v7719, %v8030
      %v8091 = vadd.f32 %v7720, %v8033
      %v8092 = vadd.f32 %v7721, %v8038
      %v8093 = vadd.f32 %v7722, %v8041
      %v8094 = vadd.f32 %v7723, %v8046
      %v8095 = vadd.f32 %v7724, %v8049
      %v8096 = vadd.f32 %v7725, %v8054
      %v8097 = vadd.f32 %v7726, %v8057
      %v8098 = vadd.f32 %v7727, %v8062
      %v8099 = vadd.f32 %v7728, %v8065
      %v8100 = vld [vmem:[%s7729] sm:$0xf]
      %v8101 = vld [vmem:[%s7729 + $0x4] sm:$0xf]
      %v8102 = vld [vmem:[%s7729 + $0x8] sm:$0x1]
      %v8103 = vld [vmem:[%s7729 + $0xc] sm:$0xf]
      %v8104 = vld [vmem:[%s7729 + $0x10] sm:$0xf]
      %v8105 = vld [vmem:[%s7729 + $0x14] sm:$0x1]
      %v8106 = vld [vmem:[%s7729 + $0x18] sm:$0xf]
      %v8107 = vld [vmem:[%s7729 + $0x1c] sm:$0xf]
      %v8108 = vld [vmem:[%s7729 + $0x20] sm:$0x1]
      %v8109 = vld [vmem:[%s7729 + $0x24] sm:$0xf]
      %v8110 = vld [vmem:[%s7729 + $0x28] sm:$0xf]
      %v8111 = vld [vmem:[%s7729 + $0x2c] sm:$0x1]
      %v8112 = vld [vmem:[%s7729 + $0x30] sm:$0xf]
      %v8113 = vld [vmem:[%s7729 + $0x34] sm:$0xf]
      %v8114 = vld [vmem:[%s7729 + $0x38] sm:$0x1]
      %v8115 = vld [vmem:[%s7729 + $0x3c] sm:$0xf]
      %v8116 = vld [vmem:[%s7729 + $0x40] sm:$0xf]
      %v8117 = vld [vmem:[%s7729 + $0x44] sm:$0x1]
      %v8118 = vld [vmem:[%s7729 + $0x48] sm:$0xf]
      %v8119 = vld [vmem:[%s7729 + $0x4c] sm:$0xf]
      %v8120 = vld [vmem:[%s7729 + $0x50] sm:$0x1]
      %v8121 = vld [vmem:[%s7729 + $0x54] sm:$0xf]
      %v8122 = vld [vmem:[%s7729 + $0x58] sm:$0xf]
      %v8123 = vld [vmem:[%s7729 + $0x5c] sm:$0x1]
      %v8124 = vld [vmem:[%s7729 + $0x60] sm:$0xf]
      %v8125 = vld [vmem:[%s7729 + $0x64] sm:$0xf]
      %v8126 = vld [vmem:[%s7729 + $0x68] sm:$0x1]
      %v8127 = vld [vmem:[%s7729 + $0x6c] sm:$0xf]
      %v8128 = vld [vmem:[%s7729 + $0x70] sm:$0xf]
      %v8129 = vld [vmem:[%s7729 + $0x74] sm:$0x1]
      %v8130 = vld [vmem:[%s7729 + $0x78] sm:$0xf]
      %v8131 = vld [vmem:[%s7729 + $0x7c] sm:$0xf]
      %v8132 = vld [vmem:[%s7729 + $0x80] sm:$0x1]
      %v8133 = vld [vmem:[%s7729 + $0x84] sm:$0xf]
      %v8134 = vld [vmem:[%s7729 + $0x88] sm:$0xf]
      %v8135 = vld [vmem:[%s7729 + $0x8c] sm:$0x1]
      %v8136 = vld [vmem:[%s7729 + $0x90] sm:$0xf]
      %v8137 = vld [vmem:[%s7729 + $0x94] sm:$0xf]
      %v8138 = vld [vmem:[%s7729 + $0x98] sm:$0x1]
      %v8139 = vld [vmem:[%s7729 + $0x9c] sm:$0xf]
      %v8140 = vld [vmem:[%s7729 + $0xa0] sm:$0xf]
      %v8141 = vld [vmem:[%s7729 + $0xa4] sm:$0x1]
      %v8142 = vld [vmem:[%s7729 + $0xa8] sm:$0xf]
      %v8143 = vld [vmem:[%s7729 + $0xac] sm:$0xf]
      %v8144 = vld [vmem:[%s7729 + $0xb0] sm:$0x1]
      %v8145 = vld [vmem:[%s7729 + $0xb4] sm:$0xf]
      %v8146 = vld [vmem:[%s7729 + $0xb8] sm:$0xf]
      %v8147 = vld [vmem:[%s7729 + $0xbc] sm:$0x1]
      %v8149 = vshrl.u32 %v8100, 16
      %v8151 = vrot.slane %v8149, 4
      %v8152 = vshll.u32 %v8100, 16
      %v8154 = vrot.slane %v8152, 5
      %v8155 = vor.u32 %v8151, %v8154
      %v8156 = vrot.slane %v8155, 4
      %v8158 = vshll.u32 %v8101, 16
      %v8160 = vrot.slane %v8158, 5
      %v8161 = vsel %vm506, %v8156, %v8160
      %v8162 = vshrl.u32 %v8101, 16
      %v8164 = vrot.slane %v8162, 4
      %v8165 = vor.u32 %v8164, %v8160
      %v8166 = vrot.slane %v8165, 4
      %v8168 = vshll.u32 %v8102, 16
      %v8170 = vrot.slane %v8168, 5
      %v8171 = vsel %vm506, %v8166, %v8170
      %v8173 = vshrl.u32 %v8103, 16
      %v8175 = vrot.slane %v8173, 4
      %v8176 = vshll.u32 %v8103, 16
      %v8178 = vrot.slane %v8176, 5
      %v8179 = vor.u32 %v8175, %v8178
      %v8180 = vrot.slane %v8179, 4
      %v8182 = vshll.u32 %v8104, 16
      %v8184 = vrot.slane %v8182, 5
      %v8185 = vsel %vm506, %v8180, %v8184
      %v8186 = vshrl.u32 %v8104, 16
      %v8188 = vrot.slane %v8186, 4
      %v8189 = vor.u32 %v8188, %v8184
      %v8190 = vrot.slane %v8189, 4
      %v8192 = vshll.u32 %v8105, 16
      %v8194 = vrot.slane %v8192, 5
      %v8195 = vsel %vm506, %v8190, %v8194
      %v8197 = vshrl.u32 %v8106, 16
      %v8199 = vrot.slane %v8197, 4
      %v8200 = vshll.u32 %v8106, 16
      %v8202 = vrot.slane %v8200, 5
      %v8203 = vor.u32 %v8199, %v8202
      %v8204 = vrot.slane %v8203, 4
      %v8206 = vshll.u32 %v8107, 16
      %v8208 = vrot.slane %v8206, 5
      %v8209 = vsel %vm506, %v8204, %v8208
      %v8210 = vshrl.u32 %v8107, 16
      %v8212 = vrot.slane %v8210, 4
      %v8213 = vor.u32 %v8212, %v8208
      %v8214 = vrot.slane %v8213, 4
      %v8216 = vshll.u32 %v8108, 16
      %v8218 = vrot.slane %v8216, 5
      %v8219 = vsel %vm506, %v8214, %v8218
      %v8221 = vshrl.u32 %v8109, 16
      %v8223 = vrot.slane %v8221, 4
      %v8224 = vshll.u32 %v8109, 16
      %v8226 = vrot.slane %v8224, 5
      %v8227 = vor.u32 %v8223, %v8226
      %v8228 = vrot.slane %v8227, 4
      %v8230 = vshll.u32 %v8110, 16
      %v8232 = vrot.slane %v8230, 5
      %v8233 = vsel %vm506, %v8228, %v8232
      %v8234 = vshrl.u32 %v8110, 16
      %v8236 = vrot.slane %v8234, 4
      %v8237 = vor.u32 %v8236, %v8232
      %v8238 = vrot.slane %v8237, 4
      %v8240 = vshll.u32 %v8111, 16
      %v8242 = vrot.slane %v8240, 5
      %v8243 = vsel %vm506, %v8238, %v8242
      %v8245 = vshrl.u32 %v8112, 16
      %v8247 = vrot.slane %v8245, 4
      %v8248 = vshll.u32 %v8112, 16
      %v8250 = vrot.slane %v8248, 5
      %v8251 = vor.u32 %v8247, %v8250
      %v8252 = vrot.slane %v8251, 4
      %v8254 = vshll.u32 %v8113, 16
      %v8256 = vrot.slane %v8254, 5
      %v8257 = vsel %vm506, %v8252, %v8256
      %v8258 = vshrl.u32 %v8113, 16
      %v8260 = vrot.slane %v8258, 4
      %v8261 = vor.u32 %v8260, %v8256
      %v8262 = vrot.slane %v8261, 4
      %v8264 = vshll.u32 %v8114, 16
      %v8266 = vrot.slane %v8264, 5
      %v8267 = vsel %vm506, %v8262, %v8266
      %v8269 = vshrl.u32 %v8115, 16
      %v8271 = vrot.slane %v8269, 4
      %v8272 = vshll.u32 %v8115, 16
      %v8274 = vrot.slane %v8272, 5
      %v8275 = vor.u32 %v8271, %v8274
      %v8276 = vrot.slane %v8275, 4
      %v8278 = vshll.u32 %v8116, 16
      %v8280 = vrot.slane %v8278, 5
      %v8281 = vsel %vm506, %v8276, %v8280
      %v8282 = vshrl.u32 %v8116, 16
      %v8284 = vrot.slane %v8282, 4
      %v8285 = vor.u32 %v8284, %v8280
      %v8286 = vrot.slane %v8285, 4
      %v8288 = vshll.u32 %v8117, 16
      %v8290 = vrot.slane %v8288, 5
      %v8291 = vsel %vm506, %v8286, %v8290
      %v8293 = vshrl.u32 %v8118, 16
      %v8295 = vrot.slane %v8293, 4
      %v8296 = vshll.u32 %v8118, 16
      %v8298 = vrot.slane %v8296, 5
      %v8299 = vor.u32 %v8295, %v8298
      %v8300 = vrot.slane %v8299, 4
      %v8302 = vshll.u32 %v8119, 16
      %v8304 = vrot.slane %v8302, 5
      %v8305 = vsel %vm506, %v8300, %v8304
      %v8306 = vshrl.u32 %v8119, 16
      %v8308 = vrot.slane %v8306, 4
      %v8309 = vor.u32 %v8308, %v8304
      %v8310 = vrot.slane %v8309, 4
      %v8312 = vshll.u32 %v8120, 16
      %v8314 = vrot.slane %v8312, 5
      %v8315 = vsel %vm506, %v8310, %v8314
      %v8317 = vshrl.u32 %v8121, 16
      %v8319 = vrot.slane %v8317, 4
      %v8320 = vshll.u32 %v8121, 16
      %v8322 = vrot.slane %v8320, 5
      %v8323 = vor.u32 %v8319, %v8322
      %v8324 = vrot.slane %v8323, 4
      %v8326 = vshll.u32 %v8122, 16
      %v8328 = vrot.slane %v8326, 5
      %v8329 = vsel %vm506, %v8324, %v8328
      %v8330 = vshrl.u32 %v8122, 16
      %v8332 = vrot.slane %v8330, 4
      %v8333 = vor.u32 %v8332, %v8328
      %v8334 = vrot.slane %v8333, 4
      %v8336 = vshll.u32 %v8123, 16
      %v8338 = vrot.slane %v8336, 5
      %v8339 = vsel %vm506, %v8334, %v8338
      %v8341 = vshrl.u32 %v8124, 16
      %v8343 = vrot.slane %v8341, 4
      %v8344 = vshll.u32 %v8124, 16
      %v8346 = vrot.slane %v8344, 5
      %v8347 = vor.u32 %v8343, %v8346
      %v8348 = vrot.slane %v8347, 4
      %v8350 = vshll.u32 %v8125, 16
      %v8352 = vrot.slane %v8350, 5
      %v8353 = vsel %vm506, %v8348, %v8352
      %v8354 = vshrl.u32 %v8125, 16
      %v8356 = vrot.slane %v8354, 4
      %v8357 = vor.u32 %v8356, %v8352
      %v8358 = vrot.slane %v8357, 4
      %v8360 = vshll.u32 %v8126, 16
      %v8362 = vrot.slane %v8360, 5
      %v8363 = vsel %vm506, %v8358, %v8362
      %v8365 = vshrl.u32 %v8127, 16
      %v8367 = vrot.slane %v8365, 4
      %v8368 = vshll.u32 %v8127, 16
      %v8370 = vrot.slane %v8368, 5
      %v8371 = vor.u32 %v8367, %v8370
      %v8372 = vrot.slane %v8371, 4
      %v8374 = vshll.u32 %v8128, 16
      %v8376 = vrot.slane %v8374, 5
      %v8377 = vsel %vm506, %v8372, %v8376
      %v8378 = vshrl.u32 %v8128, 16
      %v8380 = vrot.slane %v8378, 4
      %v8381 = vor.u32 %v8380, %v8376
      %v8382 = vrot.slane %v8381, 4
      %v8384 = vshll.u32 %v8129, 16
      %v8386 = vrot.slane %v8384, 5
      %v8387 = vsel %vm506, %v8382, %v8386
      %v8389 = vshrl.u32 %v8130, 16
      %v8391 = vrot.slane %v8389, 4
      %v8392 = vshll.u32 %v8130, 16
      %v8394 = vrot.slane %v8392, 5
      %v8395 = vor.u32 %v8391, %v8394
      %v8396 = vrot.slane %v8395, 4
      %v8398 = vshll.u32 %v8131, 16
      %v8400 = vrot.slane %v8398, 5
      %v8401 = vsel %vm506, %v8396, %v8400
      %v8402 = vshrl.u32 %v8131, 16
      %v8404 = vrot.slane %v8402, 4
      %v8405 = vor.u32 %v8404, %v8400
      %v8406 = vrot.slane %v8405, 4
      %v8408 = vshll.u32 %v8132, 16
      %v8410 = vrot.slane %v8408, 5
      %v8411 = vsel %vm506, %v8406, %v8410
      %v8413 = vshrl.u32 %v8133, 16
      %v8415 = vrot.slane %v8413, 4
      %v8416 = vshll.u32 %v8133, 16
      %v8418 = vrot.slane %v8416, 5
      %v8419 = vor.u32 %v8415, %v8418
      %v8420 = vrot.slane %v8419, 4
      %v8422 = vshll.u32 %v8134, 16
      %v8424 = vrot.slane %v8422, 5
      %v8425 = vsel %vm506, %v8420, %v8424
      %v8426 = vshrl.u32 %v8134, 16
      %v8428 = vrot.slane %v8426, 4
      %v8429 = vor.u32 %v8428, %v8424
      %v8430 = vrot.slane %v8429, 4
      %v8432 = vshll.u32 %v8135, 16
      %v8434 = vrot.slane %v8432, 5
      %v8435 = vsel %vm506, %v8430, %v8434
      %v8437 = vshrl.u32 %v8136, 16
      %v8439 = vrot.slane %v8437, 4
      %v8440 = vshll.u32 %v8136, 16
      %v8442 = vrot.slane %v8440, 5
      %v8443 = vor.u32 %v8439, %v8442
      %v8444 = vrot.slane %v8443, 4
      %v8446 = vshll.u32 %v8137, 16
      %v8448 = vrot.slane %v8446, 5
      %v8449 = vsel %vm506, %v8444, %v8448
      %v8450 = vshrl.u32 %v8137, 16
      %v8452 = vrot.slane %v8450, 4
      %v8453 = vor.u32 %v8452, %v8448
      %v8454 = vrot.slane %v8453, 4
      %v8456 = vshll.u32 %v8138, 16
      %v8458 = vrot.slane %v8456, 5
      %v8459 = vsel %vm506, %v8454, %v8458
      %v8461 = vshrl.u32 %v8139, 16
      %v8463 = vrot.slane %v8461, 4
      %v8464 = vshll.u32 %v8139, 16
      %v8466 = vrot.slane %v8464, 5
      %v8467 = vor.u32 %v8463, %v8466
      %v8468 = vrot.slane %v8467, 4
      %v8470 = vshll.u32 %v8140, 16
      %v8472 = vrot.slane %v8470, 5
      %v8473 = vsel %vm506, %v8468, %v8472
      %v8474 = vshrl.u32 %v8140, 16
      %v8476 = vrot.slane %v8474, 4
      %v8477 = vor.u32 %v8476, %v8472
      %v8478 = vrot.slane %v8477, 4
      %v8480 = vshll.u32 %v8141, 16
      %v8482 = vrot.slane %v8480, 5
      %v8483 = vsel %vm506, %v8478, %v8482
      %v8485 = vshrl.u32 %v8142, 16
      %v8487 = vrot.slane %v8485, 4
      %v8488 = vshll.u32 %v8142, 16
      %v8490 = vrot.slane %v8488, 5
      %v8491 = vor.u32 %v8487, %v8490
      %v8492 = vrot.slane %v8491, 4
      %v8494 = vshll.u32 %v8143, 16
      %v8496 = vrot.slane %v8494, 5
      %v8497 = vsel %vm506, %v8492, %v8496
      %v8498 = vshrl.u32 %v8143, 16
      %v8500 = vrot.slane %v8498, 4
      %v8501 = vor.u32 %v8500, %v8496
      %v8502 = vrot.slane %v8501, 4
      %v8504 = vshll.u32 %v8144, 16
      %v8506 = vrot.slane %v8504, 5
      %v8507 = vsel %vm506, %v8502, %v8506
      %v8509 = vshrl.u32 %v8145, 16
      %v8511 = vrot.slane %v8509, 4
      %v8512 = vshll.u32 %v8145, 16
      %v8514 = vrot.slane %v8512, 5
      %v8515 = vor.u32 %v8511, %v8514
      %v8516 = vrot.slane %v8515, 4
      %v8518 = vshll.u32 %v8146, 16
      %v8520 = vrot.slane %v8518, 5
      %v8521 = vsel %vm506, %v8516, %v8520
      %v8522 = vshrl.u32 %v8146, 16
      %v8524 = vrot.slane %v8522, 4
      %v8525 = vor.u32 %v8524, %v8520
      %v8526 = vrot.slane %v8525, 4
      %v8528 = vshll.u32 %v8147, 16
      %v8530 = vrot.slane %v8528, 5
      %v8531 = vsel %vm506, %v8526, %v8530
      %s8532 = scalar_lea.vmem %s7, 112
      %v8533 = vld [vmem:[%s8532] sm:$0xf]
      %v8534 = vld [vmem:[%s8532 + $0x4] sm:$0xf]
      %v8535 = vld [vmem:[%s8532 + $0x8] sm:$0xf]
      %v8536 = vld [vmem:[%s8532 + $0xc] sm:$0xf]
      %v8537 = vunpack.c.l.b16 %v8161
      %v8538 = vunpack.c.l.b16 %v8171
      %v8539 = vunpack.c.l.b16 %v8185
      %v8540 = vunpack.c.l.b16 %v8195
      %v8541 = vunpack.c.l.b16 %v8209
      %v8542 = vunpack.c.l.b16 %v8219
      %v8543 = vunpack.c.l.b16 %v8233
      %v8544 = vunpack.c.l.b16 %v8243
      %v8545 = vunpack.c.l.b16 %v8257
      %v8546 = vunpack.c.l.b16 %v8267
      %v8547 = vunpack.c.l.b16 %v8281
      %v8548 = vunpack.c.l.b16 %v8291
      %v8549 = vunpack.c.l.b16 %v8305
      %v8550 = vunpack.c.l.b16 %v8315
      %v8551 = vunpack.c.l.b16 %v8329
      %v8552 = vunpack.c.l.b16 %v8339
      %v8553 = vunpack.c.l.b16 %v8353
      %v8554 = vunpack.c.l.b16 %v8363
      %v8555 = vunpack.c.l.b16 %v8377
      %v8556 = vunpack.c.l.b16 %v8387
      %v8557 = vunpack.c.l.b16 %v8401
      %v8558 = vunpack.c.l.b16 %v8411
      %v8559 = vunpack.c.l.b16 %v8425
      %v8560 = vunpack.c.l.b16 %v8435
      %v8561 = vunpack.c.l.b16 %v8449
      %v8562 = vunpack.c.l.b16 %v8459
      %v8563 = vunpack.c.l.b16 %v8473
      %v8564 = vunpack.c.l.b16 %v8483
      %v8565 = vunpack.c.l.b16 %v8497
      %v8566 = vunpack.c.l.b16 %v8507
      %v8567 = vunpack.c.l.b16 %v8521
      %v8568 = vunpack.c.l.b16 %v8531
      %v8569 = vpack.c.b16 %v8538, %v8537
      %v8570 = vpack.c.b16 %v8540, %v8539
      %v8571 = vpack.c.b16 %v8542, %v8541
      %v8572 = vpack.c.b16 %v8544, %v8543
      %v8573 = vpack.c.b16 %v8546, %v8545
      %v8574 = vpack.c.b16 %v8548, %v8547
      %v8575 = vpack.c.b16 %v8550, %v8549
      %v8576 = vpack.c.b16 %v8552, %v8551
      %v8577 = vpack.c.b16 %v8554, %v8553
      %v8578 = vpack.c.b16 %v8556, %v8555
      %v8579 = vpack.c.b16 %v8558, %v8557
      %v8580 = vpack.c.b16 %v8560, %v8559
      %v8581 = vpack.c.b16 %v8562, %v8561
      %v8582 = vpack.c.b16 %v8564, %v8563
      %v8583 = vpack.c.b16 %v8566, %v8565
      %v8584 = vpack.c.b16 %v8568, %v8567
      %v8589 = vunpack.c.l.b16 %v8533
      %v8590 = vunpack.c.l.b16 %v8534
      %v8591 = vunpack.c.l.b16 %v8535
      %v8592 = vunpack.c.l.b16 %v8536
      %v8593 = vpack.c.b16 %v8590, %v8589
      %v8594 = vpack.c.b16 %v8592, %v8591
      %v8598 = vsel %vm3447, %v8569, 0
      %v8601 = vsel %vm3447, %v8570, 0
      %v8604 = vsel %vm3447, %v8571, 0
      %v8607 = vsel %vm3447, %v8572, 0
      %v8610 = vsel %vm3447, %v8573, 0
      %v8613 = vsel %vm3447, %v8574, 0
      %v8616 = vsel %vm3447, %v8575, 0
      %v8619 = vsel %vm3447, %v8576, 0
      %v8622 = vsel %vm3447, %v8577, 0
      %v8625 = vsel %vm3447, %v8578, 0
      %v8628 = vsel %vm3447, %v8579, 0
      %v8631 = vsel %vm3447, %v8580, 0
      %v8634 = vsel %vm3447, %v8581, 0
      %v8637 = vsel %vm3447, %v8582, 0
      %v8640 = vsel %vm3447, %v8583, 0
      %v8643 = vsel %vm3447, %v8584, 0
      %8645 = vmatprep.subr.bf16.mxu0 0
      %8646 = vmatpush1.bf16.msra.mxu0 0
      %8647 = vmatprep.subr.bf16.mxu0 0
      %8648 = vmatpush1.bf16.msra.mxu0 0
      %8649 = vmatprep.subr.bf16.mxu0 0
      %8650 = vmatpush1.bf16.msra.mxu0 0
      %8651 = vmatprep.subr.bf16.mxu0 0
      %8652 = vmatpush1.bf16.msra.mxu0 0
      %8653 = vmatprep.subr.bf16.mxu0 0
      %8654 = vmatpush1.bf16.msra.mxu0 0
      %8655 = vmatprep.subr.bf16.mxu0 0
      %8656 = vmatpush1.bf16.msra.mxu0 0
      %8657 = vmatprep.subr.bf16.mxu0 0
      %8658 = vmatpush1.bf16.msra.mxu0 %v8594
      %8659 = vmatprep.subr.bf16.mxu0 0
      %8660 = vmatpush1.bf16.msra.mxu0 %v8593
      %8661 = vmatprep.subr.bf16.mxu0 0
      %8662 = vmatpush2.bf16.msra.mxu0 0
      %8663 = vmatprep.subr.bf16.mxu0 0
      %8664 = vmatpush2.bf16.msra.mxu0 0
      %8665 = vmatprep.subr.bf16.mxu0 0
      %8666 = vmatpush2.bf16.msra.mxu0 0
      %8667 = vmatprep.subr.bf16.mxu0 0
      %8668 = vmatpush2.bf16.msra.mxu0 0
      %8669 = vmatprep.subr.bf16.mxu0 0
      %8670 = vmatpush2.bf16.msra.mxu0 0
      %8671 = vmatprep.subr.bf16.mxu0 0
      %8672 = vmatpush2.bf16.msra.mxu0 0
      %8673 = vmatprep.subr.bf16.mxu0 0
      %8674 = vmatpush2.bf16.msra.mxu0 0
      %8675 = vmatprep.subr.bf16.mxu0 0
      %8676 = vmatpush2.bf16.msra.mxu0 0
      %8677 = vmatprep.mubr.bf16.mxu0 0
      %8678 = vmatmul.mubr.bf16.gmra.mxu0 %v8598
      %v8679 = vpop.f32.mrf.mxu0
      %v8680 = vadd.f32 0.0, %v8679
      %v8681 = vpop.f32.mrf.mxu0
      %v8682 = vpop.f32.mrf.mxu0
      %v8683 = vadd.f32 0.0, %v8682
      %v8684 = vpop.f32.mrf.mxu0
      %8685 = vmatprep.mubr.bf16.mxu0 0
      %8686 = vmatmul.mubr.bf16.gmra.mxu0 %v8601
      %v8687 = vpop.f32.mrf.mxu0
      %v8688 = vadd.f32 0.0, %v8687
      %v8689 = vpop.f32.mrf.mxu0
      %v8690 = vpop.f32.mrf.mxu0
      %v8691 = vadd.f32 0.0, %v8690
      %v8692 = vpop.f32.mrf.mxu0
      %8693 = vmatprep.mubr.bf16.mxu0 0
      %8694 = vmatmul.mubr.bf16.gmra.mxu0 %v8604
      %v8695 = vpop.f32.mrf.mxu0
      %v8696 = vadd.f32 0.0, %v8695
      %v8697 = vpop.f32.mrf.mxu0
      %v8698 = vpop.f32.mrf.mxu0
      %v8699 = vadd.f32 0.0, %v8698
      %v8700 = vpop.f32.mrf.mxu0
      %8701 = vmatprep.mubr.bf16.mxu0 0
      %8702 = vmatmul.mubr.bf16.gmra.mxu0 %v8607
      %v8703 = vpop.f32.mrf.mxu0
      %v8704 = vadd.f32 0.0, %v8703
      %v8705 = vpop.f32.mrf.mxu0
      %v8706 = vpop.f32.mrf.mxu0
      %v8707 = vadd.f32 0.0, %v8706
      %v8708 = vpop.f32.mrf.mxu0
      %8709 = vmatprep.mubr.bf16.mxu0 0
      %8710 = vmatmul.mubr.bf16.gmra.mxu0 %v8610
      %v8711 = vpop.f32.mrf.mxu0
      %v8712 = vadd.f32 0.0, %v8711
      %v8713 = vpop.f32.mrf.mxu0
      %v8714 = vpop.f32.mrf.mxu0
      %v8715 = vadd.f32 0.0, %v8714
      %v8716 = vpop.f32.mrf.mxu0
      %8717 = vmatprep.mubr.bf16.mxu0 0
      %8718 = vmatmul.mubr.bf16.gmra.mxu0 %v8613
      %v8719 = vpop.f32.mrf.mxu0
      %v8720 = vadd.f32 0.0, %v8719
      %v8721 = vpop.f32.mrf.mxu0
      %v8722 = vpop.f32.mrf.mxu0
      %v8723 = vadd.f32 0.0, %v8722
      %v8724 = vpop.f32.mrf.mxu0
      %8725 = vmatprep.mubr.bf16.mxu0 0
      %8726 = vmatmul.mubr.bf16.gmra.mxu0 %v8616
      %v8727 = vpop.f32.mrf.mxu0
      %v8728 = vadd.f32 0.0, %v8727
      %v8729 = vpop.f32.mrf.mxu0
      %v8730 = vpop.f32.mrf.mxu0
      %v8731 = vadd.f32 0.0, %v8730
      %v8732 = vpop.f32.mrf.mxu0
      %8733 = vmatprep.mubr.bf16.mxu0 0
      %8734 = vmatmul.mubr.bf16.gmra.mxu0 %v8619
      %v8735 = vpop.f32.mrf.mxu0
      %v8736 = vadd.f32 0.0, %v8735
      %v8737 = vpop.f32.mrf.mxu0
      %v8738 = vpop.f32.mrf.mxu0
      %v8739 = vadd.f32 0.0, %v8738
      %v8740 = vpop.f32.mrf.mxu0
      %8741 = vmatprep.mubr.bf16.mxu0 0
      %8742 = vmatmul.mubr.bf16.gmra.mxu0 %v8622
      %v8743 = vpop.f32.mrf.mxu0
      %v8744 = vadd.f32 0.0, %v8743
      %v8745 = vpop.f32.mrf.mxu0
      %v8746 = vpop.f32.mrf.mxu0
      %v8747 = vadd.f32 0.0, %v8746
      %v8748 = vpop.f32.mrf.mxu0
      %8749 = vmatprep.mubr.bf16.mxu0 0
      %8750 = vmatmul.mubr.bf16.gmra.mxu0 %v8625
      %v8751 = vpop.f32.mrf.mxu0
      %v8752 = vadd.f32 0.0, %v8751
      %v8753 = vpop.f32.mrf.mxu0
      %v8754 = vpop.f32.mrf.mxu0
      %v8755 = vadd.f32 0.0, %v8754
      %v8756 = vpop.f32.mrf.mxu0
      %8757 = vmatprep.mubr.bf16.mxu0 0
      %8758 = vmatmul.mubr.bf16.gmra.mxu0 %v8628
      %v8759 = vpop.f32.mrf.mxu0
      %v8760 = vadd.f32 0.0, %v8759
      %v8761 = vpop.f32.mrf.mxu0
      %v8762 = vpop.f32.mrf.mxu0
      %v8763 = vadd.f32 0.0, %v8762
      %v8764 = vpop.f32.mrf.mxu0
      %8765 = vmatprep.mubr.bf16.mxu0 0
      %8766 = vmatmul.mubr.bf16.gmra.mxu0 %v8631
      %v8767 = vpop.f32.mrf.mxu0
      %v8768 = vadd.f32 0.0, %v8767
      %v8769 = vpop.f32.mrf.mxu0
      %v8770 = vpop.f32.mrf.mxu0
      %v8771 = vadd.f32 0.0, %v8770
      %v8772 = vpop.f32.mrf.mxu0
      %8773 = vmatprep.mubr.bf16.mxu0 0
      %8774 = vmatmul.mubr.bf16.gmra.mxu0 %v8634
      %v8775 = vpop.f32.mrf.mxu0
      %v8776 = vadd.f32 0.0, %v8775
      %v8777 = vpop.f32.mrf.mxu0
      %v8778 = vpop.f32.mrf.mxu0
      %v8779 = vadd.f32 0.0, %v8778
      %v8780 = vpop.f32.mrf.mxu0
      %8781 = vmatprep.mubr.bf16.mxu0 0
      %8782 = vmatmul.mubr.bf16.gmra.mxu0 %v8637
      %v8783 = vpop.f32.mrf.mxu0
      %v8784 = vadd.f32 0.0, %v8783
      %v8785 = vpop.f32.mrf.mxu0
      %v8786 = vpop.f32.mrf.mxu0
      %v8787 = vadd.f32 0.0, %v8786
      %v8788 = vpop.f32.mrf.mxu0
      %8789 = vmatprep.mubr.bf16.mxu0 0
      %8790 = vmatmul.mubr.bf16.gmra.mxu0 %v8640
      %v8791 = vpop.f32.mrf.mxu0
      %v8792 = vadd.f32 0.0, %v8791
      %v8793 = vpop.f32.mrf.mxu0
      %v8794 = vpop.f32.mrf.mxu0
      %v8795 = vadd.f32 0.0, %v8794
      %v8796 = vpop.f32.mrf.mxu0
      %8797 = vmatprep.mubr.bf16.mxu0 0
      %8798 = vmatmul.mubr.bf16.gmra.mxu0 %v8643
      %v8799 = vpop.f32.mrf.mxu0
      %v8800 = vadd.f32 0.0, %v8799
      %v8801 = vpop.f32.mrf.mxu0
      %v8802 = vpop.f32.mrf.mxu0
      %v8803 = vadd.f32 0.0, %v8802
      %v8804 = vpop.f32.mrf.mxu0
      %8805 = vdwg.mxu0
      %v8806 = vadd.f32 %v8068, %v8680
      %v8807 = vadd.f32 %v8069, %v8683
      %v8808 = vadd.f32 %v8070, %v8688
      %v8809 = vadd.f32 %v8071, %v8691
      %v8810 = vadd.f32 %v8072, %v8696
      %v8811 = vadd.f32 %v8073, %v8699
      %v8812 = vadd.f32 %v8074, %v8704
      %v8813 = vadd.f32 %v8075, %v8707
      %v8814 = vadd.f32 %v8076, %v8712
      %v8815 = vadd.f32 %v8077, %v8715
      %v8816 = vadd.f32 %v8078, %v8720
      %v8817 = vadd.f32 %v8079, %v8723
      %v8818 = vadd.f32 %v8080, %v8728
      %v8819 = vadd.f32 %v8081, %v8731
      %v8820 = vadd.f32 %v8082, %v8736
      %v8821 = vadd.f32 %v8083, %v8739
      %v8822 = vadd.f32 %v8084, %v8744
      %v8823 = vadd.f32 %v8085, %v8747
      %v8824 = vadd.f32 %v8086, %v8752
      %v8825 = vadd.f32 %v8087, %v8755
      %v8826 = vadd.f32 %v8088, %v8760
      %v8827 = vadd.f32 %v8089, %v8763
      %v8828 = vadd.f32 %v8090, %v8768
      %v8829 = vadd.f32 %v8091, %v8771
      %v8830 = vadd.f32 %v8092, %v8776
      %v8831 = vadd.f32 %v8093, %v8779
      %v8832 = vadd.f32 %v8094, %v8784
      %v8833 = vadd.f32 %v8095, %v8787
      %v8834 = vadd.f32 %v8096, %v8792
      %v8835 = vadd.f32 %v8097, %v8795
      %v8836 = vadd.f32 %v8098, %v8800
      %v8837 = vadd.f32 %v8099, %v8803
      %v8838 = vld [vmem:[%s7729] sm:$0xe]
      %v8839 = vld [vmem:[%s7729 + $0xc] sm:$0xe]
      %v8840 = vld [vmem:[%s7729 + $0x18] sm:$0xe]
      %v8841 = vld [vmem:[%s7729 + $0x24] sm:$0xe]
      %v8842 = vld [vmem:[%s7729 + $0x30] sm:$0xe]
      %v8843 = vld [vmem:[%s7729 + $0x3c] sm:$0xe]
      %v8844 = vld [vmem:[%s7729 + $0x48] sm:$0xe]
      %v8845 = vld [vmem:[%s7729 + $0x54] sm:$0xe]
      %v8846 = vld [vmem:[%s7729 + $0x60] sm:$0xe]
      %v8847 = vld [vmem:[%s7729 + $0x6c] sm:$0xe]
      %v8848 = vld [vmem:[%s7729 + $0x78] sm:$0xe]
      %v8849 = vld [vmem:[%s7729 + $0x84] sm:$0xe]
      %v8850 = vld [vmem:[%s7729 + $0x90] sm:$0xe]
      %v8851 = vld [vmem:[%s7729 + $0x9c] sm:$0xe]
      %v8852 = vld [vmem:[%s7729 + $0xa8] sm:$0xe]
      %v8853 = vld [vmem:[%s7729 + $0xb4] sm:$0xe]
      %v8902 = vrot.slane %v8838, 5
      %v8903 = vrot.slane %v8902, 4
      %v8904 = vrot.slane %v8101, 5
      %v8905 = vsel %vm1513, %v8903, %v8904
      %v8906 = vrot.slane %v8904, 4
      %v8907 = vrot.slane %v8102, 5
      %v8908 = vsel %vm1513, %v8906, %v8907
      %v8909 = vrot.slane %v8839, 5
      %v8910 = vrot.slane %v8909, 4
      %v8911 = vrot.slane %v8104, 5
      %v8912 = vsel %vm1513, %v8910, %v8911
      %v8913 = vrot.slane %v8911, 4
      %v8914 = vrot.slane %v8105, 5
      %v8915 = vsel %vm1513, %v8913, %v8914
      %v8916 = vrot.slane %v8840, 5
      %v8917 = vrot.slane %v8916, 4
      %v8918 = vrot.slane %v8107, 5
      %v8919 = vsel %vm1513, %v8917, %v8918
      %v8920 = vrot.slane %v8918, 4
      %v8921 = vrot.slane %v8108, 5
      %v8922 = vsel %vm1513, %v8920, %v8921
      %v8923 = vrot.slane %v8841, 5
      %v8924 = vrot.slane %v8923, 4
      %v8925 = vrot.slane %v8110, 5
      %v8926 = vsel %vm1513, %v8924, %v8925
      %v8927 = vrot.slane %v8925, 4
      %v8928 = vrot.slane %v8111, 5
      %v8929 = vsel %vm1513, %v8927, %v8928
      %v8930 = vrot.slane %v8842, 5
      %v8931 = vrot.slane %v8930, 4
      %v8932 = vrot.slane %v8113, 5
      %v8933 = vsel %vm1513, %v8931, %v8932
      %v8934 = vrot.slane %v8932, 4
      %v8935 = vrot.slane %v8114, 5
      %v8936 = vsel %vm1513, %v8934, %v8935
      %v8937 = vrot.slane %v8843, 5
      %v8938 = vrot.slane %v8937, 4
      %v8939 = vrot.slane %v8116, 5
      %v8940 = vsel %vm1513, %v8938, %v8939
      %v8941 = vrot.slane %v8939, 4
      %v8942 = vrot.slane %v8117, 5
      %v8943 = vsel %vm1513, %v8941, %v8942
      %v8944 = vrot.slane %v8844, 5
      %v8945 = vrot.slane %v8944, 4
      %v8946 = vrot.slane %v8119, 5
      %v8947 = vsel %vm1513, %v8945, %v8946
      %v8948 = vrot.slane %v8946, 4
      %v8949 = vrot.slane %v8120, 5
      %v8950 = vsel %vm1513, %v8948, %v8949
      %v8951 = vrot.slane %v8845, 5
      %v8952 = vrot.slane %v8951, 4
      %v8953 = vrot.slane %v8122, 5
      %v8954 = vsel %vm1513, %v8952, %v8953
      %v8955 = vrot.slane %v8953, 4
      %v8956 = vrot.slane %v8123, 5
      %v8957 = vsel %vm1513, %v8955, %v8956
      %v8958 = vrot.slane %v8846, 5
      %v8959 = vrot.slane %v8958, 4
      %v8960 = vrot.slane %v8125, 5
      %v8961 = vsel %vm1513, %v8959, %v8960
      %v8962 = vrot.slane %v8960, 4
      %v8963 = vrot.slane %v8126, 5
      %v8964 = vsel %vm1513, %v8962, %v8963
      %v8965 = vrot.slane %v8847, 5
      %v8966 = vrot.slane %v8965, 4
      %v8967 = vrot.slane %v8128, 5
      %v8968 = vsel %vm1513, %v8966, %v8967
      %v8969 = vrot.slane %v8967, 4
      %v8970 = vrot.slane %v8129, 5
      %v8971 = vsel %vm1513, %v8969, %v8970
      %v8972 = vrot.slane %v8848, 5
      %v8973 = vrot.slane %v8972, 4
      %v8974 = vrot.slane %v8131, 5
      %v8975 = vsel %vm1513, %v8973, %v8974
      %v8976 = vrot.slane %v8974, 4
      %v8977 = vrot.slane %v8132, 5
      %v8978 = vsel %vm1513, %v8976, %v8977
      %v8979 = vrot.slane %v8849, 5
      %v8980 = vrot.slane %v8979, 4
      %v8981 = vrot.slane %v8134, 5
      %v8982 = vsel %vm1513, %v8980, %v8981
      %v8983 = vrot.slane %v8981, 4
      %v8984 = vrot.slane %v8135, 5
      %v8985 = vsel %vm1513, %v8983, %v8984
      %v8986 = vrot.slane %v8850, 5
      %v8987 = vrot.slane %v8986, 4
      %v8988 = vrot.slane %v8137, 5
      %v8989 = vsel %vm1513, %v8987, %v8988
      %v8990 = vrot.slane %v8988, 4
      %v8991 = vrot.slane %v8138, 5
      %v8992 = vsel %vm1513, %v8990, %v8991
      %v8993 = vrot.slane %v8851, 5
      %v8994 = vrot.slane %v8993, 4
      %v8995 = vrot.slane %v8140, 5
      %v8996 = vsel %vm1513, %v8994, %v8995
      %v8997 = vrot.slane %v8995, 4
      %v8998 = vrot.slane %v8141, 5
      %v8999 = vsel %vm1513, %v8997, %v8998
      %v9000 = vrot.slane %v8852, 5
      %v9001 = vrot.slane %v9000, 4
      %v9002 = vrot.slane %v8143, 5
      %v9003 = vsel %vm1513, %v9001, %v9002
      %v9004 = vrot.slane %v9002, 4
      %v9005 = vrot.slane %v8144, 5
      %v9006 = vsel %vm1513, %v9004, %v9005
      %v9007 = vrot.slane %v8853, 5
      %v9008 = vrot.slane %v9007, 4
      %v9009 = vrot.slane %v8146, 5
      %v9010 = vsel %vm1513, %v9008, %v9009
      %v9011 = vrot.slane %v9009, 4
      %v9012 = vrot.slane %v8147, 5
      %v9013 = vsel %vm1513, %v9011, %v9012
      %s9014 = scalar_lea.vmem %s7, 128
      %v9015 = vld [vmem:[%s9014] sm:$0xf]
      %v9016 = vld [vmem:[%s9014 + $0x4] sm:$0xf]
      %v9017 = vld [vmem:[%s9014 + $0x8] sm:$0xf]
      %v9018 = vld [vmem:[%s9014 + $0xc] sm:$0xf]
      %v9019 = vunpack.c.l.b16 %v8905
      %v9020 = vunpack.c.l.b16 %v8908
      %v9021 = vunpack.c.l.b16 %v8912
      %v9022 = vunpack.c.l.b16 %v8915
      %v9023 = vunpack.c.l.b16 %v8919
      %v9024 = vunpack.c.l.b16 %v8922
      %v9025 = vunpack.c.l.b16 %v8926
      %v9026 = vunpack.c.l.b16 %v8929
      %v9027 = vunpack.c.l.b16 %v8933
      %v9028 = vunpack.c.l.b16 %v8936
      %v9029 = vunpack.c.l.b16 %v8940
      %v9030 = vunpack.c.l.b16 %v8943
      %v9031 = vunpack.c.l.b16 %v8947
      %v9032 = vunpack.c.l.b16 %v8950
      %v9033 = vunpack.c.l.b16 %v8954
      %v9034 = vunpack.c.l.b16 %v8957
      %v9035 = vunpack.c.l.b16 %v8961
      %v9036 = vunpack.c.l.b16 %v8964
      %v9037 = vunpack.c.l.b16 %v8968
      %v9038 = vunpack.c.l.b16 %v8971
      %v9039 = vunpack.c.l.b16 %v8975
      %v9040 = vunpack.c.l.b16 %v8978
      %v9041 = vunpack.c.l.b16 %v8982
      %v9042 = vunpack.c.l.b16 %v8985
      %v9043 = vunpack.c.l.b16 %v8989
      %v9044 = vunpack.c.l.b16 %v8992
      %v9045 = vunpack.c.l.b16 %v8996
      %v9046 = vunpack.c.l.b16 %v8999
      %v9047 = vunpack.c.l.b16 %v9003
      %v9048 = vunpack.c.l.b16 %v9006
      %v9049 = vunpack.c.l.b16 %v9010
      %v9050 = vunpack.c.l.b16 %v9013
      %v9051 = vpack.c.b16 %v9020, %v9019
      %v9052 = vpack.c.b16 %v9022, %v9021
      %v9053 = vpack.c.b16 %v9024, %v9023
      %v9054 = vpack.c.b16 %v9026, %v9025
      %v9055 = vpack.c.b16 %v9028, %v9027
      %v9056 = vpack.c.b16 %v9030, %v9029
      %v9057 = vpack.c.b16 %v9032, %v9031
      %v9058 = vpack.c.b16 %v9034, %v9033
      %v9059 = vpack.c.b16 %v9036, %v9035
      %v9060 = vpack.c.b16 %v9038, %v9037
      %v9061 = vpack.c.b16 %v9040, %v9039
      %v9062 = vpack.c.b16 %v9042, %v9041
      %v9063 = vpack.c.b16 %v9044, %v9043
      %v9064 = vpack.c.b16 %v9046, %v9045
      %v9065 = vpack.c.b16 %v9048, %v9047
      %v9066 = vpack.c.b16 %v9050, %v9049
      %v9071 = vunpack.c.l.b16 %v9015
      %v9072 = vunpack.c.l.b16 %v9016
      %v9073 = vunpack.c.l.b16 %v9017
      %v9074 = vunpack.c.l.b16 %v9018
      %v9075 = vpack.c.b16 %v9072, %v9071
      %v9076 = vpack.c.b16 %v9074, %v9073
      %v9080 = vsel %vm3447, %v9051, 0
      %v9083 = vsel %vm3447, %v9052, 0
      %v9086 = vsel %vm3447, %v9053, 0
      %v9089 = vsel %vm3447, %v9054, 0
      %v9092 = vsel %vm3447, %v9055, 0
      %v9095 = vsel %vm3447, %v9056, 0
      %v9098 = vsel %vm3447, %v9057, 0
      %v9101 = vsel %vm3447, %v9058, 0
      %v9104 = vsel %vm3447, %v9059, 0
      %v9107 = vsel %vm3447, %v9060, 0
      %v9110 = vsel %vm3447, %v9061, 0
      %v9113 = vsel %vm3447, %v9062, 0
      %v9116 = vsel %vm3447, %v9063, 0
      %v9119 = vsel %vm3447, %v9064, 0
      %v9122 = vsel %vm3447, %v9065, 0
      %v9125 = vsel %vm3447, %v9066, 0
      %9127 = vmatprep.subr.bf16.mxu0 0
      %9128 = vmatpush1.bf16.msra.mxu0 0
      %9129 = vmatprep.subr.bf16.mxu0 0
      %9130 = vmatpush1.bf16.msra.mxu0 0
      %9131 = vmatprep.subr.bf16.mxu0 0
      %9132 = vmatpush1.bf16.msra.mxu0 0
      %9133 = vmatprep.subr.bf16.mxu0 0
      %9134 = vmatpush1.bf16.msra.mxu0 0
      %9135 = vmatprep.subr.bf16.mxu0 0
      %9136 = vmatpush1.bf16.msra.mxu0 0
      %9137 = vmatprep.subr.bf16.mxu0 0
      %9138 = vmatpush1.bf16.msra.mxu0 0
      %9139 = vmatprep.subr.bf16.mxu0 0
      %9140 = vmatpush1.bf16.msra.mxu0 %v9076
      %9141 = vmatprep.subr.bf16.mxu0 0
      %9142 = vmatpush1.bf16.msra.mxu0 %v9075
      %9143 = vmatprep.subr.bf16.mxu0 0
      %9144 = vmatpush2.bf16.msra.mxu0 0
      %9145 = vmatprep.subr.bf16.mxu0 0
      %9146 = vmatpush2.bf16.msra.mxu0 0
      %9147 = vmatprep.subr.bf16.mxu0 0
      %9148 = vmatpush2.bf16.msra.mxu0 0
      %9149 = vmatprep.subr.bf16.mxu0 0
      %9150 = vmatpush2.bf16.msra.mxu0 0
      %9151 = vmatprep.subr.bf16.mxu0 0
      %9152 = vmatpush2.bf16.msra.mxu0 0
      %9153 = vmatprep.subr.bf16.mxu0 0
      %9154 = vmatpush2.bf16.msra.mxu0 0
      %9155 = vmatprep.subr.bf16.mxu0 0
      %9156 = vmatpush2.bf16.msra.mxu0 0
      %9157 = vmatprep.subr.bf16.mxu0 0
      %9158 = vmatpush2.bf16.msra.mxu0 0
      %9159 = vmatprep.mubr.bf16.mxu0 0
      %9160 = vmatmul.mubr.bf16.gmra.mxu0 %v9080
      %v9161 = vpop.f32.mrf.mxu0
      %v9162 = vadd.f32 0.0, %v9161
      %v9163 = vpop.f32.mrf.mxu0
      %v9164 = vpop.f32.mrf.mxu0
      %v9165 = vadd.f32 0.0, %v9164
      %v9166 = vpop.f32.mrf.mxu0
      %9167 = vmatprep.mubr.bf16.mxu0 0
      %9168 = vmatmul.mubr.bf16.gmra.mxu0 %v9083
      %v9169 = vpop.f32.mrf.mxu0
      %v9170 = vadd.f32 0.0, %v9169
      %v9171 = vpop.f32.mrf.mxu0
      %v9172 = vpop.f32.mrf.mxu0
      %v9173 = vadd.f32 0.0, %v9172
      %v9174 = vpop.f32.mrf.mxu0
      %9175 = vmatprep.mubr.bf16.mxu0 0
      %9176 = vmatmul.mubr.bf16.gmra.mxu0 %v9086
      %v9177 = vpop.f32.mrf.mxu0
      %v9178 = vadd.f32 0.0, %v9177
      %v9179 = vpop.f32.mrf.mxu0
      %v9180 = vpop.f32.mrf.mxu0
      %v9181 = vadd.f32 0.0, %v9180
      %v9182 = vpop.f32.mrf.mxu0
      %9183 = vmatprep.mubr.bf16.mxu0 0
      %9184 = vmatmul.mubr.bf16.gmra.mxu0 %v9089
      %v9185 = vpop.f32.mrf.mxu0
      %v9186 = vadd.f32 0.0, %v9185
      %v9187 = vpop.f32.mrf.mxu0
      %v9188 = vpop.f32.mrf.mxu0
      %v9189 = vadd.f32 0.0, %v9188
      %v9190 = vpop.f32.mrf.mxu0
      %9191 = vmatprep.mubr.bf16.mxu0 0
      %9192 = vmatmul.mubr.bf16.gmra.mxu0 %v9092
      %v9193 = vpop.f32.mrf.mxu0
      %v9194 = vadd.f32 0.0, %v9193
      %v9195 = vpop.f32.mrf.mxu0
      %v9196 = vpop.f32.mrf.mxu0
      %v9197 = vadd.f32 0.0, %v9196
      %v9198 = vpop.f32.mrf.mxu0
      %9199 = vmatprep.mubr.bf16.mxu0 0
      %9200 = vmatmul.mubr.bf16.gmra.mxu0 %v9095
      %v9201 = vpop.f32.mrf.mxu0
      %v9202 = vadd.f32 0.0, %v9201
      %v9203 = vpop.f32.mrf.mxu0
      %v9204 = vpop.f32.mrf.mxu0
      %v9205 = vadd.f32 0.0, %v9204
      %v9206 = vpop.f32.mrf.mxu0
      %9207 = vmatprep.mubr.bf16.mxu0 0
      %9208 = vmatmul.mubr.bf16.gmra.mxu0 %v9098
      %v9209 = vpop.f32.mrf.mxu0
      %v9210 = vadd.f32 0.0, %v9209
      %v9211 = vpop.f32.mrf.mxu0
      %v9212 = vpop.f32.mrf.mxu0
      %v9213 = vadd.f32 0.0, %v9212
      %v9214 = vpop.f32.mrf.mxu0
      %9215 = vmatprep.mubr.bf16.mxu0 0
      %9216 = vmatmul.mubr.bf16.gmra.mxu0 %v9101
      %v9217 = vpop.f32.mrf.mxu0
      %v9218 = vadd.f32 0.0, %v9217
      %v9219 = vpop.f32.mrf.mxu0
      %v9220 = vpop.f32.mrf.mxu0
      %v9221 = vadd.f32 0.0, %v9220
      %v9222 = vpop.f32.mrf.mxu0
      %9223 = vmatprep.mubr.bf16.mxu0 0
      %9224 = vmatmul.mubr.bf16.gmra.mxu0 %v9104
      %v9225 = vpop.f32.mrf.mxu0
      %v9226 = vadd.f32 0.0, %v9225
      %v9227 = vpop.f32.mrf.mxu0
      %v9228 = vpop.f32.mrf.mxu0
      %v9229 = vadd.f32 0.0, %v9228
      %v9230 = vpop.f32.mrf.mxu0
      %9231 = vmatprep.mubr.bf16.mxu0 0
      %9232 = vmatmul.mubr.bf16.gmra.mxu0 %v9107
      %v9233 = vpop.f32.mrf.mxu0
      %v9234 = vadd.f32 0.0, %v9233
      %v9235 = vpop.f32.mrf.mxu0
      %v9236 = vpop.f32.mrf.mxu0
      %v9237 = vadd.f32 0.0, %v9236
      %v9238 = vpop.f32.mrf.mxu0
      %9239 = vmatprep.mubr.bf16.mxu0 0
      %9240 = vmatmul.mubr.bf16.gmra.mxu0 %v9110
      %v9241 = vpop.f32.mrf.mxu0
      %v9242 = vadd.f32 0.0, %v9241
      %v9243 = vpop.f32.mrf.mxu0
      %v9244 = vpop.f32.mrf.mxu0
      %v9245 = vadd.f32 0.0, %v9244
      %v9246 = vpop.f32.mrf.mxu0
      %9247 = vmatprep.mubr.bf16.mxu0 0
      %9248 = vmatmul.mubr.bf16.gmra.mxu0 %v9113
      %v9249 = vpop.f32.mrf.mxu0
      %v9250 = vadd.f32 0.0, %v9249
      %v9251 = vpop.f32.mrf.mxu0
      %v9252 = vpop.f32.mrf.mxu0
      %v9253 = vadd.f32 0.0, %v9252
      %v9254 = vpop.f32.mrf.mxu0
      %9255 = vmatprep.mubr.bf16.mxu0 0
      %9256 = vmatmul.mubr.bf16.gmra.mxu0 %v9116
      %v9257 = vpop.f32.mrf.mxu0
      %v9258 = vadd.f32 0.0, %v9257
      %v9259 = vpop.f32.mrf.mxu0
      %v9260 = vpop.f32.mrf.mxu0
      %v9261 = vadd.f32 0.0, %v9260
      %v9262 = vpop.f32.mrf.mxu0
      %9263 = vmatprep.mubr.bf16.mxu0 0
      %9264 = vmatmul.mubr.bf16.gmra.mxu0 %v9119
      %v9265 = vpop.f32.mrf.mxu0
      %v9266 = vadd.f32 0.0, %v9265
      %v9267 = vpop.f32.mrf.mxu0
      %v9268 = vpop.f32.mrf.mxu0
      %v9269 = vadd.f32 0.0, %v9268
      %v9270 = vpop.f32.mrf.mxu0
      %9271 = vmatprep.mubr.bf16.mxu0 0
      %9272 = vmatmul.mubr.bf16.gmra.mxu0 %v9122
      %v9273 = vpop.f32.mrf.mxu0
      %v9274 = vadd.f32 0.0, %v9273
      %v9275 = vpop.f32.mrf.mxu0
      %v9276 = vpop.f32.mrf.mxu0
      %v9277 = vadd.f32 0.0, %v9276
      %v9278 = vpop.f32.mrf.mxu0
      %9279 = vmatprep.mubr.bf16.mxu0 0
      %9280 = vmatmul.mubr.bf16.gmra.mxu0 %v9125
      %v9281 = vpop.f32.mrf.mxu0
      %v9282 = vadd.f32 0.0, %v9281
      %v9283 = vpop.f32.mrf.mxu0
      %v9284 = vpop.f32.mrf.mxu0
      %v9285 = vadd.f32 0.0, %v9284
      %v9286 = vpop.f32.mrf.mxu0
      %9287 = vdwg.mxu0
      %v9288 = vadd.f32 %v8806, %v9162
      %v9289 = vadd.f32 %v8807, %v9165
      %v9290 = vadd.f32 %v8808, %v9170
      %v9291 = vadd.f32 %v8809, %v9173
      %v9292 = vadd.f32 %v8810, %v9178
      %v9293 = vadd.f32 %v8811, %v9181
      %v9294 = vadd.f32 %v8812, %v9186
      %v9295 = vadd.f32 %v8813, %v9189
      %v9296 = vadd.f32 %v8814, %v9194
      %v9297 = vadd.f32 %v8815, %v9197
      %v9298 = vadd.f32 %v8816, %v9202
      %v9299 = vadd.f32 %v8817, %v9205
      %v9300 = vadd.f32 %v8818, %v9210
      %v9301 = vadd.f32 %v8819, %v9213
      %v9302 = vadd.f32 %v8820, %v9218
      %v9303 = vadd.f32 %v8821, %v9221
      %v9304 = vadd.f32 %v8822, %v9226
      %v9305 = vadd.f32 %v8823, %v9229
      %v9306 = vadd.f32 %v8824, %v9234
      %v9307 = vadd.f32 %v8825, %v9237
      %v9308 = vadd.f32 %v8826, %v9242
      %v9309 = vadd.f32 %v8827, %v9245
      %v9310 = vadd.f32 %v8828, %v9250
      %v9311 = vadd.f32 %v8829, %v9253
      %v9312 = vadd.f32 %v8830, %v9258
      %v9313 = vadd.f32 %v8831, %v9261
      %v9314 = vadd.f32 %v8832, %v9266
      %v9315 = vadd.f32 %v8833, %v9269
      %v9316 = vadd.f32 %v8834, %v9274
      %v9317 = vadd.f32 %v8835, %v9277
      %v9318 = vadd.f32 %v8836, %v9282
      %v9319 = vadd.f32 %v8837, %v9285
      %v9320 = vld [vmem:[%s8] sm:$0x1]
      %v9322 = vlaneseq
      %v9323 = vshrl.u32 %v9322, 7
      %v9324 = vsub.s32 0, %v9323
      %v9325 = vrot.slane %v9320, %v9324
      %v9327 = vadd.f32 %v9288, %v9325
      %v9328 = vadd.f32 %v9289, %v9325
      %v9329 = vadd.f32 %v9290, %v9325
      %v9330 = vadd.f32 %v9291, %v9325
      %v9331 = vadd.f32 %v9292, %v9325
      %v9332 = vadd.f32 %v9293, %v9325
      %v9333 = vadd.f32 %v9294, %v9325
      %v9334 = vadd.f32 %v9295, %v9325
      %v9335 = vadd.f32 %v9296, %v9325
      %v9336 = vadd.f32 %v9297, %v9325
      %v9337 = vadd.f32 %v9298, %v9325
      %v9338 = vadd.f32 %v9299, %v9325
      %v9339 = vadd.f32 %v9300, %v9325
      %v9340 = vadd.f32 %v9301, %v9325
      %v9341 = vadd.f32 %v9302, %v9325
      %v9342 = vadd.f32 %v9303, %v9325
      %v9343 = vadd.f32 %v9304, %v9325
      %v9344 = vadd.f32 %v9305, %v9325
      %v9345 = vadd.f32 %v9306, %v9325
      %v9346 = vadd.f32 %v9307, %v9325
      %v9347 = vadd.f32 %v9308, %v9325
      %v9348 = vadd.f32 %v9309, %v9325
      %v9349 = vadd.f32 %v9310, %v9325
      %v9350 = vadd.f32 %v9311, %v9325
      %v9351 = vadd.f32 %v9312, %v9325
      %v9352 = vadd.f32 %v9313, %v9325
      %v9353 = vadd.f32 %v9314, %v9325
      %v9354 = vadd.f32 %v9315, %v9325
      %v9355 = vadd.f32 %v9316, %v9325
      %v9356 = vadd.f32 %v9317, %v9325
      %v9357 = vadd.f32 %v9318, %v9325
      %v9358 = vadd.f32 %v9319, %v9325
      %v9359 = vsel %vm3447, %v9327, 0.0
      %v9360 = vsel %vm3447, %v9328, 0.0
      %v9361 = vadd.f32 %v9359, %v9360
      %v9362 = vsel %vm3447, %v9329, 0.0
      %v9363 = vadd.f32 %v9361, %v9362
      %v9364 = vsel %vm3447, %v9330, 0.0
      %v9365 = vadd.f32 %v9363, %v9364
      %v9366 = vsel %vm3447, %v9331, 0.0
      %v9367 = vadd.f32 %v9365, %v9366
      %v9368 = vsel %vm3447, %v9332, 0.0
      %v9369 = vadd.f32 %v9367, %v9368
      %v9370 = vsel %vm3447, %v9333, 0.0
      %v9371 = vadd.f32 %v9369, %v9370
      %v9372 = vsel %vm3447, %v9334, 0.0
      %v9373 = vadd.f32 %v9371, %v9372
      %v9374 = vsel %vm3447, %v9335, 0.0
      %v9375 = vadd.f32 %v9373, %v9374
      %v9376 = vsel %vm3447, %v9336, 0.0
      %v9377 = vadd.f32 %v9375, %v9376
      %v9378 = vsel %vm3447, %v9337, 0.0
      %v9379 = vadd.f32 %v9377, %v9378
      %v9380 = vsel %vm3447, %v9338, 0.0
      %v9381 = vadd.f32 %v9379, %v9380
      %v9382 = vsel %vm3447, %v9339, 0.0
      %v9383 = vadd.f32 %v9381, %v9382
      %v9384 = vsel %vm3447, %v9340, 0.0
      %v9385 = vadd.f32 %v9383, %v9384
      %v9386 = vsel %vm3447, %v9341, 0.0
      %v9387 = vadd.f32 %v9385, %v9386
      %v9388 = vsel %vm3447, %v9342, 0.0
      %v9389 = vadd.f32 %v9387, %v9388
      %v9390 = vsel %vm3447, %v9343, 0.0
      %v9391 = vadd.f32 %v9389, %v9390
      %v9392 = vsel %vm3447, %v9344, 0.0
      %v9393 = vadd.f32 %v9391, %v9392
      %v9394 = vsel %vm3447, %v9345, 0.0
      %v9395 = vadd.f32 %v9393, %v9394
      %v9396 = vsel %vm3447, %v9346, 0.0
      %v9397 = vadd.f32 %v9395, %v9396
      %v9398 = vsel %vm3447, %v9347, 0.0
      %v9399 = vadd.f32 %v9397, %v9398
      %v9400 = vsel %vm3447, %v9348, 0.0
      %v9401 = vadd.f32 %v9399, %v9400
      %v9402 = vsel %vm3447, %v9349, 0.0
      %v9403 = vadd.f32 %v9401, %v9402
      %v9404 = vsel %vm3447, %v9350, 0.0
      %v9405 = vadd.f32 %v9403, %v9404
      %v9406 = vsel %vm3447, %v9351, 0.0
      %v9407 = vadd.f32 %v9405, %v9406
      %v9408 = vsel %vm3447, %v9352, 0.0
      %v9409 = vadd.f32 %v9407, %v9408
      %v9410 = vsel %vm3447, %v9353, 0.0
      %v9411 = vadd.f32 %v9409, %v9410
      %v9412 = vsel %vm3447, %v9354, 0.0
      %v9413 = vadd.f32 %v9411, %v9412
      %v9414 = vsel %vm3447, %v9355, 0.0
      %v9415 = vadd.f32 %v9413, %v9414
      %v9416 = vsel %vm3447, %v9356, 0.0
      %v9417 = vadd.f32 %v9415, %v9416
      %v9418 = vsel %vm3447, %v9357, 0.0
      %v9419 = vadd.f32 %v9417, %v9418
      %v9420 = vsel %vm3447, %v9358, 0.0
      %v9421 = vadd.f32 %v9419, %v9420
      %v9422 = vrot.slane %v9421, 4
      %v9423 = vadd.f32 %v9421, %v9422
      %v9424 = vrot.slane %v9423, 2
      %v9425 = vadd.f32 %v9423, %v9424
      %v9426 = vrot.slane %v9425, 1
      %v9427 = vadd.f32 %v9425, %v9426
      %v9428 = vmul.f32 %v9327, %v9327
      %v9429 = vmul.f32 %v9328, %v9328
      %v9430 = vmul.f32 %v9329, %v9329
      %v9431 = vmul.f32 %v9330, %v9330
      %v9432 = vmul.f32 %v9331, %v9331
      %v9433 = vmul.f32 %v9332, %v9332
      %v9434 = vmul.f32 %v9333, %v9333
      %v9435 = vmul.f32 %v9334, %v9334
      %v9436 = vmul.f32 %v9335, %v9335
      %v9437 = vmul.f32 %v9336, %v9336
      %v9438 = vmul.f32 %v9337, %v9337
      %v9439 = vmul.f32 %v9338, %v9338
      %v9440 = vmul.f32 %v9339, %v9339
      %v9441 = vmul.f32 %v9340, %v9340
      %v9442 = vmul.f32 %v9341, %v9341
      %v9443 = vmul.f32 %v9342, %v9342
      %v9444 = vmul.f32 %v9343, %v9343
      %v9445 = vmul.f32 %v9344, %v9344
      %v9446 = vmul.f32 %v9345, %v9345
      %v9447 = vmul.f32 %v9346, %v9346
      %v9448 = vmul.f32 %v9347, %v9347
      %v9449 = vmul.f32 %v9348, %v9348
      %v9450 = vmul.f32 %v9349, %v9349
      %v9451 = vmul.f32 %v9350, %v9350
      %v9452 = vmul.f32 %v9351, %v9351
      %v9453 = vmul.f32 %v9352, %v9352
      %v9454 = vmul.f32 %v9353, %v9353
      %v9455 = vmul.f32 %v9354, %v9354
      %v9456 = vmul.f32 %v9355, %v9355
      %v9457 = vmul.f32 %v9356, %v9356
      %v9458 = vmul.f32 %v9357, %v9357
      %v9459 = vmul.f32 %v9358, %v9358
      %v9460 = vsel %vm3447, %v9428, 0.0
      %v9461 = vsel %vm3447, %v9429, 0.0
      %v9462 = vadd.f32 %v9460, %v9461
      %v9463 = vsel %vm3447, %v9430, 0.0
      %v9464 = vadd.f32 %v9462, %v9463
      %v9465 = vsel %vm3447, %v9431, 0.0
      %v9466 = vadd.f32 %v9464, %v9465
      %v9467 = vsel %vm3447, %v9432, 0.0
      %v9468 = vadd.f32 %v9466, %v9467
      %v9469 = vsel %vm3447, %v9433, 0.0
      %v9470 = vadd.f32 %v9468, %v9469
      %v9471 = vsel %vm3447, %v9434, 0.0
      %v9472 = vadd.f32 %v9470, %v9471
      %v9473 = vsel %vm3447, %v9435, 0.0
      %v9474 = vadd.f32 %v9472, %v9473
      %v9475 = vsel %vm3447, %v9436, 0.0
      %v9476 = vadd.f32 %v9474, %v9475
      %v9477 = vsel %vm3447, %v9437, 0.0
      %v9478 = vadd.f32 %v9476, %v9477
      %v9479 = vsel %vm3447, %v9438, 0.0
      %v9480 = vadd.f32 %v9478, %v9479
      %v9481 = vsel %vm3447, %v9439, 0.0
      %v9482 = vadd.f32 %v9480, %v9481
      %v9483 = vsel %vm3447, %v9440, 0.0
      %v9484 = vadd.f32 %v9482, %v9483
      %v9485 = vsel %vm3447, %v9441, 0.0
      %v9486 = vadd.f32 %v9484, %v9485
      %v9487 = vsel %vm3447, %v9442, 0.0
      %v9488 = vadd.f32 %v9486, %v9487
      %v9489 = vsel %vm3447, %v9443, 0.0
      %v9490 = vadd.f32 %v9488, %v9489
      %v9491 = vsel %vm3447, %v9444, 0.0
      %v9492 = vadd.f32 %v9490, %v9491
      %v9493 = vsel %vm3447, %v9445, 0.0
      %v9494 = vadd.f32 %v9492, %v9493
      %v9495 = vsel %vm3447, %v9446, 0.0
      %v9496 = vadd.f32 %v9494, %v9495
      %v9497 = vsel %vm3447, %v9447, 0.0
      %v9498 = vadd.f32 %v9496, %v9497
      %v9499 = vsel %vm3447, %v9448, 0.0
      %v9500 = vadd.f32 %v9498, %v9499
      %v9501 = vsel %vm3447, %v9449, 0.0
      %v9502 = vadd.f32 %v9500, %v9501
      %v9503 = vsel %vm3447, %v9450, 0.0
      %v9504 = vadd.f32 %v9502, %v9503
      %v9505 = vsel %vm3447, %v9451, 0.0
      %v9506 = vadd.f32 %v9504, %v9505
      %v9507 = vsel %vm3447, %v9452, 0.0
      %v9508 = vadd.f32 %v9506, %v9507
      %v9509 = vsel %vm3447, %v9453, 0.0
      %v9510 = vadd.f32 %v9508, %v9509
      %v9511 = vsel %vm3447, %v9454, 0.0
      %v9512 = vadd.f32 %v9510, %v9511
      %v9513 = vsel %vm3447, %v9455, 0.0
      %v9514 = vadd.f32 %v9512, %v9513
      %v9515 = vsel %vm3447, %v9456, 0.0
      %v9516 = vadd.f32 %v9514, %v9515
      %v9517 = vsel %vm3447, %v9457, 0.0
      %v9518 = vadd.f32 %v9516, %v9517
      %v9519 = vsel %vm3447, %v9458, 0.0
      %v9520 = vadd.f32 %v9518, %v9519
      %v9521 = vsel %vm3447, %v9459, 0.0
      %v9522 = vadd.f32 %v9520, %v9521
      %v9523 = vrot.slane %v9522, 4
      %v9524 = vadd.f32 %v9522, %v9523
      %v9525 = vrot.slane %v9524, 2
      %v9526 = vadd.f32 %v9524, %v9525
      %v9527 = vrot.slane %v9526, 1
      %v9528 = vadd.f32 %v9526, %v9527
      %v9529 = vld [vmem:[%s11] sm:$0xff]
      %v9530 = vld [vmem:[%s11 + $0x8] sm:$0xff]
      %v9531 = vld [vmem:[%s11 + $0x10] sm:$0xff]
      %v9532 = vld [vmem:[%s11 + $0x18] sm:$0xff]
      %v9534 = vsel %vm3447, %v9427, 0
      %9536 = vmatprep.subr.mxu0 0.0
      %9537 = vmatpush1.msra.mxu0 0.0
      %9538 = vmatprep.subr.mxu0 0.0
      %9539 = vmatpush1.msra.mxu0 0.0
      %9540 = vmatprep.subr.mxu0 0.0
      %9541 = vmatpush1.msra.mxu0 0.0
      %9542 = vmatprep.subr.mxu0 0.0
      %9543 = vmatpush1.msra.mxu0 0.0
      %9544 = vmatprep.subr.mxu0 0.0
      %9545 = vmatpush1.msra.mxu0 0.0
      %9546 = vmatprep.subr.mxu0 0.0
      %9547 = vmatpush1.msra.mxu0 0.0
      %9548 = vmatprep.subr.mxu0 0.0
      %9549 = vmatpush1.msra.mxu0 0.0
      %9550 = vmatprep.subr.mxu0 0.0
      %9551 = vmatpush1.msra.mxu0 0.0
      %9552 = vmatprep.subr.mxu0 0.0
      %9553 = vmatpush1.msra.mxu0 0.0
      %9554 = vmatprep.subr.mxu0 0.0
      %9555 = vmatpush1.msra.mxu0 0.0
      %9556 = vmatprep.subr.mxu0 0.0
      %9557 = vmatpush1.msra.mxu0 0.0
      %9558 = vmatprep.subr.mxu0 0.0
      %9559 = vmatpush1.msra.mxu0 0.0
      %9560 = vmatprep.subr.mxu0 0.0
      %9561 = vmatpush1.msra.mxu0 %v9532
      %9562 = vmatprep.subr.mxu0 0.0
      %9563 = vmatpush1.msra.mxu0 %v9531
      %9564 = vmatprep.subr.mxu0 0.0
      %9565 = vmatpush1.msra.mxu0 %v9530
      %9566 = vmatprep.subr.mxu0 0.0
      %9567 = vmatpush1.msra.mxu0 %v9529
      %9568 = vmatprep.subr.mxu0 0.0
      %9569 = vmatpush2.msra.mxu0 0.0
      %9570 = vmatprep.subr.mxu0 0.0
      %9571 = vmatpush2.msra.mxu0 0.0
      %9572 = vmatprep.subr.mxu0 0.0
      %9573 = vmatpush2.msra.mxu0 0.0
      %9574 = vmatprep.subr.mxu0 0.0
      %9575 = vmatpush2.msra.mxu0 0.0
      %9576 = vmatprep.subr.mxu0 0.0
      %9577 = vmatpush2.msra.mxu0 0.0
      %9578 = vmatprep.subr.mxu0 0.0
      %9579 = vmatpush2.msra.mxu0 0.0
      %9580 = vmatprep.subr.mxu0 0.0
      %9581 = vmatpush2.msra.mxu0 0.0
      %9582 = vmatprep.subr.mxu0 0.0
      %9583 = vmatpush2.msra.mxu0 0.0
      %9584 = vmatprep.subr.mxu0 0.0
      %9585 = vmatpush2.msra.mxu0 0.0
      %9586 = vmatprep.subr.mxu0 0.0
      %9587 = vmatpush2.msra.mxu0 0.0
      %9588 = vmatprep.subr.mxu0 0.0
      %9589 = vmatpush2.msra.mxu0 0.0
      %9590 = vmatprep.subr.mxu0 0.0
      %9591 = vmatpush2.msra.mxu0 0.0
      %9592 = vmatprep.subr.mxu0 0.0
      %9593 = vmatpush2.msra.mxu0 0.0
      %9594 = vmatprep.subr.mxu0 0.0
      %9595 = vmatpush2.msra.mxu0 0.0
      %9596 = vmatprep.subr.mxu0 0.0
      %9597 = vmatpush2.msra.mxu0 0.0
      %9598 = vmatprep.subr.mxu0 0.0
      %9599 = vmatpush2.msra.mxu0 0.0
      %9600 = vmatprep.mubr.f32.mxu0 0.0
      %9601 = vmatmul.mubr.f32.gmra.mxu0 %v9534
      %v9602 = vpop.f32.mrf.mxu0
      %v9603 = vadd.f32 0.0, %v9602
      %v9604 = vpop.f32.mrf.mxu0
      %9605 = vdwg.mxu0
      %v9607 = vsel %vm3447, %v9528, 0
      %9609 = vmatprep.subr.mxu0 0.0
      %9610 = vmatpush1.msra.mxu0 0.0
      %9611 = vmatprep.subr.mxu0 0.0
      %9612 = vmatpush1.msra.mxu0 0.0
      %9613 = vmatprep.subr.mxu0 0.0
      %9614 = vmatpush1.msra.mxu0 0.0
      %9615 = vmatprep.subr.mxu0 0.0
      %9616 = vmatpush1.msra.mxu0 0.0
      %9617 = vmatprep.subr.mxu0 0.0
      %9618 = vmatpush1.msra.mxu0 0.0
      %9619 = vmatprep.subr.mxu0 0.0
      %9620 = vmatpush1.msra.mxu0 0.0
      %9621 = vmatprep.subr.mxu0 0.0
      %9622 = vmatpush1.msra.mxu0 0.0
      %9623 = vmatprep.subr.mxu0 0.0
      %9624 = vmatpush1.msra.mxu0 0.0
      %9625 = vmatprep.subr.mxu0 0.0
      %9626 = vmatpush1.msra.mxu0 0.0
      %9627 = vmatprep.subr.mxu0 0.0
      %9628 = vmatpush1.msra.mxu0 0.0
      %9629 = vmatprep.subr.mxu0 0.0
      %9630 = vmatpush1.msra.mxu0 0.0
      %9631 = vmatprep.subr.mxu0 0.0
      %9632 = vmatpush1.msra.mxu0 0.0
      %9633 = vmatprep.subr.mxu0 0.0
      %9634 = vmatpush1.msra.mxu0 %v9532
      %9635 = vmatprep.subr.mxu0 0.0
      %9636 = vmatpush1.msra.mxu0 %v9531
      %9637 = vmatprep.subr.mxu0 0.0
      %9638 = vmatpush1.msra.mxu0 %v9530
      %9639 = vmatprep.subr.mxu0 0.0
      %9640 = vmatpush1.msra.mxu0 %v9529
      %9641 = vmatprep.subr.mxu0 0.0
      %9642 = vmatpush2.msra.mxu0 0.0
      %9643 = vmatprep.subr.mxu0 0.0
      %9644 = vmatpush2.msra.mxu0 0.0
      %9645 = vmatprep.subr.mxu0 0.0
      %9646 = vmatpush2.msra.mxu0 0.0
      %9647 = vmatprep.subr.mxu0 0.0
      %9648 = vmatpush2.msra.mxu0 0.0
      %9649 = vmatprep.subr.mxu0 0.0
      %9650 = vmatpush2.msra.mxu0 0.0
      %9651 = vmatprep.subr.mxu0 0.0
      %9652 = vmatpush2.msra.mxu0 0.0
      %9653 = vmatprep.subr.mxu0 0.0
      %9654 = vmatpush2.msra.mxu0 0.0
      %9655 = vmatprep.subr.mxu0 0.0
      %9656 = vmatpush2.msra.mxu0 0.0
      %9657 = vmatprep.subr.mxu0 0.0
      %9658 = vmatpush2.msra.mxu0 0.0
      %9659 = vmatprep.subr.mxu0 0.0
      %9660 = vmatpush2.msra.mxu0 0.0
      %9661 = vmatprep.subr.mxu0 0.0
      %9662 = vmatpush2.msra.mxu0 0.0
      %9663 = vmatprep.subr.mxu0 0.0
      %9664 = vmatpush2.msra.mxu0 0.0
      %9665 = vmatprep.subr.mxu0 0.0
      %9666 = vmatpush2.msra.mxu0 0.0
      %9667 = vmatprep.subr.mxu0 0.0
      %9668 = vmatpush2.msra.mxu0 0.0
      %9669 = vmatprep.subr.mxu0 0.0
      %9670 = vmatpush2.msra.mxu0 0.0
      %9671 = vmatprep.subr.mxu0 0.0
      %9672 = vmatpush2.msra.mxu0 0.0
      %9673 = vmatprep.mubr.f32.mxu0 0.0
      %9674 = vmatmul.mubr.f32.gmra.mxu0 %v9607
      %v9675 = vpop.f32.mrf.mxu0
      %v9676 = vadd.f32 0.0, %v9675
      %v9677 = vpop.f32.mrf.mxu0
      %9678 = vdwg.mxu0
      %v9679 = vmul.f32 %v9603, %v3768
      %v9680 = vmul.f32 %v9676, %v3768
      %v9681 = vmul.f32 %v9679, %v9679
      %v9682 = vsub.f32 %v9680, %v9681
      %v9683 = vmax.f32 %v9682, 0.0
      %v9684 = vadd.f32 %v9683, 1e-05
      %v9685 = vrsqrt.pop %v9684
      %v9686 = vld [vmem:[%s12] sm:$0xff]
      %v9688 = vsel %vm3777, %v9679, 0
      %9690 = vmatprep.subr.mxu0 0.0
      %9691 = vmatpush1.msra.mxu0 0.0
      %9692 = vmatprep.subr.mxu0 0.0
      %9693 = vmatpush1.msra.mxu0 0.0
      %9694 = vmatprep.subr.mxu0 0.0
      %9695 = vmatpush1.msra.mxu0 0.0
      %9696 = vmatprep.subr.mxu0 0.0
      %9697 = vmatpush1.msra.mxu0 0.0
      %9698 = vmatprep.subr.mxu0 0.0
      %9699 = vmatpush1.msra.mxu0 0.0
      %9700 = vmatprep.subr.mxu0 0.0
      %9701 = vmatpush1.msra.mxu0 0.0
      %9702 = vmatprep.subr.mxu0 0.0
      %9703 = vmatpush1.msra.mxu0 0.0
      %9704 = vmatprep.subr.mxu0 0.0
      %9705 = vmatpush1.msra.mxu0 0.0
      %9706 = vmatprep.subr.mxu0 0.0
      %9707 = vmatpush1.msra.mxu0 0.0
      %9708 = vmatprep.subr.mxu0 0.0
      %9709 = vmatpush1.msra.mxu0 0.0
      %9710 = vmatprep.subr.mxu0 0.0
      %9711 = vmatpush1.msra.mxu0 0.0
      %9712 = vmatprep.subr.mxu0 0.0
      %9713 = vmatpush1.msra.mxu0 0.0
      %9714 = vmatprep.subr.mxu0 0.0
      %9715 = vmatpush1.msra.mxu0 0.0
      %9716 = vmatprep.subr.mxu0 0.0
      %9717 = vmatpush1.msra.mxu0 0.0
      %9718 = vmatprep.subr.mxu0 0.0
      %9719 = vmatpush1.msra.mxu0 0.0
      %9720 = vmatprep.subr.mxu0 0.0
      %9721 = vmatpush1.msra.mxu0 %v9686
      %9722 = vmatprep.subr.mxu0 0.0
      %9723 = vmatpush2.msra.mxu0 0.0
      %9724 = vmatprep.subr.mxu0 0.0
      %9725 = vmatpush2.msra.mxu0 0.0
      %9726 = vmatprep.subr.mxu0 0.0
      %9727 = vmatpush2.msra.mxu0 0.0
      %9728 = vmatprep.subr.mxu0 0.0
      %9729 = vmatpush2.msra.mxu0 0.0
      %9730 = vmatprep.subr.mxu0 0.0
      %9731 = vmatpush2.msra.mxu0 0.0
      %9732 = vmatprep.subr.mxu0 0.0
      %9733 = vmatpush2.msra.mxu0 0.0
      %9734 = vmatprep.subr.mxu0 0.0
      %9735 = vmatpush2.msra.mxu0 0.0
      %9736 = vmatprep.subr.mxu0 0.0
      %9737 = vmatpush2.msra.mxu0 0.0
      %9738 = vmatprep.subr.mxu0 0.0
      %9739 = vmatpush2.msra.mxu0 0.0
      %9740 = vmatprep.subr.mxu0 0.0
      %9741 = vmatpush2.msra.mxu0 0.0
      %9742 = vmatprep.subr.mxu0 0.0
      %9743 = vmatpush2.msra.mxu0 0.0
      %9744 = vmatprep.subr.mxu0 0.0
      %9745 = vmatpush2.msra.mxu0 0.0
      %9746 = vmatprep.subr.mxu0 0.0
      %9747 = vmatpush2.msra.mxu0 0.0
      %9748 = vmatprep.subr.mxu0 0.0
      %9749 = vmatpush2.msra.mxu0 0.0
      %9750 = vmatprep.subr.mxu0 0.0
      %9751 = vmatpush2.msra.mxu0 0.0
      %9752 = vmatprep.subr.mxu0 0.0
      %9753 = vmatpush2.msra.mxu0 0.0
      %9754 = vmatprep.mubr.f32.mxu0 0.0
      %9755 = vmatmul.mubr.f32.gmra.mxu0 %v9688
      %v9756 = vpop.f32.mrf.mxu0
      %v9757 = vadd.f32 0.0, %v9756
      %v9758 = vpop.f32.mrf.mxu0
      %9759 = vdwg.mxu0
      %v9761 = vsel %vm3777, %v9685, 0
      %9763 = vmatprep.subr.mxu0 0.0
      %9764 = vmatpush1.msra.mxu0 0.0
      %9765 = vmatprep.subr.mxu0 0.0
      %9766 = vmatpush1.msra.mxu0 0.0
      %9767 = vmatprep.subr.mxu0 0.0
      %9768 = vmatpush1.msra.mxu0 0.0
      %9769 = vmatprep.subr.mxu0 0.0
      %9770 = vmatpush1.msra.mxu0 0.0
      %9771 = vmatprep.subr.mxu0 0.0
      %9772 = vmatpush1.msra.mxu0 0.0
      %9773 = vmatprep.subr.mxu0 0.0
      %9774 = vmatpush1.msra.mxu0 0.0
      %9775 = vmatprep.subr.mxu0 0.0
      %9776 = vmatpush1.msra.mxu0 0.0
      %9777 = vmatprep.subr.mxu0 0.0
      %9778 = vmatpush1.msra.mxu0 0.0
      %9779 = vmatprep.subr.mxu0 0.0
      %9780 = vmatpush1.msra.mxu0 0.0
      %9781 = vmatprep.subr.mxu0 0.0
      %9782 = vmatpush1.msra.mxu0 0.0
      %9783 = vmatprep.subr.mxu0 0.0
      %9784 = vmatpush1.msra.mxu0 0.0
      %9785 = vmatprep.subr.mxu0 0.0
      %9786 = vmatpush1.msra.mxu0 0.0
      %9787 = vmatprep.subr.mxu0 0.0
      %9788 = vmatpush1.msra.mxu0 0.0
      %9789 = vmatprep.subr.mxu0 0.0
      %9790 = vmatpush1.msra.mxu0 0.0
      %9791 = vmatprep.subr.mxu0 0.0
      %9792 = vmatpush1.msra.mxu0 0.0
      %9793 = vmatprep.subr.mxu0 0.0
      %9794 = vmatpush1.msra.mxu0 %v9686
      %9795 = vmatprep.subr.mxu0 0.0
      %9796 = vmatpush2.msra.mxu0 0.0
      %9797 = vmatprep.subr.mxu0 0.0
      %9798 = vmatpush2.msra.mxu0 0.0
      %9799 = vmatprep.subr.mxu0 0.0
      %9800 = vmatpush2.msra.mxu0 0.0
      %9801 = vmatprep.subr.mxu0 0.0
      %9802 = vmatpush2.msra.mxu0 0.0
      %9803 = vmatprep.subr.mxu0 0.0
      %9804 = vmatpush2.msra.mxu0 0.0
      %9805 = vmatprep.subr.mxu0 0.0
      %9806 = vmatpush2.msra.mxu0 0.0
      %9807 = vmatprep.subr.mxu0 0.0
      %9808 = vmatpush2.msra.mxu0 0.0
      %9809 = vmatprep.subr.mxu0 0.0
      %9810 = vmatpush2.msra.mxu0 0.0
      %9811 = vmatprep.subr.mxu0 0.0
      %9812 = vmatpush2.msra.mxu0 0.0
      %9813 = vmatprep.subr.mxu0 0.0
      %9814 = vmatpush2.msra.mxu0 0.0
      %9815 = vmatprep.subr.mxu0 0.0
      %9816 = vmatpush2.msra.mxu0 0.0
      %9817 = vmatprep.subr.mxu0 0.0
      %9818 = vmatpush2.msra.mxu0 0.0
      %9819 = vmatprep.subr.mxu0 0.0
      %9820 = vmatpush2.msra.mxu0 0.0
      %9821 = vmatprep.subr.mxu0 0.0
      %9822 = vmatpush2.msra.mxu0 0.0
      %9823 = vmatprep.subr.mxu0 0.0
      %9824 = vmatpush2.msra.mxu0 0.0
      %9825 = vmatprep.subr.mxu0 0.0
      %9826 = vmatpush2.msra.mxu0 0.0
      %9827 = vmatprep.mubr.f32.mxu0 0.0
      %9828 = vmatmul.mubr.f32.gmra.mxu0 %v9761
      %v9829 = vpop.f32.mrf.mxu0
      %v9830 = vadd.f32 0.0, %v9829
      %v9831 = vpop.f32.mrf.mxu0
      %9832 = vdwg.mxu0
      %v9833 = vlaneseq
      %v9834 = vshrl.u32 %v9833, 7
      %v9835 = vsub.s32 0, %v9834
      %v9836 = vrot.slane %v9757, %v9835
      %v9837 = vsub.f32 %v9327, %v9836
      %v9838 = vsub.f32 %v9328, %v9836
      %v9839 = vsub.f32 %v9329, %v9836
      %v9840 = vsub.f32 %v9330, %v9836
      %v9841 = vsub.f32 %v9331, %v9836
      %v9842 = vsub.f32 %v9332, %v9836
      %v9843 = vsub.f32 %v9333, %v9836
      %v9844 = vsub.f32 %v9334, %v9836
      %v9845 = vsub.f32 %v9335, %v9836
      %v9846 = vsub.f32 %v9336, %v9836
      %v9847 = vsub.f32 %v9337, %v9836
      %v9848 = vsub.f32 %v9338, %v9836
      %v9849 = vsub.f32 %v9339, %v9836
      %v9850 = vsub.f32 %v9340, %v9836
      %v9851 = vsub.f32 %v9341, %v9836
      %v9852 = vsub.f32 %v9342, %v9836
      %v9853 = vsub.f32 %v9343, %v9836
      %v9854 = vsub.f32 %v9344, %v9836
      %v9855 = vsub.f32 %v9345, %v9836
      %v9856 = vsub.f32 %v9346, %v9836
      %v9857 = vsub.f32 %v9347, %v9836
      %v9858 = vsub.f32 %v9348, %v9836
      %v9859 = vsub.f32 %v9349, %v9836
      %v9860 = vsub.f32 %v9350, %v9836
      %v9861 = vsub.f32 %v9351, %v9836
      %v9862 = vsub.f32 %v9352, %v9836
      %v9863 = vsub.f32 %v9353, %v9836
      %v9864 = vsub.f32 %v9354, %v9836
      %v9865 = vsub.f32 %v9355, %v9836
      %v9866 = vsub.f32 %v9356, %v9836
      %v9867 = vsub.f32 %v9357, %v9836
      %v9868 = vsub.f32 %v9358, %v9836
      %v9869 = vld [vmem:[%s9] sm:$0x1]
      %v9870 = vmul.f32 %v9830, %v9869
      %v9871 = vlaneseq
      %v9872 = vshrl.u32 %v9871, 7
      %v9873 = vsub.s32 0, %v9872
      %v9874 = vrot.slane %v9870, %v9873
      %v9875 = vmul.f32 %v9837, %v9874
      %v9876 = vmul.f32 %v9838, %v9874
      %v9877 = vmul.f32 %v9839, %v9874
      %v9878 = vmul.f32 %v9840, %v9874
      %v9879 = vmul.f32 %v9841, %v9874
      %v9880 = vmul.f32 %v9842, %v9874
      %v9881 = vmul.f32 %v9843, %v9874
      %v9882 = vmul.f32 %v9844, %v9874
      %v9883 = vmul.f32 %v9845, %v9874
      %v9884 = vmul.f32 %v9846, %v9874
      %v9885 = vmul.f32 %v9847, %v9874
      %v9886 = vmul.f32 %v9848, %v9874
      %v9887 = vmul.f32 %v9849, %v9874
      %v9888 = vmul.f32 %v9850, %v9874
      %v9889 = vmul.f32 %v9851, %v9874
      %v9890 = vmul.f32 %v9852, %v9874
      %v9891 = vmul.f32 %v9853, %v9874
      %v9892 = vmul.f32 %v9854, %v9874
      %v9893 = vmul.f32 %v9855, %v9874
      %v9894 = vmul.f32 %v9856, %v9874
      %v9895 = vmul.f32 %v9857, %v9874
      %v9896 = vmul.f32 %v9858, %v9874
      %v9897 = vmul.f32 %v9859, %v9874
      %v9898 = vmul.f32 %v9860, %v9874
      %v9899 = vmul.f32 %v9861, %v9874
      %v9900 = vmul.f32 %v9862, %v9874
      %v9901 = vmul.f32 %v9863, %v9874
      %v9902 = vmul.f32 %v9864, %v9874
      %v9903 = vmul.f32 %v9865, %v9874
      %v9904 = vmul.f32 %v9866, %v9874
      %v9905 = vmul.f32 %v9867, %v9874
      %v9906 = vmul.f32 %v9868, %v9874
      %v9907 = vld [vmem:[%s10] sm:$0x1]
      %v9909 = vlaneseq
      %v9910 = vshrl.u32 %v9909, 7
      %v9911 = vsub.s32 0, %v9910
      %v9912 = vrot.slane %v9907, %v9911
      %v9914 = vadd.f32 %v9875, %v9912
      %v9915 = vadd.f32 %v9876, %v9912
      %v9916 = vadd.f32 %v9877, %v9912
      %v9917 = vadd.f32 %v9878, %v9912
      %v9918 = vadd.f32 %v9879, %v9912
      %v9919 = vadd.f32 %v9880, %v9912
      %v9920 = vadd.f32 %v9881, %v9912
      %v9921 = vadd.f32 %v9882, %v9912
      %v9922 = vadd.f32 %v9883, %v9912
      %v9923 = vadd.f32 %v9884, %v9912
      %v9924 = vadd.f32 %v9885, %v9912
      %v9925 = vadd.f32 %v9886, %v9912
      %v9926 = vadd.f32 %v9887, %v9912
      %v9927 = vadd.f32 %v9888, %v9912
      %v9928 = vadd.f32 %v9889, %v9912
      %v9929 = vadd.f32 %v9890, %v9912
      %v9930 = vadd.f32 %v9891, %v9912
      %v9931 = vadd.f32 %v9892, %v9912
      %v9932 = vadd.f32 %v9893, %v9912
      %v9933 = vadd.f32 %v9894, %v9912
      %v9934 = vadd.f32 %v9895, %v9912
      %v9935 = vadd.f32 %v9896, %v9912
      %v9936 = vadd.f32 %v9897, %v9912
      %v9937 = vadd.f32 %v9898, %v9912
      %v9938 = vadd.f32 %v9899, %v9912
      %v9939 = vadd.f32 %v9900, %v9912
      %v9940 = vadd.f32 %v9901, %v9912
      %v9941 = vadd.f32 %v9902, %v9912
      %v9942 = vadd.f32 %v9903, %v9912
      %v9943 = vadd.f32 %v9904, %v9912
      %v9944 = vadd.f32 %v9905, %v9912
      %v9945 = vadd.f32 %v9906, %v9912
      %v9946 = vmax.f32 %v9914, 0.0
      %v9947 = vmax.f32 %v9915, 0.0
      %v9948 = vmax.f32 %v9916, 0.0
      %v9949 = vmax.f32 %v9917, 0.0
      %v9950 = vmax.f32 %v9918, 0.0
      %v9951 = vmax.f32 %v9919, 0.0
      %v9952 = vmax.f32 %v9920, 0.0
      %v9953 = vmax.f32 %v9921, 0.0
      %v9954 = vmax.f32 %v9922, 0.0
      %v9955 = vmax.f32 %v9923, 0.0
      %v9956 = vmax.f32 %v9924, 0.0
      %v9957 = vmax.f32 %v9925, 0.0
      %v9958 = vmax.f32 %v9926, 0.0
      %v9959 = vmax.f32 %v9927, 0.0
      %v9960 = vmax.f32 %v9928, 0.0
      %v9961 = vmax.f32 %v9929, 0.0
      %v9962 = vmax.f32 %v9930, 0.0
      %v9963 = vmax.f32 %v9931, 0.0
      %v9964 = vmax.f32 %v9932, 0.0
      %v9965 = vmax.f32 %v9933, 0.0
      %v9966 = vmax.f32 %v9934, 0.0
      %v9967 = vmax.f32 %v9935, 0.0
      %v9968 = vmax.f32 %v9936, 0.0
      %v9969 = vmax.f32 %v9937, 0.0
      %v9970 = vmax.f32 %v9938, 0.0
      %v9971 = vmax.f32 %v9939, 0.0
      %v9972 = vmax.f32 %v9940, 0.0
      %v9973 = vmax.f32 %v9941, 0.0
      %v9974 = vmax.f32 %v9942, 0.0
      %v9975 = vmax.f32 %v9943, 0.0
      %v9976 = vmax.f32 %v9944, 0.0
      %v9977 = vmax.f32 %v9945, 0.0
      %9978 = vxpose.xlu0.b32.start [1/16] %v9946, 128
      %9979 = vxpose.xlu0.b32.cont [2/16] %v9947, 128
      %9980 = vxpose.xlu0.b32.cont [3/16] %v9948, 128
      %9981 = vxpose.xlu0.b32.cont [4/16] %v9949, 128
      %9982 = vxpose.xlu0.b32.cont [5/16] %v9950, 128
      %9983 = vxpose.xlu0.b32.cont [6/16] %v9951, 128
      %9984 = vxpose.xlu0.b32.cont [7/16] %v9952, 128
      %9985 = vxpose.xlu0.b32.cont [8/16] %v9953, 128
      %9986 = vxpose.xlu0.b32.cont [9/16] %v9954, 128
      %9987 = vxpose.xlu0.b32.cont [10/16] %v9955, 128
      %9988 = vxpose.xlu0.b32.cont [11/16] %v9956, 128
      %9989 = vxpose.xlu0.b32.cont [12/16] %v9957, 128
      %9990 = vxpose.xlu0.b32.cont [13/16] %v9958, 128
      %9991 = vxpose.xlu0.b32.cont [14/16] %v9959, 128
      %9992 = vxpose.xlu0.b32.cont [15/16] %v9960, 128
      %9993 = vxpose.xlu0.b32.end [16/16] %v9961, 128
      %v9994 = vpop.trf.xlu0
      %v9995 = vpop.trf.xlu0
      %v9996 = vpop.trf.xlu0
      %v9997 = vpop.trf.xlu0
      %v9998 = vpop.trf.xlu0
      %v9999 = vpop.trf.xlu0
      %v10000 = vpop.trf.xlu0
      %v10001 = vpop.trf.xlu0
      %v10002 = vpop.trf.xlu0
      %v10003 = vpop.trf.xlu0
      %v10004 = vpop.trf.xlu0
      %v10005 = vpop.trf.xlu0
      %v10006 = vpop.trf.xlu0
      %v10007 = vpop.trf.xlu0
      %v10008 = vpop.trf.xlu0
      %v10009 = vpop.trf.xlu0
      %10010 = vxpose.xlu0.b32.start [1/16] %v9962, 128
      %10011 = vxpose.xlu0.b32.cont [2/16] %v9963, 128
      %10012 = vxpose.xlu0.b32.cont [3/16] %v9964, 128
      %10013 = vxpose.xlu0.b32.cont [4/16] %v9965, 128
      %10014 = vxpose.xlu0.b32.cont [5/16] %v9966, 128
      %10015 = vxpose.xlu0.b32.cont [6/16] %v9967, 128
      %10016 = vxpose.xlu0.b32.cont [7/16] %v9968, 128
      %10017 = vxpose.xlu0.b32.cont [8/16] %v9969, 128
      %10018 = vxpose.xlu0.b32.cont [9/16] %v9970, 128
      %10019 = vxpose.xlu0.b32.cont [10/16] %v9971, 128
      %10020 = vxpose.xlu0.b32.cont [11/16] %v9972, 128
      %10021 = vxpose.xlu0.b32.cont [12/16] %v9973, 128
      %10022 = vxpose.xlu0.b32.cont [13/16] %v9974, 128
      %10023 = vxpose.xlu0.b32.cont [14/16] %v9975, 128
      %10024 = vxpose.xlu0.b32.cont [15/16] %v9976, 128
      %10025 = vxpose.xlu0.b32.end [16/16] %v9977, 128
      %v10026 = vpop.trf.xlu0
      %v10027 = vpop.trf.xlu0
      %v10028 = vpop.trf.xlu0
      %v10029 = vpop.trf.xlu0
      %v10030 = vpop.trf.xlu0
      %v10031 = vpop.trf.xlu0
      %v10032 = vpop.trf.xlu0
      %v10033 = vpop.trf.xlu0
      %v10034 = vpop.trf.xlu0
      %v10035 = vpop.trf.xlu0
      %v10036 = vpop.trf.xlu0
      %v10037 = vpop.trf.xlu0
      %v10038 = vpop.trf.xlu0
      %v10039 = vpop.trf.xlu0
      %v10040 = vpop.trf.xlu0
      %v10041 = vpop.trf.xlu0
      %10042 = vst [vmem:[%s440] sm:$0xff] %v9994
      %10043 = vst [vmem:[%s440 + $0x8] sm:$0xff] %v10026
      %10044 = vst [vmem:[%s440 + $0x10] sm:$0xff] %v9995
      %10045 = vst [vmem:[%s440 + $0x18] sm:$0xff] %v10027
      %10046 = vst [vmem:[%s440 + $0x20] sm:$0xff] %v9996
      %10047 = vst [vmem:[%s440 + $0x28] sm:$0xff] %v10028
      %10048 = vst [vmem:[%s440 + $0x30] sm:$0xff] %v9997
      %10049 = vst [vmem:[%s440 + $0x38] sm:$0xff] %v10029
      %p10050 = scmp.lt.s32.totalorder %s24, 1
      %s10051 = scalar_select %p10050, %s24, 1
      %s10052 = smul.addr %s10051, 8
      %s10053 = smul.addr %s10052, 8
      %s10054 = scalar_lea.vmem %s13, %s10053
      // Predicated region
      $region73: #{up_forward.3} parent=71 // pred_check
        %p10055 = pneg %p320
      $region74: #{up_forward.3} parent=71 // pred_check_branch
        %10057 = sbr.rel (%p10055) target = $region76
      $region75: #{up_forward.3} parent=71 // pred_region
        _
      $region76: #{up_forward.3} parent=71 // pred_fallthru
        _
    $region72: #{up_forward.3} parent=5 // pred_fallthru
      _
    %p10058 = scmp.le.s32.totalorder 2, %s19
    // Predicated region
    $region77: #{up_forward.3} parent=5 // pred_check
      %p10059 = pneg %p10058
    $region78: #{up_forward.3} parent=5 // pred_check_branch
      %10061 = sbr.rel (%p10059) target = $region80
    $region79: #{up_forward.3} parent=5 // pred_region
      %s10062 = ssub.s32 %s19, 2
      // Predicated region
      $region81: #{up_forward.3} parent=79 // pred_check
        %p10063 = pneg %p326
      $region82: #{up_forward.3} parent=79 // pred_check_branch
        %10065 = sbr.rel (%p10063) target = $region84
      $region83: #{up_forward.3} parent=79 // pred_region
        %p10066 = scmp.lt.s32.totalorder %s25, 1
        %s10067 = scalar_select %p10066, %s25, 1
        %s10068 = smul.addr %s10067, 8
        %s10069 = smul.addr %s10068, 8
        %s10070 = scalar_lea.vmem %s13, %s10069
      $region84: #{up_forward.3} parent=79 // pred_fallthru
        _
    $region80: #{up_forward.3} parent=5 // pred_fallthru
      _
  $region6: #{up_forward.3} parent=0 // loop_footer
    %s23 = sadd.s32 1, %s19
  $region7: #{up_forward.3} parent=0 // loop_footer_branch
    %18 = sbr.rel target = $region3
  $region8: #{up_forward.3} parent=0 // loop_exit
    _

</llo_original>
